<compile_context>
chip_gen: v5e
topology: v5e:2x2
jax: 0.10.0
libtpu: 0.0.40
codegen_flags: <defaults>
</compile_context>

<pallas_src>
import jax
import jax.numpy as jnp
from jax import lax
from jax.experimental import pallas as pl
from jax.experimental.pallas import tpu as pltpu

B = 2            # batch
L_NAME = 1000    # name tokens   (vocab 316, emb 16)
L_BEH = 4000     # behavior tokens (vocab 289, emb 8)
E1, E2 = 16, 8
C = 128          # conv out channels (per conv)
H = 100          # GRU hidden size (logical)
HP = 128         # GRU hidden size padded to lane width
GP = 3 * HP      # padded per-direction gate width (r, z, n) = 384
T = 1000         # sequence length after the convs
ROWS = T * B     # 2000 t-major gate rows (row = t*B + b)
KCAT = 3 * E1 + 4 * E1 + 5 * E1 + 4 * E2   # 224: concatenated im2col width

TM = 400         # kernel-1 row tile (multiple of 16 for bf16 packing; 5 steps)
UNROLL = 4       # GRU time-loop unroll: 4 steps * B=2 rows = one 8-row tile
NG = T // UNROLL


# ---------------------------------------------------------------------------
# Kernel 1: block-diagonal im2col conv (+bias, ReLU) fused with the combined
# GRU input projection of both directions.  Output rows are t-major, bf16.
# ---------------------------------------------------------------------------
def conv_gate_kernel(x_ref, wc_ref, bc_ref, wih_ref, bg_ref, g_ref):
    # conv as one block-diagonal matmul: (TM, 224) @ (224, 512) -> (TM, 512)
    cv = jnp.dot(x_ref[...], wc_ref[...], preferred_element_type=jnp.float32)
    cv = jnp.maximum(cv + bc_ref[...], 0.0).astype(jnp.bfloat16)
    # single fused GRU input projection for both directions: (TM,512)@(512,768)
    g = jnp.dot(cv, wih_ref[...],
                preferred_element_type=jnp.float32) + bg_ref[...]
    g_ref[...] = g.astype(jnp.bfloat16)


def conv_gates(xcat, wc, bc, wih, bg):
    const = lambda i: (0, 0)
    return pl.pallas_call(
        conv_gate_kernel,
        out_shape=jax.ShapeDtypeStruct((ROWS, 2 * GP), jnp.bfloat16),
        grid=(ROWS // TM,),
        in_specs=[
            pl.BlockSpec((TM, KCAT), lambda i: (i, 0)),
            pl.BlockSpec((KCAT, 4 * C), const),
            pl.BlockSpec((1, 4 * C), const),
            pl.BlockSpec((4 * C, 2 * GP), const),
            pl.BlockSpec((1, 2 * GP), const),
        ],
        out_specs=pl.BlockSpec((TM, 2 * GP), lambda i: (i, 0)),
        compiler_params=pltpu.CompilerParams(
            dimension_semantics=("parallel",)),
    )(xcat, wc, bc, wih, bg)


# ---------------------------------------------------------------------------
# Kernel 2: fused bidirectional GRU recurrence + MLP head (grid-less).
# Both directions advance in one loop; backward reads gate rows in reverse.
# ---------------------------------------------------------------------------
def gru_mlp_kernel(g_ref, whh_ref, bhn_ref, w1_ref, b1_ref, w2_ref, b2_ref,
                   w3_ref, b3_ref, o_ref):
    # Hoisted broadcasts of the n-gate recurrent bias (r/z biases were folded
    # into the kernel-1 gate bias).
    bhn_f = jnp.broadcast_to(bhn_ref[0], (B, GP))
    bhn_b = jnp.broadcast_to(bhn_ref[1], (B, GP))

    def gru_step(gx_bf16, h, d, bhn):
        # bf16 x bf16 recurrent matmul (single-pass MXU), f32 accumulation.
        gh = jnp.dot(h.astype(jnp.bfloat16), whh_ref[d],
                     preferred_element_type=jnp.float32) + bhn
        gx = gx_bf16.astype(jnp.float32)
        r = jax.nn.sigmoid(gx[:, 0:HP] + gh[:, 0:HP])
        z = jax.nn.sigmoid(gx[:, HP:2 * HP] + gh[:, HP:2 * HP])
        n = jnp.tanh(gx[:, 2 * HP:] + r * gh[:, 2 * HP:])
        return (1.0 - z) * n + z * h

    def group(g, carry):
        hf, hb = carry
        # one sublane-aligned 8-row gate tile per direction per 4 steps
        fbase = pl.multiple_of(g * (UNROLL * B), UNROLL * B)
        bbase = pl.multiple_of(ROWS - UNROLL * B - g * (UNROLL * B),
                               UNROLL * B)
        gxf = g_ref[pl.ds(fbase, UNROLL * B), pl.ds(0, GP)]     # (8, GP) bf16
        gxb = g_ref[pl.ds(bbase, UNROLL * B), pl.ds(GP, GP)]    # (8, GP) bf16
        for u in range(UNROLL):
            hf = gru_step(gxf[B * u:B * (u + 1), :], hf, 0, bhn_f)
            hb = gru_step(
                gxb[UNROLL * B - B * (u + 1):UNROLL * B - B * u, :],
                hb, 1, bhn_b)
        return hf, hb

    h0 = jnp.zeros((B, HP), jnp.float32)
    hf, hb = lax.fori_loop(0, NG, group, (h0, h0))

    # MLP head: lin1 -> relu -> lin2 -> relu -> lin3 -> sigmoid
    # TODO(synk): dropout(p=0.2) implemented as identity (eval/inference mode).
    h_cat = jnp.concatenate([hf, hb], axis=-1)                  # (B, 2*HP)
    x = jnp.maximum(
        jnp.dot(h_cat, w1_ref[...],
                preferred_element_type=jnp.float32) + b1_ref[...], 0.0)
    x = jnp.maximum(
        jnp.dot(x, w2_ref[...],
                preferred_element_type=jnp.float32) + b2_ref[...], 0.0)
    o_ref[...] = jax.nn.sigmoid(
        jnp.dot(x, w3_ref[...],
                preferred_element_type=jnp.float32) + b3_ref[...])


def gru_mlp(gates, whh, bhn, w1, b1, w2, b2, w3, b3):
    vspec = lambda: pl.BlockSpec(memory_space=pltpu.MemorySpace.VMEM)
    return pl.pallas_call(
        gru_mlp_kernel,
        out_shape=jax.ShapeDtypeStruct((B, 1), jnp.float32),
        in_specs=[vspec() for _ in range(9)],
        out_specs=vspec(),
    )(gates, whh, bhn, w1, b1, w2, b2, w3, b3)


# ---------------------------------------------------------------------------
# Parameter construction (deterministic, PyTorch-layout shapes) + forward glue
# ---------------------------------------------------------------------------
def init_params(key):
    ks = jax.random.split(key, 24)
    nrm = lambda k, s, sc: jax.random.normal(k, s, jnp.float32) * sc
    p = {}
    p['emb1'] = nrm(ks[0], (316, E1), 0.1)
    p['emb2'] = nrm(ks[1], (289, E2), 0.1)
    p['c11_w'] = nrm(ks[2], (C, 1, 3, E1), 0.1); p['c11_b'] = nrm(ks[3], (C,), 0.1)
    p['c12_w'] = nrm(ks[4], (C, 1, 4, E1), 0.1); p['c12_b'] = nrm(ks[5], (C,), 0.1)
    p['c13_w'] = nrm(ks[6], (C, 1, 5, E1), 0.1); p['c13_b'] = nrm(ks[7], (C,), 0.1)
    p['c2_w'] = nrm(ks[8], (C, 1, 4, E2), 0.1);  p['c2_b'] = nrm(ks[9], (C,), 0.1)
    p['wih_f'] = nrm(ks[10], (3 * H, 4 * C), 0.05)
    p['whh_f'] = nrm(ks[11], (3 * H, H), 0.05)
    p['bih_f'] = nrm(ks[12], (3 * H,), 0.05)
    p['bhh_f'] = nrm(ks[13], (3 * H,), 0.05)
    p['wih_b'] = nrm(ks[14], (3 * H, 4 * C), 0.05)
    p['whh_b'] = nrm(ks[15], (3 * H, H), 0.05)
    p['bih_b'] = nrm(ks[16], (3 * H,), 0.05)
    p['bhh_b'] = nrm(ks[17], (3 * H,), 0.05)
    p['l1_w'] = nrm(ks[18], (64, 200), 0.1); p['l1_b'] = nrm(ks[19], (64,), 0.1)
    p['l2_w'] = nrm(ks[20], (32, 64), 0.1);  p['l2_b'] = nrm(ks[21], (32,), 0.1)
    p['l3_w'] = nrm(ks[22], (1, 32), 0.1);   p['l3_b'] = nrm(ks[23], (1,), 0.1)
    return p


def im2col_t(x, k):
    # x: (Lp, B, E) t-major -> (Lp-k+1, B, k*E); windows flattened in (k, E)
    # order to match torch Conv2d weight.reshape(Cout, k*E).
    L_out = x.shape[0] - k + 1
    cols = jnp.stack([x[i:i + L_out] for i in range(k)], axis=2)
    return cols.reshape(L_out, x.shape[1], k * x.shape[2])


def pad_gate_cols(w):
    # (..., 3*H) in (r,z,n) order -> (..., 3*HP) with each gate zero-padded to HP
    pads = [(0, 0)] * (w.ndim - 1) + [(0, HP - H)]
    r = jnp.pad(w[..., 0:H], pads)
    z = jnp.pad(w[..., H:2 * H], pads)
    n = jnp.pad(w[..., 2 * H:3 * H], pads)
    return jnp.concatenate([r, z, n], axis=-1)


@jax.jit
def net_forward(tokens, p):
    name_ids = tokens[:, :L_NAME]
    beh_ids = tokens[:, L_NAME:]
    # embeddings in t-major (T, B, E) so the gate tensor never needs a big
    # transpose between the two kernels.
    xn = jnp.take(p['emb1'], name_ids, axis=0).transpose(1, 0, 2)   # (1000,B,16)
    xb = jnp.take(p['emb2'], beh_ids, axis=0)                       # (B,4000,8)

    xn_p1 = jnp.pad(xn, ((1, 1), (0, 0), (0, 0)))   # Conv2d padding=(1,0)
    xn_p2 = jnp.pad(xn, ((2, 1), (0, 0), (0, 0)))   # ZeroPad2d((0,0,2,1))
    xn_p3 = jnp.pad(xn, ((2, 2), (0, 0), (0, 0)))   # Conv2d padding=(2,0)
    x1 = im2col_t(xn_p1, 3)                                     # (T,B,48)
    x2 = im2col_t(xn_p2, 4)                                     # (T,B,64)
    x3 = im2col_t(xn_p3, 5)                                     # (T,B,80)
    x4 = xb.reshape(B, T, 4 * E2).transpose(1, 0, 2)            # (T,B,32) stride-4
    xcat = jnp.concatenate([x1, x2, x3, x4], axis=-1)           # (T,B,224)
    xcat = xcat.reshape(ROWS, KCAT).astype(jnp.bfloat16)

    # block-diagonal conv weight: (k*E) column blocks -> 128-channel blocks
    w1c = p['c11_w'].reshape(C, 3 * E1).T
    w2c = p['c12_w'].reshape(C, 4 * E1).T
    w3c = p['c13_w'].reshape(C, 5 * E1).T
    w4c = p['c2_w'].reshape(C, 4 * E2).T
    wc = jnp.zeros((KCAT, 4 * C), jnp.float32)
    wc = wc.at[0:48, 0:128].set(w1c)
    wc = wc.at[48:112, 128:256].set(w2c)
    wc = wc.at[112:192, 256:384].set(w3c)
    wc = wc.at[192:224, 384:512].set(w4c)
    wc = wc.astype(jnp.bfloat16)
    bc = jnp.concatenate([p['c11_b'], p['c12_b'],
                          p['c13_b'], p['c2_b']]).reshape(1, 4 * C)

    # combined GRU input weights for both directions: (512, 768) bf16
    wih = jnp.concatenate([pad_gate_cols(p['wih_f'].T),
                           pad_gate_cols(p['wih_b'].T)],
                          axis=-1).astype(jnp.bfloat16)

    # gate bias with b_hh_r / b_hh_z folded in (b_hh_n stays in the recurrence)
    def fold_bias(bih, bhh):
        b = bih + jnp.concatenate([bhh[:2 * H], jnp.zeros((H,), jnp.float32)])
        return pad_gate_cols(b.reshape(1, 3 * H))
    bg = jnp.concatenate([fold_bias(p['bih_f'], p['bhh_f']),
                          fold_bias(p['bih_b'], p['bhh_b'])], axis=-1)  # (1,768)

    gates = conv_gates(xcat, wc, bc, wih, bg)                   # (2000,768) bf16

    # recurrent weights as h @ W_hh^T, zero-padded, bf16 operands
    def pad_whh(w):
        return pad_gate_cols(jnp.pad(w.T, ((0, HP - H), (0, 0))))  # (HP, 3*HP)
    whh = jnp.stack([pad_whh(p['whh_f']),
                     pad_whh(p['whh_b'])]).astype(jnp.bfloat16)     # (2,HP,GP)

    def n_bias(bhh):
        return pad_gate_cols(
            jnp.concatenate([jnp.zeros((2 * H,), jnp.float32),
                             bhh[2 * H:]]).reshape(1, 3 * H))
    bhn = jnp.stack([n_bias(p['bhh_f']), n_bias(p['bhh_b'])])       # (2,1,GP) f32

    # MLP head params; lin1 rows rearranged for the padded (B, 2*HP) concat.
    l1wt = p['l1_w'].T                                              # (200, 64)
    zrow = jnp.zeros((HP - H, 64), jnp.float32)
    l1w = jnp.concatenate([l1wt[:H], zrow, l1wt[H:], zrow], axis=0) # (256, 64)

    return gru_mlp(gates, whh, bhn,
                   l1w, p['l1_b'].reshape(1, 64),
                   p['l2_w'].T, p['l2_b'].reshape(1, 32),
                   p['l3_w'].T, p['l3_b'].reshape(1, 1))            # (B, 1)


if __name__ == "__main__":
    key = jax.random.PRNGKey(0)
    kn, kb = jax.random.split(key)
    name_ids = jax.random.randint(kn, (B, L_NAME), 0, 316, dtype=jnp.int32)
    beh_ids = jax.random.randint(kb, (B, L_BEH), 0, 289, dtype=jnp.int32)
    tokens = jnp.concatenate([name_ids, beh_ids], axis=1)           # (B, 5000)

    params = init_params(jax.random.PRNGKey(1))
    out = net_forward(tokens, params)
    out = jax.block_until_ready(out)
    assert out.shape == (B, 1)
    assert bool(jnp.all(jnp.isfinite(out)))
    print("KERNEL_OK")
</pallas_src>

<mosaic_0001>
module attributes {stable_mosaic.version = 11 : i64} {
  func.func @conv_gate_kernel(%arg0: i32, %arg1: memref<400x224xbf16, #tpu.memory_space<vmem>>, %arg2: memref<224x512xbf16, #tpu.memory_space<vmem>>, %arg3: memref<1x512xf32, #tpu.memory_space<vmem>>, %arg4: memref<512x768xbf16, #tpu.memory_space<vmem>>, %arg5: memref<1x768xf32, #tpu.memory_space<vmem>>, %arg6: memref<400x768xbf16, #tpu.memory_space<vmem>>) attributes {dimension_semantics = [#tpu.dimension_semantics<parallel>], iteration_bounds = array<i64: 5>, scalar_prefetch = 0 : i64, scratch_operands = 0 : i64, tpu.core_type = #tpu.core_type<tc>, window_params = [{transform_indices = @transform_0, window_bounds = array<i64: 400, 224>}, {pipeline_mode = #tpu.pipeline_mode<synchronous>, transform_indices = @transform_1, window_bounds = array<i64: 224, 512>}, {pipeline_mode = #tpu.pipeline_mode<synchronous>, transform_indices = @transform_2, window_bounds = array<i64: 1, 512>}, {pipeline_mode = #tpu.pipeline_mode<synchronous>, transform_indices = @transform_3, window_bounds = array<i64: 512, 768>}, {pipeline_mode = #tpu.pipeline_mode<synchronous>, transform_indices = @transform_4, window_bounds = array<i64: 1, 768>}, {transform_indices = @transform_5, window_bounds = array<i64: 400, 768>}]} {
    %c0 = arith.constant 0 : index
    %c0_0 = arith.constant 0 : index
    %0 = vector.load %arg1[%c0, %c0_0] : memref<400x224xbf16, #tpu.memory_space<vmem>>, vector<400x224xbf16>
    %c0_1 = arith.constant 0 : index
    %c0_2 = arith.constant 0 : index
    %1 = vector.load %arg2[%c0_1, %c0_2] : memref<224x512xbf16, #tpu.memory_space<vmem>>, vector<224x512xbf16>
    %cst = arith.constant dense<0.000000e+00> : vector<400x512xf32>
    %2 = tpu.matmul %0, %1, %cst {dimension_numbers = #tpu.dot_dimension_numbers<[1], [0], [0], [1], [0, 0, 1, 1], [], []>} : vector<400x224xbf16>, vector<224x512xbf16>, vector<400x512xf32> -> vector<400x512xf32>
    %c0_3 = arith.constant 0 : index
    %c0_4 = arith.constant 0 : index
    %3 = vector.load %arg3[%c0_3, %c0_4] : memref<1x512xf32, #tpu.memory_space<vmem>>, vector<1x512xf32>
    %4 = vector.broadcast %3 : vector<1x512xf32> to vector<400x512xf32>
    %5 = arith.addf %2, %4 : vector<400x512xf32>
    %cst_5 = arith.constant 0.000000e+00 : f32
    %6 = vector.broadcast %cst_5 : f32 to vector<400x512xf32>
    %7 = arith.maximumf %5, %6 : vector<400x512xf32>
    %8 = arith.truncf %7 : vector<400x512xf32> to vector<400x512xbf16>
    %c0_6 = arith.constant 0 : index
    %c0_7 = arith.constant 0 : index
    %9 = vector.load %arg4[%c0_6, %c0_7] : memref<512x768xbf16, #tpu.memory_space<vmem>>, vector<512x768xbf16>
    %cst_8 = arith.constant dense<0.000000e+00> : vector<400x768xf32>
    %10 = tpu.matmul %8, %9, %cst_8 {dimension_numbers = #tpu.dot_dimension_numbers<[1], [0], [0], [1], [0, 0, 1, 1], [], []>} : vector<400x512xbf16>, vector<512x768xbf16>, vector<400x768xf32> -> vector<400x768xf32>
    %c0_9 = arith.constant 0 : index
    %c0_10 = arith.constant 0 : index
    %11 = vector.load %arg5[%c0_9, %c0_10] : memref<1x768xf32, #tpu.memory_space<vmem>>, vector<1x768xf32>
    %12 = vector.broadcast %11 : vector<1x768xf32> to vector<400x768xf32>
    %13 = arith.addf %10, %12 : vector<400x768xf32>
    %14 = arith.truncf %13 : vector<400x768xf32> to vector<400x768xbf16>
    %c0_11 = arith.constant 0 : index
    %c0_12 = arith.constant 0 : index
    %15 = vector.load %arg6[%c0_11, %c0_12] : memref<400x768xbf16, #tpu.memory_space<vmem>>, vector<400x768xbf16>
    tpu.vector_store %arg6[%c0_11, %c0_12], %14 {strides = array<i32>} : memref<400x768xbf16, #tpu.memory_space<vmem>>, vector<400x768xbf16>,
    return
  }
  func.func @transform_0(%arg0: i32) -> (i32, i32) {
    %c0_i32 = arith.constant 0 : i32
    %c0_i32_0 = arith.constant 0 : i32
    return %arg0, %c0_i32 : i32, i32
  }
  func.func @transform_1(%arg0: i32) -> (i32, i32) {
    %c0_i32 = arith.constant 0 : i32
    %c0_i32_0 = arith.constant 0 : i32
    %c0_i32_1 = arith.constant 0 : i32
    return %c0_i32, %c0_i32_0 : i32, i32
  }
  func.func @transform_2(%arg0: i32) -> (i32, i32) {
    %c0_i32 = arith.constant 0 : i32
    %c0_i32_0 = arith.constant 0 : i32
    %c0_i32_1 = arith.constant 0 : i32
    return %c0_i32, %c0_i32_0 : i32, i32
  }
  func.func @transform_3(%arg0: i32) -> (i32, i32) {
    %c0_i32 = arith.constant 0 : i32
    %c0_i32_0 = arith.constant 0 : i32
    %c0_i32_1 = arith.constant 0 : i32
    return %c0_i32, %c0_i32_0 : i32, i32
  }
  func.func @transform_4(%arg0: i32) -> (i32, i32) {
    %c0_i32 = arith.constant 0 : i32
    %c0_i32_0 = arith.constant 0 : i32
    %c0_i32_1 = arith.constant 0 : i32
    return %c0_i32, %c0_i32_0 : i32, i32
  }
  func.func @transform_5(%arg0: i32) -> (i32, i32) {
    %c0_i32 = arith.constant 0 : i32
    %c0_i32_0 = arith.constant 0 : i32
    return %arg0, %c0_i32 : i32, i32
  }
}

module attributes {stable_mosaic.version = 11 : i64} {
  func.func @gru_mlp_kernel(%arg0: memref<2000x768xbf16, #tpu.memory_space<vmem>>, %arg1: memref<2x128x384xbf16, #tpu.memory_space<vmem>>, %arg2: memref<2x1x384xf32, #tpu.memory_space<vmem>>, %arg3: memref<256x64xf32, #tpu.memory_space<vmem>>, %arg4: memref<1x64xf32, #tpu.memory_space<vmem>>, %arg5: memref<64x32xf32, #tpu.memory_space<vmem>>, %arg6: memref<1x32xf32, #tpu.memory_space<vmem>>, %arg7: memref<32x1xf32, #tpu.memory_space<vmem>>, %arg8: memref<1x1xf32, #tpu.memory_space<vmem>>, %arg9: memref<2x1xf32, #tpu.memory_space<vmem>>) attributes {dimension_semantics = [], scalar_prefetch = 0 : i64, scratch_operands = 0 : i64, tpu.core_type = #tpu.core_type<tc>} {
    %c0 = arith.constant 0 : index
    %c0_0 = arith.constant 0 : index
    %c0_1 = arith.constant 0 : index
    %0 = vector.load %arg2[%c0, %c0_0, %c0_1] : memref<2x1x384xf32, #tpu.memory_space<vmem>>, vector<1x1x384xf32>
    %1 = vector.shape_cast %0 : vector<1x1x384xf32> to vector<1x384xf32>
    %2 = vector.shape_cast %1 : vector<1x384xf32> to vector<1x384xf32>
    %3 = vector.broadcast %2 : vector<1x384xf32> to vector<2x384xf32>
    %c1 = arith.constant 1 : index
    %c0_2 = arith.constant 0 : index
    %c0_3 = arith.constant 0 : index
    %4 = vector.load %arg2[%c1, %c0_2, %c0_3] : memref<2x1x384xf32, #tpu.memory_space<vmem>>, vector<1x1x384xf32>
    %5 = vector.shape_cast %4 : vector<1x1x384xf32> to vector<1x384xf32>
    %6 = vector.shape_cast %5 : vector<1x384xf32> to vector<1x384xf32>
    %7 = vector.broadcast %6 : vector<1x384xf32> to vector<2x384xf32>
    %cst = arith.constant 0.000000e+00 : f32
    %8 = vector.broadcast %cst : f32 to vector<2x128xf32>
    %c0_i32 = arith.constant 0 : i32
    %c250_i32 = arith.constant 250 : i32
    %9 = arith.addi %c0_i32, %c250_i32 : i32
    %c1_i32 = arith.constant 1 : i32
    %10:2 = scf.for %arg10 = %c0_i32 to %9 step %c1_i32 iter_args(%arg11 = %8, %arg12 = %8) -> (vector<2x128xf32>, vector<2x128xf32>)  : i32 {
      %c8_i32 = arith.constant 8 : i32
      %37 = arith.muli %arg10, %c8_i32 : i32
      %38 = tpu.assume_multiple %37, 8 : i32
      %c8_i32_25 = arith.constant 8 : i32
      %39 = arith.muli %arg10, %c8_i32_25 : i32
      %c1992_i32 = arith.constant 1992 : i32
      %40 = arith.subi %c1992_i32, %39 : i32
      %41 = tpu.assume_multiple %40, 8 : i32
      %42 = arith.index_cast %38 : i32 to index
      %c0_26 = arith.constant 0 : index
      %43 = vector.load %arg0[%42, %c0_26] : memref<2000x768xbf16, #tpu.memory_space<vmem>>, vector<8x384xbf16>
      %44 = arith.index_cast %41 : i32 to index
      %c384 = arith.constant 384 : index
      %45 = vector.load %arg0[%44, %c384] : memref<2000x768xbf16, #tpu.memory_space<vmem>>, vector<8x384xbf16>
      %46 = vector.extract_strided_slice %43 {offsets = [0, 0], sizes = [2, 384], strides = [1, 1]} : vector<8x384xbf16> to vector<2x384xbf16>
      %47 = arith.truncf %arg11 : vector<2x128xf32> to vector<2x128xbf16>
      %c0_27 = arith.constant 0 : index
      %c0_28 = arith.constant 0 : index
      %c0_29 = arith.constant 0 : index
      %48 = vector.load %arg1[%c0_27, %c0_28, %c0_29] : memref<2x128x384xbf16, #tpu.memory_space<vmem>>, vector<1x128x384xbf16>
      %49 = vector.shape_cast %48 : vector<1x128x384xbf16> to vector<128x384xbf16>
      %cst_30 = arith.constant dense<0.000000e+00> : vector<2x384xf32>
      %50 = tpu.matmul %47, %49, %cst_30 {dimension_numbers = #tpu.dot_dimension_numbers<[1], [0], [0], [1], [0, 0, 1, 1], [], []>} : vector<2x128xbf16>, vector<128x384xbf16>, vector<2x384xf32> -> vector<2x384xf32>
      %51 = arith.addf %50, %3 : vector<2x384xf32>
      %52 = arith.extf %46 : vector<2x384xbf16> to vector<2x384xf32>
      %53 = vector.extract_strided_slice %52 {offsets = [0, 0], sizes = [2, 128], strides = [1, 1]} : vector<2x384xf32> to vector<2x128xf32>
      %54 = vector.extract_strided_slice %51 {offsets = [0, 0], sizes = [2, 128], strides = [1, 1]} : vector<2x384xf32> to vector<2x128xf32>
      %55 = arith.addf %53, %54 : vector<2x128xf32>
      %56 = arith.negf %55 : vector<2x128xf32>
      %57 = math.exp %56 : vector<2x128xf32>
      %cst_31 = arith.constant 1.000000e+00 : f32
      %58 = vector.broadcast %cst_31 : f32 to vector<2x128xf32>
      %59 = arith.addf %58, %57 : vector<2x128xf32>
      %60 = arith.divf %58, %59 : vector<2x128xf32>
      %61 = vector.extract_strided_slice %52 {offsets = [0, 128], sizes = [2, 128], strides = [1, 1]} : vector<2x384xf32> to vector<2x128xf32>
      %62 = vector.extract_strided_slice %51 {offsets = [0, 128], sizes = [2, 128], strides = [1, 1]} : vector<2x384xf32> to vector<2x128xf32>
      %63 = arith.addf %61, %62 : vector<2x128xf32>
      %64 = arith.negf %63 : vector<2x128xf32>
      %65 = math.exp %64 : vector<2x128xf32>
      %cst_32 = arith.constant 1.000000e+00 : f32
      %66 = vector.broadcast %cst_32 : f32 to vector<2x128xf32>
      %67 = arith.addf %66, %65 : vector<2x128xf32>
      %68 = arith.divf %66, %67 : vector<2x128xf32>
      %69 = vector.extract_strided_slice %52 {offsets = [0, 256], sizes = [2, 128], strides = [1, 1]} : vector<2x384xf32> to vector<2x128xf32>
      %70 = vector.extract_strided_slice %51 {offsets = [0, 256], sizes = [2, 128], strides = [1, 1]} : vector<2x384xf32> to vector<2x128xf32>
      %71 = arith.mulf %60, %70 : vector<2x128xf32>
      %72 = arith.addf %69, %71 : vector<2x128xf32>
      %73 = math.tanh %72 : vector<2x128xf32>
      %cst_33 = arith.constant 1.000000e+00 : f32
      %74 = vector.broadcast %cst_33 : f32 to vector<2x128xf32>
      %75 = arith.subf %74, %68 : vector<2x128xf32>
      %76 = arith.mulf %75, %73 : vector<2x128xf32>
      %77 = arith.mulf %68, %arg11 : vector<2x128xf32>
      %78 = arith.addf %76, %77 : vector<2x128xf32>
      %79 = vector.extract_strided_slice %45 {offsets = [6, 0], sizes = [2, 384], strides = [1, 1]} : vector<8x384xbf16> to vector<2x384xbf16>
      %80 = arith.truncf %arg12 : vector<2x128xf32> to vector<2x128xbf16>
      %c1_34 = arith.constant 1 : index
      %c0_35 = arith.constant 0 : index
      %c0_36 = arith.constant 0 : index
      %81 = vector.load %arg1[%c1_34, %c0_35, %c0_36] : memref<2x128x384xbf16, #tpu.memory_space<vmem>>, vector<1x128x384xbf16>
      %82 = vector.shape_cast %81 : vector<1x128x384xbf16> to vector<128x384xbf16>
      %cst_37 = arith.constant dense<0.000000e+00> : vector<2x384xf32>
      %83 = tpu.matmul %80, %82, %cst_37 {dimension_numbers = #tpu.dot_dimension_numbers<[1], [0], [0], [1], [0, 0, 1, 1], [], []>} : vector<2x128xbf16>, vector<128x384xbf16>, vector<2x384xf32> -> vector<2x384xf32>
      %84 = arith.addf %83, %7 : vector<2x384xf32>
      %85 = arith.extf %79 : vector<2x384xbf16> to vector<2x384xf32>
      %86 = vector.extract_strided_slice %85 {offsets = [0, 0], sizes = [2, 128], strides = [1, 1]} : vector<2x384xf32> to vector<2x128xf32>
      %87 = vector.extract_strided_slice %84 {offsets = [0, 0], sizes = [2, 128], strides = [1, 1]} : vector<2x384xf32> to vector<2x128xf32>
      %88 = arith.addf %86, %87 : vector<2x128xf32>
      %89 = arith.negf %88 : vector<2x128xf32>
      %90 = math.exp %89 : vector<2x128xf32>
      %cst_38 = arith.constant 1.000000e+00 : f32
      %91 = vector.broadcast %cst_38 : f32 to vector<2x128xf32>
      %92 = arith.addf %91, %90 : vector<2x128xf32>
      %93 = arith.divf %91, %92 : vector<2x128xf32>
      %94 = vector.extract_strided_slice %85 {offsets = [0, 128], sizes = [2, 128], strides = [1, 1]} : vector<2x384xf32> to vector<2x128xf32>
      %95 = vector.extract_strided_slice %84 {offsets = [0, 128], sizes = [2, 128], strides = [1, 1]} : vector<2x384xf32> to vector<2x128xf32>
      %96 = arith.addf %94, %95 : vector<2x128xf32>
      %97 = arith.negf %96 : vector<2x128xf32>
      %98 = math.exp %97 : vector<2x128xf32>
      %cst_39 = arith.constant 1.000000e+00 : f32
      %99 = vector.broadcast %cst_39 : f32 to vector<2x128xf32>
      %100 = arith.addf %99, %98 : vector<2x128xf32>
      %101 = arith.divf %99, %100 : vector<2x128xf32>
      %102 = vector.extract_strided_slice %85 {offsets = [0, 256], sizes = [2, 128], strides = [1, 1]} : vector<2x384xf32> to vector<2x128xf32>
      %103 = vector.extract_strided_slice %84 {offsets = [0, 256], sizes = [2, 128], strides = [1, 1]} : vector<2x384xf32> to vector<2x128xf32>
      %104 = arith.mulf %93, %103 : vector<2x128xf32>
      %105 = arith.addf %102, %104 : vector<2x128xf32>
      %106 = math.tanh %105 : vector<2x128xf32>
      %cst_40 = arith.constant 1.000000e+00 : f32
      %107 = vector.broadcast %cst_40 : f32 to vector<2x128xf32>
      %108 = arith.subf %107, %101 : vector<2x128xf32>
      %109 = arith.mulf %108, %106 : vector<2x128xf32>
      %110 = arith.mulf %101, %arg12 : vector<2x128xf32>
      %111 = arith.addf %109, %110 : vector<2x128xf32>
      %112 = vector.extract_strided_slice %43 {offsets = [2, 0], sizes = [2, 384], strides = [1, 1]} : vector<8x384xbf16> to vector<2x384xbf16>
      %113 = arith.truncf %78 : vector<2x128xf32> to vector<2x128xbf16>
      %c0_41 = arith.constant 0 : index
      %c0_42 = arith.constant 0 : index
      %c0_43 = arith.constant 0 : index
      %114 = vector.load %arg1[%c0_41, %c0_42, %c0_43] : memref<2x128x384xbf16, #tpu.memory_space<vmem>>, vector<1x128x384xbf16>
      %115 = vector.shape_cast %114 : vector<1x128x384xbf16> to vector<128x384xbf16>
      %cst_44 = arith.constant dense<0.000000e+00> : vector<2x384xf32>
      %116 = tpu.matmul %113, %115, %cst_44 {dimension_numbers = #tpu.dot_dimension_numbers<[1], [0], [0], [1], [0, 0, 1, 1], [], []>} : vector<2x128xbf16>, vector<128x384xbf16>, vector<2x384xf32> -> vector<2x384xf32>
      %117 = arith.addf %116, %3 : vector<2x384xf32>
      %118 = arith.extf %112 : vector<2x384xbf16> to vector<2x384xf32>
      %119 = vector.extract_strided_slice %118 {offsets = [0, 0], sizes = [2, 128], strides = [1, 1]} : vector<2x384xf32> to vector<2x128xf32>
      %120 = vector.extract_strided_slice %117 {offsets = [0, 0], sizes = [2, 128], strides = [1, 1]} : vector<2x384xf32> to vector<2x128xf32>
      %121 = arith.addf %119, %120 : vector<2x128xf32>
      %122 = arith.negf %121 : vector<2x128xf32>
      %123 = math.exp %122 : vector<2x128xf32>
      %cst_45 = arith.constant 1.000000e+00 : f32
      %124 = vector.broadcast %cst_45 : f32 to vector<2x128xf32>
      %125 = arith.addf %124, %123 : vector<2x128xf32>
      %126 = arith.divf %124, %125 : vector<2x128xf32>
      %127 = vector.extract_strided_slice %118 {offsets = [0, 128], sizes = [2, 128], strides = [1, 1]} : vector<2x384xf32> to vector<2x128xf32>
      %128 = vector.extract_strided_slice %117 {offsets = [0, 128], sizes = [2, 128], strides = [1, 1]} : vector<2x384xf32> to vector<2x128xf32>
      %129 = arith.addf %127, %128 : vector<2x128xf32>
      %130 = arith.negf %129 : vector<2x128xf32>
      %131 = math.exp %130 : vector<2x128xf32>
      %cst_46 = arith.constant 1.000000e+00 : f32
      %132 = vector.broadcast %cst_46 : f32 to vector<2x128xf32>
      %133 = arith.addf %132, %131 : vector<2x128xf32>
      %134 = arith.divf %132, %133 : vector<2x128xf32>
      %135 = vector.extract_strided_slice %118 {offsets = [0, 256], sizes = [2, 128], strides = [1, 1]} : vector<2x384xf32> to vector<2x128xf32>
      %136 = vector.extract_strided_slice %117 {offsets = [0, 256], sizes = [2, 128], strides = [1, 1]} : vector<2x384xf32> to vector<2x128xf32>
      %137 = arith.mulf %126, %136 : vector<2x128xf32>
      %138 = arith.addf %135, %137 : vector<2x128xf32>
      %139 = math.tanh %138 : vector<2x128xf32>
      %cst_47 = arith.constant 1.000000e+00 : f32
      %140 = vector.broadcast %cst_47 : f32 to vector<2x128xf32>
      %141 = arith.subf %140, %134 : vector<2x128xf32>
      %142 = arith.mulf %141, %139 : vector<2x128xf32>
      %143 = arith.mulf %134, %78 : vector<2x128xf32>
      %144 = arith.addf %142, %143 : vector<2x128xf32>
      %145 = vector.extract_strided_slice %45 {offsets = [4, 0], sizes = [2, 384], strides = [1, 1]} : vector<8x384xbf16> to vector<2x384xbf16>
      %146 = arith.truncf %111 : vector<2x128xf32> to vector<2x128xbf16>
      %c1_48 = arith.constant 1 : index
      %c0_49 = arith.constant 0 : index
      %c0_50 = arith.constant 0 : index
      %147 = vector.load %arg1[%c1_48, %c0_49, %c0_50] : memref<2x128x384xbf16, #tpu.memory_space<vmem>>, vector<1x128x384xbf16>
      %148 = vector.shape_cast %147 : vector<1x128x384xbf16> to vector<128x384xbf16>
      %cst_51 = arith.constant dense<0.000000e+00> : vector<2x384xf32>
      %149 = tpu.matmul %146, %148, %cst_51 {dimension_numbers = #tpu.dot_dimension_numbers<[1], [0], [0], [1], [0, 0, 1, 1], [], []>} : vector<2x128xbf16>, vector<128x384xbf16>, vector<2x384xf32> -> vector<2x384xf32>
      %150 = arith.addf %149, %7 : vector<2x384xf32>
      %151 = arith.extf %145 : vector<2x384xbf16> to vector<2x384xf32>
      %152 = vector.extract_strided_slice %151 {offsets = [0, 0], sizes = [2, 128], strides = [1, 1]} : vector<2x384xf32> to vector<2x128xf32>
      %153 = vector.extract_strided_slice %150 {offsets = [0, 0], sizes = [2, 128], strides = [1, 1]} : vector<2x384xf32> to vector<2x128xf32>
      %154 = arith.addf %152, %153 : vector<2x128xf32>
      %155 = arith.negf %154 : vector<2x128xf32>
      %156 = math.exp %155 : vector<2x128xf32>
      %cst_52 = arith.constant 1.000000e+00 : f32
      %157 = vector.broadcast %cst_52 : f32 to vector<2x128xf32>
      %158 = arith.addf %157, %156 : vector<2x128xf32>
      %159 = arith.divf %157, %158 : vector<2x128xf32>
      %160 = vector.extract_strided_slice %151 {offsets = [0, 128], sizes = [2, 128], strides = [1, 1]} : vector<2x384xf32> to vector<2x128xf32>
      %161 = vector.extract_strided_slice %150 {offsets = [0, 128], sizes = [2, 128], strides = [1, 1]} : vector<2x384xf32> to vector<2x128xf32>
      %162 = arith.addf %160, %161 : vector<2x128xf32>
      %163 = arith.negf %162 : vector<2x128xf32>
      %164 = math.exp %163 : vector<2x128xf32>
      %cst_53 = arith.constant 1.000000e+00 : f32
      %165 = vector.broadcast %cst_53 : f32 to vector<2x128xf32>
      %166 = arith.addf %165, %164 : vector<2x128xf32>
      %167 = arith.divf %165, %166 : vector<2x128xf32>
      %168 = vector.extract_strided_slice %151 {offsets = [0, 256], sizes = [2, 128], strides = [1, 1]} : vector<2x384xf32> to vector<2x128xf32>
      %169 = vector.extract_strided_slice %150 {offsets = [0, 256], sizes = [2, 128], strides = [1, 1]} : vector<2x384xf32> to vector<2x128xf32>
      %170 = arith.mulf %159, %169 : vector<2x128xf32>
      %171 = arith.addf %168, %170 : vector<2x128xf32>
      %172 = math.tanh %171 : vector<2x128xf32>
      %cst_54 = arith.constant 1.000000e+00 : f32
      %173 = vector.broadcast %cst_54 : f32 to vector<2x128xf32>
      %174 = arith.subf %173, %167 : vector<2x128xf32>
      %175 = arith.mulf %174, %172 : vector<2x128xf32>
      %176 = arith.mulf %167, %111 : vector<2x128xf32>
      %177 = arith.addf %175, %176 : vector<2x128xf32>
      %178 = vector.extract_strided_slice %43 {offsets = [4, 0], sizes = [2, 384], strides = [1, 1]} : vector<8x384xbf16> to vector<2x384xbf16>
      %179 = arith.truncf %144 : vector<2x128xf32> to vector<2x128xbf16>
      %c0_55 = arith.constant 0 : index
      %c0_56 = arith.constant 0 : index
      %c0_57 = arith.constant 0 : index
      %180 = vector.load %arg1[%c0_55, %c0_56, %c0_57] : memref<2x128x384xbf16, #tpu.memory_space<vmem>>, vector<1x128x384xbf16>
      %181 = vector.shape_cast %180 : vector<1x128x384xbf16> to vector<128x384xbf16>
      %cst_58 = arith.constant dense<0.000000e+00> : vector<2x384xf32>
      %182 = tpu.matmul %179, %181, %cst_58 {dimension_numbers = #tpu.dot_dimension_numbers<[1], [0], [0], [1], [0, 0, 1, 1], [], []>} : vector<2x128xbf16>, vector<128x384xbf16>, vector<2x384xf32> -> vector<2x384xf32>
      %183 = arith.addf %182, %3 : vector<2x384xf32>
      %184 = arith.extf %178 : vector<2x384xbf16> to vector<2x384xf32>
      %185 = vector.extract_strided_slice %184 {offsets = [0, 0], sizes = [2, 128], strides = [1, 1]} : vector<2x384xf32> to vector<2x128xf32>
      %186 = vector.extract_strided_slice %183 {offsets = [0, 0], sizes = [2, 128], strides = [1, 1]} : vector<2x384xf32> to vector<2x128xf32>
      %187 = arith.addf %185, %186 : vector<2x128xf32>
      %188 = arith.negf %187 : vector<2x128xf32>
      %189 = math.exp %188 : vector<2x128xf32>
      %cst_59 = arith.constant 1.000000e+00 : f32
      %190 = vector.broadcast %cst_59 : f32 to vector<2x128xf32>
      %191 = arith.addf %190, %189 : vector<2x128xf32>
      %192 = arith.divf %190, %191 : vector<2x128xf32>
      %193 = vector.extract_strided_slice %184 {offsets = [0, 128], sizes = [2, 128], strides = [1, 1]} : vector<2x384xf32> to vector<2x128xf32>
      %194 = vector.extract_strided_slice %183 {offsets = [0, 128], sizes = [2, 128], strides = [1, 1]} : vector<2x384xf32> to vector<2x128xf32>
      %195 = arith.addf %193, %194 : vector<2x128xf32>
      %196 = arith.negf %195 : vector<2x128xf32>
      %197 = math.exp %196 : vector<2x128xf32>
      %cst_60 = arith.constant 1.000000e+00 : f32
      %198 = vector.broadcast %cst_60 : f32 to vector<2x128xf32>
      %199 = arith.addf %198, %197 : vector<2x128xf32>
      %200 = arith.divf %198, %199 : vector<2x128xf32>
      %201 = vector.extract_strided_slice %184 {offsets = [0, 256], sizes = [2, 128], strides = [1, 1]} : vector<2x384xf32> to vector<2x128xf32>
      %202 = vector.extract_strided_slice %183 {offsets = [0, 256], sizes = [2, 128], strides = [1, 1]} : vector<2x384xf32> to vector<2x128xf32>
      %203 = arith.mulf %192, %202 : vector<2x128xf32>
      %204 = arith.addf %201, %203 : vector<2x128xf32>
      %205 = math.tanh %204 : vector<2x128xf32>
      %cst_61 = arith.constant 1.000000e+00 : f32
      %206 = vector.broadcast %cst_61 : f32 to vector<2x128xf32>
      %207 = arith.subf %206, %200 : vector<2x128xf32>
      %208 = arith.mulf %207, %205 : vector<2x128xf32>
      %209 = arith.mulf %200, %144 : vector<2x128xf32>
      %210 = arith.addf %208, %209 : vector<2x128xf32>
      %211 = vector.extract_strided_slice %45 {offsets = [2, 0], sizes = [2, 384], strides = [1, 1]} : vector<8x384xbf16> to vector<2x384xbf16>
      %212 = arith.truncf %177 : vector<2x128xf32> to vector<2x128xbf16>
      %c1_62 = arith.constant 1 : index
      %c0_63 = arith.constant 0 : index
      %c0_64 = arith.constant 0 : index
      %213 = vector.load %arg1[%c1_62, %c0_63, %c0_64] : memref<2x128x384xbf16, #tpu.memory_space<vmem>>, vector<1x128x384xbf16>
      %214 = vector.shape_cast %213 : vector<1x128x384xbf16> to vector<128x384xbf16>
      %cst_65 = arith.constant dense<0.000000e+00> : vector<2x384xf32>
      %215 = tpu.matmul %212, %214, %cst_65 {dimension_numbers = #tpu.dot_dimension_numbers<[1], [0], [0], [1], [0, 0, 1, 1], [], []>} : vector<2x128xbf16>, vector<128x384xbf16>, vector<2x384xf32> -> vector<2x384xf32>
      %216 = arith.addf %215, %7 : vector<2x384xf32>
      %217 = arith.extf %211 : vector<2x384xbf16> to vector<2x384xf32>
      %218 = vector.extract_strided_slice %217 {offsets = [0, 0], sizes = [2, 128], strides = [1, 1]} : vector<2x384xf32> to vector<2x128xf32>
      %219 = vector.extract_strided_slice %216 {offsets = [0, 0], sizes = [2, 128], strides = [1, 1]} : vector<2x384xf32> to vector<2x128xf32>
      %220 = arith.addf %218, %219 : vector<2x128xf32>
      %221 = arith.negf %220 : vector<2x128xf32>
      %222 = math.exp %221 : vector<2x128xf32>
      %cst_66 = arith.constant 1.000000e+00 : f32
      %223 = vector.broadcast %cst_66 : f32 to vector<2x128xf32>
      %224 = arith.addf %223, %222 : vector<2x128xf32>
      %225 = arith.divf %223, %224 : vector<2x128xf32>
      %226 = vector.extract_strided_slice %217 {offsets = [0, 128], sizes = [2, 128], strides = [1, 1]} : vector<2x384xf32> to vector<2x128xf32>
      %227 = vector.extract_strided_slice %216 {offsets = [0, 128], sizes = [2, 128], strides = [1, 1]} : vector<2x384xf32> to vector<2x128xf32>
      %228 = arith.addf %226, %227 : vector<2x128xf32>
      %229 = arith.negf %228 : vector<2x128xf32>
      %230 = math.exp %229 : vector<2x128xf32>
      %cst_67 = arith.constant 1.000000e+00 : f32
      %231 = vector.broadcast %cst_67 : f32 to vector<2x128xf32>
      %232 = arith.addf %231, %230 : vector<2x128xf32>
      %233 = arith.divf %231, %232 : vector<2x128xf32>
      %234 = vector.extract_strided_slice %217 {offsets = [0, 256], sizes = [2, 128], strides = [1, 1]} : vector<2x384xf32> to vector<2x128xf32>
      %235 = vector.extract_strided_slice %216 {offsets = [0, 256], sizes = [2, 128], strides = [1, 1]} : vector<2x384xf32> to vector<2x128xf32>
      %236 = arith.mulf %225, %235 : vector<2x128xf32>
      %237 = arith.addf %234, %236 : vector<2x128xf32>
      %238 = math.tanh %237 : vector<2x128xf32>
      %cst_68 = arith.constant 1.000000e+00 : f32
      %239 = vector.broadcast %cst_68 : f32 to vector<2x128xf32>
      %240 = arith.subf %239, %233 : vector<2x128xf32>
      %241 = arith.mulf %240, %238 : vector<2x128xf32>
      %242 = arith.mulf %233, %177 : vector<2x128xf32>
      %243 = arith.addf %241, %242 : vector<2x128xf32>
      %244 = vector.extract_strided_slice %43 {offsets = [6, 0], sizes = [2, 384], strides = [1, 1]} : vector<8x384xbf16> to vector<2x384xbf16>
      %245 = arith.truncf %210 : vector<2x128xf32> to vector<2x128xbf16>
      %c0_69 = arith.constant 0 : index
      %c0_70 = arith.constant 0 : index
      %c0_71 = arith.constant 0 : index
      %246 = vector.load %arg1[%c0_69, %c0_70, %c0_71] : memref<2x128x384xbf16, #tpu.memory_space<vmem>>, vector<1x128x384xbf16>
      %247 = vector.shape_cast %246 : vector<1x128x384xbf16> to vector<128x384xbf16>
      %cst_72 = arith.constant dense<0.000000e+00> : vector<2x384xf32>
      %248 = tpu.matmul %245, %247, %cst_72 {dimension_numbers = #tpu.dot_dimension_numbers<[1], [0], [0], [1], [0, 0, 1, 1], [], []>} : vector<2x128xbf16>, vector<128x384xbf16>, vector<2x384xf32> -> vector<2x384xf32>
      %249 = arith.addf %248, %3 : vector<2x384xf32>
      %250 = arith.extf %244 : vector<2x384xbf16> to vector<2x384xf32>
      %251 = vector.extract_strided_slice %250 {offsets = [0, 0], sizes = [2, 128], strides = [1, 1]} : vector<2x384xf32> to vector<2x128xf32>
      %252 = vector.extract_strided_slice %249 {offsets = [0, 0], sizes = [2, 128], strides = [1, 1]} : vector<2x384xf32> to vector<2x128xf32>
      %253 = arith.addf %251, %252 : vector<2x128xf32>
      %254 = arith.negf %253 : vector<2x128xf32>
      %255 = math.exp %254 : vector<2x128xf32>
      %cst_73 = arith.constant 1.000000e+00 : f32
      %256 = vector.broadcast %cst_73 : f32 to vector<2x128xf32>
      %257 = arith.addf %256, %255 : vector<2x128xf32>
      %258 = arith.divf %256, %257 : vector<2x128xf32>
      %259 = vector.extract_strided_slice %250 {offsets = [0, 128], sizes = [2, 128], strides = [1, 1]} : vector<2x384xf32> to vector<2x128xf32>
      %260 = vector.extract_strided_slice %249 {offsets = [0, 128], sizes = [2, 128], strides = [1, 1]} : vector<2x384xf32> to vector<2x128xf32>
      %261 = arith.addf %259, %260 : vector<2x128xf32>
      %262 = arith.negf %261 : vector<2x128xf32>
      %263 = math.exp %262 : vector<2x128xf32>
      %cst_74 = arith.constant 1.000000e+00 : f32
      %264 = vector.broadcast %cst_74 : f32 to vector<2x128xf32>
      %265 = arith.addf %264, %263 : vector<2x128xf32>
      %266 = arith.divf %264, %265 : vector<2x128xf32>
      %267 = vector.extract_strided_slice %250 {offsets = [0, 256], sizes = [2, 128], strides = [1, 1]} : vector<2x384xf32> to vector<2x128xf32>
      %268 = vector.extract_strided_slice %249 {offsets = [0, 256], sizes = [2, 128], strides = [1, 1]} : vector<2x384xf32> to vector<2x128xf32>
      %269 = arith.mulf %258, %268 : vector<2x128xf32>
      %270 = arith.addf %267, %269 : vector<2x128xf32>
      %271 = math.tanh %270 : vector<2x128xf32>
      %cst_75 = arith.constant 1.000000e+00 : f32
      %272 = vector.broadcast %cst_75 : f32 to vector<2x128xf32>
      %273 = arith.subf %272, %266 : vector<2x128xf32>
      %274 = arith.mulf %273, %271 : vector<2x128xf32>
      %275 = arith.mulf %266, %210 : vector<2x128xf32>
      %276 = arith.addf %274, %275 : vector<2x128xf32>
      %277 = vector.extract_strided_slice %45 {offsets = [0, 0], sizes = [2, 384], strides = [1, 1]} : vector<8x384xbf16> to vector<2x384xbf16>
      %278 = arith.truncf %243 : vector<2x128xf32> to vector<2x128xbf16>
      %c1_76 = arith.constant 1 : index
      %c0_77 = arith.constant 0 : index
      %c0_78 = arith.constant 0 : index
      %279 = vector.load %arg1[%c1_76, %c0_77, %c0_78] : memref<2x128x384xbf16, #tpu.memory_space<vmem>>, vector<1x128x384xbf16>
      %280 = vector.shape_cast %279 : vector<1x128x384xbf16> to vector<128x384xbf16>
      %cst_79 = arith.constant dense<0.000000e+00> : vector<2x384xf32>
      %281 = tpu.matmul %278, %280, %cst_79 {dimension_numbers = #tpu.dot_dimension_numbers<[1], [0], [0], [1], [0, 0, 1, 1], [], []>} : vector<2x128xbf16>, vector<128x384xbf16>, vector<2x384xf32> -> vector<2x384xf32>
      %282 = arith.addf %281, %7 : vector<2x384xf32>
      %283 = arith.extf %277 : vector<2x384xbf16> to vector<2x384xf32>
      %284 = vector.extract_strided_slice %283 {offsets = [0, 0], sizes = [2, 128], strides = [1, 1]} : vector<2x384xf32> to vector<2x128xf32>
      %285 = vector.extract_strided_slice %282 {offsets = [0, 0], sizes = [2, 128], strides = [1, 1]} : vector<2x384xf32> to vector<2x128xf32>
      %286 = arith.addf %284, %285 : vector<2x128xf32>
      %287 = arith.negf %286 : vector<2x128xf32>
      %288 = math.exp %287 : vector<2x128xf32>
      %cst_80 = arith.constant 1.000000e+00 : f32
      %289 = vector.broadcast %cst_80 : f32 to vector<2x128xf32>
      %290 = arith.addf %289, %288 : vector<2x128xf32>
      %291 = arith.divf %289, %290 : vector<2x128xf32>
      %292 = vector.extract_strided_slice %283 {offsets = [0, 128], sizes = [2, 128], strides = [1, 1]} : vector<2x384xf32> to vector<2x128xf32>
      %293 = vector.extract_strided_slice %282 {offsets = [0, 128], sizes = [2, 128], strides = [1, 1]} : vector<2x384xf32> to vector<2x128xf32>
      %294 = arith.addf %292, %293 : vector<2x128xf32>
      %295 = arith.negf %294 : vector<2x128xf32>
      %296 = math.exp %295 : vector<2x128xf32>
      %cst_81 = arith.constant 1.000000e+00 : f32
      %297 = vector.broadcast %cst_81 : f32 to vector<2x128xf32>
      %298 = arith.addf %297, %296 : vector<2x128xf32>
      %299 = arith.divf %297, %298 : vector<2x128xf32>
      %300 = vector.extract_strided_slice %283 {offsets = [0, 256], sizes = [2, 128], strides = [1, 1]} : vector<2x384xf32> to vector<2x128xf32>
      %301 = vector.extract_strided_slice %282 {offsets = [0, 256], sizes = [2, 128], strides = [1, 1]} : vector<2x384xf32> to vector<2x128xf32>
      %302 = arith.mulf %291, %301 : vector<2x128xf32>
      %303 = arith.addf %300, %302 : vector<2x128xf32>
      %304 = math.tanh %303 : vector<2x128xf32>
      %cst_82 = arith.constant 1.000000e+00 : f32
      %305 = vector.broadcast %cst_82 : f32 to vector<2x128xf32>
      %306 = arith.subf %305, %299 : vector<2x128xf32>
      %307 = arith.mulf %306, %304 : vector<2x128xf32>
      %308 = arith.mulf %299, %243 : vector<2x128xf32>
      %309 = arith.addf %307, %308 : vector<2x128xf32>
      scf.yield %276, %309 : vector<2x128xf32>, vector<2x128xf32>
    }
    %c250_i32_4 = arith.constant 250 : i32
    %11 = tpu.concatenate %10#0, %10#1 in 1 : vector<2x128xf32>, vector<2x128xf32> -> vector<2x256xf32>
    %c0_5 = arith.constant 0 : index
    %c0_6 = arith.constant 0 : index
    %12 = vector.load %arg3[%c0_5, %c0_6] : memref<256x64xf32, #tpu.memory_space<vmem>>, vector<256x64xf32>
    %cst_7 = arith.constant dense<0.000000e+00> : vector<2x64xf32>
    %13 = tpu.matmul %11, %12, %cst_7 {dimension_numbers = #tpu.dot_dimension_numbers<[1], [0], [0], [1], [0, 0, 1, 1], [], []>} : vector<2x256xf32>, vector<256x64xf32>, vector<2x64xf32> -> vector<2x64xf32>
    %c0_8 = arith.constant 0 : index
    %c0_9 = arith.constant 0 : index
    %14 = vector.load %arg4[%c0_8, %c0_9] : memref<1x64xf32, #tpu.memory_space<vmem>>, vector<1x64xf32>
    %15 = vector.broadcast %14 : vector<1x64xf32> to vector<2x64xf32>
    %16 = arith.addf %13, %15 : vector<2x64xf32>
    %cst_10 = arith.constant 0.000000e+00 : f32
    %17 = vector.broadcast %cst_10 : f32 to vector<2x64xf32>
    %18 = arith.maximumf %16, %17 : vector<2x64xf32>
    %c0_11 = arith.constant 0 : index
    %c0_12 = arith.constant 0 : index
    %19 = vector.load %arg5[%c0_11, %c0_12] : memref<64x32xf32, #tpu.memory_space<vmem>>, vector<64x32xf32>
    %cst_13 = arith.constant dense<0.000000e+00> : vector<2x32xf32>
    %20 = tpu.matmul %18, %19, %cst_13 {dimension_numbers = #tpu.dot_dimension_numbers<[1], [0], [0], [1], [0, 0, 1, 1], [], []>} : vector<2x64xf32>, vector<64x32xf32>, vector<2x32xf32> -> vector<2x32xf32>
    %c0_14 = arith.constant 0 : index
    %c0_15 = arith.constant 0 : index
    %21 = vector.load %arg6[%c0_14, %c0_15] : memref<1x32xf32, #tpu.memory_space<vmem>>, vector<1x32xf32>
    %22 = vector.broadcast %21 : vector<1x32xf32> to vector<2x32xf32>
    %23 = arith.addf %20, %22 : vector<2x32xf32>
    %cst_16 = arith.constant 0.000000e+00 : f32
    %24 = vector.broadcast %cst_16 : f32 to vector<2x32xf32>
    %25 = arith.maximumf %23, %24 : vector<2x32xf32>
    %c0_17 = arith.constant 0 : index
    %c0_18 = arith.constant 0 : index
    %26 = vector.load %arg7[%c0_17, %c0_18] : memref<32x1xf32, #tpu.memory_space<vmem>>, vector<32x1xf32>
    %cst_19 = arith.constant dense<0.000000e+00> : vector<2x1xf32>
    %27 = tpu.matmul %25, %26, %cst_19 {dimension_numbers = #tpu.dot_dimension_numbers<[1], [0], [0], [1], [0, 0, 1, 1], [], []>} : vector<2x32xf32>, vector<32x1xf32>, vector<2x1xf32> -> vector<2x1xf32>
    %c0_20 = arith.constant 0 : index
    %c0_21 = arith.constant 0 : index
    %28 = vector.load %arg8[%c0_20, %c0_21] : memref<1x1xf32, #tpu.memory_space<vmem>>, vector<1x1xf32>
    %29 = vector.broadcast %28 : vector<1x1xf32> to vector<2x1xf32>
    %30 = arith.addf %27, %29 : vector<2x1xf32>
    %31 = arith.negf %30 : vector<2x1xf32>
    %32 = math.exp %31 : vector<2x1xf32>
    %cst_22 = arith.constant 1.000000e+00 : f32
    %33 = vector.broadcast %cst_22 : f32 to vector<2x1xf32>
    %34 = arith.addf %33, %32 : vector<2x1xf32>
    %35 = arith.divf %33, %34 : vector<2x1xf32>
    %c0_23 = arith.constant 0 : index
    %c0_24 = arith.constant 0 : index
    %36 = vector.load %arg9[%c0_23, %c0_24] : memref<2x1xf32, #tpu.memory_space<vmem>>, vector<2x1xf32>
    tpu.vector_store %arg9[%c0_23, %c0_24], %35 {strides = array<i32>} : memref<2x1xf32, #tpu.memory_space<vmem>>, vector<2x1xf32>,
    return
  }
}

</mosaic_0001>

<llo_original>
// kernel: net_forward.3
$region0: #{net_forward.3}
  #allocation0 [shape = 'u32[]', space=smem, size = 0x4, offset = 0x4, fixed_abs, tag = 'smem constant byte address 0x4 - core index']
  #allocation1 [shape = 'u32[72,128]{1,0:T(1,128)}', space=vmem, size = 0x9000, scoped, tag = 'internal scratch']
  #allocation2 [shape = 'f32[1,1]{1,0:T(1,128)S(1)}', space=vmem, size = 0x200, scoped, tag = 'scoped memory for net_forward.3']
  %s0 = inlined_call_operand.vmem [shape: bf16[2000,768], index: 0, kind: input, shape index: {}]
  %s1 = inlined_call_operand.vmem [shape: bf16[2,128,384], index: 1, kind: input, shape index: {}]
  %s2 = inlined_call_operand.vmem [shape: f32[2,1,384], index: 2, kind: input, shape index: {}]
  %s3 = inlined_call_operand.vmem [shape: f32[256,64], index: 3, kind: input, shape index: {}]
  %s4 = inlined_call_operand.vmem [shape: f32[1,64], index: 4, kind: input, shape index: {}]
  %s5 = inlined_call_operand.vmem [shape: f32[64,32], index: 5, kind: input, shape index: {}]
  %s6 = inlined_call_operand.vmem [shape: f32[1,32], index: 6, kind: input, shape index: {}]
  %s7 = inlined_call_operand.vmem [shape: f32[32,1], index: 7, kind: input, shape index: {}]
  %s8 = inlined_call_operand.<no memory space> [shape: f32[1,1], index: 8, kind: input, shape index: {}]
  %s9 = inlined_call_operand.vmem [shape: f32[2,1], index: 9, kind: output, shape index: {}]
  %s10 = sld [smem:[#allocation0]]
  $region53: #{net_forward.3} parent=0
    _
  %s12 = ssub.s32 1, %s10
  %s13 = scalar_select 0, %s12, %s10
  %v14 = vstv %s8
  %15 = vst [vmem:[#allocation2] sm:$0x1] %v14
  // Predicated region
  $region2: #{net_forward.3} parent=0 // pred_check
    _
  $region3: #{net_forward.3} parent=0 // pred_check_branch
    %17 = sbr.rel (0) target = $region5
  $region4: #{net_forward.3} parent=0 // pred_region
    _
  $region5: #{net_forward.3} parent=0 // pred_fallthru
    _
  // Predicated region
  $region6: #{net_forward.3} parent=0 // pred_check
    _
  $region7: #{net_forward.3} parent=0 // pred_check_branch
    %19 = sbr.rel (0) target = $region9
  $region8: #{net_forward.3} parent=0 // pred_region
    _
  $region9: #{net_forward.3} parent=0 // pred_fallthru
    _
  // Predicated region
  $region10: #{net_forward.3} parent=0 // pred_check
    _
  $region11: #{net_forward.3} parent=0 // pred_check_branch
    %21 = sbr.rel (0) target = $region13
  $region12: #{net_forward.3} parent=0 // pred_region
    _
  $region13: #{net_forward.3} parent=0 // pred_fallthru
    _
  // Predicated region
  $region14: #{net_forward.3} parent=0 // pred_check
    _
  $region15: #{net_forward.3} parent=0 // pred_check_branch
    %23 = sbr.rel (0) target = $region17
  $region16: #{net_forward.3} parent=0 // pred_region
    _
  $region17: #{net_forward.3} parent=0 // pred_fallthru
    _
  // Predicated region
  $region18: #{net_forward.3} parent=0 // pred_check
    _
  $region19: #{net_forward.3} parent=0 // pred_check_branch
    %25 = sbr.rel (0) target = $region21
  $region20: #{net_forward.3} parent=0 // pred_region
    _
  $region21: #{net_forward.3} parent=0 // pred_fallthru
    _
  // Predicated region
  $region22: #{net_forward.3} parent=0 // pred_check
    _
  $region23: #{net_forward.3} parent=0 // pred_check_branch
    %27 = sbr.rel (0) target = $region25
  $region24: #{net_forward.3} parent=0 // pred_region
    _
  $region25: #{net_forward.3} parent=0 // pred_fallthru
    _
  // Predicated region
  $region26: #{net_forward.3} parent=0 // pred_check
    _
  $region27: #{net_forward.3} parent=0 // pred_check_branch
    %29 = sbr.rel (0) target = $region29
  $region28: #{net_forward.3} parent=0 // pred_region
    _
  $region29: #{net_forward.3} parent=0 // pred_fallthru
    _
  // Predicated region
  $region30: #{net_forward.3} parent=0 // pred_check
    _
  $region31: #{net_forward.3} parent=0 // pred_check_branch
    %31 = sbr.rel (0) target = $region33
  $region32: #{net_forward.3} parent=0 // pred_region
    _
  $region33: #{net_forward.3} parent=0 // pred_fallthru
    _
  // Predicated region
  $region34: #{net_forward.3} parent=0 // pred_check
    _
  $region35: #{net_forward.3} parent=0 // pred_check_branch
    %33 = sbr.rel (0) target = $region37
  $region36: #{net_forward.3} parent=0 // pred_region
    _
  $region37: #{net_forward.3} parent=0 // pred_fallthru
    _
  %v34 = vld [vmem:[%s2] sm:$0x7]
  %v36 = vperm.slane %v34, 0
  %v37 = vperm.slane %v34, 1
  %v38 = vperm.slane %v34, 2
  %s42 = scalar_lea.vmem %s2, 3
  %v43 = vld [vmem:[%s42] sm:$0x7]
  %v45 = vperm.slane %v43, 0
  %v46 = vperm.slane %v43, 1
  %v47 = vperm.slane %v43, 2
  loop: start=0, step=1, limit=250
  $region38: #{net_forward.3} parent=0 // loop_pre_header
    _
  $region39: #{net_forward.3} parent=0 // loop_header
    %s52 = sphi 0, %s56
    %p53 = scmp.ge.s32.totalorder %s52, 250
    %v57 = vphi 0.0, %v1100
    %v58 = vphi 0.0, %v1193
  $region40: #{net_forward.3} parent=0 // loop_header_branch
    %55 = sbr.rel (%p53) target = $region44
  $region41: #{net_forward.3} parent=0 // loop_body
    %s59 = smul.u32 %s52, 8
    %s60 = ssub.s32 1992, %s59
    %s61 = sshra.s32 %s59, 3
    %s62 = sand.u32 %s59, 7
    %s63 = smul.u32 %s61, 6
    %s64 = smul.addr %s63, 4
    %s65 = scalar_lea.vmem %s0, %s64
    %v66 = vld [vmem:[%s65] sm:$0xff]
    %v67 = vld [vmem:[%s65 + $0x8] sm:$0xf]
    %s68 = sshra.s32 %s60, 3
    %s69 = sand.u32 %s60, 7
    %s70 = smul.u32 %s68, 6
    %s71 = smul.addr %s70, 4
    %s72 = scalar_lea.vmem %s0, %s71
    %v73 = vld [vmem:[%s72 + $0xc] sm:$0xff]
    %v74 = vld [vmem:[%s72 + $0x14] sm:$0xf]
    %v75 = vpack.c.bf16 %v57, %v57
    %v76 = vld [vmem:[%s1] sm:$0xff]
    %v77 = vld [vmem:[%s1 + $0x8] sm:$0xf]
    %v78 = vld [vmem:[%s1 + $0xc] sm:$0xff]
    %v79 = vld [vmem:[%s1 + $0x14] sm:$0xf]
    %v80 = vld [vmem:[%s1 + $0x18] sm:$0xff]
    %v81 = vld [vmem:[%s1 + $0x20] sm:$0xf]
    %v82 = vld [vmem:[%s1 + $0x24] sm:$0xff]
    %v83 = vld [vmem:[%s1 + $0x2c] sm:$0xf]
    %v84 = vld [vmem:[%s1 + $0x30] sm:$0xff]
    %v85 = vld [vmem:[%s1 + $0x38] sm:$0xf]
    %v86 = vld [vmem:[%s1 + $0x3c] sm:$0xff]
    %v87 = vld [vmem:[%s1 + $0x44] sm:$0xf]
    %v88 = vld [vmem:[%s1 + $0x48] sm:$0xff]
    %v89 = vld [vmem:[%s1 + $0x50] sm:$0xf]
    %v90 = vld [vmem:[%s1 + $0x54] sm:$0xff]
    %v91 = vld [vmem:[%s1 + $0x5c] sm:$0xf]
    %v92 = vld [vmem:[%s1 + $0x60] sm:$0xff]
    %v93 = vld [vmem:[%s1 + $0x68] sm:$0xf]
    %v94 = vld [vmem:[%s1 + $0x6c] sm:$0xff]
    %v95 = vld [vmem:[%s1 + $0x74] sm:$0xf]
    %v96 = vld [vmem:[%s1 + $0x78] sm:$0xff]
    %v97 = vld [vmem:[%s1 + $0x80] sm:$0xf]
    %v98 = vld [vmem:[%s1 + $0x84] sm:$0xff]
    %v99 = vld [vmem:[%s1 + $0x8c] sm:$0xf]
    %v100 = vld [vmem:[%s1 + $0x90] sm:$0xff]
    %v101 = vld [vmem:[%s1 + $0x98] sm:$0xf]
    %v102 = vld [vmem:[%s1 + $0x9c] sm:$0xff]
    %v103 = vld [vmem:[%s1 + $0xa4] sm:$0xf]
    %v104 = vld [vmem:[%s1 + $0xa8] sm:$0xff]
    %v105 = vld [vmem:[%s1 + $0xb0] sm:$0xf]
    %v106 = vld [vmem:[%s1 + $0xb4] sm:$0xff]
    %v107 = vld [vmem:[%s1 + $0xbc] sm:$0xf]
    %v109 = vrot.slane %v75, 3
    %v143 = vunpack.c.l.b16 %v76
    %v144 = vunpack.c.h.b16 %v76
    %v145 = vunpack.c.l.b16 %v77
    %v146 = vunpack.c.l.b16 %v78
    %v147 = vunpack.c.h.b16 %v78
    %v148 = vunpack.c.l.b16 %v79
    %v149 = vunpack.c.l.b16 %v80
    %v150 = vunpack.c.h.b16 %v80
    %v151 = vunpack.c.l.b16 %v81
    %v152 = vunpack.c.l.b16 %v82
    %v153 = vunpack.c.h.b16 %v82
    %v154 = vunpack.c.l.b16 %v83
    %v155 = vunpack.c.l.b16 %v84
    %v156 = vunpack.c.h.b16 %v84
    %v157 = vunpack.c.l.b16 %v85
    %v158 = vunpack.c.l.b16 %v86
    %v159 = vunpack.c.h.b16 %v86
    %v160 = vunpack.c.l.b16 %v87
    %v161 = vunpack.c.l.b16 %v88
    %v162 = vunpack.c.h.b16 %v88
    %v163 = vunpack.c.l.b16 %v89
    %v164 = vunpack.c.l.b16 %v90
    %v165 = vunpack.c.h.b16 %v90
    %v166 = vunpack.c.l.b16 %v91
    %v167 = vunpack.c.l.b16 %v92
    %v168 = vunpack.c.h.b16 %v92
    %v169 = vunpack.c.l.b16 %v93
    %v170 = vunpack.c.l.b16 %v94
    %v171 = vunpack.c.h.b16 %v94
    %v172 = vunpack.c.l.b16 %v95
    %v173 = vunpack.c.l.b16 %v96
    %v174 = vunpack.c.h.b16 %v96
    %v175 = vunpack.c.l.b16 %v97
    %v176 = vunpack.c.l.b16 %v98
    %v177 = vunpack.c.h.b16 %v98
    %v178 = vunpack.c.l.b16 %v99
    %v179 = vunpack.c.l.b16 %v100
    %v180 = vunpack.c.h.b16 %v100
    %v181 = vunpack.c.l.b16 %v101
    %v182 = vunpack.c.l.b16 %v102
    %v183 = vunpack.c.h.b16 %v102
    %v184 = vunpack.c.l.b16 %v103
    %v185 = vunpack.c.l.b16 %v104
    %v186 = vunpack.c.h.b16 %v104
    %v187 = vunpack.c.l.b16 %v105
    %v188 = vunpack.c.l.b16 %v106
    %v189 = vunpack.c.h.b16 %v106
    %v190 = vunpack.c.l.b16 %v107
    %v191 = vpack.c.b16 %v146, %v143
    %v192 = vpack.c.b16 %v147, %v144
    %v193 = vpack.c.b16 %v148, %v145
    %v194 = vpack.c.b16 %v152, %v149
    %v195 = vpack.c.b16 %v153, %v150
    %v196 = vpack.c.b16 %v154, %v151
    %v197 = vpack.c.b16 %v158, %v155
    %v198 = vpack.c.b16 %v159, %v156
    %v199 = vpack.c.b16 %v160, %v157
    %v200 = vpack.c.b16 %v164, %v161
    %v201 = vpack.c.b16 %v165, %v162
    %v202 = vpack.c.b16 %v166, %v163
    %v203 = vpack.c.b16 %v170, %v167
    %v204 = vpack.c.b16 %v171, %v168
    %v205 = vpack.c.b16 %v172, %v169
    %v206 = vpack.c.b16 %v176, %v173
    %v207 = vpack.c.b16 %v177, %v174
    %v208 = vpack.c.b16 %v178, %v175
    %v209 = vpack.c.b16 %v182, %v179
    %v210 = vpack.c.b16 %v183, %v180
    %v211 = vpack.c.b16 %v184, %v181
    %v212 = vpack.c.b16 %v188, %v185
    %v213 = vpack.c.b16 %v189, %v186
    %v214 = vpack.c.b16 %v190, %v187
    %239 = vmatpush.bf16.msra.mxu0 %v212
    %240 = vmatpush.bf16.msra.mxu0 %v209
    %241 = vmatpush.bf16.msra.mxu0 %v206
    %242 = vmatpush.bf16.msra.mxu0 %v203
    %243 = vmatpush.bf16.msra.mxu0 %v200
    %244 = vmatpush.bf16.msra.mxu0 %v197
    %245 = vmatpush.bf16.msra.mxu0 %v194
    %246 = vmatpush.bf16.msra.mxu0 %v191
    %247 = vmatmul.bf16.gmra.mxu0 %v109
    %v248 = vpop.f32.mrf.mxu0
    %v249 = vadd.f32 %v36, %v248
    %v250 = vpop.f32.mrf.mxu0
    %251 = vdwg.mxu0
    %252 = vmatpush.bf16.msra.mxu0 %v213
    %253 = vmatpush.bf16.msra.mxu0 %v210
    %254 = vmatpush.bf16.msra.mxu0 %v207
    %255 = vmatpush.bf16.msra.mxu0 %v204
    %256 = vmatpush.bf16.msra.mxu0 %v201
    %257 = vmatpush.bf16.msra.mxu0 %v198
    %258 = vmatpush.bf16.msra.mxu0 %v195
    %259 = vmatpush.bf16.msra.mxu0 %v192
    %260 = vmatmul.bf16.gmra.mxu0 %v109
    %v261 = vpop.f32.mrf.mxu0
    %v262 = vadd.f32 %v37, %v261
    %v263 = vpop.f32.mrf.mxu0
    %264 = vdwg.mxu0
    %265 = vmatpush.bf16.msra.mxu0 %v214
    %266 = vmatpush.bf16.msra.mxu0 %v211
    %267 = vmatpush.bf16.msra.mxu0 %v208
    %268 = vmatpush.bf16.msra.mxu0 %v205
    %269 = vmatpush.bf16.msra.mxu0 %v202
    %270 = vmatpush.bf16.msra.mxu0 %v199
    %271 = vmatpush.bf16.msra.mxu0 %v196
    %272 = vmatpush.bf16.msra.mxu0 %v193
    %273 = vmatmul.bf16.gmra.mxu0 %v109
    %v274 = vpop.f32.mrf.mxu0
    %v275 = vadd.f32 %v38, %v274
    %v276 = vpop.f32.mrf.mxu0
    %277 = vdwg.mxu0
    %v278 = vunpack.c.l.bf16 %v66
    %v279 = vunpack.c.h.bf16 %v66
    %v280 = vunpack.c.l.bf16 %v67
    %v281 = vadd.f32 %v278, %v249
    %v282 = vxor.u32 %v281, 2147483648
    %v283 = vmul.f32 %v282, 1.442695
    %v284 = vpow.pop %v283
    %v285 = vadd.f32 %v284, 1.0
    %v286 = vrcp.pop %v285
    %v287 = vmul.f32 %v285, %v286
    %v288 = vsub.f32 1.0, %v287
    %v289 = vmul.f32 %v286, %v288
    %v290 = vadd.f32 %v286, %v289
    %vm291 = vweird.f32 %v285
    %vm292 = vweird.f32 %v286
    %vm293 = vmor %vm291, %vm292
    %v294 = vsel %vm293, %v286, %v290
    %v295 = vand.u32 2147483647, %v285
    %vm296 = vcmp.eq.f32.partialorder %v295, 8.507059e+37
    %v297 = vand.u32 %v285, 2147483648
    %v298 = vor.u32 1.1754944e-38, %v297
    %v299 = vsel %vm296, %v298, %v294
    %v300 = vmul.f32 1.0, %v299
    %v301 = vadd.f32 %v279, %v262
    %v302 = vxor.u32 %v301, 2147483648
    %v303 = vmul.f32 %v302, 1.442695
    %v304 = vpow.pop %v303
    %v305 = vadd.f32 %v304, 1.0
    %v306 = vrcp.pop %v305
    %v307 = vmul.f32 %v305, %v306
    %v308 = vsub.f32 1.0, %v307
    %v309 = vmul.f32 %v306, %v308
    %v310 = vadd.f32 %v306, %v309
    %vm311 = vweird.f32 %v305
    %vm312 = vweird.f32 %v306
    %vm313 = vmor %vm311, %vm312
    %v314 = vsel %vm313, %v306, %v310
    %v315 = vand.u32 2147483647, %v305
    %vm316 = vcmp.eq.f32.partialorder %v315, 8.507059e+37
    %v317 = vand.u32 %v305, 2147483648
    %v318 = vor.u32 1.1754944e-38, %v317
    %v319 = vsel %vm316, %v318, %v314
    %v320 = vmul.f32 1.0, %v319
    %v321 = vmul.f32 %v300, %v275
    %v322 = vadd.f32 %v280, %v321
    %v323 = vtanh.pop %v322
    %v324 = vsub.f32 1.0, %v320
    %v325 = vmul.f32 %v324, %v323
    %v327 = vrot.slane %v57, 6
    %v329 = vmul.f32 %v320, %v327
    %v330 = vadd.f32 %v325, %v329
    %v331 = vpack.c.bf16 %v58, %v58
    %s332 = scalar_lea.vmem %s1, 192
    %v333 = vld [vmem:[%s332] sm:$0xff]
    %v334 = vld [vmem:[%s332 + $0x8] sm:$0xf]
    %v335 = vld [vmem:[%s332 + $0xc] sm:$0xff]
    %v336 = vld [vmem:[%s332 + $0x14] sm:$0xf]
    %v337 = vld [vmem:[%s332 + $0x18] sm:$0xff]
    %v338 = vld [vmem:[%s332 + $0x20] sm:$0xf]
    %v339 = vld [vmem:[%s332 + $0x24] sm:$0xff]
    %v340 = vld [vmem:[%s332 + $0x2c] sm:$0xf]
    %v341 = vld [vmem:[%s332 + $0x30] sm:$0xff]
    %v342 = vld [vmem:[%s332 + $0x38] sm:$0xf]
    %v343 = vld [vmem:[%s332 + $0x3c] sm:$0xff]
    %v344 = vld [vmem:[%s332 + $0x44] sm:$0xf]
    %v345 = vld [vmem:[%s332 + $0x48] sm:$0xff]
    %v346 = vld [vmem:[%s332 + $0x50] sm:$0xf]
    %v347 = vld [vmem:[%s332 + $0x54] sm:$0xff]
    %v348 = vld [vmem:[%s332 + $0x5c] sm:$0xf]
    %v349 = vld [vmem:[%s332 + $0x60] sm:$0xff]
    %v350 = vld [vmem:[%s332 + $0x68] sm:$0xf]
    %v351 = vld [vmem:[%s332 + $0x6c] sm:$0xff]
    %v352 = vld [vmem:[%s332 + $0x74] sm:$0xf]
    %v353 = vld [vmem:[%s332 + $0x78] sm:$0xff]
    %v354 = vld [vmem:[%s332 + $0x80] sm:$0xf]
    %v355 = vld [vmem:[%s332 + $0x84] sm:$0xff]
    %v356 = vld [vmem:[%s332 + $0x8c] sm:$0xf]
    %v357 = vld [vmem:[%s332 + $0x90] sm:$0xff]
    %v358 = vld [vmem:[%s332 + $0x98] sm:$0xf]
    %v359 = vld [vmem:[%s332 + $0x9c] sm:$0xff]
    %v360 = vld [vmem:[%s332 + $0xa4] sm:$0xf]
    %v361 = vld [vmem:[%s332 + $0xa8] sm:$0xff]
    %v362 = vld [vmem:[%s332 + $0xb0] sm:$0xf]
    %v363 = vld [vmem:[%s332 + $0xb4] sm:$0xff]
    %v364 = vld [vmem:[%s332 + $0xbc] sm:$0xf]
    %v397 = vunpack.c.l.b16 %v333
    %v398 = vunpack.c.h.b16 %v333
    %v399 = vunpack.c.l.b16 %v334
    %v400 = vunpack.c.l.b16 %v335
    %v401 = vunpack.c.h.b16 %v335
    %v402 = vunpack.c.l.b16 %v336
    %v403 = vunpack.c.l.b16 %v337
    %v404 = vunpack.c.h.b16 %v337
    %v405 = vunpack.c.l.b16 %v338
    %v406 = vunpack.c.l.b16 %v339
    %v407 = vunpack.c.h.b16 %v339
    %v408 = vunpack.c.l.b16 %v340
    %v409 = vunpack.c.l.b16 %v341
    %v410 = vunpack.c.h.b16 %v341
    %v411 = vunpack.c.l.b16 %v342
    %v412 = vunpack.c.l.b16 %v343
    %v413 = vunpack.c.h.b16 %v343
    %v414 = vunpack.c.l.b16 %v344
    %v415 = vunpack.c.l.b16 %v345
    %v416 = vunpack.c.h.b16 %v345
    %v417 = vunpack.c.l.b16 %v346
    %v418 = vunpack.c.l.b16 %v347
    %v419 = vunpack.c.h.b16 %v347
    %v420 = vunpack.c.l.b16 %v348
    %v421 = vunpack.c.l.b16 %v349
    %v422 = vunpack.c.h.b16 %v349
    %v423 = vunpack.c.l.b16 %v350
    %v424 = vunpack.c.l.b16 %v351
    %v425 = vunpack.c.h.b16 %v351
    %v426 = vunpack.c.l.b16 %v352
    %v427 = vunpack.c.l.b16 %v353
    %v428 = vunpack.c.h.b16 %v353
    %v429 = vunpack.c.l.b16 %v354
    %v430 = vunpack.c.l.b16 %v355
    %v431 = vunpack.c.h.b16 %v355
    %v432 = vunpack.c.l.b16 %v356
    %v433 = vunpack.c.l.b16 %v357
    %v434 = vunpack.c.h.b16 %v357
    %v435 = vunpack.c.l.b16 %v358
    %v436 = vunpack.c.l.b16 %v359
    %v437 = vunpack.c.h.b16 %v359
    %v438 = vunpack.c.l.b16 %v360
    %v439 = vunpack.c.l.b16 %v361
    %v440 = vunpack.c.h.b16 %v361
    %v441 = vunpack.c.l.b16 %v362
    %v442 = vunpack.c.l.b16 %v363
    %v443 = vunpack.c.h.b16 %v363
    %v444 = vunpack.c.l.b16 %v364
    %v445 = vpack.c.b16 %v400, %v397
    %v446 = vpack.c.b16 %v401, %v398
    %v447 = vpack.c.b16 %v402, %v399
    %v448 = vpack.c.b16 %v406, %v403
    %v449 = vpack.c.b16 %v407, %v404
    %v450 = vpack.c.b16 %v408, %v405
    %v451 = vpack.c.b16 %v412, %v409
    %v452 = vpack.c.b16 %v413, %v410
    %v453 = vpack.c.b16 %v414, %v411
    %v454 = vpack.c.b16 %v418, %v415
    %v455 = vpack.c.b16 %v419, %v416
    %v456 = vpack.c.b16 %v420, %v417
    %v457 = vpack.c.b16 %v424, %v421
    %v458 = vpack.c.b16 %v425, %v422
    %v459 = vpack.c.b16 %v426, %v423
    %v460 = vpack.c.b16 %v430, %v427
    %v461 = vpack.c.b16 %v431, %v428
    %v462 = vpack.c.b16 %v432, %v429
    %v463 = vpack.c.b16 %v436, %v433
    %v464 = vpack.c.b16 %v437, %v434
    %v465 = vpack.c.b16 %v438, %v435
    %v466 = vpack.c.b16 %v442, %v439
    %v467 = vpack.c.b16 %v443, %v440
    %v468 = vpack.c.b16 %v444, %v441
    %493 = vmatpush.bf16.msra.mxu0 %v466
    %494 = vmatpush.bf16.msra.mxu0 %v463
    %495 = vmatpush.bf16.msra.mxu0 %v460
    %496 = vmatpush.bf16.msra.mxu0 %v457
    %497 = vmatpush.bf16.msra.mxu0 %v454
    %498 = vmatpush.bf16.msra.mxu0 %v451
    %499 = vmatpush.bf16.msra.mxu0 %v448
    %500 = vmatpush.bf16.msra.mxu0 %v445
    %501 = vmatmul.bf16.gmra.mxu0 %v331
    %v502 = vpop.f32.mrf.mxu0
    %v503 = vadd.f32 %v45, %v502
    %v504 = vpop.f32.mrf.mxu0
    %505 = vdwg.mxu0
    %506 = vmatpush.bf16.msra.mxu0 %v467
    %507 = vmatpush.bf16.msra.mxu0 %v464
    %508 = vmatpush.bf16.msra.mxu0 %v461
    %509 = vmatpush.bf16.msra.mxu0 %v458
    %510 = vmatpush.bf16.msra.mxu0 %v455
    %511 = vmatpush.bf16.msra.mxu0 %v452
    %512 = vmatpush.bf16.msra.mxu0 %v449
    %513 = vmatpush.bf16.msra.mxu0 %v446
    %514 = vmatmul.bf16.gmra.mxu0 %v331
    %v515 = vpop.f32.mrf.mxu0
    %v516 = vadd.f32 %v46, %v515
    %v517 = vpop.f32.mrf.mxu0
    %518 = vdwg.mxu0
    %519 = vmatpush.bf16.msra.mxu0 %v468
    %520 = vmatpush.bf16.msra.mxu0 %v465
    %521 = vmatpush.bf16.msra.mxu0 %v462
    %522 = vmatpush.bf16.msra.mxu0 %v459
    %523 = vmatpush.bf16.msra.mxu0 %v456
    %524 = vmatpush.bf16.msra.mxu0 %v453
    %525 = vmatpush.bf16.msra.mxu0 %v450
    %526 = vmatpush.bf16.msra.mxu0 %v447
    %527 = vmatmul.bf16.gmra.mxu0 %v331
    %v528 = vpop.f32.mrf.mxu0
    %v529 = vadd.f32 %v47, %v528
    %v530 = vpop.f32.mrf.mxu0
    %531 = vdwg.mxu0
    %v532 = vunpack.c.l.bf16 %v73
    %v533 = vunpack.c.h.bf16 %v73
    %v534 = vunpack.c.l.bf16 %v74
    %v536 = vrot.slane %v503, 2
    %v538 = vadd.f32 %v532, %v536
    %v539 = vxor.u32 %v538, 2147483648
    %v540 = vmul.f32 %v539, 1.442695
    %v541 = vpow.pop %v540
    %v542 = vadd.f32 %v541, 1.0
    %v543 = vrcp.pop %v542
    %v544 = vmul.f32 %v542, %v543
    %v545 = vsub.f32 1.0, %v544
    %v546 = vmul.f32 %v543, %v545
    %v547 = vadd.f32 %v543, %v546
    %vm548 = vweird.f32 %v542
    %vm549 = vweird.f32 %v543
    %vm550 = vmor %vm548, %vm549
    %v551 = vsel %vm550, %v543, %v547
    %v552 = vand.u32 2147483647, %v542
    %vm553 = vcmp.eq.f32.partialorder %v552, 8.507059e+37
    %v554 = vand.u32 %v542, 2147483648
    %v555 = vor.u32 1.1754944e-38, %v554
    %v556 = vsel %vm553, %v555, %v551
    %v557 = vmul.f32 1.0, %v556
    %v559 = vrot.slane %v516, 2
    %v561 = vadd.f32 %v533, %v559
    %v562 = vxor.u32 %v561, 2147483648
    %v563 = vmul.f32 %v562, 1.442695
    %v564 = vpow.pop %v563
    %v565 = vadd.f32 %v564, 1.0
    %v566 = vrcp.pop %v565
    %v567 = vmul.f32 %v565, %v566
    %v568 = vsub.f32 1.0, %v567
    %v569 = vmul.f32 %v566, %v568
    %v570 = vadd.f32 %v566, %v569
    %vm571 = vweird.f32 %v565
    %vm572 = vweird.f32 %v566
    %vm573 = vmor %vm571, %vm572
    %v574 = vsel %vm573, %v566, %v570
    %v575 = vand.u32 2147483647, %v565
    %vm576 = vcmp.eq.f32.partialorder %v575, 8.507059e+37
    %v577 = vand.u32 %v565, 2147483648
    %v578 = vor.u32 1.1754944e-38, %v577
    %v579 = vsel %vm576, %v578, %v574
    %v580 = vmul.f32 1.0, %v579
    %v582 = vrot.slane %v529, 2
    %v584 = vmul.f32 %v557, %v582
    %v585 = vadd.f32 %v534, %v584
    %v586 = vtanh.pop %v585
    %v587 = vsub.f32 1.0, %v580
    %v588 = vmul.f32 %v587, %v586
    %v590 = vrot.slane %v58, 2
    %v592 = vmul.f32 %v580, %v590
    %v593 = vadd.f32 %v588, %v592
    %v594 = vpack.c.bf16 %v330, %v330
    %595 = vmatpush.bf16.msra.mxu0 %v212
    %596 = vmatpush.bf16.msra.mxu0 %v209
    %597 = vmatpush.bf16.msra.mxu0 %v206
    %598 = vmatpush.bf16.msra.mxu0 %v203
    %599 = vmatpush.bf16.msra.mxu0 %v200
    %600 = vmatpush.bf16.msra.mxu0 %v197
    %601 = vmatpush.bf16.msra.mxu0 %v194
    %602 = vmatpush.bf16.msra.mxu0 %v191
    %603 = vmatmul.bf16.gmra.mxu0 %v594
    %v604 = vpop.f32.mrf.mxu0
    %v605 = vadd.f32 %v36, %v604
    %v606 = vpop.f32.mrf.mxu0
    %607 = vdwg.mxu0
    %608 = vmatpush.bf16.msra.mxu0 %v213
    %609 = vmatpush.bf16.msra.mxu0 %v210
    %610 = vmatpush.bf16.msra.mxu0 %v207
    %611 = vmatpush.bf16.msra.mxu0 %v204
    %612 = vmatpush.bf16.msra.mxu0 %v201
    %613 = vmatpush.bf16.msra.mxu0 %v198
    %614 = vmatpush.bf16.msra.mxu0 %v195
    %615 = vmatpush.bf16.msra.mxu0 %v192
    %616 = vmatmul.bf16.gmra.mxu0 %v594
    %v617 = vpop.f32.mrf.mxu0
    %v618 = vadd.f32 %v37, %v617
    %v619 = vpop.f32.mrf.mxu0
    %620 = vdwg.mxu0
    %621 = vmatpush.bf16.msra.mxu0 %v214
    %622 = vmatpush.bf16.msra.mxu0 %v211
    %623 = vmatpush.bf16.msra.mxu0 %v208
    %624 = vmatpush.bf16.msra.mxu0 %v205
    %625 = vmatpush.bf16.msra.mxu0 %v202
    %626 = vmatpush.bf16.msra.mxu0 %v199
    %627 = vmatpush.bf16.msra.mxu0 %v196
    %628 = vmatpush.bf16.msra.mxu0 %v193
    %629 = vmatmul.bf16.gmra.mxu0 %v594
    %v630 = vpop.f32.mrf.mxu0
    %v631 = vadd.f32 %v38, %v630
    %v632 = vpop.f32.mrf.mxu0
    %633 = vdwg.mxu0
    %v635 = vrot.slane %v605, 6
    %v637 = vadd.f32 %v278, %v635
    %v638 = vxor.u32 %v637, 2147483648
    %v639 = vmul.f32 %v638, 1.442695
    %v640 = vpow.pop %v639
    %v641 = vadd.f32 %v640, 1.0
    %v642 = vrcp.pop %v641
    %v643 = vmul.f32 %v641, %v642
    %v644 = vsub.f32 1.0, %v643
    %v645 = vmul.f32 %v642, %v644
    %v646 = vadd.f32 %v642, %v645
    %vm647 = vweird.f32 %v641
    %vm648 = vweird.f32 %v642
    %vm649 = vmor %vm647, %vm648
    %v650 = vsel %vm649, %v642, %v646
    %v651 = vand.u32 2147483647, %v641
    %vm652 = vcmp.eq.f32.partialorder %v651, 8.507059e+37
    %v653 = vand.u32 %v641, 2147483648
    %v654 = vor.u32 1.1754944e-38, %v653
    %v655 = vsel %vm652, %v654, %v650
    %v656 = vmul.f32 1.0, %v655
    %v658 = vrot.slane %v618, 6
    %v660 = vadd.f32 %v279, %v658
    %v661 = vxor.u32 %v660, 2147483648
    %v662 = vmul.f32 %v661, 1.442695
    %v663 = vpow.pop %v662
    %v664 = vadd.f32 %v663, 1.0
    %v665 = vrcp.pop %v664
    %v666 = vmul.f32 %v664, %v665
    %v667 = vsub.f32 1.0, %v666
    %v668 = vmul.f32 %v665, %v667
    %v669 = vadd.f32 %v665, %v668
    %vm670 = vweird.f32 %v664
    %vm671 = vweird.f32 %v665
    %vm672 = vmor %vm670, %vm671
    %v673 = vsel %vm672, %v665, %v669
    %v674 = vand.u32 2147483647, %v664
    %vm675 = vcmp.eq.f32.partialorder %v674, 8.507059e+37
    %v676 = vand.u32 %v664, 2147483648
    %v677 = vor.u32 1.1754944e-38, %v676
    %v678 = vsel %vm675, %v677, %v673
    %v679 = vmul.f32 1.0, %v678
    %v681 = vrot.slane %v631, 6
    %v683 = vmul.f32 %v656, %v681
    %v684 = vadd.f32 %v280, %v683
    %v685 = vtanh.pop %v684
    %v686 = vsub.f32 1.0, %v679
    %v687 = vmul.f32 %v686, %v685
    %v689 = vrot.slane %v330, 6
    %v691 = vmul.f32 %v679, %v689
    %v692 = vadd.f32 %v687, %v691
    %v693 = vpack.c.bf16 %v593, %v593
    %v695 = vrot.slane %v693, 3
    %697 = vmatpush.bf16.msra.mxu0 %v466
    %698 = vmatpush.bf16.msra.mxu0 %v463
    %699 = vmatpush.bf16.msra.mxu0 %v460
    %700 = vmatpush.bf16.msra.mxu0 %v457
    %701 = vmatpush.bf16.msra.mxu0 %v454
    %702 = vmatpush.bf16.msra.mxu0 %v451
    %703 = vmatpush.bf16.msra.mxu0 %v448
    %704 = vmatpush.bf16.msra.mxu0 %v445
    %705 = vmatmul.bf16.gmra.mxu0 %v695
    %v706 = vpop.f32.mrf.mxu0
    %v707 = vadd.f32 %v45, %v706
    %v708 = vpop.f32.mrf.mxu0
    %709 = vdwg.mxu0
    %710 = vmatpush.bf16.msra.mxu0 %v467
    %711 = vmatpush.bf16.msra.mxu0 %v464
    %712 = vmatpush.bf16.msra.mxu0 %v461
    %713 = vmatpush.bf16.msra.mxu0 %v458
    %714 = vmatpush.bf16.msra.mxu0 %v455
    %715 = vmatpush.bf16.msra.mxu0 %v452
    %716 = vmatpush.bf16.msra.mxu0 %v449
    %717 = vmatpush.bf16.msra.mxu0 %v446
    %718 = vmatmul.bf16.gmra.mxu0 %v695
    %v719 = vpop.f32.mrf.mxu0
    %v720 = vadd.f32 %v46, %v719
    %v721 = vpop.f32.mrf.mxu0
    %722 = vdwg.mxu0
    %723 = vmatpush.bf16.msra.mxu0 %v468
    %724 = vmatpush.bf16.msra.mxu0 %v465
    %725 = vmatpush.bf16.msra.mxu0 %v462
    %726 = vmatpush.bf16.msra.mxu0 %v459
    %727 = vmatpush.bf16.msra.mxu0 %v456
    %728 = vmatpush.bf16.msra.mxu0 %v453
    %729 = vmatpush.bf16.msra.mxu0 %v450
    %730 = vmatpush.bf16.msra.mxu0 %v447
    %731 = vmatmul.bf16.gmra.mxu0 %v695
    %v732 = vpop.f32.mrf.mxu0
    %v733 = vadd.f32 %v47, %v732
    %v734 = vpop.f32.mrf.mxu0
    %735 = vdwg.mxu0
    %v737 = vrot.slane %v707, 4
    %v739 = vadd.f32 %v532, %v737
    %v740 = vxor.u32 %v739, 2147483648
    %v741 = vmul.f32 %v740, 1.442695
    %v742 = vpow.pop %v741
    %v743 = vadd.f32 %v742, 1.0
    %v744 = vrcp.pop %v743
    %v745 = vmul.f32 %v743, %v744
    %v746 = vsub.f32 1.0, %v745
    %v747 = vmul.f32 %v744, %v746
    %v748 = vadd.f32 %v744, %v747
    %vm749 = vweird.f32 %v743
    %vm750 = vweird.f32 %v744
    %vm751 = vmor %vm749, %vm750
    %v752 = vsel %vm751, %v744, %v748
    %v753 = vand.u32 2147483647, %v743
    %vm754 = vcmp.eq.f32.partialorder %v753, 8.507059e+37
    %v755 = vand.u32 %v743, 2147483648
    %v756 = vor.u32 1.1754944e-38, %v755
    %v757 = vsel %vm754, %v756, %v752
    %v758 = vmul.f32 1.0, %v757
    %v760 = vrot.slane %v720, 4
    %v762 = vadd.f32 %v533, %v760
    %v763 = vxor.u32 %v762, 2147483648
    %v764 = vmul.f32 %v763, 1.442695
    %v765 = vpow.pop %v764
    %v766 = vadd.f32 %v765, 1.0
    %v767 = vrcp.pop %v766
    %v768 = vmul.f32 %v766, %v767
    %v769 = vsub.f32 1.0, %v768
    %v770 = vmul.f32 %v767, %v769
    %v771 = vadd.f32 %v767, %v770
    %vm772 = vweird.f32 %v766
    %vm773 = vweird.f32 %v767
    %vm774 = vmor %vm772, %vm773
    %v775 = vsel %vm774, %v767, %v771
    %v776 = vand.u32 2147483647, %v766
    %vm777 = vcmp.eq.f32.partialorder %v776, 8.507059e+37
    %v778 = vand.u32 %v766, 2147483648
    %v779 = vor.u32 1.1754944e-38, %v778
    %v780 = vsel %vm777, %v779, %v775
    %v781 = vmul.f32 1.0, %v780
    %v783 = vrot.slane %v733, 4
    %v785 = vmul.f32 %v758, %v783
    %v786 = vadd.f32 %v534, %v785
    %v787 = vtanh.pop %v786
    %v788 = vsub.f32 1.0, %v781
    %v789 = vmul.f32 %v788, %v787
    %v791 = vrot.slane %v593, 2
    %v793 = vmul.f32 %v781, %v791
    %v794 = vadd.f32 %v789, %v793
    %v795 = vpack.c.bf16 %v692, %v692
    %v797 = vrot.slane %v795, 1
    %799 = vmatpush.bf16.msra.mxu0 %v212
    %800 = vmatpush.bf16.msra.mxu0 %v209
    %801 = vmatpush.bf16.msra.mxu0 %v206
    %802 = vmatpush.bf16.msra.mxu0 %v203
    %803 = vmatpush.bf16.msra.mxu0 %v200
    %804 = vmatpush.bf16.msra.mxu0 %v197
    %805 = vmatpush.bf16.msra.mxu0 %v194
    %806 = vmatpush.bf16.msra.mxu0 %v191
    %807 = vmatmul.bf16.gmra.mxu0 %v797
    %v808 = vpop.f32.mrf.mxu0
    %v809 = vadd.f32 %v36, %v808
    %v810 = vpop.f32.mrf.mxu0
    %811 = vdwg.mxu0
    %812 = vmatpush.bf16.msra.mxu0 %v213
    %813 = vmatpush.bf16.msra.mxu0 %v210
    %814 = vmatpush.bf16.msra.mxu0 %v207
    %815 = vmatpush.bf16.msra.mxu0 %v204
    %816 = vmatpush.bf16.msra.mxu0 %v201
    %817 = vmatpush.bf16.msra.mxu0 %v198
    %818 = vmatpush.bf16.msra.mxu0 %v195
    %819 = vmatpush.bf16.msra.mxu0 %v192
    %820 = vmatmul.bf16.gmra.mxu0 %v797
    %v821 = vpop.f32.mrf.mxu0
    %v822 = vadd.f32 %v37, %v821
    %v823 = vpop.f32.mrf.mxu0
    %824 = vdwg.mxu0
    %825 = vmatpush.bf16.msra.mxu0 %v214
    %826 = vmatpush.bf16.msra.mxu0 %v211
    %827 = vmatpush.bf16.msra.mxu0 %v208
    %828 = vmatpush.bf16.msra.mxu0 %v205
    %829 = vmatpush.bf16.msra.mxu0 %v202
    %830 = vmatpush.bf16.msra.mxu0 %v199
    %831 = vmatpush.bf16.msra.mxu0 %v196
    %832 = vmatpush.bf16.msra.mxu0 %v193
    %833 = vmatmul.bf16.gmra.mxu0 %v797
    %v834 = vpop.f32.mrf.mxu0
    %v835 = vadd.f32 %v38, %v834
    %v836 = vpop.f32.mrf.mxu0
    %837 = vdwg.mxu0
    %v839 = vrot.slane %v809, 4
    %v841 = vadd.f32 %v278, %v839
    %v842 = vxor.u32 %v841, 2147483648
    %v843 = vmul.f32 %v842, 1.442695
    %v844 = vpow.pop %v843
    %v845 = vadd.f32 %v844, 1.0
    %v846 = vrcp.pop %v845
    %v847 = vmul.f32 %v845, %v846
    %v848 = vsub.f32 1.0, %v847
    %v849 = vmul.f32 %v846, %v848
    %v850 = vadd.f32 %v846, %v849
    %vm851 = vweird.f32 %v845
    %vm852 = vweird.f32 %v846
    %vm853 = vmor %vm851, %vm852
    %v854 = vsel %vm853, %v846, %v850
    %v855 = vand.u32 2147483647, %v845
    %vm856 = vcmp.eq.f32.partialorder %v855, 8.507059e+37
    %v857 = vand.u32 %v845, 2147483648
    %v858 = vor.u32 1.1754944e-38, %v857
    %v859 = vsel %vm856, %v858, %v854
    %v860 = vmul.f32 1.0, %v859
    %v862 = vrot.slane %v822, 4
    %v864 = vadd.f32 %v279, %v862
    %v865 = vxor.u32 %v864, 2147483648
    %v866 = vmul.f32 %v865, 1.442695
    %v867 = vpow.pop %v866
    %v868 = vadd.f32 %v867, 1.0
    %v869 = vrcp.pop %v868
    %v870 = vmul.f32 %v868, %v869
    %v871 = vsub.f32 1.0, %v870
    %v872 = vmul.f32 %v869, %v871
    %v873 = vadd.f32 %v869, %v872
    %vm874 = vweird.f32 %v868
    %vm875 = vweird.f32 %v869
    %vm876 = vmor %vm874, %vm875
    %v877 = vsel %vm876, %v869, %v873
    %v878 = vand.u32 2147483647, %v868
    %vm879 = vcmp.eq.f32.partialorder %v878, 8.507059e+37
    %v880 = vand.u32 %v868, 2147483648
    %v881 = vor.u32 1.1754944e-38, %v880
    %v882 = vsel %vm879, %v881, %v877
    %v883 = vmul.f32 1.0, %v882
    %v885 = vrot.slane %v835, 4
    %v887 = vmul.f32 %v860, %v885
    %v888 = vadd.f32 %v280, %v887
    %v889 = vtanh.pop %v888
    %v890 = vsub.f32 1.0, %v883
    %v891 = vmul.f32 %v890, %v889
    %v893 = vrot.slane %v692, 6
    %v895 = vmul.f32 %v883, %v893
    %v896 = vadd.f32 %v891, %v895
    %v897 = vpack.c.bf16 %v794, %v794
    %v899 = vrot.slane %v897, 2
    %901 = vmatpush.bf16.msra.mxu0 %v466
    %902 = vmatpush.bf16.msra.mxu0 %v463
    %903 = vmatpush.bf16.msra.mxu0 %v460
    %904 = vmatpush.bf16.msra.mxu0 %v457
    %905 = vmatpush.bf16.msra.mxu0 %v454
    %906 = vmatpush.bf16.msra.mxu0 %v451
    %907 = vmatpush.bf16.msra.mxu0 %v448
    %908 = vmatpush.bf16.msra.mxu0 %v445
    %909 = vmatmul.bf16.gmra.mxu0 %v899
    %v910 = vpop.f32.mrf.mxu0
    %v911 = vadd.f32 %v45, %v910
    %v912 = vpop.f32.mrf.mxu0
    %913 = vdwg.mxu0
    %914 = vmatpush.bf16.msra.mxu0 %v467
    %915 = vmatpush.bf16.msra.mxu0 %v464
    %916 = vmatpush.bf16.msra.mxu0 %v461
    %917 = vmatpush.bf16.msra.mxu0 %v458
    %918 = vmatpush.bf16.msra.mxu0 %v455
    %919 = vmatpush.bf16.msra.mxu0 %v452
    %920 = vmatpush.bf16.msra.mxu0 %v449
    %921 = vmatpush.bf16.msra.mxu0 %v446
    %922 = vmatmul.bf16.gmra.mxu0 %v899
    %v923 = vpop.f32.mrf.mxu0
    %v924 = vadd.f32 %v46, %v923
    %v925 = vpop.f32.mrf.mxu0
    %926 = vdwg.mxu0
    %927 = vmatpush.bf16.msra.mxu0 %v468
    %928 = vmatpush.bf16.msra.mxu0 %v465
    %929 = vmatpush.bf16.msra.mxu0 %v462
    %930 = vmatpush.bf16.msra.mxu0 %v459
    %931 = vmatpush.bf16.msra.mxu0 %v456
    %932 = vmatpush.bf16.msra.mxu0 %v453
    %933 = vmatpush.bf16.msra.mxu0 %v450
    %934 = vmatpush.bf16.msra.mxu0 %v447
    %935 = vmatmul.bf16.gmra.mxu0 %v899
    %v936 = vpop.f32.mrf.mxu0
    %v937 = vadd.f32 %v47, %v936
    %v938 = vpop.f32.mrf.mxu0
    %939 = vdwg.mxu0
    %v941 = vrot.slane %v911, 6
    %v943 = vadd.f32 %v532, %v941
    %v944 = vxor.u32 %v943, 2147483648
    %v945 = vmul.f32 %v944, 1.442695
    %v946 = vpow.pop %v945
    %v947 = vadd.f32 %v946, 1.0
    %v948 = vrcp.pop %v947
    %v949 = vmul.f32 %v947, %v948
    %v950 = vsub.f32 1.0, %v949
    %v951 = vmul.f32 %v948, %v950
    %v952 = vadd.f32 %v948, %v951
    %vm953 = vweird.f32 %v947
    %vm954 = vweird.f32 %v948
    %vm955 = vmor %vm953, %vm954
    %v956 = vsel %vm955, %v948, %v952
    %v957 = vand.u32 2147483647, %v947
    %vm958 = vcmp.eq.f32.partialorder %v957, 8.507059e+37
    %v959 = vand.u32 %v947, 2147483648
    %v960 = vor.u32 1.1754944e-38, %v959
    %v961 = vsel %vm958, %v960, %v956
    %v962 = vmul.f32 1.0, %v961
    %v964 = vrot.slane %v924, 6
    %v966 = vadd.f32 %v533, %v964
    %v967 = vxor.u32 %v966, 2147483648
    %v968 = vmul.f32 %v967, 1.442695
    %v969 = vpow.pop %v968
    %v970 = vadd.f32 %v969, 1.0
    %v971 = vrcp.pop %v970
    %v972 = vmul.f32 %v970, %v971
    %v973 = vsub.f32 1.0, %v972
    %v974 = vmul.f32 %v971, %v973
    %v975 = vadd.f32 %v971, %v974
    %vm976 = vweird.f32 %v970
    %vm977 = vweird.f32 %v971
    %vm978 = vmor %vm976, %vm977
    %v979 = vsel %vm978, %v971, %v975
    %v980 = vand.u32 2147483647, %v970
    %vm981 = vcmp.eq.f32.partialorder %v980, 8.507059e+37
    %v982 = vand.u32 %v970, 2147483648
    %v983 = vor.u32 1.1754944e-38, %v982
    %v984 = vsel %vm981, %v983, %v979
    %v985 = vmul.f32 1.0, %v984
    %v987 = vrot.slane %v937, 6
    %v989 = vmul.f32 %v962, %v987
    %v990 = vadd.f32 %v534, %v989
    %v991 = vtanh.pop %v990
    %v992 = vsub.f32 1.0, %v985
    %v993 = vmul.f32 %v992, %v991
    %v995 = vrot.slane %v794, 2
    %v997 = vmul.f32 %v985, %v995
    %v998 = vadd.f32 %v993, %v997
    %v999 = vpack.c.bf16 %v896, %v896
    %v1001 = vrot.slane %v999, 2
    %1003 = vmatpush.bf16.msra.mxu0 %v212
    %1004 = vmatpush.bf16.msra.mxu0 %v209
    %1005 = vmatpush.bf16.msra.mxu0 %v206
    %1006 = vmatpush.bf16.msra.mxu0 %v203
    %1007 = vmatpush.bf16.msra.mxu0 %v200
    %1008 = vmatpush.bf16.msra.mxu0 %v197
    %1009 = vmatpush.bf16.msra.mxu0 %v194
    %1010 = vmatpush.bf16.msra.mxu0 %v191
    %1011 = vmatmul.bf16.gmra.mxu0 %v1001
    %v1012 = vpop.f32.mrf.mxu0
    %v1013 = vadd.f32 %v36, %v1012
    %v1014 = vpop.f32.mrf.mxu0
    %1015 = vdwg.mxu0
    %1016 = vmatpush.bf16.msra.mxu0 %v213
    %1017 = vmatpush.bf16.msra.mxu0 %v210
    %1018 = vmatpush.bf16.msra.mxu0 %v207
    %1019 = vmatpush.bf16.msra.mxu0 %v204
    %1020 = vmatpush.bf16.msra.mxu0 %v201
    %1021 = vmatpush.bf16.msra.mxu0 %v198
    %1022 = vmatpush.bf16.msra.mxu0 %v195
    %1023 = vmatpush.bf16.msra.mxu0 %v192
    %1024 = vmatmul.bf16.gmra.mxu0 %v1001
    %v1025 = vpop.f32.mrf.mxu0
    %v1026 = vadd.f32 %v37, %v1025
    %v1027 = vpop.f32.mrf.mxu0
    %1028 = vdwg.mxu0
    %1029 = vmatpush.bf16.msra.mxu0 %v214
    %1030 = vmatpush.bf16.msra.mxu0 %v211
    %1031 = vmatpush.bf16.msra.mxu0 %v208
    %1032 = vmatpush.bf16.msra.mxu0 %v205
    %1033 = vmatpush.bf16.msra.mxu0 %v202
    %1034 = vmatpush.bf16.msra.mxu0 %v199
    %1035 = vmatpush.bf16.msra.mxu0 %v196
    %1036 = vmatpush.bf16.msra.mxu0 %v193
    %1037 = vmatmul.bf16.gmra.mxu0 %v1001
    %v1038 = vpop.f32.mrf.mxu0
    %v1039 = vadd.f32 %v38, %v1038
    %v1040 = vpop.f32.mrf.mxu0
    %1041 = vdwg.mxu0
    %v1043 = vrot.slane %v1013, 2
    %v1045 = vadd.f32 %v278, %v1043
    %v1046 = vxor.u32 %v1045, 2147483648
    %v1047 = vmul.f32 %v1046, 1.442695
    %v1048 = vpow.pop %v1047
    %v1049 = vadd.f32 %v1048, 1.0
    %v1050 = vrcp.pop %v1049
    %v1051 = vmul.f32 %v1049, %v1050
    %v1052 = vsub.f32 1.0, %v1051
    %v1053 = vmul.f32 %v1050, %v1052
    %v1054 = vadd.f32 %v1050, %v1053
    %vm1055 = vweird.f32 %v1049
    %vm1056 = vweird.f32 %v1050
    %vm1057 = vmor %vm1055, %vm1056
    %v1058 = vsel %vm1057, %v1050, %v1054
    %v1059 = vand.u32 2147483647, %v1049
    %vm1060 = vcmp.eq.f32.partialorder %v1059, 8.507059e+37
    %v1061 = vand.u32 %v1049, 2147483648
    %v1062 = vor.u32 1.1754944e-38, %v1061
    %v1063 = vsel %vm1060, %v1062, %v1058
    %v1064 = vmul.f32 1.0, %v1063
    %v1066 = vrot.slane %v1026, 2
    %v1068 = vadd.f32 %v279, %v1066
    %v1069 = vxor.u32 %v1068, 2147483648
    %v1070 = vmul.f32 %v1069, 1.442695
    %v1071 = vpow.pop %v1070
    %v1072 = vadd.f32 %v1071, 1.0
    %v1073 = vrcp.pop %v1072
    %v1074 = vmul.f32 %v1072, %v1073
    %v1075 = vsub.f32 1.0, %v1074
    %v1076 = vmul.f32 %v1073, %v1075
    %v1077 = vadd.f32 %v1073, %v1076
    %vm1078 = vweird.f32 %v1072
    %vm1079 = vweird.f32 %v1073
    %vm1080 = vmor %vm1078, %vm1079
    %v1081 = vsel %vm1080, %v1073, %v1077
    %v1082 = vand.u32 2147483647, %v1072
    %vm1083 = vcmp.eq.f32.partialorder %v1082, 8.507059e+37
    %v1084 = vand.u32 %v1072, 2147483648
    %v1085 = vor.u32 1.1754944e-38, %v1084
    %v1086 = vsel %vm1083, %v1085, %v1081
    %v1087 = vmul.f32 1.0, %v1086
    %v1089 = vrot.slane %v1039, 2
    %v1091 = vmul.f32 %v1064, %v1089
    %v1092 = vadd.f32 %v280, %v1091
    %v1093 = vtanh.pop %v1092
    %v1094 = vsub.f32 1.0, %v1087
    %v1095 = vmul.f32 %v1094, %v1093
    %v1097 = vrot.slane %v896, 6
    %v1099 = vmul.f32 %v1087, %v1097
    %v1100 = vadd.f32 %v1095, %v1099
    %v1101 = vpack.c.bf16 %v998, %v998
    %v1103 = vrot.slane %v1101, 1
    %1105 = vmatpush.bf16.msra.mxu0 %v466
    %1106 = vmatpush.bf16.msra.mxu0 %v463
    %1107 = vmatpush.bf16.msra.mxu0 %v460
    %1108 = vmatpush.bf16.msra.mxu0 %v457
    %1109 = vmatpush.bf16.msra.mxu0 %v454
    %1110 = vmatpush.bf16.msra.mxu0 %v451
    %1111 = vmatpush.bf16.msra.mxu0 %v448
    %1112 = vmatpush.bf16.msra.mxu0 %v445
    %1113 = vmatmul.bf16.gmra.mxu0 %v1103
    %v1114 = vpop.f32.mrf.mxu0
    %v1115 = vadd.f32 %v45, %v1114
    %v1116 = vpop.f32.mrf.mxu0
    %1117 = vdwg.mxu0
    %1118 = vmatpush.bf16.msra.mxu0 %v467
    %1119 = vmatpush.bf16.msra.mxu0 %v464
    %1120 = vmatpush.bf16.msra.mxu0 %v461
    %1121 = vmatpush.bf16.msra.mxu0 %v458
    %1122 = vmatpush.bf16.msra.mxu0 %v455
    %1123 = vmatpush.bf16.msra.mxu0 %v452
    %1124 = vmatpush.bf16.msra.mxu0 %v449
    %1125 = vmatpush.bf16.msra.mxu0 %v446
    %1126 = vmatmul.bf16.gmra.mxu0 %v1103
    %v1127 = vpop.f32.mrf.mxu0
    %v1128 = vadd.f32 %v46, %v1127
    %v1129 = vpop.f32.mrf.mxu0
    %1130 = vdwg.mxu0
    %1131 = vmatpush.bf16.msra.mxu0 %v468
    %1132 = vmatpush.bf16.msra.mxu0 %v465
    %1133 = vmatpush.bf16.msra.mxu0 %v462
    %1134 = vmatpush.bf16.msra.mxu0 %v459
    %1135 = vmatpush.bf16.msra.mxu0 %v456
    %1136 = vmatpush.bf16.msra.mxu0 %v453
    %1137 = vmatpush.bf16.msra.mxu0 %v450
    %1138 = vmatpush.bf16.msra.mxu0 %v447
    %1139 = vmatmul.bf16.gmra.mxu0 %v1103
    %v1140 = vpop.f32.mrf.mxu0
    %v1141 = vadd.f32 %v47, %v1140
    %v1142 = vpop.f32.mrf.mxu0
    %1143 = vdwg.mxu0
    %v1144 = vadd.f32 %v532, %v1115
    %v1145 = vxor.u32 %v1144, 2147483648
    %v1146 = vmul.f32 %v1145, 1.442695
    %v1147 = vpow.pop %v1146
    %v1148 = vadd.f32 %v1147, 1.0
    %v1149 = vrcp.pop %v1148
    %v1150 = vmul.f32 %v1148, %v1149
    %v1151 = vsub.f32 1.0, %v1150
    %v1152 = vmul.f32 %v1149, %v1151
    %v1153 = vadd.f32 %v1149, %v1152
    %vm1154 = vweird.f32 %v1148
    %vm1155 = vweird.f32 %v1149
    %vm1156 = vmor %vm1154, %vm1155
    %v1157 = vsel %vm1156, %v1149, %v1153
    %v1158 = vand.u32 2147483647, %v1148
    %vm1159 = vcmp.eq.f32.partialorder %v1158, 8.507059e+37
    %v1160 = vand.u32 %v1148, 2147483648
    %v1161 = vor.u32 1.1754944e-38, %v1160
    %v1162 = vsel %vm1159, %v1161, %v1157
    %v1163 = vmul.f32 1.0, %v1162
    %v1164 = vadd.f32 %v533, %v1128
    %v1165 = vxor.u32 %v1164, 2147483648
    %v1166 = vmul.f32 %v1165, 1.442695
    %v1167 = vpow.pop %v1166
    %v1168 = vadd.f32 %v1167, 1.0
    %v1169 = vrcp.pop %v1168
    %v1170 = vmul.f32 %v1168, %v1169
    %v1171 = vsub.f32 1.0, %v1170
    %v1172 = vmul.f32 %v1169, %v1171
    %v1173 = vadd.f32 %v1169, %v1172
    %vm1174 = vweird.f32 %v1168
    %vm1175 = vweird.f32 %v1169
    %vm1176 = vmor %vm1174, %vm1175
    %v1177 = vsel %vm1176, %v1169, %v1173
    %v1178 = vand.u32 2147483647, %v1168
    %vm1179 = vcmp.eq.f32.partialorder %v1178, 8.507059e+37
    %v1180 = vand.u32 %v1168, 2147483648
    %v1181 = vor.u32 1.1754944e-38, %v1180
    %v1182 = vsel %vm1179, %v1181, %v1177
    %v1183 = vmul.f32 1.0, %v1182
    %v1184 = vmul.f32 %v1163, %v1141
    %v1185 = vadd.f32 %v534, %v1184
    %v1186 = vtanh.pop %v1185
    %v1187 = vsub.f32 1.0, %v1183
    %v1188 = vmul.f32 %v1187, %v1186
    %v1190 = vrot.slane %v998, 2
    %v1192 = vmul.f32 %v1183, %v1190
    %v1193 = vadd.f32 %v1188, %v1192
  $region42: #{net_forward.3} parent=0 // loop_footer
    %s56 = sadd.s32 1, %s52
  $region43: #{net_forward.3} parent=0 // loop_footer_branch
    %51 = sbr.rel target = $region39
  $region44: #{net_forward.3} parent=0 // loop_exit
    _
  %v1195 = vrot.slane %v58, 2
  %v1196 = vld [vmem:[%s3] sm:$0xff]
  %v1197 = vld [vmem:[%s3 + $0x8] sm:$0xff]
  %v1198 = vld [vmem:[%s3 + $0x10] sm:$0xff]
  %v1199 = vld [vmem:[%s3 + $0x18] sm:$0xff]
  %v1200 = vld [vmem:[%s3 + $0x20] sm:$0xff]
  %v1201 = vld [vmem:[%s3 + $0x28] sm:$0xff]
  %v1202 = vld [vmem:[%s3 + $0x30] sm:$0xff]
  %v1203 = vld [vmem:[%s3 + $0x38] sm:$0xff]
  %v1204 = vld [vmem:[%s3 + $0x40] sm:$0xff]
  %v1205 = vld [vmem:[%s3 + $0x48] sm:$0xff]
  %v1206 = vld [vmem:[%s3 + $0x50] sm:$0xff]
  %v1207 = vld [vmem:[%s3 + $0x58] sm:$0xff]
  %v1208 = vld [vmem:[%s3 + $0x60] sm:$0xff]
  %v1209 = vld [vmem:[%s3 + $0x68] sm:$0xff]
  %v1210 = vld [vmem:[%s3 + $0x70] sm:$0xff]
  %v1211 = vld [vmem:[%s3 + $0x78] sm:$0xff]
  %v1212 = vld [vmem:[%s3 + $0x80] sm:$0xff]
  %v1213 = vld [vmem:[%s3 + $0x88] sm:$0xff]
  %v1214 = vld [vmem:[%s3 + $0x90] sm:$0xff]
  %v1215 = vld [vmem:[%s3 + $0x98] sm:$0xff]
  %v1216 = vld [vmem:[%s3 + $0xa0] sm:$0xff]
  %v1217 = vld [vmem:[%s3 + $0xa8] sm:$0xff]
  %v1218 = vld [vmem:[%s3 + $0xb0] sm:$0xff]
  %v1219 = vld [vmem:[%s3 + $0xb8] sm:$0xff]
  %v1220 = vld [vmem:[%s3 + $0xc0] sm:$0xff]
  %v1221 = vld [vmem:[%s3 + $0xc8] sm:$0xff]
  %v1222 = vld [vmem:[%s3 + $0xd0] sm:$0xff]
  %v1223 = vld [vmem:[%s3 + $0xd8] sm:$0xff]
  %v1224 = vld [vmem:[%s3 + $0xe0] sm:$0xff]
  %v1225 = vld [vmem:[%s3 + $0xe8] sm:$0xff]
  %v1226 = vld [vmem:[%s3 + $0xf0] sm:$0xff]
  %v1227 = vld [vmem:[%s3 + $0xf8] sm:$0xff]
  %v1228 = vld [vmem:[%s4] sm:$0x1]
  %v1230 = vperm.slane %v1228, 0
  %v1233 = vrot.slane %v57, 6
  %v1234 = vrot.slane %v1195, 6
  %1237 = vmatpush.msra.mxu0 %v1211
  %1238 = vmatpush.msra.mxu0 %v1210
  %1239 = vmatpush.msra.mxu0 %v1209
  %1240 = vmatpush.msra.mxu0 %v1208
  %1241 = vmatpush.msra.mxu0 %v1207
  %1242 = vmatpush.msra.mxu0 %v1206
  %1243 = vmatpush.msra.mxu0 %v1205
  %1244 = vmatpush.msra.mxu0 %v1204
  %1245 = vmatpush.msra.mxu0 %v1203
  %1246 = vmatpush.msra.mxu0 %v1202
  %1247 = vmatpush.msra.mxu0 %v1201
  %1248 = vmatpush.msra.mxu0 %v1200
  %1249 = vmatpush.msra.mxu0 %v1199
  %1250 = vmatpush.msra.mxu0 %v1198
  %1251 = vmatpush.msra.mxu0 %v1197
  %1252 = vmatpush.msra.mxu0 %v1196
  %1253 = vmatmul.f32.gmra.mxu0 %v1233
  %v1254 = vpop.f32.mrf.mxu0
  %v1255 = vadd.f32 %v1230, %v1254
  %1256 = vdwg.mxu0
  %1257 = vmatpush.msra.mxu0 %v1227
  %1258 = vmatpush.msra.mxu0 %v1226
  %1259 = vmatpush.msra.mxu0 %v1225
  %1260 = vmatpush.msra.mxu0 %v1224
  %1261 = vmatpush.msra.mxu0 %v1223
  %1262 = vmatpush.msra.mxu0 %v1222
  %1263 = vmatpush.msra.mxu0 %v1221
  %1264 = vmatpush.msra.mxu0 %v1220
  %1265 = vmatpush.msra.mxu0 %v1219
  %1266 = vmatpush.msra.mxu0 %v1218
  %1267 = vmatpush.msra.mxu0 %v1217
  %1268 = vmatpush.msra.mxu0 %v1216
  %1269 = vmatpush.msra.mxu0 %v1215
  %1270 = vmatpush.msra.mxu0 %v1214
  %1271 = vmatpush.msra.mxu0 %v1213
  %1272 = vmatpush.msra.mxu0 %v1212
  %1273 = vmatmul.f32.gmra.mxu0 %v1234
  %v1274 = vpop.f32.mrf.mxu0
  %v1275 = vadd.f32 %v1255, %v1274
  %1276 = vdwg.mxu0
  %v1277 = vmax.f32 %v1275, 0.0
  %v1278 = vld [vmem:[%s5] sm:$0xff]
  %v1279 = vld [vmem:[%s5 + $0x8] sm:$0xff]
  %v1280 = vld [vmem:[%s5 + $0x10] sm:$0xff]
  %v1281 = vld [vmem:[%s5 + $0x18] sm:$0xff]
  %v1282 = vld [vmem:[%s5 + $0x20] sm:$0xff]
  %v1283 = vld [vmem:[%s5 + $0x28] sm:$0xff]
  %v1284 = vld [vmem:[%s5 + $0x30] sm:$0xff]
  %v1285 = vld [vmem:[%s5 + $0x38] sm:$0xff]
  %v1286 = vld [vmem:[%s6] sm:$0x1]
  %v1288 = vperm.slane %v1286, 0
  %vm1290 = vcmask 523264
  %v1292 = vsel %vm1290, %v1277, 0
  %1294 = vmatpush.msra.mxu0 0.0
  %1295 = vmatpush.msra.mxu0 0.0
  %1296 = vmatpush.msra.mxu0 0.0
  %1297 = vmatpush.msra.mxu0 0.0
  %1298 = vmatpush.msra.mxu0 0.0
  %1299 = vmatpush.msra.mxu0 0.0
  %1300 = vmatpush.msra.mxu0 0.0
  %1301 = vmatpush.msra.mxu0 0.0
  %1302 = vmatpush.msra.mxu0 %v1285
  %1303 = vmatpush.msra.mxu0 %v1284
  %1304 = vmatpush.msra.mxu0 %v1283
  %1305 = vmatpush.msra.mxu0 %v1282
  %1306 = vmatpush.msra.mxu0 %v1281
  %1307 = vmatpush.msra.mxu0 %v1280
  %1308 = vmatpush.msra.mxu0 %v1279
  %1309 = vmatpush.msra.mxu0 %v1278
  %1310 = vmatmul.f32.gmra.mxu0 %v1292
  %v1311 = vpop.f32.mrf.mxu0
  %v1312 = vadd.f32 %v1288, %v1311
  %1313 = vdwg.mxu0
  %v1314 = vmax.f32 %v1312, 0.0
  %v1315 = vld [vmem:[%s7] sm:$0xff]
  %v1316 = vld [vmem:[%s7 + $0x8] sm:$0xff]
  %v1317 = vld [vmem:[%s7 + $0x10] sm:$0xff]
  %v1318 = vld [vmem:[%s7 + $0x18] sm:$0xff]
  %v1319 = vld [vmem:[#allocation2] sm:$0x1]
  %v1321 = vperm.slane %v1319, 0
  %vm1323 = vcmask 261120
  %v1325 = vsel %vm1323, %v1314, 0
  %1327 = vmatpush.msra.mxu0 0.0
  %1328 = vmatpush.msra.mxu0 0.0
  %1329 = vmatpush.msra.mxu0 0.0
  %1330 = vmatpush.msra.mxu0 0.0
  %1331 = vmatpush.msra.mxu0 0.0
  %1332 = vmatpush.msra.mxu0 0.0
  %1333 = vmatpush.msra.mxu0 0.0
  %1334 = vmatpush.msra.mxu0 0.0
  %1335 = vmatpush.msra.mxu0 0.0
  %1336 = vmatpush.msra.mxu0 0.0
  %1337 = vmatpush.msra.mxu0 0.0
  %1338 = vmatpush.msra.mxu0 0.0
  %1339 = vmatpush.msra.mxu0 %v1318
  %1340 = vmatpush.msra.mxu0 %v1317
  %1341 = vmatpush.msra.mxu0 %v1316
  %1342 = vmatpush.msra.mxu0 %v1315
  %1343 = vmatmul.f32.gmra.mxu0 %v1325
  %v1344 = vpop.f32.mrf.mxu0
  %v1345 = vadd.f32 %v1321, %v1344
  %1346 = vdwg.mxu0
  %v1347 = vxor.u32 %v1345, 2147483648
  %v1348 = vmul.f32 %v1347, 1.442695
  %v1349 = vpow.pop %v1348
  %v1350 = vadd.f32 %v1349, 1.0
  %v1351 = vrcp.pop %v1350
  %v1352 = vmul.f32 %v1350, %v1351
  %v1353 = vsub.f32 1.0, %v1352
  %v1354 = vmul.f32 %v1351, %v1353
  %v1355 = vadd.f32 %v1351, %v1354
  %vm1356 = vweird.f32 %v1350
  %vm1357 = vweird.f32 %v1351
  %vm1358 = vmor %vm1356, %vm1357
  %v1359 = vsel %vm1358, %v1351, %v1355
  %v1360 = vand.u32 2147483647, %v1350
  %vm1361 = vcmp.eq.f32.partialorder %v1360, 8.507059e+37
  %v1362 = vand.u32 %v1350, 2147483648
  %v1363 = vor.u32 1.1754944e-38, %v1362
  %v1364 = vsel %vm1361, %v1363, %v1359
  %v1365 = vmul.f32 1.0, %v1364
  %vm1366 = vcmask 1024
  %1367 = vst.msk [vmem:[%s9] sm:$0x3] %vm1366, %v1365
  // Predicated region
  $region45: #{net_forward.3} parent=0 // pred_check
    _
  $region46: #{net_forward.3} parent=0 // pred_check_branch
    %1369 = sbr.rel (0) target = $region48
  $region47: #{net_forward.3} parent=0 // pred_region
    _
  $region48: #{net_forward.3} parent=0 // pred_fallthru
    _
  // Predicated region
  $region49: #{net_forward.3} parent=0 // pred_check
    _
  $region50: #{net_forward.3} parent=0 // pred_check_branch
    %1371 = sbr.rel (0) target = $region52
  $region51: #{net_forward.3} parent=0 // pred_region
    _
  $region52: #{net_forward.3} parent=0 // pred_fallthru
    _

// kernel: net_forward.2
$region0: #{net_forward.2}
  #allocation0 [shape = 'u32[]', space=smem, size = 0x4, offset = 0x4, fixed_abs, tag = 'smem constant byte address 0x4 - core index']
  #allocation1 [shape = 'u32[72,128]{1,0:T(1,128)}', space=vmem, size = 0x9000, scoped, tag = 'internal scratch']
  %s0 = inlined_call_operand.vmem [shape: bf16[2000,224], index: 0, kind: input, shape index: {}]
  %s1 = inlined_call_operand.vmem [shape: bf16[224,512], index: 1, kind: input, shape index: {}]
  %s2 = inlined_call_operand.vmem [shape: f32[1,512], index: 2, kind: input, shape index: {}]
  %s3 = inlined_call_operand.vmem [shape: bf16[512,768], index: 3, kind: input, shape index: {}]
  %s4 = inlined_call_operand.vmem [shape: f32[1,768], index: 4, kind: input, shape index: {}]
  %s5 = inlined_call_operand.vmem [shape: bf16[2000,768], index: 5, kind: output, shape index: {}]
  %s6 = sld [smem:[#allocation0]]
  $region53: #{net_forward.2} parent=0
    _
  %s8 = ssub.s32 1, %s6
  %s9 = scalar_select 0, %s8, %s6
  loop: start=0, step=1, limit=7
  $region2: #{net_forward.2} parent=0 // loop_pre_header
    _
  $region3: #{net_forward.2} parent=0 // loop_header
    %s11 = sphi 0, %s15
    %p12 = scmp.ge.s32.totalorder %s11, 7
    %s21 = sphi 0, %s23
    %s24 = sphi 0, %s21
    %s25 = sphi 0, %s24
    %s41 = sphi 0, %s25
    %s45 = sphi 0, %s45
    %s47 = sphi 0, %s45
    %s48 = sphi 0, %s47
    %s62 = sphi 0, %s48
    %s66 = sphi 0, %s66
    %s68 = sphi 0, %s66
    %s69 = sphi 0, %s68
    %s83 = sphi 0, %s69
    %s87 = sphi 0, %s87
    %s89 = sphi 0, %s87
    %s90 = sphi 0, %s89
    %s104 = sphi 0, %s90
    %s108 = sphi 0, %s108
    %s110 = sphi 0, %s108
    %s111 = sphi 0, %s110
    %s125 = sphi 0, %s111
    %s131 = sphi 0, %s133
    %s134 = sphi 0, %s131
    %s135 = sphi 0, %s134
    %s151 = sphi 0, %s135
  $region4: #{net_forward.2} parent=0 // loop_header_branch
    %14 = sbr.rel (%p12) target = $region8
  $region5: #{net_forward.2} parent=0 // loop_body
    %s16 = ssub.s32 %s11, 1
    %s17 = ssub.s32 %s11, 2
    %s18 = sadd.s32 %s11, 1
    %s19 = ssub.s32 %s11, %s18
    %p20 = scmp.eq.s32.totalorder %s19, 0
    %s22 = sadd.s32 %s21, 1
    %s23 = scalar_select %p20, %s21, %s22
    %p26 = pneg %p20
    %p27 = scmp.eq.s32.totalorder %s11, 4
    %p28 = por %p26, %p27
    %p29 = scmp.ne.s32.totalorder %s21, %s24
    %p30 = scmp.eq.s32.totalorder %s11, 0
    %p31 = por %p29, %p30
    %p32 = scmp.ne.s32.totalorder %s21, %s24
    %p33 = scmp.eq.s32.totalorder %s16, 4
    %p34 = por %p32, %p33
    %p35 = scmp.ne.s32.totalorder %s24, %s25
    %p36 = scmp.eq.s32.totalorder %s16, 0
    %p37 = por %p35, %p36
    %p38 = scmp.ne.s32.totalorder %s24, %s25
    %p39 = scmp.eq.s32.totalorder %s17, 4
    %p40 = por %p38, %p39
    %p42 = scmp.ne.s32.totalorder %s25, %s41
    %p43 = scmp.eq.s32.totalorder %s17, 0
    %p44 = por %p42, %p43
    %s46 = sadd.s32 %s45, 1
    %p49 = scmp.eq.s32.totalorder %s11, 4
    %p50 = scmp.ne.s32.totalorder %s45, %s47
    %p51 = scmp.eq.s32.totalorder %s11, 0
    %p52 = por %p50, %p51
    %p53 = scmp.ne.s32.totalorder %s45, %s47
    %p54 = scmp.eq.s32.totalorder %s16, 4
    %p55 = por %p53, %p54
    %p56 = scmp.ne.s32.totalorder %s47, %s48
    %p57 = scmp.eq.s32.totalorder %s16, 0
    %p58 = por %p56, %p57
    %p59 = scmp.ne.s32.totalorder %s47, %s48
    %p60 = scmp.eq.s32.totalorder %s17, 4
    %p61 = por %p59, %p60
    %p63 = scmp.ne.s32.totalorder %s48, %s62
    %p64 = scmp.eq.s32.totalorder %s17, 0
    %p65 = por %p63, %p64
    %s67 = sadd.s32 %s66, 1
    %p70 = scmp.eq.s32.totalorder %s11, 4
    %p71 = scmp.ne.s32.totalorder %s66, %s68
    %p72 = scmp.eq.s32.totalorder %s11, 0
    %p73 = por %p71, %p72
    %p74 = scmp.ne.s32.totalorder %s66, %s68
    %p75 = scmp.eq.s32.totalorder %s16, 4
    %p76 = por %p74, %p75
    %p77 = scmp.ne.s32.totalorder %s68, %s69
    %p78 = scmp.eq.s32.totalorder %s16, 0
    %p79 = por %p77, %p78
    %p80 = scmp.ne.s32.totalorder %s68, %s69
    %p81 = scmp.eq.s32.totalorder %s17, 4
    %p82 = por %p80, %p81
    %p84 = scmp.ne.s32.totalorder %s69, %s83
    %p85 = scmp.eq.s32.totalorder %s17, 0
    %p86 = por %p84, %p85
    %s88 = sadd.s32 %s87, 1
    %p91 = scmp.eq.s32.totalorder %s11, 4
    %p92 = scmp.ne.s32.totalorder %s87, %s89
    %p93 = scmp.eq.s32.totalorder %s11, 0
    %p94 = por %p92, %p93
    %p95 = scmp.ne.s32.totalorder %s87, %s89
    %p96 = scmp.eq.s32.totalorder %s16, 4
    %p97 = por %p95, %p96
    %p98 = scmp.ne.s32.totalorder %s89, %s90
    %p99 = scmp.eq.s32.totalorder %s16, 0
    %p100 = por %p98, %p99
    %p101 = scmp.ne.s32.totalorder %s89, %s90
    %p102 = scmp.eq.s32.totalorder %s17, 4
    %p103 = por %p101, %p102
    %p105 = scmp.ne.s32.totalorder %s90, %s104
    %p106 = scmp.eq.s32.totalorder %s17, 0
    %p107 = por %p105, %p106
    %s109 = sadd.s32 %s108, 1
    %p112 = scmp.eq.s32.totalorder %s11, 4
    %p113 = scmp.ne.s32.totalorder %s108, %s110
    %p114 = scmp.eq.s32.totalorder %s11, 0
    %p115 = por %p113, %p114
    %p116 = scmp.ne.s32.totalorder %s108, %s110
    %p117 = scmp.eq.s32.totalorder %s16, 4
    %p118 = por %p116, %p117
    %p119 = scmp.ne.s32.totalorder %s110, %s111
    %p120 = scmp.eq.s32.totalorder %s16, 0
    %p121 = por %p119, %p120
    %p122 = scmp.ne.s32.totalorder %s110, %s111
    %p123 = scmp.eq.s32.totalorder %s17, 4
    %p124 = por %p122, %p123
    %p126 = scmp.ne.s32.totalorder %s111, %s125
    %p127 = scmp.eq.s32.totalorder %s17, 0
    %p128 = por %p126, %p127
    %s129 = ssub.s32 %s11, %s18
    %p130 = scmp.eq.s32.totalorder %s129, 0
    %s132 = sadd.s32 %s131, 1
    %s133 = scalar_select %p130, %s131, %s132
    %p136 = pneg %p130
    %p137 = scmp.eq.s32.totalorder %s11, 4
    %p138 = por %p136, %p137
    %p139 = scmp.ne.s32.totalorder %s131, %s134
    %p140 = scmp.eq.s32.totalorder %s11, 0
    %p141 = por %p139, %p140
    %p142 = scmp.ne.s32.totalorder %s131, %s134
    %p143 = scmp.eq.s32.totalorder %s16, 4
    %p144 = por %p142, %p143
    %p145 = scmp.ne.s32.totalorder %s134, %s135
    %p146 = scmp.eq.s32.totalorder %s16, 0
    %p147 = por %p145, %p146
    %p148 = scmp.ne.s32.totalorder %s134, %s135
    %p149 = scmp.eq.s32.totalorder %s17, 4
    %p150 = por %p148, %p149
    %p152 = scmp.ne.s32.totalorder %s135, %s151
    %p153 = scmp.eq.s32.totalorder %s17, 0
    %p154 = por %p152, %p153
    %p155 = scmp.le.s32.totalorder 1, %s11
    %p156 = scmp.lt.s32.totalorder %s11, 6
    %p157 = pnand %p155, %p156
    %p158 = pneg %p157
    // Predicated region
    $region9: #{net_forward.2} parent=5 // pred_check
      _
    $region10: #{net_forward.2} parent=5 // pred_check_branch
      %160 = sbr.rel (%p157) target = $region12
    $region11: #{net_forward.2} parent=5 // pred_region
      %s161 = ssub.s32 %s11, 1
      // Predicated region
      $region13: #{net_forward.2} parent=11 // pred_check
        %p162 = pneg %p58
      $region14: #{net_forward.2} parent=11 // pred_check_branch
        %164 = sbr.rel (%p162) target = $region16
      $region15: #{net_forward.2} parent=11 // pred_region
        _
      $region16: #{net_forward.2} parent=11 // pred_fallthru
        _
      // Predicated region
      $region17: #{net_forward.2} parent=11 // pred_check
        %p165 = pneg %p79
      $region18: #{net_forward.2} parent=11 // pred_check_branch
        %167 = sbr.rel (%p165) target = $region20
      $region19: #{net_forward.2} parent=11 // pred_region
        _
      $region20: #{net_forward.2} parent=11 // pred_fallthru
        _
      // Predicated region
      $region21: #{net_forward.2} parent=11 // pred_check
        %p168 = pneg %p100
      $region22: #{net_forward.2} parent=11 // pred_check_branch
        %170 = sbr.rel (%p168) target = $region24
      $region23: #{net_forward.2} parent=11 // pred_region
        _
      $region24: #{net_forward.2} parent=11 // pred_fallthru
        _
      // Predicated region
      $region25: #{net_forward.2} parent=11 // pred_check
        %p171 = pneg %p121
      $region26: #{net_forward.2} parent=11 // pred_check_branch
        %173 = sbr.rel (%p171) target = $region28
      $region27: #{net_forward.2} parent=11 // pred_region
        _
      $region28: #{net_forward.2} parent=11 // pred_fallthru
        _
    $region12: #{net_forward.2} parent=5 // pred_fallthru
      _
    %p174 = scmp.lt.s32.totalorder %s11, 5
    // Predicated region
    $region29: #{net_forward.2} parent=5 // pred_check
      %p175 = pneg %p174
    $region30: #{net_forward.2} parent=5 // pred_check_branch
      %177 = sbr.rel (%p175) target = $region32
    $region31: #{net_forward.2} parent=5 // pred_region
      // Predicated region
      $region33: #{net_forward.2} parent=31 // pred_check
        %p178 = pneg %p31
      $region34: #{net_forward.2} parent=31 // pred_check_branch
        %180 = sbr.rel (%p178) target = $region36
      $region35: #{net_forward.2} parent=31 // pred_region
        %s181 = smul.u32 50, %s11
        %p182 = scmp.lt.s32.totalorder %s181, 249
        %s183 = scalar_select %p182, %s181, 249
        %s184 = smul.addr %s183, 2
        %s185 = smul.addr %s184, 4
        %s186 = scalar_lea.vmem %s0, %s185
        %s187 = smul.u32 50, %s11
      $region36: #{net_forward.2} parent=31 // pred_fallthru
        _
    $region32: #{net_forward.2} parent=5 // pred_fallthru
      _
    %p188 = scmp.le.s32.totalorder 1, %s11
    %p189 = scmp.lt.s32.totalorder %s11, 6
    %p190 = pnand %p188, %p189
    %p191 = pneg %p190
    // Predicated region
    $region37: #{net_forward.2} parent=5 // pred_check
      _
    $region38: #{net_forward.2} parent=5 // pred_check_branch
      %193 = sbr.rel (%p190) target = $region40
    $region39: #{net_forward.2} parent=5 // pred_region
      %s194 = ssub.s32 %s11, 1
      %s195 = smul.u32 50, %s16
      %p196 = scmp.lt.s32.totalorder %s195, 249
      %s197 = scalar_select %p196, %s195, 249
      %s198 = smul.addr %s197, 2
      %s199 = smul.addr %s198, 4
      %s200 = scalar_lea.vmem %s0, %s199
      %p201 = pneg %p37
      %p202 = pneg %p34
      %p203 = pneg %p58
      %p204 = pneg %p55
      %p205 = pneg %p79
      %p206 = pneg %p76
      %p207 = pneg %p100
      %p208 = pneg %p97
      %p209 = pneg %p121
      %p210 = pneg %p118
      %p211 = pneg %p147
      %p212 = pneg %p144
      %s213 = smul.u32 50, %s16
      %p214 = scmp.lt.s32.totalorder %s213, 249
      %s215 = scalar_select %p214, %s213, 249
      %s216 = smul.addr %s215, 6
      %s217 = smul.addr %s216, 4
      %s218 = scalar_lea.vmem %s5, %s217
      %s219 = smul.u32 50, %s16
      %p220 = scmp.lt.s32.totalorder %s219, 249
      %s221 = scalar_select %p220, %s219, 249
      %s222 = smul.addr %s221, 2
      %s223 = smul.addr %s222, 4
      %s224 = scalar_lea.vmem %s0, %s223
      %s225 = smul.u32 50, %s16
      %s226 = smul.u32 50, %s16
      %p227 = scmp.lt.s32.totalorder %s226, 249
      %s228 = scalar_select %p227, %s226, 249
      %s229 = smul.addr %s228, 6
      %s230 = smul.addr %s229, 4
      %s231 = scalar_lea.vmem %s5, %s230
      %s232 = smul.u32 50, %s16
      %v234 = vld [vmem:[%s224] sm:$0xff]
      %v235 = vld [vmem:[%s224 + $0x8] sm:$0xff]
      %v236 = vld [vmem:[%s224 + $0x10] sm:$0xff]
      %v237 = vld [vmem:[%s224 + $0x18] sm:$0xff]
      %v238 = vld [vmem:[%s224 + $0x20] sm:$0xff]
      %v239 = vld [vmem:[%s224 + $0x28] sm:$0xff]
      %v240 = vld [vmem:[%s224 + $0x30] sm:$0xff]
      %v241 = vld [vmem:[%s224 + $0x38] sm:$0xff]
      %v242 = vld [vmem:[%s224 + $0x40] sm:$0xff]
      %v243 = vld [vmem:[%s224 + $0x48] sm:$0xff]
      %v244 = vld [vmem:[%s224 + $0x50] sm:$0xff]
      %v245 = vld [vmem:[%s224 + $0x58] sm:$0xff]
      %v246 = vld [vmem:[%s224 + $0x60] sm:$0xff]
      %v247 = vld [vmem:[%s224 + $0x68] sm:$0xff]
      %v248 = vld [vmem:[%s224 + $0x70] sm:$0xff]
      %v249 = vld [vmem:[%s224 + $0x78] sm:$0xff]
      %v250 = vld [vmem:[%s224 + $0x80] sm:$0xff]
      %v251 = vld [vmem:[%s224 + $0x88] sm:$0xff]
      %v252 = vld [vmem:[%s224 + $0x90] sm:$0xff]
      %v253 = vld [vmem:[%s224 + $0x98] sm:$0xff]
      %v254 = vld [vmem:[%s224 + $0xa0] sm:$0xff]
      %v255 = vld [vmem:[%s224 + $0xa8] sm:$0xff]
      %v256 = vld [vmem:[%s224 + $0xb0] sm:$0xff]
      %v257 = vld [vmem:[%s224 + $0xb8] sm:$0xff]
      %v258 = vld [vmem:[%s224 + $0xc0] sm:$0xff]
      %v259 = vld [vmem:[%s224 + $0xc8] sm:$0xff]
      %v260 = vld [vmem:[%s224 + $0xd0] sm:$0xff]
      %v261 = vld [vmem:[%s224 + $0xd8] sm:$0xff]
      %v262 = vld [vmem:[%s224 + $0xe0] sm:$0xff]
      %v263 = vld [vmem:[%s224 + $0xe8] sm:$0xff]
      %v264 = vld [vmem:[%s224 + $0xf0] sm:$0xff]
      %v265 = vld [vmem:[%s224 + $0xf8] sm:$0xff]
      %v266 = vld [vmem:[%s224 + $0x100] sm:$0xff]
      %v267 = vld [vmem:[%s224 + $0x108] sm:$0xff]
      %v268 = vld [vmem:[%s224 + $0x110] sm:$0xff]
      %v269 = vld [vmem:[%s224 + $0x118] sm:$0xff]
      %v270 = vld [vmem:[%s224 + $0x120] sm:$0xff]
      %v271 = vld [vmem:[%s224 + $0x128] sm:$0xff]
      %v272 = vld [vmem:[%s224 + $0x130] sm:$0xff]
      %v273 = vld [vmem:[%s224 + $0x138] sm:$0xff]
      %v274 = vld [vmem:[%s224 + $0x140] sm:$0xff]
      %v275 = vld [vmem:[%s224 + $0x148] sm:$0xff]
      %v276 = vld [vmem:[%s224 + $0x150] sm:$0xff]
      %v277 = vld [vmem:[%s224 + $0x158] sm:$0xff]
      %v278 = vld [vmem:[%s224 + $0x160] sm:$0xff]
      %v279 = vld [vmem:[%s224 + $0x168] sm:$0xff]
      %v280 = vld [vmem:[%s224 + $0x170] sm:$0xff]
      %v281 = vld [vmem:[%s224 + $0x178] sm:$0xff]
      %v282 = vld [vmem:[%s224 + $0x180] sm:$0xff]
      %v283 = vld [vmem:[%s224 + $0x188] sm:$0xff]
      %v284 = vld [vmem:[%s1] sm:$0xff]
      %v285 = vld [vmem:[%s1 + $0x8] sm:$0xff]
      %v286 = vld [vmem:[%s1 + $0x10] sm:$0xff]
      %v287 = vld [vmem:[%s1 + $0x18] sm:$0xff]
      %v288 = vld [vmem:[%s1 + $0x20] sm:$0xff]
      %v289 = vld [vmem:[%s1 + $0x28] sm:$0xff]
      %v290 = vld [vmem:[%s1 + $0x30] sm:$0xff]
      %v291 = vld [vmem:[%s1 + $0x38] sm:$0xff]
      %v292 = vld [vmem:[%s1 + $0x40] sm:$0xff]
      %v293 = vld [vmem:[%s1 + $0x48] sm:$0xff]
      %v294 = vld [vmem:[%s1 + $0x50] sm:$0xff]
      %v295 = vld [vmem:[%s1 + $0x58] sm:$0xff]
      %v296 = vld [vmem:[%s1 + $0x60] sm:$0xff]
      %v297 = vld [vmem:[%s1 + $0x68] sm:$0xff]
      %v298 = vld [vmem:[%s1 + $0x70] sm:$0xff]
      %v299 = vld [vmem:[%s1 + $0x78] sm:$0xff]
      %v300 = vld [vmem:[%s1 + $0x80] sm:$0xff]
      %v301 = vld [vmem:[%s1 + $0x88] sm:$0xff]
      %v302 = vld [vmem:[%s1 + $0x90] sm:$0xff]
      %v303 = vld [vmem:[%s1 + $0x98] sm:$0xff]
      %v304 = vld [vmem:[%s1 + $0xa0] sm:$0xff]
      %v305 = vld [vmem:[%s1 + $0xa8] sm:$0xff]
      %v306 = vld [vmem:[%s1 + $0xb0] sm:$0xff]
      %v307 = vld [vmem:[%s1 + $0xb8] sm:$0xff]
      %v308 = vld [vmem:[%s1 + $0xc0] sm:$0xff]
      %v309 = vld [vmem:[%s1 + $0xc8] sm:$0xff]
      %v310 = vld [vmem:[%s1 + $0xd0] sm:$0xff]
      %v311 = vld [vmem:[%s1 + $0xd8] sm:$0xff]
      %v312 = vld [vmem:[%s1 + $0xe0] sm:$0xff]
      %v313 = vld [vmem:[%s1 + $0xe8] sm:$0xff]
      %v314 = vld [vmem:[%s1 + $0xf0] sm:$0xff]
      %v315 = vld [vmem:[%s1 + $0xf8] sm:$0xff]
      %v316 = vld [vmem:[%s1 + $0x100] sm:$0xff]
      %v317 = vld [vmem:[%s1 + $0x108] sm:$0xff]
      %v318 = vld [vmem:[%s1 + $0x110] sm:$0xff]
      %v319 = vld [vmem:[%s1 + $0x118] sm:$0xff]
      %v320 = vld [vmem:[%s1 + $0x120] sm:$0xff]
      %v321 = vld [vmem:[%s1 + $0x128] sm:$0xff]
      %v322 = vld [vmem:[%s1 + $0x130] sm:$0xff]
      %v323 = vld [vmem:[%s1 + $0x138] sm:$0xff]
      %v324 = vld [vmem:[%s1 + $0x140] sm:$0xff]
      %v325 = vld [vmem:[%s1 + $0x148] sm:$0xff]
      %v326 = vld [vmem:[%s1 + $0x150] sm:$0xff]
      %v327 = vld [vmem:[%s1 + $0x158] sm:$0xff]
      %v328 = vld [vmem:[%s1 + $0x160] sm:$0xff]
      %v329 = vld [vmem:[%s1 + $0x168] sm:$0xff]
      %v330 = vld [vmem:[%s1 + $0x170] sm:$0xff]
      %v331 = vld [vmem:[%s1 + $0x178] sm:$0xff]
      %v332 = vld [vmem:[%s1 + $0x180] sm:$0xff]
      %v333 = vld [vmem:[%s1 + $0x188] sm:$0xff]
      %v334 = vld [vmem:[%s1 + $0x190] sm:$0xff]
      %v335 = vld [vmem:[%s1 + $0x198] sm:$0xff]
      %v336 = vld [vmem:[%s1 + $0x1a0] sm:$0xff]
      %v337 = vld [vmem:[%s1 + $0x1a8] sm:$0xff]
      %v338 = vld [vmem:[%s1 + $0x1b0] sm:$0xff]
      %v339 = vld [vmem:[%s1 + $0x1b8] sm:$0xff]
      %v340 = vld [vmem:[%s2] sm:$0xf]
      %v342 = vperm.slane %v340, 0
      %v343 = vperm.slane %v340, 1
      %v344 = vperm.slane %v340, 2
      %v345 = vperm.slane %v340, 3
      %v400 = vunpack.c.l.b16 %v234
      %v401 = vunpack.c.h.b16 %v234
      %v402 = vunpack.c.l.b16 %v235
      %v403 = vunpack.c.h.b16 %v235
      %v404 = vunpack.c.l.b16 %v236
      %v405 = vunpack.c.h.b16 %v236
      %v406 = vunpack.c.l.b16 %v237
      %v407 = vunpack.c.h.b16 %v237
      %v408 = vunpack.c.l.b16 %v238
      %v409 = vunpack.c.h.b16 %v238
      %v410 = vunpack.c.l.b16 %v239
      %v411 = vunpack.c.h.b16 %v239
      %v412 = vunpack.c.l.b16 %v240
      %v413 = vunpack.c.h.b16 %v240
      %v414 = vunpack.c.l.b16 %v241
      %v415 = vunpack.c.h.b16 %v241
      %v416 = vunpack.c.l.b16 %v242
      %v417 = vunpack.c.h.b16 %v242
      %v418 = vunpack.c.l.b16 %v243
      %v419 = vunpack.c.h.b16 %v243
      %v420 = vunpack.c.l.b16 %v244
      %v421 = vunpack.c.h.b16 %v244
      %v422 = vunpack.c.l.b16 %v245
      %v423 = vunpack.c.h.b16 %v245
      %v424 = vunpack.c.l.b16 %v246
      %v425 = vunpack.c.h.b16 %v246
      %v426 = vunpack.c.l.b16 %v247
      %v427 = vunpack.c.h.b16 %v247
      %v428 = vunpack.c.l.b16 %v248
      %v429 = vunpack.c.h.b16 %v248
      %v430 = vunpack.c.l.b16 %v249
      %v431 = vunpack.c.h.b16 %v249
      %v432 = vunpack.c.l.b16 %v250
      %v433 = vunpack.c.h.b16 %v250
      %v434 = vunpack.c.l.b16 %v251
      %v435 = vunpack.c.h.b16 %v251
      %v436 = vunpack.c.l.b16 %v252
      %v437 = vunpack.c.h.b16 %v252
      %v438 = vunpack.c.l.b16 %v253
      %v439 = vunpack.c.h.b16 %v253
      %v440 = vunpack.c.l.b16 %v254
      %v441 = vunpack.c.h.b16 %v254
      %v442 = vunpack.c.l.b16 %v255
      %v443 = vunpack.c.h.b16 %v255
      %v444 = vunpack.c.l.b16 %v256
      %v445 = vunpack.c.h.b16 %v256
      %v446 = vunpack.c.l.b16 %v257
      %v447 = vunpack.c.h.b16 %v257
      %v448 = vunpack.c.l.b16 %v258
      %v449 = vunpack.c.h.b16 %v258
      %v450 = vunpack.c.l.b16 %v259
      %v451 = vunpack.c.h.b16 %v259
      %v452 = vunpack.c.l.b16 %v260
      %v453 = vunpack.c.h.b16 %v260
      %v454 = vunpack.c.l.b16 %v261
      %v455 = vunpack.c.h.b16 %v261
      %v456 = vunpack.c.l.b16 %v262
      %v457 = vunpack.c.h.b16 %v262
      %v458 = vunpack.c.l.b16 %v263
      %v459 = vunpack.c.h.b16 %v263
      %v460 = vunpack.c.l.b16 %v264
      %v461 = vunpack.c.h.b16 %v264
      %v462 = vunpack.c.l.b16 %v265
      %v463 = vunpack.c.h.b16 %v265
      %v464 = vunpack.c.l.b16 %v266
      %v465 = vunpack.c.h.b16 %v266
      %v466 = vunpack.c.l.b16 %v267
      %v467 = vunpack.c.h.b16 %v267
      %v468 = vunpack.c.l.b16 %v268
      %v469 = vunpack.c.h.b16 %v268
      %v470 = vunpack.c.l.b16 %v269
      %v471 = vunpack.c.h.b16 %v269
      %v472 = vunpack.c.l.b16 %v270
      %v473 = vunpack.c.h.b16 %v270
      %v474 = vunpack.c.l.b16 %v271
      %v475 = vunpack.c.h.b16 %v271
      %v476 = vunpack.c.l.b16 %v272
      %v477 = vunpack.c.h.b16 %v272
      %v478 = vunpack.c.l.b16 %v273
      %v479 = vunpack.c.h.b16 %v273
      %v480 = vunpack.c.l.b16 %v274
      %v481 = vunpack.c.h.b16 %v274
      %v482 = vunpack.c.l.b16 %v275
      %v483 = vunpack.c.h.b16 %v275
      %v484 = vunpack.c.l.b16 %v276
      %v485 = vunpack.c.h.b16 %v276
      %v486 = vunpack.c.l.b16 %v277
      %v487 = vunpack.c.h.b16 %v277
      %v488 = vunpack.c.l.b16 %v278
      %v489 = vunpack.c.h.b16 %v278
      %v490 = vunpack.c.l.b16 %v279
      %v491 = vunpack.c.h.b16 %v279
      %v492 = vunpack.c.l.b16 %v280
      %v493 = vunpack.c.h.b16 %v280
      %v494 = vunpack.c.l.b16 %v281
      %v495 = vunpack.c.h.b16 %v281
      %v496 = vunpack.c.l.b16 %v282
      %v497 = vunpack.c.h.b16 %v282
      %v498 = vunpack.c.l.b16 %v283
      %v499 = vunpack.c.h.b16 %v283
      %v500 = vpack.c.b16 %v402, %v400
      %v501 = vpack.c.b16 %v403, %v401
      %v502 = vpack.c.b16 %v406, %v404
      %v503 = vpack.c.b16 %v407, %v405
      %v504 = vpack.c.b16 %v410, %v408
      %v505 = vpack.c.b16 %v411, %v409
      %v506 = vpack.c.b16 %v414, %v412
      %v507 = vpack.c.b16 %v415, %v413
      %v508 = vpack.c.b16 %v418, %v416
      %v509 = vpack.c.b16 %v419, %v417
      %v510 = vpack.c.b16 %v422, %v420
      %v511 = vpack.c.b16 %v423, %v421
      %v512 = vpack.c.b16 %v426, %v424
      %v513 = vpack.c.b16 %v427, %v425
      %v514 = vpack.c.b16 %v430, %v428
      %v515 = vpack.c.b16 %v431, %v429
      %v516 = vpack.c.b16 %v434, %v432
      %v517 = vpack.c.b16 %v435, %v433
      %v518 = vpack.c.b16 %v438, %v436
      %v519 = vpack.c.b16 %v439, %v437
      %v520 = vpack.c.b16 %v442, %v440
      %v521 = vpack.c.b16 %v443, %v441
      %v522 = vpack.c.b16 %v446, %v444
      %v523 = vpack.c.b16 %v447, %v445
      %v524 = vpack.c.b16 %v450, %v448
      %v525 = vpack.c.b16 %v451, %v449
      %v526 = vpack.c.b16 %v454, %v452
      %v527 = vpack.c.b16 %v455, %v453
      %v528 = vpack.c.b16 %v458, %v456
      %v529 = vpack.c.b16 %v459, %v457
      %v530 = vpack.c.b16 %v462, %v460
      %v531 = vpack.c.b16 %v463, %v461
      %v532 = vpack.c.b16 %v466, %v464
      %v533 = vpack.c.b16 %v467, %v465
      %v534 = vpack.c.b16 %v470, %v468
      %v535 = vpack.c.b16 %v471, %v469
      %v536 = vpack.c.b16 %v474, %v472
      %v537 = vpack.c.b16 %v475, %v473
      %v538 = vpack.c.b16 %v478, %v476
      %v539 = vpack.c.b16 %v479, %v477
      %v540 = vpack.c.b16 %v482, %v480
      %v541 = vpack.c.b16 %v483, %v481
      %v542 = vpack.c.b16 %v486, %v484
      %v543 = vpack.c.b16 %v487, %v485
      %v544 = vpack.c.b16 %v490, %v488
      %v545 = vpack.c.b16 %v491, %v489
      %v546 = vpack.c.b16 %v494, %v492
      %v547 = vpack.c.b16 %v495, %v493
      %v548 = vpack.c.b16 %v498, %v496
      %v549 = vpack.c.b16 %v499, %v497
      %v631 = vunpack.c.l.b16 %v284
      %v632 = vunpack.c.h.b16 %v284
      %v633 = vunpack.c.l.b16 %v285
      %v634 = vunpack.c.h.b16 %v285
      %v635 = vunpack.c.l.b16 %v286
      %v636 = vunpack.c.h.b16 %v286
      %v637 = vunpack.c.l.b16 %v287
      %v638 = vunpack.c.h.b16 %v287
      %v639 = vunpack.c.l.b16 %v288
      %v640 = vunpack.c.h.b16 %v288
      %v641 = vunpack.c.l.b16 %v289
      %v642 = vunpack.c.h.b16 %v289
      %v643 = vunpack.c.l.b16 %v290
      %v644 = vunpack.c.h.b16 %v290
      %v645 = vunpack.c.l.b16 %v291
      %v646 = vunpack.c.h.b16 %v291
      %v647 = vunpack.c.l.b16 %v292
      %v648 = vunpack.c.h.b16 %v292
      %v649 = vunpack.c.l.b16 %v293
      %v650 = vunpack.c.h.b16 %v293
      %v651 = vunpack.c.l.b16 %v294
      %v652 = vunpack.c.h.b16 %v294
      %v653 = vunpack.c.l.b16 %v295
      %v654 = vunpack.c.h.b16 %v295
      %v655 = vunpack.c.l.b16 %v296
      %v656 = vunpack.c.h.b16 %v296
      %v657 = vunpack.c.l.b16 %v297
      %v658 = vunpack.c.h.b16 %v297
      %v659 = vunpack.c.l.b16 %v298
      %v660 = vunpack.c.h.b16 %v298
      %v661 = vunpack.c.l.b16 %v299
      %v662 = vunpack.c.h.b16 %v299
      %v663 = vunpack.c.l.b16 %v300
      %v664 = vunpack.c.h.b16 %v300
      %v665 = vunpack.c.l.b16 %v301
      %v666 = vunpack.c.h.b16 %v301
      %v667 = vunpack.c.l.b16 %v302
      %v668 = vunpack.c.h.b16 %v302
      %v669 = vunpack.c.l.b16 %v303
      %v670 = vunpack.c.h.b16 %v303
      %v671 = vunpack.c.l.b16 %v304
      %v672 = vunpack.c.h.b16 %v304
      %v673 = vunpack.c.l.b16 %v305
      %v674 = vunpack.c.h.b16 %v305
      %v675 = vunpack.c.l.b16 %v306
      %v676 = vunpack.c.h.b16 %v306
      %v677 = vunpack.c.l.b16 %v307
      %v678 = vunpack.c.h.b16 %v307
      %v679 = vunpack.c.l.b16 %v308
      %v680 = vunpack.c.h.b16 %v308
      %v681 = vunpack.c.l.b16 %v309
      %v682 = vunpack.c.h.b16 %v309
      %v683 = vunpack.c.l.b16 %v310
      %v684 = vunpack.c.h.b16 %v310
      %v685 = vunpack.c.l.b16 %v311
      %v686 = vunpack.c.h.b16 %v311
      %v687 = vunpack.c.l.b16 %v312
      %v688 = vunpack.c.h.b16 %v312
      %v689 = vunpack.c.l.b16 %v313
      %v690 = vunpack.c.h.b16 %v313
      %v691 = vunpack.c.l.b16 %v314
      %v692 = vunpack.c.h.b16 %v314
      %v693 = vunpack.c.l.b16 %v315
      %v694 = vunpack.c.h.b16 %v315
      %v695 = vunpack.c.l.b16 %v316
      %v696 = vunpack.c.h.b16 %v316
      %v697 = vunpack.c.l.b16 %v317
      %v698 = vunpack.c.h.b16 %v317
      %v699 = vunpack.c.l.b16 %v318
      %v700 = vunpack.c.h.b16 %v318
      %v701 = vunpack.c.l.b16 %v319
      %v702 = vunpack.c.h.b16 %v319
      %v703 = vunpack.c.l.b16 %v320
      %v704 = vunpack.c.h.b16 %v320
      %v705 = vunpack.c.l.b16 %v321
      %v706 = vunpack.c.h.b16 %v321
      %v707 = vunpack.c.l.b16 %v322
      %v708 = vunpack.c.h.b16 %v322
      %v709 = vunpack.c.l.b16 %v323
      %v710 = vunpack.c.h.b16 %v323
      %v711 = vunpack.c.l.b16 %v324
      %v712 = vunpack.c.h.b16 %v324
      %v713 = vunpack.c.l.b16 %v325
      %v714 = vunpack.c.h.b16 %v325
      %v715 = vunpack.c.l.b16 %v326
      %v716 = vunpack.c.h.b16 %v326
      %v717 = vunpack.c.l.b16 %v327
      %v718 = vunpack.c.h.b16 %v327
      %v719 = vunpack.c.l.b16 %v328
      %v720 = vunpack.c.h.b16 %v328
      %v721 = vunpack.c.l.b16 %v329
      %v722 = vunpack.c.h.b16 %v329
      %v723 = vunpack.c.l.b16 %v330
      %v724 = vunpack.c.h.b16 %v330
      %v725 = vunpack.c.l.b16 %v331
      %v726 = vunpack.c.h.b16 %v331
      %v727 = vunpack.c.l.b16 %v332
      %v728 = vunpack.c.h.b16 %v332
      %v729 = vunpack.c.l.b16 %v333
      %v730 = vunpack.c.h.b16 %v333
      %v731 = vunpack.c.l.b16 %v334
      %v732 = vunpack.c.h.b16 %v334
      %v733 = vunpack.c.l.b16 %v335
      %v734 = vunpack.c.h.b16 %v335
      %v735 = vunpack.c.l.b16 %v336
      %v736 = vunpack.c.h.b16 %v336
      %v737 = vunpack.c.l.b16 %v337
      %v738 = vunpack.c.h.b16 %v337
      %v739 = vunpack.c.l.b16 %v338
      %v740 = vunpack.c.h.b16 %v338
      %v741 = vunpack.c.l.b16 %v339
      %v742 = vunpack.c.h.b16 %v339
      %v743 = vpack.c.b16 %v635, %v631
      %v744 = vpack.c.b16 %v636, %v632
      %v745 = vpack.c.b16 %v637, %v633
      %v746 = vpack.c.b16 %v638, %v634
      %v747 = vpack.c.b16 %v643, %v639
      %v748 = vpack.c.b16 %v644, %v640
      %v749 = vpack.c.b16 %v645, %v641
      %v750 = vpack.c.b16 %v646, %v642
      %v751 = vpack.c.b16 %v651, %v647
      %v752 = vpack.c.b16 %v652, %v648
      %v753 = vpack.c.b16 %v653, %v649
      %v754 = vpack.c.b16 %v654, %v650
      %v755 = vpack.c.b16 %v659, %v655
      %v756 = vpack.c.b16 %v660, %v656
      %v757 = vpack.c.b16 %v661, %v657
      %v758 = vpack.c.b16 %v662, %v658
      %v759 = vpack.c.b16 %v667, %v663
      %v760 = vpack.c.b16 %v668, %v664
      %v761 = vpack.c.b16 %v669, %v665
      %v762 = vpack.c.b16 %v670, %v666
      %v763 = vpack.c.b16 %v675, %v671
      %v764 = vpack.c.b16 %v676, %v672
      %v765 = vpack.c.b16 %v677, %v673
      %v766 = vpack.c.b16 %v678, %v674
      %v767 = vpack.c.b16 %v683, %v679
      %v768 = vpack.c.b16 %v684, %v680
      %v769 = vpack.c.b16 %v685, %v681
      %v770 = vpack.c.b16 %v686, %v682
      %v771 = vpack.c.b16 %v691, %v687
      %v772 = vpack.c.b16 %v692, %v688
      %v773 = vpack.c.b16 %v693, %v689
      %v774 = vpack.c.b16 %v694, %v690
      %v775 = vpack.c.b16 %v699, %v695
      %v776 = vpack.c.b16 %v700, %v696
      %v777 = vpack.c.b16 %v701, %v697
      %v778 = vpack.c.b16 %v702, %v698
      %v779 = vpack.c.b16 %v707, %v703
      %v780 = vpack.c.b16 %v708, %v704
      %v781 = vpack.c.b16 %v709, %v705
      %v782 = vpack.c.b16 %v710, %v706
      %v783 = vpack.c.b16 %v715, %v711
      %v784 = vpack.c.b16 %v716, %v712
      %v785 = vpack.c.b16 %v717, %v713
      %v786 = vpack.c.b16 %v718, %v714
      %v787 = vpack.c.b16 %v723, %v719
      %v788 = vpack.c.b16 %v724, %v720
      %v789 = vpack.c.b16 %v725, %v721
      %v790 = vpack.c.b16 %v726, %v722
      %v791 = vpack.c.b16 %v731, %v727
      %v792 = vpack.c.b16 %v732, %v728
      %v793 = vpack.c.b16 %v733, %v729
      %v794 = vpack.c.b16 %v734, %v730
      %v795 = vpack.c.b16 %v739, %v735
      %v796 = vpack.c.b16 %v740, %v736
      %v797 = vpack.c.b16 %v741, %v737
      %v798 = vpack.c.b16 %v742, %v738
      %vm855 = vcmask 785408
      %v857 = vsel %vm855, %v501, 0
      %v860 = vsel %vm855, %v503, 0
      %v863 = vsel %vm855, %v505, 0
      %v866 = vsel %vm855, %v507, 0
      %v869 = vsel %vm855, %v509, 0
      %v872 = vsel %vm855, %v511, 0
      %v875 = vsel %vm855, %v513, 0
      %v878 = vsel %vm855, %v515, 0
      %v881 = vsel %vm855, %v517, 0
      %v884 = vsel %vm855, %v519, 0
      %v887 = vsel %vm855, %v521, 0
      %v890 = vsel %vm855, %v523, 0
      %v893 = vsel %vm855, %v525, 0
      %v896 = vsel %vm855, %v527, 0
      %v899 = vsel %vm855, %v529, 0
      %v902 = vsel %vm855, %v531, 0
      %v905 = vsel %vm855, %v533, 0
      %v908 = vsel %vm855, %v535, 0
      %v911 = vsel %vm855, %v537, 0
      %v914 = vsel %vm855, %v539, 0
      %v917 = vsel %vm855, %v541, 0
      %v920 = vsel %vm855, %v543, 0
      %v923 = vsel %vm855, %v545, 0
      %v926 = vsel %vm855, %v547, 0
      %v929 = vsel %vm855, %v549, 0
      %931 = vmatpush.bf16.msra.mxu0 %v771
      %932 = vmatpush.bf16.msra.mxu0 %v767
      %933 = vmatpush.bf16.msra.mxu0 %v763
      %934 = vmatpush.bf16.msra.mxu0 %v759
      %935 = vmatpush.bf16.msra.mxu0 %v755
      %936 = vmatpush.bf16.msra.mxu0 %v751
      %937 = vmatpush.bf16.msra.mxu0 %v747
      %938 = vmatpush.bf16.msra.mxu0 %v743
      %939 = vmatmul.bf16.gmra.mxu0 %v500
      %v940 = vpop.f32.mrf.mxu0
      %v941 = vadd.f32 %v342, %v940
      %v942 = vpop.f32.mrf.mxu0
      %v943 = vadd.f32 %v342, %v942
      %944 = vmatmul.bf16.gmra.mxu0 %v502
      %v945 = vpop.f32.mrf.mxu0
      %v946 = vadd.f32 %v342, %v945
      %v947 = vpop.f32.mrf.mxu0
      %v948 = vadd.f32 %v342, %v947
      %949 = vmatmul.bf16.gmra.mxu0 %v504
      %v950 = vpop.f32.mrf.mxu0
      %v951 = vadd.f32 %v342, %v950
      %v952 = vpop.f32.mrf.mxu0
      %v953 = vadd.f32 %v342, %v952
      %954 = vmatmul.bf16.gmra.mxu0 %v506
      %v955 = vpop.f32.mrf.mxu0
      %v956 = vadd.f32 %v342, %v955
      %v957 = vpop.f32.mrf.mxu0
      %v958 = vadd.f32 %v342, %v957
      %959 = vmatmul.bf16.gmra.mxu0 %v508
      %v960 = vpop.f32.mrf.mxu0
      %v961 = vadd.f32 %v342, %v960
      %v962 = vpop.f32.mrf.mxu0
      %v963 = vadd.f32 %v342, %v962
      %964 = vmatmul.bf16.gmra.mxu0 %v510
      %v965 = vpop.f32.mrf.mxu0
      %v966 = vadd.f32 %v342, %v965
      %v967 = vpop.f32.mrf.mxu0
      %v968 = vadd.f32 %v342, %v967
      %969 = vmatmul.bf16.gmra.mxu0 %v512
      %v970 = vpop.f32.mrf.mxu0
      %v971 = vadd.f32 %v342, %v970
      %v972 = vpop.f32.mrf.mxu0
      %v973 = vadd.f32 %v342, %v972
      %974 = vmatmul.bf16.gmra.mxu0 %v514
      %v975 = vpop.f32.mrf.mxu0
      %v976 = vadd.f32 %v342, %v975
      %v977 = vpop.f32.mrf.mxu0
      %v978 = vadd.f32 %v342, %v977
      %979 = vmatmul.bf16.gmra.mxu0 %v516
      %v980 = vpop.f32.mrf.mxu0
      %v981 = vadd.f32 %v342, %v980
      %v982 = vpop.f32.mrf.mxu0
      %v983 = vadd.f32 %v342, %v982
      %984 = vmatmul.bf16.gmra.mxu0 %v518
      %v985 = vpop.f32.mrf.mxu0
      %v986 = vadd.f32 %v342, %v985
      %v987 = vpop.f32.mrf.mxu0
      %v988 = vadd.f32 %v342, %v987
      %989 = vmatmul.bf16.gmra.mxu0 %v520
      %v990 = vpop.f32.mrf.mxu0
      %v991 = vadd.f32 %v342, %v990
      %v992 = vpop.f32.mrf.mxu0
      %v993 = vadd.f32 %v342, %v992
      %994 = vmatmul.bf16.gmra.mxu0 %v522
      %v995 = vpop.f32.mrf.mxu0
      %v996 = vadd.f32 %v342, %v995
      %v997 = vpop.f32.mrf.mxu0
      %v998 = vadd.f32 %v342, %v997
      %999 = vmatmul.bf16.gmra.mxu0 %v524
      %v1000 = vpop.f32.mrf.mxu0
      %v1001 = vadd.f32 %v342, %v1000
      %v1002 = vpop.f32.mrf.mxu0
      %v1003 = vadd.f32 %v342, %v1002
      %1004 = vmatmul.bf16.gmra.mxu0 %v526
      %v1005 = vpop.f32.mrf.mxu0
      %v1006 = vadd.f32 %v342, %v1005
      %v1007 = vpop.f32.mrf.mxu0
      %v1008 = vadd.f32 %v342, %v1007
      %1009 = vmatmul.bf16.gmra.mxu0 %v528
      %v1010 = vpop.f32.mrf.mxu0
      %v1011 = vadd.f32 %v342, %v1010
      %v1012 = vpop.f32.mrf.mxu0
      %v1013 = vadd.f32 %v342, %v1012
      %1014 = vmatmul.bf16.gmra.mxu0 %v530
      %v1015 = vpop.f32.mrf.mxu0
      %v1016 = vadd.f32 %v342, %v1015
      %v1017 = vpop.f32.mrf.mxu0
      %v1018 = vadd.f32 %v342, %v1017
      %1019 = vmatmul.bf16.gmra.mxu0 %v532
      %v1020 = vpop.f32.mrf.mxu0
      %v1021 = vadd.f32 %v342, %v1020
      %v1022 = vpop.f32.mrf.mxu0
      %v1023 = vadd.f32 %v342, %v1022
      %1024 = vmatmul.bf16.gmra.mxu0 %v534
      %v1025 = vpop.f32.mrf.mxu0
      %v1026 = vadd.f32 %v342, %v1025
      %v1027 = vpop.f32.mrf.mxu0
      %v1028 = vadd.f32 %v342, %v1027
      %1029 = vmatmul.bf16.gmra.mxu0 %v536
      %v1030 = vpop.f32.mrf.mxu0
      %v1031 = vadd.f32 %v342, %v1030
      %v1032 = vpop.f32.mrf.mxu0
      %v1033 = vadd.f32 %v342, %v1032
      %1034 = vmatmul.bf16.gmra.mxu0 %v538
      %v1035 = vpop.f32.mrf.mxu0
      %v1036 = vadd.f32 %v342, %v1035
      %v1037 = vpop.f32.mrf.mxu0
      %v1038 = vadd.f32 %v342, %v1037
      %1039 = vmatmul.bf16.gmra.mxu0 %v540
      %v1040 = vpop.f32.mrf.mxu0
      %v1041 = vadd.f32 %v342, %v1040
      %v1042 = vpop.f32.mrf.mxu0
      %v1043 = vadd.f32 %v342, %v1042
      %1044 = vmatmul.bf16.gmra.mxu0 %v542
      %v1045 = vpop.f32.mrf.mxu0
      %v1046 = vadd.f32 %v342, %v1045
      %v1047 = vpop.f32.mrf.mxu0
      %v1048 = vadd.f32 %v342, %v1047
      %1049 = vmatmul.bf16.gmra.mxu0 %v544
      %v1050 = vpop.f32.mrf.mxu0
      %v1051 = vadd.f32 %v342, %v1050
      %v1052 = vpop.f32.mrf.mxu0
      %v1053 = vadd.f32 %v342, %v1052
      %1054 = vmatmul.bf16.gmra.mxu0 %v546
      %v1055 = vpop.f32.mrf.mxu0
      %v1056 = vadd.f32 %v342, %v1055
      %v1057 = vpop.f32.mrf.mxu0
      %v1058 = vadd.f32 %v342, %v1057
      %1059 = vmatmul.bf16.gmra.mxu0 %v548
      %v1060 = vpop.f32.mrf.mxu0
      %v1061 = vadd.f32 %v342, %v1060
      %v1062 = vpop.f32.mrf.mxu0
      %v1063 = vadd.f32 %v342, %v1062
      %1064 = vdwg.mxu0
      %1065 = vmatpush.bf16.msra.mxu0 0
      %1066 = vmatpush.bf16.msra.mxu0 0
      %1067 = vmatpush.bf16.msra.mxu0 %v795
      %1068 = vmatpush.bf16.msra.mxu0 %v791
      %1069 = vmatpush.bf16.msra.mxu0 %v787
      %1070 = vmatpush.bf16.msra.mxu0 %v783
      %1071 = vmatpush.bf16.msra.mxu0 %v779
      %1072 = vmatpush.bf16.msra.mxu0 %v775
      %1073 = vmatmul.bf16.gmra.mxu0 %v857
      %v1074 = vpop.f32.mrf.mxu0
      %v1075 = vadd.f32 %v941, %v1074
      %v1076 = vpop.f32.mrf.mxu0
      %v1077 = vadd.f32 %v943, %v1076
      %1078 = vmatmul.bf16.gmra.mxu0 %v860
      %v1079 = vpop.f32.mrf.mxu0
      %v1080 = vadd.f32 %v946, %v1079
      %v1081 = vpop.f32.mrf.mxu0
      %v1082 = vadd.f32 %v948, %v1081
      %1083 = vmatmul.bf16.gmra.mxu0 %v863
      %v1084 = vpop.f32.mrf.mxu0
      %v1085 = vadd.f32 %v951, %v1084
      %v1086 = vpop.f32.mrf.mxu0
      %v1087 = vadd.f32 %v953, %v1086
      %1088 = vmatmul.bf16.gmra.mxu0 %v866
      %v1089 = vpop.f32.mrf.mxu0
      %v1090 = vadd.f32 %v956, %v1089
      %v1091 = vpop.f32.mrf.mxu0
      %v1092 = vadd.f32 %v958, %v1091
      %1093 = vmatmul.bf16.gmra.mxu0 %v869
      %v1094 = vpop.f32.mrf.mxu0
      %v1095 = vadd.f32 %v961, %v1094
      %v1096 = vpop.f32.mrf.mxu0
      %v1097 = vadd.f32 %v963, %v1096
      %1098 = vmatmul.bf16.gmra.mxu0 %v872
      %v1099 = vpop.f32.mrf.mxu0
      %v1100 = vadd.f32 %v966, %v1099
      %v1101 = vpop.f32.mrf.mxu0
      %v1102 = vadd.f32 %v968, %v1101
      %1103 = vmatmul.bf16.gmra.mxu0 %v875
      %v1104 = vpop.f32.mrf.mxu0
      %v1105 = vadd.f32 %v971, %v1104
      %v1106 = vpop.f32.mrf.mxu0
      %v1107 = vadd.f32 %v973, %v1106
      %1108 = vmatmul.bf16.gmra.mxu0 %v878
      %v1109 = vpop.f32.mrf.mxu0
      %v1110 = vadd.f32 %v976, %v1109
      %v1111 = vpop.f32.mrf.mxu0
      %v1112 = vadd.f32 %v978, %v1111
      %1113 = vmatmul.bf16.gmra.mxu0 %v881
      %v1114 = vpop.f32.mrf.mxu0
      %v1115 = vadd.f32 %v981, %v1114
      %v1116 = vpop.f32.mrf.mxu0
      %v1117 = vadd.f32 %v983, %v1116
      %1118 = vmatmul.bf16.gmra.mxu0 %v884
      %v1119 = vpop.f32.mrf.mxu0
      %v1120 = vadd.f32 %v986, %v1119
      %v1121 = vpop.f32.mrf.mxu0
      %v1122 = vadd.f32 %v988, %v1121
      %1123 = vmatmul.bf16.gmra.mxu0 %v887
      %v1124 = vpop.f32.mrf.mxu0
      %v1125 = vadd.f32 %v991, %v1124
      %v1126 = vpop.f32.mrf.mxu0
      %v1127 = vadd.f32 %v993, %v1126
      %1128 = vmatmul.bf16.gmra.mxu0 %v890
      %v1129 = vpop.f32.mrf.mxu0
      %v1130 = vadd.f32 %v996, %v1129
      %v1131 = vpop.f32.mrf.mxu0
      %v1132 = vadd.f32 %v998, %v1131
      %1133 = vmatmul.bf16.gmra.mxu0 %v893
      %v1134 = vpop.f32.mrf.mxu0
      %v1135 = vadd.f32 %v1001, %v1134
      %v1136 = vpop.f32.mrf.mxu0
      %v1137 = vadd.f32 %v1003, %v1136
      %1138 = vmatmul.bf16.gmra.mxu0 %v896
      %v1139 = vpop.f32.mrf.mxu0
      %v1140 = vadd.f32 %v1006, %v1139
      %v1141 = vpop.f32.mrf.mxu0
      %v1142 = vadd.f32 %v1008, %v1141
      %1143 = vmatmul.bf16.gmra.mxu0 %v899
      %v1144 = vpop.f32.mrf.mxu0
      %v1145 = vadd.f32 %v1011, %v1144
      %v1146 = vpop.f32.mrf.mxu0
      %v1147 = vadd.f32 %v1013, %v1146
      %1148 = vmatmul.bf16.gmra.mxu0 %v902
      %v1149 = vpop.f32.mrf.mxu0
      %v1150 = vadd.f32 %v1016, %v1149
      %v1151 = vpop.f32.mrf.mxu0
      %v1152 = vadd.f32 %v1018, %v1151
      %1153 = vmatmul.bf16.gmra.mxu0 %v905
      %v1154 = vpop.f32.mrf.mxu0
      %v1155 = vadd.f32 %v1021, %v1154
      %v1156 = vpop.f32.mrf.mxu0
      %v1157 = vadd.f32 %v1023, %v1156
      %1158 = vmatmul.bf16.gmra.mxu0 %v908
      %v1159 = vpop.f32.mrf.mxu0
      %v1160 = vadd.f32 %v1026, %v1159
      %v1161 = vpop.f32.mrf.mxu0
      %v1162 = vadd.f32 %v1028, %v1161
      %1163 = vmatmul.bf16.gmra.mxu0 %v911
      %v1164 = vpop.f32.mrf.mxu0
      %v1165 = vadd.f32 %v1031, %v1164
      %v1166 = vpop.f32.mrf.mxu0
      %v1167 = vadd.f32 %v1033, %v1166
      %1168 = vmatmul.bf16.gmra.mxu0 %v914
      %v1169 = vpop.f32.mrf.mxu0
      %v1170 = vadd.f32 %v1036, %v1169
      %v1171 = vpop.f32.mrf.mxu0
      %v1172 = vadd.f32 %v1038, %v1171
      %1173 = vmatmul.bf16.gmra.mxu0 %v917
      %v1174 = vpop.f32.mrf.mxu0
      %v1175 = vadd.f32 %v1041, %v1174
      %v1176 = vpop.f32.mrf.mxu0
      %v1177 = vadd.f32 %v1043, %v1176
      %1178 = vmatmul.bf16.gmra.mxu0 %v920
      %v1179 = vpop.f32.mrf.mxu0
      %v1180 = vadd.f32 %v1046, %v1179
      %v1181 = vpop.f32.mrf.mxu0
      %v1182 = vadd.f32 %v1048, %v1181
      %1183 = vmatmul.bf16.gmra.mxu0 %v923
      %v1184 = vpop.f32.mrf.mxu0
      %v1185 = vadd.f32 %v1051, %v1184
      %v1186 = vpop.f32.mrf.mxu0
      %v1187 = vadd.f32 %v1053, %v1186
      %1188 = vmatmul.bf16.gmra.mxu0 %v926
      %v1189 = vpop.f32.mrf.mxu0
      %v1190 = vadd.f32 %v1056, %v1189
      %v1191 = vpop.f32.mrf.mxu0
      %v1192 = vadd.f32 %v1058, %v1191
      %1193 = vmatmul.bf16.gmra.mxu0 %v929
      %v1194 = vpop.f32.mrf.mxu0
      %v1195 = vadd.f32 %v1061, %v1194
      %v1196 = vpop.f32.mrf.mxu0
      %v1197 = vadd.f32 %v1063, %v1196
      %1198 = vdwg.mxu0
      %1199 = vmatpush.bf16.msra.mxu0 %v772
      %1200 = vmatpush.bf16.msra.mxu0 %v768
      %1201 = vmatpush.bf16.msra.mxu0 %v764
      %1202 = vmatpush.bf16.msra.mxu0 %v760
      %1203 = vmatpush.bf16.msra.mxu0 %v756
      %1204 = vmatpush.bf16.msra.mxu0 %v752
      %1205 = vmatpush.bf16.msra.mxu0 %v748
      %1206 = vmatpush.bf16.msra.mxu0 %v744
      %1207 = vmatmul.bf16.gmra.mxu0 %v500
      %v1208 = vpop.f32.mrf.mxu0
      %v1209 = vadd.f32 %v343, %v1208
      %v1210 = vpop.f32.mrf.mxu0
      %v1211 = vadd.f32 %v343, %v1210
      %1212 = vmatmul.bf16.gmra.mxu0 %v502
      %v1213 = vpop.f32.mrf.mxu0
      %v1214 = vadd.f32 %v343, %v1213
      %v1215 = vpop.f32.mrf.mxu0
      %v1216 = vadd.f32 %v343, %v1215
      %1217 = vmatmul.bf16.gmra.mxu0 %v504
      %v1218 = vpop.f32.mrf.mxu0
      %v1219 = vadd.f32 %v343, %v1218
      %v1220 = vpop.f32.mrf.mxu0
      %v1221 = vadd.f32 %v343, %v1220
      %1222 = vmatmul.bf16.gmra.mxu0 %v506
      %v1223 = vpop.f32.mrf.mxu0
      %v1224 = vadd.f32 %v343, %v1223
      %v1225 = vpop.f32.mrf.mxu0
      %v1226 = vadd.f32 %v343, %v1225
      %1227 = vmatmul.bf16.gmra.mxu0 %v508
      %v1228 = vpop.f32.mrf.mxu0
      %v1229 = vadd.f32 %v343, %v1228
      %v1230 = vpop.f32.mrf.mxu0
      %v1231 = vadd.f32 %v343, %v1230
      %1232 = vmatmul.bf16.gmra.mxu0 %v510
      %v1233 = vpop.f32.mrf.mxu0
      %v1234 = vadd.f32 %v343, %v1233
      %v1235 = vpop.f32.mrf.mxu0
      %v1236 = vadd.f32 %v343, %v1235
      %1237 = vmatmul.bf16.gmra.mxu0 %v512
      %v1238 = vpop.f32.mrf.mxu0
      %v1239 = vadd.f32 %v343, %v1238
      %v1240 = vpop.f32.mrf.mxu0
      %v1241 = vadd.f32 %v343, %v1240
      %1242 = vmatmul.bf16.gmra.mxu0 %v514
      %v1243 = vpop.f32.mrf.mxu0
      %v1244 = vadd.f32 %v343, %v1243
      %v1245 = vpop.f32.mrf.mxu0
      %v1246 = vadd.f32 %v343, %v1245
      %1247 = vmatmul.bf16.gmra.mxu0 %v516
      %v1248 = vpop.f32.mrf.mxu0
      %v1249 = vadd.f32 %v343, %v1248
      %v1250 = vpop.f32.mrf.mxu0
      %v1251 = vadd.f32 %v343, %v1250
      %1252 = vmatmul.bf16.gmra.mxu0 %v518
      %v1253 = vpop.f32.mrf.mxu0
      %v1254 = vadd.f32 %v343, %v1253
      %v1255 = vpop.f32.mrf.mxu0
      %v1256 = vadd.f32 %v343, %v1255
      %1257 = vmatmul.bf16.gmra.mxu0 %v520
      %v1258 = vpop.f32.mrf.mxu0
      %v1259 = vadd.f32 %v343, %v1258
      %v1260 = vpop.f32.mrf.mxu0
      %v1261 = vadd.f32 %v343, %v1260
      %1262 = vmatmul.bf16.gmra.mxu0 %v522
      %v1263 = vpop.f32.mrf.mxu0
      %v1264 = vadd.f32 %v343, %v1263
      %v1265 = vpop.f32.mrf.mxu0
      %v1266 = vadd.f32 %v343, %v1265
      %1267 = vmatmul.bf16.gmra.mxu0 %v524
      %v1268 = vpop.f32.mrf.mxu0
      %v1269 = vadd.f32 %v343, %v1268
      %v1270 = vpop.f32.mrf.mxu0
      %v1271 = vadd.f32 %v343, %v1270
      %1272 = vmatmul.bf16.gmra.mxu0 %v526
      %v1273 = vpop.f32.mrf.mxu0
      %v1274 = vadd.f32 %v343, %v1273
      %v1275 = vpop.f32.mrf.mxu0
      %v1276 = vadd.f32 %v343, %v1275
      %1277 = vmatmul.bf16.gmra.mxu0 %v528
      %v1278 = vpop.f32.mrf.mxu0
      %v1279 = vadd.f32 %v343, %v1278
      %v1280 = vpop.f32.mrf.mxu0
      %v1281 = vadd.f32 %v343, %v1280
      %1282 = vmatmul.bf16.gmra.mxu0 %v530
      %v1283 = vpop.f32.mrf.mxu0
      %v1284 = vadd.f32 %v343, %v1283
      %v1285 = vpop.f32.mrf.mxu0
      %v1286 = vadd.f32 %v343, %v1285
      %1287 = vmatmul.bf16.gmra.mxu0 %v532
      %v1288 = vpop.f32.mrf.mxu0
      %v1289 = vadd.f32 %v343, %v1288
      %v1290 = vpop.f32.mrf.mxu0
      %v1291 = vadd.f32 %v343, %v1290
      %1292 = vmatmul.bf16.gmra.mxu0 %v534
      %v1293 = vpop.f32.mrf.mxu0
      %v1294 = vadd.f32 %v343, %v1293
      %v1295 = vpop.f32.mrf.mxu0
      %v1296 = vadd.f32 %v343, %v1295
      %1297 = vmatmul.bf16.gmra.mxu0 %v536
      %v1298 = vpop.f32.mrf.mxu0
      %v1299 = vadd.f32 %v343, %v1298
      %v1300 = vpop.f32.mrf.mxu0
      %v1301 = vadd.f32 %v343, %v1300
      %1302 = vmatmul.bf16.gmra.mxu0 %v538
      %v1303 = vpop.f32.mrf.mxu0
      %v1304 = vadd.f32 %v343, %v1303
      %v1305 = vpop.f32.mrf.mxu0
      %v1306 = vadd.f32 %v343, %v1305
      %1307 = vmatmul.bf16.gmra.mxu0 %v540
      %v1308 = vpop.f32.mrf.mxu0
      %v1309 = vadd.f32 %v343, %v1308
      %v1310 = vpop.f32.mrf.mxu0
      %v1311 = vadd.f32 %v343, %v1310
      %1312 = vmatmul.bf16.gmra.mxu0 %v542
      %v1313 = vpop.f32.mrf.mxu0
      %v1314 = vadd.f32 %v343, %v1313
      %v1315 = vpop.f32.mrf.mxu0
      %v1316 = vadd.f32 %v343, %v1315
      %1317 = vmatmul.bf16.gmra.mxu0 %v544
      %v1318 = vpop.f32.mrf.mxu0
      %v1319 = vadd.f32 %v343, %v1318
      %v1320 = vpop.f32.mrf.mxu0
      %v1321 = vadd.f32 %v343, %v1320
      %1322 = vmatmul.bf16.gmra.mxu0 %v546
      %v1323 = vpop.f32.mrf.mxu0
      %v1324 = vadd.f32 %v343, %v1323
      %v1325 = vpop.f32.mrf.mxu0
      %v1326 = vadd.f32 %v343, %v1325
      %1327 = vmatmul.bf16.gmra.mxu0 %v548
      %v1328 = vpop.f32.mrf.mxu0
      %v1329 = vadd.f32 %v343, %v1328
      %v1330 = vpop.f32.mrf.mxu0
      %v1331 = vadd.f32 %v343, %v1330
      %1332 = vdwg.mxu0
      %1333 = vmatpush.bf16.msra.mxu0 0
      %1334 = vmatpush.bf16.msra.mxu0 0
      %1335 = vmatpush.bf16.msra.mxu0 %v796
      %1336 = vmatpush.bf16.msra.mxu0 %v792
      %1337 = vmatpush.bf16.msra.mxu0 %v788
      %1338 = vmatpush.bf16.msra.mxu0 %v784
      %1339 = vmatpush.bf16.msra.mxu0 %v780
      %1340 = vmatpush.bf16.msra.mxu0 %v776
      %1341 = vmatmul.bf16.gmra.mxu0 %v857
      %v1342 = vpop.f32.mrf.mxu0
      %v1343 = vadd.f32 %v1209, %v1342
      %v1344 = vpop.f32.mrf.mxu0
      %v1345 = vadd.f32 %v1211, %v1344
      %1346 = vmatmul.bf16.gmra.mxu0 %v860
      %v1347 = vpop.f32.mrf.mxu0
      %v1348 = vadd.f32 %v1214, %v1347
      %v1349 = vpop.f32.mrf.mxu0
      %v1350 = vadd.f32 %v1216, %v1349
      %1351 = vmatmul.bf16.gmra.mxu0 %v863
      %v1352 = vpop.f32.mrf.mxu0
      %v1353 = vadd.f32 %v1219, %v1352
      %v1354 = vpop.f32.mrf.mxu0
      %v1355 = vadd.f32 %v1221, %v1354
      %1356 = vmatmul.bf16.gmra.mxu0 %v866
      %v1357 = vpop.f32.mrf.mxu0
      %v1358 = vadd.f32 %v1224, %v1357
      %v1359 = vpop.f32.mrf.mxu0
      %v1360 = vadd.f32 %v1226, %v1359
      %1361 = vmatmul.bf16.gmra.mxu0 %v869
      %v1362 = vpop.f32.mrf.mxu0
      %v1363 = vadd.f32 %v1229, %v1362
      %v1364 = vpop.f32.mrf.mxu0
      %v1365 = vadd.f32 %v1231, %v1364
      %1366 = vmatmul.bf16.gmra.mxu0 %v872
      %v1367 = vpop.f32.mrf.mxu0
      %v1368 = vadd.f32 %v1234, %v1367
      %v1369 = vpop.f32.mrf.mxu0
      %v1370 = vadd.f32 %v1236, %v1369
      %1371 = vmatmul.bf16.gmra.mxu0 %v875
      %v1372 = vpop.f32.mrf.mxu0
      %v1373 = vadd.f32 %v1239, %v1372
      %v1374 = vpop.f32.mrf.mxu0
      %v1375 = vadd.f32 %v1241, %v1374
      %1376 = vmatmul.bf16.gmra.mxu0 %v878
      %v1377 = vpop.f32.mrf.mxu0
      %v1378 = vadd.f32 %v1244, %v1377
      %v1379 = vpop.f32.mrf.mxu0
      %v1380 = vadd.f32 %v1246, %v1379
      %1381 = vmatmul.bf16.gmra.mxu0 %v881
      %v1382 = vpop.f32.mrf.mxu0
      %v1383 = vadd.f32 %v1249, %v1382
      %v1384 = vpop.f32.mrf.mxu0
      %v1385 = vadd.f32 %v1251, %v1384
      %1386 = vmatmul.bf16.gmra.mxu0 %v884
      %v1387 = vpop.f32.mrf.mxu0
      %v1388 = vadd.f32 %v1254, %v1387
      %v1389 = vpop.f32.mrf.mxu0
      %v1390 = vadd.f32 %v1256, %v1389
      %1391 = vmatmul.bf16.gmra.mxu0 %v887
      %v1392 = vpop.f32.mrf.mxu0
      %v1393 = vadd.f32 %v1259, %v1392
      %v1394 = vpop.f32.mrf.mxu0
      %v1395 = vadd.f32 %v1261, %v1394
      %1396 = vmatmul.bf16.gmra.mxu0 %v890
      %v1397 = vpop.f32.mrf.mxu0
      %v1398 = vadd.f32 %v1264, %v1397
      %v1399 = vpop.f32.mrf.mxu0
      %v1400 = vadd.f32 %v1266, %v1399
      %1401 = vmatmul.bf16.gmra.mxu0 %v893
      %v1402 = vpop.f32.mrf.mxu0
      %v1403 = vadd.f32 %v1269, %v1402
      %v1404 = vpop.f32.mrf.mxu0
      %v1405 = vadd.f32 %v1271, %v1404
      %1406 = vmatmul.bf16.gmra.mxu0 %v896
      %v1407 = vpop.f32.mrf.mxu0
      %v1408 = vadd.f32 %v1274, %v1407
      %v1409 = vpop.f32.mrf.mxu0
      %v1410 = vadd.f32 %v1276, %v1409
      %1411 = vmatmul.bf16.gmra.mxu0 %v899
      %v1412 = vpop.f32.mrf.mxu0
      %v1413 = vadd.f32 %v1279, %v1412
      %v1414 = vpop.f32.mrf.mxu0
      %v1415 = vadd.f32 %v1281, %v1414
      %1416 = vmatmul.bf16.gmra.mxu0 %v902
      %v1417 = vpop.f32.mrf.mxu0
      %v1418 = vadd.f32 %v1284, %v1417
      %v1419 = vpop.f32.mrf.mxu0
      %v1420 = vadd.f32 %v1286, %v1419
      %1421 = vmatmul.bf16.gmra.mxu0 %v905
      %v1422 = vpop.f32.mrf.mxu0
      %v1423 = vadd.f32 %v1289, %v1422
      %v1424 = vpop.f32.mrf.mxu0
      %v1425 = vadd.f32 %v1291, %v1424
      %1426 = vmatmul.bf16.gmra.mxu0 %v908
      %v1427 = vpop.f32.mrf.mxu0
      %v1428 = vadd.f32 %v1294, %v1427
      %v1429 = vpop.f32.mrf.mxu0
      %v1430 = vadd.f32 %v1296, %v1429
      %1431 = vmatmul.bf16.gmra.mxu0 %v911
      %v1432 = vpop.f32.mrf.mxu0
      %v1433 = vadd.f32 %v1299, %v1432
      %v1434 = vpop.f32.mrf.mxu0
      %v1435 = vadd.f32 %v1301, %v1434
      %1436 = vmatmul.bf16.gmra.mxu0 %v914
      %v1437 = vpop.f32.mrf.mxu0
      %v1438 = vadd.f32 %v1304, %v1437
      %v1439 = vpop.f32.mrf.mxu0
      %v1440 = vadd.f32 %v1306, %v1439
      %1441 = vmatmul.bf16.gmra.mxu0 %v917
      %v1442 = vpop.f32.mrf.mxu0
      %v1443 = vadd.f32 %v1309, %v1442
      %v1444 = vpop.f32.mrf.mxu0
      %v1445 = vadd.f32 %v1311, %v1444
      %1446 = vmatmul.bf16.gmra.mxu0 %v920
      %v1447 = vpop.f32.mrf.mxu0
      %v1448 = vadd.f32 %v1314, %v1447
      %v1449 = vpop.f32.mrf.mxu0
      %v1450 = vadd.f32 %v1316, %v1449
      %1451 = vmatmul.bf16.gmra.mxu0 %v923
      %v1452 = vpop.f32.mrf.mxu0
      %v1453 = vadd.f32 %v1319, %v1452
      %v1454 = vpop.f32.mrf.mxu0
      %v1455 = vadd.f32 %v1321, %v1454
      %1456 = vmatmul.bf16.gmra.mxu0 %v926
      %v1457 = vpop.f32.mrf.mxu0
      %v1458 = vadd.f32 %v1324, %v1457
      %v1459 = vpop.f32.mrf.mxu0
      %v1460 = vadd.f32 %v1326, %v1459
      %1461 = vmatmul.bf16.gmra.mxu0 %v929
      %v1462 = vpop.f32.mrf.mxu0
      %v1463 = vadd.f32 %v1329, %v1462
      %v1464 = vpop.f32.mrf.mxu0
      %v1465 = vadd.f32 %v1331, %v1464
      %1466 = vdwg.mxu0
      %1467 = vmatpush.bf16.msra.mxu0 %v773
      %1468 = vmatpush.bf16.msra.mxu0 %v769
      %1469 = vmatpush.bf16.msra.mxu0 %v765
      %1470 = vmatpush.bf16.msra.mxu0 %v761
      %1471 = vmatpush.bf16.msra.mxu0 %v757
      %1472 = vmatpush.bf16.msra.mxu0 %v753
      %1473 = vmatpush.bf16.msra.mxu0 %v749
      %1474 = vmatpush.bf16.msra.mxu0 %v745
      %1475 = vmatmul.bf16.gmra.mxu0 %v500
      %v1476 = vpop.f32.mrf.mxu0
      %v1477 = vadd.f32 %v344, %v1476
      %v1478 = vpop.f32.mrf.mxu0
      %v1479 = vadd.f32 %v344, %v1478
      %1480 = vmatmul.bf16.gmra.mxu0 %v502
      %v1481 = vpop.f32.mrf.mxu0
      %v1482 = vadd.f32 %v344, %v1481
      %v1483 = vpop.f32.mrf.mxu0
      %v1484 = vadd.f32 %v344, %v1483
      %1485 = vmatmul.bf16.gmra.mxu0 %v504
      %v1486 = vpop.f32.mrf.mxu0
      %v1487 = vadd.f32 %v344, %v1486
      %v1488 = vpop.f32.mrf.mxu0
      %v1489 = vadd.f32 %v344, %v1488
      %1490 = vmatmul.bf16.gmra.mxu0 %v506
      %v1491 = vpop.f32.mrf.mxu0
      %v1492 = vadd.f32 %v344, %v1491
      %v1493 = vpop.f32.mrf.mxu0
      %v1494 = vadd.f32 %v344, %v1493
      %1495 = vmatmul.bf16.gmra.mxu0 %v508
      %v1496 = vpop.f32.mrf.mxu0
      %v1497 = vadd.f32 %v344, %v1496
      %v1498 = vpop.f32.mrf.mxu0
      %v1499 = vadd.f32 %v344, %v1498
      %1500 = vmatmul.bf16.gmra.mxu0 %v510
      %v1501 = vpop.f32.mrf.mxu0
      %v1502 = vadd.f32 %v344, %v1501
      %v1503 = vpop.f32.mrf.mxu0
      %v1504 = vadd.f32 %v344, %v1503
      %1505 = vmatmul.bf16.gmra.mxu0 %v512
      %v1506 = vpop.f32.mrf.mxu0
      %v1507 = vadd.f32 %v344, %v1506
      %v1508 = vpop.f32.mrf.mxu0
      %v1509 = vadd.f32 %v344, %v1508
      %1510 = vmatmul.bf16.gmra.mxu0 %v514
      %v1511 = vpop.f32.mrf.mxu0
      %v1512 = vadd.f32 %v344, %v1511
      %v1513 = vpop.f32.mrf.mxu0
      %v1514 = vadd.f32 %v344, %v1513
      %1515 = vmatmul.bf16.gmra.mxu0 %v516
      %v1516 = vpop.f32.mrf.mxu0
      %v1517 = vadd.f32 %v344, %v1516
      %v1518 = vpop.f32.mrf.mxu0
      %v1519 = vadd.f32 %v344, %v1518
      %1520 = vmatmul.bf16.gmra.mxu0 %v518
      %v1521 = vpop.f32.mrf.mxu0
      %v1522 = vadd.f32 %v344, %v1521
      %v1523 = vpop.f32.mrf.mxu0
      %v1524 = vadd.f32 %v344, %v1523
      %1525 = vmatmul.bf16.gmra.mxu0 %v520
      %v1526 = vpop.f32.mrf.mxu0
      %v1527 = vadd.f32 %v344, %v1526
      %v1528 = vpop.f32.mrf.mxu0
      %v1529 = vadd.f32 %v344, %v1528
      %1530 = vmatmul.bf16.gmra.mxu0 %v522
      %v1531 = vpop.f32.mrf.mxu0
      %v1532 = vadd.f32 %v344, %v1531
      %v1533 = vpop.f32.mrf.mxu0
      %v1534 = vadd.f32 %v344, %v1533
      %1535 = vmatmul.bf16.gmra.mxu0 %v524
      %v1536 = vpop.f32.mrf.mxu0
      %v1537 = vadd.f32 %v344, %v1536
      %v1538 = vpop.f32.mrf.mxu0
      %v1539 = vadd.f32 %v344, %v1538
      %1540 = vmatmul.bf16.gmra.mxu0 %v526
      %v1541 = vpop.f32.mrf.mxu0
      %v1542 = vadd.f32 %v344, %v1541
      %v1543 = vpop.f32.mrf.mxu0
      %v1544 = vadd.f32 %v344, %v1543
      %1545 = vmatmul.bf16.gmra.mxu0 %v528
      %v1546 = vpop.f32.mrf.mxu0
      %v1547 = vadd.f32 %v344, %v1546
      %v1548 = vpop.f32.mrf.mxu0
      %v1549 = vadd.f32 %v344, %v1548
      %1550 = vmatmul.bf16.gmra.mxu0 %v530
      %v1551 = vpop.f32.mrf.mxu0
      %v1552 = vadd.f32 %v344, %v1551
      %v1553 = vpop.f32.mrf.mxu0
      %v1554 = vadd.f32 %v344, %v1553
      %1555 = vmatmul.bf16.gmra.mxu0 %v532
      %v1556 = vpop.f32.mrf.mxu0
      %v1557 = vadd.f32 %v344, %v1556
      %v1558 = vpop.f32.mrf.mxu0
      %v1559 = vadd.f32 %v344, %v1558
      %1560 = vmatmul.bf16.gmra.mxu0 %v534
      %v1561 = vpop.f32.mrf.mxu0
      %v1562 = vadd.f32 %v344, %v1561
      %v1563 = vpop.f32.mrf.mxu0
      %v1564 = vadd.f32 %v344, %v1563
      %1565 = vmatmul.bf16.gmra.mxu0 %v536
      %v1566 = vpop.f32.mrf.mxu0
      %v1567 = vadd.f32 %v344, %v1566
      %v1568 = vpop.f32.mrf.mxu0
      %v1569 = vadd.f32 %v344, %v1568
      %1570 = vmatmul.bf16.gmra.mxu0 %v538
      %v1571 = vpop.f32.mrf.mxu0
      %v1572 = vadd.f32 %v344, %v1571
      %v1573 = vpop.f32.mrf.mxu0
      %v1574 = vadd.f32 %v344, %v1573
      %1575 = vmatmul.bf16.gmra.mxu0 %v540
      %v1576 = vpop.f32.mrf.mxu0
      %v1577 = vadd.f32 %v344, %v1576
      %v1578 = vpop.f32.mrf.mxu0
      %v1579 = vadd.f32 %v344, %v1578
      %1580 = vmatmul.bf16.gmra.mxu0 %v542
      %v1581 = vpop.f32.mrf.mxu0
      %v1582 = vadd.f32 %v344, %v1581
      %v1583 = vpop.f32.mrf.mxu0
      %v1584 = vadd.f32 %v344, %v1583
      %1585 = vmatmul.bf16.gmra.mxu0 %v544
      %v1586 = vpop.f32.mrf.mxu0
      %v1587 = vadd.f32 %v344, %v1586
      %v1588 = vpop.f32.mrf.mxu0
      %v1589 = vadd.f32 %v344, %v1588
      %1590 = vmatmul.bf16.gmra.mxu0 %v546
      %v1591 = vpop.f32.mrf.mxu0
      %v1592 = vadd.f32 %v344, %v1591
      %v1593 = vpop.f32.mrf.mxu0
      %v1594 = vadd.f32 %v344, %v1593
      %1595 = vmatmul.bf16.gmra.mxu0 %v548
      %v1596 = vpop.f32.mrf.mxu0
      %v1597 = vadd.f32 %v344, %v1596
      %v1598 = vpop.f32.mrf.mxu0
      %v1599 = vadd.f32 %v344, %v1598
      %1600 = vdwg.mxu0
      %1601 = vmatpush.bf16.msra.mxu0 0
      %1602 = vmatpush.bf16.msra.mxu0 0
      %1603 = vmatpush.bf16.msra.mxu0 %v797
      %1604 = vmatpush.bf16.msra.mxu0 %v793
      %1605 = vmatpush.bf16.msra.mxu0 %v789
      %1606 = vmatpush.bf16.msra.mxu0 %v785
      %1607 = vmatpush.bf16.msra.mxu0 %v781
      %1608 = vmatpush.bf16.msra.mxu0 %v777
      %1609 = vmatmul.bf16.gmra.mxu0 %v857
      %v1610 = vpop.f32.mrf.mxu0
      %v1611 = vadd.f32 %v1477, %v1610
      %v1612 = vpop.f32.mrf.mxu0
      %v1613 = vadd.f32 %v1479, %v1612
      %1614 = vmatmul.bf16.gmra.mxu0 %v860
      %v1615 = vpop.f32.mrf.mxu0
      %v1616 = vadd.f32 %v1482, %v1615
      %v1617 = vpop.f32.mrf.mxu0
      %v1618 = vadd.f32 %v1484, %v1617
      %1619 = vmatmul.bf16.gmra.mxu0 %v863
      %v1620 = vpop.f32.mrf.mxu0
      %v1621 = vadd.f32 %v1487, %v1620
      %v1622 = vpop.f32.mrf.mxu0
      %v1623 = vadd.f32 %v1489, %v1622
      %1624 = vmatmul.bf16.gmra.mxu0 %v866
      %v1625 = vpop.f32.mrf.mxu0
      %v1626 = vadd.f32 %v1492, %v1625
      %v1627 = vpop.f32.mrf.mxu0
      %v1628 = vadd.f32 %v1494, %v1627
      %1629 = vmatmul.bf16.gmra.mxu0 %v869
      %v1630 = vpop.f32.mrf.mxu0
      %v1631 = vadd.f32 %v1497, %v1630
      %v1632 = vpop.f32.mrf.mxu0
      %v1633 = vadd.f32 %v1499, %v1632
      %1634 = vmatmul.bf16.gmra.mxu0 %v872
      %v1635 = vpop.f32.mrf.mxu0
      %v1636 = vadd.f32 %v1502, %v1635
      %v1637 = vpop.f32.mrf.mxu0
      %v1638 = vadd.f32 %v1504, %v1637
      %1639 = vmatmul.bf16.gmra.mxu0 %v875
      %v1640 = vpop.f32.mrf.mxu0
      %v1641 = vadd.f32 %v1507, %v1640
      %v1642 = vpop.f32.mrf.mxu0
      %v1643 = vadd.f32 %v1509, %v1642
      %1644 = vmatmul.bf16.gmra.mxu0 %v878
      %v1645 = vpop.f32.mrf.mxu0
      %v1646 = vadd.f32 %v1512, %v1645
      %v1647 = vpop.f32.mrf.mxu0
      %v1648 = vadd.f32 %v1514, %v1647
      %1649 = vmatmul.bf16.gmra.mxu0 %v881
      %v1650 = vpop.f32.mrf.mxu0
      %v1651 = vadd.f32 %v1517, %v1650
      %v1652 = vpop.f32.mrf.mxu0
      %v1653 = vadd.f32 %v1519, %v1652
      %1654 = vmatmul.bf16.gmra.mxu0 %v884
      %v1655 = vpop.f32.mrf.mxu0
      %v1656 = vadd.f32 %v1522, %v1655
      %v1657 = vpop.f32.mrf.mxu0
      %v1658 = vadd.f32 %v1524, %v1657
      %1659 = vmatmul.bf16.gmra.mxu0 %v887
      %v1660 = vpop.f32.mrf.mxu0
      %v1661 = vadd.f32 %v1527, %v1660
      %v1662 = vpop.f32.mrf.mxu0
      %v1663 = vadd.f32 %v1529, %v1662
      %1664 = vmatmul.bf16.gmra.mxu0 %v890
      %v1665 = vpop.f32.mrf.mxu0
      %v1666 = vadd.f32 %v1532, %v1665
      %v1667 = vpop.f32.mrf.mxu0
      %v1668 = vadd.f32 %v1534, %v1667
      %1669 = vmatmul.bf16.gmra.mxu0 %v893
      %v1670 = vpop.f32.mrf.mxu0
      %v1671 = vadd.f32 %v1537, %v1670
      %v1672 = vpop.f32.mrf.mxu0
      %v1673 = vadd.f32 %v1539, %v1672
      %1674 = vmatmul.bf16.gmra.mxu0 %v896
      %v1675 = vpop.f32.mrf.mxu0
      %v1676 = vadd.f32 %v1542, %v1675
      %v1677 = vpop.f32.mrf.mxu0
      %v1678 = vadd.f32 %v1544, %v1677
      %1679 = vmatmul.bf16.gmra.mxu0 %v899
      %v1680 = vpop.f32.mrf.mxu0
      %v1681 = vadd.f32 %v1547, %v1680
      %v1682 = vpop.f32.mrf.mxu0
      %v1683 = vadd.f32 %v1549, %v1682
      %1684 = vmatmul.bf16.gmra.mxu0 %v902
      %v1685 = vpop.f32.mrf.mxu0
      %v1686 = vadd.f32 %v1552, %v1685
      %v1687 = vpop.f32.mrf.mxu0
      %v1688 = vadd.f32 %v1554, %v1687
      %1689 = vmatmul.bf16.gmra.mxu0 %v905
      %v1690 = vpop.f32.mrf.mxu0
      %v1691 = vadd.f32 %v1557, %v1690
      %v1692 = vpop.f32.mrf.mxu0
      %v1693 = vadd.f32 %v1559, %v1692
      %1694 = vmatmul.bf16.gmra.mxu0 %v908
      %v1695 = vpop.f32.mrf.mxu0
      %v1696 = vadd.f32 %v1562, %v1695
      %v1697 = vpop.f32.mrf.mxu0
      %v1698 = vadd.f32 %v1564, %v1697
      %1699 = vmatmul.bf16.gmra.mxu0 %v911
      %v1700 = vpop.f32.mrf.mxu0
      %v1701 = vadd.f32 %v1567, %v1700
      %v1702 = vpop.f32.mrf.mxu0
      %v1703 = vadd.f32 %v1569, %v1702
      %1704 = vmatmul.bf16.gmra.mxu0 %v914
      %v1705 = vpop.f32.mrf.mxu0
      %v1706 = vadd.f32 %v1572, %v1705
      %v1707 = vpop.f32.mrf.mxu0
      %v1708 = vadd.f32 %v1574, %v1707
      %1709 = vmatmul.bf16.gmra.mxu0 %v917
      %v1710 = vpop.f32.mrf.mxu0
      %v1711 = vadd.f32 %v1577, %v1710
      %v1712 = vpop.f32.mrf.mxu0
      %v1713 = vadd.f32 %v1579, %v1712
      %1714 = vmatmul.bf16.gmra.mxu0 %v920
      %v1715 = vpop.f32.mrf.mxu0
      %v1716 = vadd.f32 %v1582, %v1715
      %v1717 = vpop.f32.mrf.mxu0
      %v1718 = vadd.f32 %v1584, %v1717
      %1719 = vmatmul.bf16.gmra.mxu0 %v923
      %v1720 = vpop.f32.mrf.mxu0
      %v1721 = vadd.f32 %v1587, %v1720
      %v1722 = vpop.f32.mrf.mxu0
      %v1723 = vadd.f32 %v1589, %v1722
      %1724 = vmatmul.bf16.gmra.mxu0 %v926
      %v1725 = vpop.f32.mrf.mxu0
      %v1726 = vadd.f32 %v1592, %v1725
      %v1727 = vpop.f32.mrf.mxu0
      %v1728 = vadd.f32 %v1594, %v1727
      %1729 = vmatmul.bf16.gmra.mxu0 %v929
      %v1730 = vpop.f32.mrf.mxu0
      %v1731 = vadd.f32 %v1597, %v1730
      %v1732 = vpop.f32.mrf.mxu0
      %v1733 = vadd.f32 %v1599, %v1732
      %1734 = vdwg.mxu0
      %1735 = vmatpush.bf16.msra.mxu0 %v774
      %1736 = vmatpush.bf16.msra.mxu0 %v770
      %1737 = vmatpush.bf16.msra.mxu0 %v766
      %1738 = vmatpush.bf16.msra.mxu0 %v762
      %1739 = vmatpush.bf16.msra.mxu0 %v758
      %1740 = vmatpush.bf16.msra.mxu0 %v754
      %1741 = vmatpush.bf16.msra.mxu0 %v750
      %1742 = vmatpush.bf16.msra.mxu0 %v746
      %1743 = vmatmul.bf16.gmra.mxu0 %v500
      %v1744 = vpop.f32.mrf.mxu0
      %v1745 = vadd.f32 %v345, %v1744
      %v1746 = vpop.f32.mrf.mxu0
      %v1747 = vadd.f32 %v345, %v1746
      %1748 = vmatmul.bf16.gmra.mxu0 %v502
      %v1749 = vpop.f32.mrf.mxu0
      %v1750 = vadd.f32 %v345, %v1749
      %v1751 = vpop.f32.mrf.mxu0
      %v1752 = vadd.f32 %v345, %v1751
      %1753 = vmatmul.bf16.gmra.mxu0 %v504
      %v1754 = vpop.f32.mrf.mxu0
      %v1755 = vadd.f32 %v345, %v1754
      %v1756 = vpop.f32.mrf.mxu0
      %v1757 = vadd.f32 %v345, %v1756
      %1758 = vmatmul.bf16.gmra.mxu0 %v506
      %v1759 = vpop.f32.mrf.mxu0
      %v1760 = vadd.f32 %v345, %v1759
      %v1761 = vpop.f32.mrf.mxu0
      %v1762 = vadd.f32 %v345, %v1761
      %1763 = vmatmul.bf16.gmra.mxu0 %v508
      %v1764 = vpop.f32.mrf.mxu0
      %v1765 = vadd.f32 %v345, %v1764
      %v1766 = vpop.f32.mrf.mxu0
      %v1767 = vadd.f32 %v345, %v1766
      %1768 = vmatmul.bf16.gmra.mxu0 %v510
      %v1769 = vpop.f32.mrf.mxu0
      %v1770 = vadd.f32 %v345, %v1769
      %v1771 = vpop.f32.mrf.mxu0
      %v1772 = vadd.f32 %v345, %v1771
      %1773 = vmatmul.bf16.gmra.mxu0 %v512
      %v1774 = vpop.f32.mrf.mxu0
      %v1775 = vadd.f32 %v345, %v1774
      %v1776 = vpop.f32.mrf.mxu0
      %v1777 = vadd.f32 %v345, %v1776
      %1778 = vmatmul.bf16.gmra.mxu0 %v514
      %v1779 = vpop.f32.mrf.mxu0
      %v1780 = vadd.f32 %v345, %v1779
      %v1781 = vpop.f32.mrf.mxu0
      %v1782 = vadd.f32 %v345, %v1781
      %1783 = vmatmul.bf16.gmra.mxu0 %v516
      %v1784 = vpop.f32.mrf.mxu0
      %v1785 = vadd.f32 %v345, %v1784
      %v1786 = vpop.f32.mrf.mxu0
      %v1787 = vadd.f32 %v345, %v1786
      %1788 = vmatmul.bf16.gmra.mxu0 %v518
      %v1789 = vpop.f32.mrf.mxu0
      %v1790 = vadd.f32 %v345, %v1789
      %v1791 = vpop.f32.mrf.mxu0
      %v1792 = vadd.f32 %v345, %v1791
      %1793 = vmatmul.bf16.gmra.mxu0 %v520
      %v1794 = vpop.f32.mrf.mxu0
      %v1795 = vadd.f32 %v345, %v1794
      %v1796 = vpop.f32.mrf.mxu0
      %v1797 = vadd.f32 %v345, %v1796
      %1798 = vmatmul.bf16.gmra.mxu0 %v522
      %v1799 = vpop.f32.mrf.mxu0
      %v1800 = vadd.f32 %v345, %v1799
      %v1801 = vpop.f32.mrf.mxu0
      %v1802 = vadd.f32 %v345, %v1801
      %1803 = vmatmul.bf16.gmra.mxu0 %v524
      %v1804 = vpop.f32.mrf.mxu0
      %v1805 = vadd.f32 %v345, %v1804
      %v1806 = vpop.f32.mrf.mxu0
      %v1807 = vadd.f32 %v345, %v1806
      %1808 = vmatmul.bf16.gmra.mxu0 %v526
      %v1809 = vpop.f32.mrf.mxu0
      %v1810 = vadd.f32 %v345, %v1809
      %v1811 = vpop.f32.mrf.mxu0
      %v1812 = vadd.f32 %v345, %v1811
      %1813 = vmatmul.bf16.gmra.mxu0 %v528
      %v1814 = vpop.f32.mrf.mxu0
      %v1815 = vadd.f32 %v345, %v1814
      %v1816 = vpop.f32.mrf.mxu0
      %v1817 = vadd.f32 %v345, %v1816
      %1818 = vmatmul.bf16.gmra.mxu0 %v530
      %v1819 = vpop.f32.mrf.mxu0
      %v1820 = vadd.f32 %v345, %v1819
      %v1821 = vpop.f32.mrf.mxu0
      %v1822 = vadd.f32 %v345, %v1821
      %1823 = vmatmul.bf16.gmra.mxu0 %v532
      %v1824 = vpop.f32.mrf.mxu0
      %v1825 = vadd.f32 %v345, %v1824
      %v1826 = vpop.f32.mrf.mxu0
      %v1827 = vadd.f32 %v345, %v1826
      %1828 = vmatmul.bf16.gmra.mxu0 %v534
      %v1829 = vpop.f32.mrf.mxu0
      %v1830 = vadd.f32 %v345, %v1829
      %v1831 = vpop.f32.mrf.mxu0
      %v1832 = vadd.f32 %v345, %v1831
      %1833 = vmatmul.bf16.gmra.mxu0 %v536
      %v1834 = vpop.f32.mrf.mxu0
      %v1835 = vadd.f32 %v345, %v1834
      %v1836 = vpop.f32.mrf.mxu0
      %v1837 = vadd.f32 %v345, %v1836
      %1838 = vmatmul.bf16.gmra.mxu0 %v538
      %v1839 = vpop.f32.mrf.mxu0
      %v1840 = vadd.f32 %v345, %v1839
      %v1841 = vpop.f32.mrf.mxu0
      %v1842 = vadd.f32 %v345, %v1841
      %1843 = vmatmul.bf16.gmra.mxu0 %v540
      %v1844 = vpop.f32.mrf.mxu0
      %v1845 = vadd.f32 %v345, %v1844
      %v1846 = vpop.f32.mrf.mxu0
      %v1847 = vadd.f32 %v345, %v1846
      %1848 = vmatmul.bf16.gmra.mxu0 %v542
      %v1849 = vpop.f32.mrf.mxu0
      %v1850 = vadd.f32 %v345, %v1849
      %v1851 = vpop.f32.mrf.mxu0
      %v1852 = vadd.f32 %v345, %v1851
      %1853 = vmatmul.bf16.gmra.mxu0 %v544
      %v1854 = vpop.f32.mrf.mxu0
      %v1855 = vadd.f32 %v345, %v1854
      %v1856 = vpop.f32.mrf.mxu0
      %v1857 = vadd.f32 %v345, %v1856
      %1858 = vmatmul.bf16.gmra.mxu0 %v546
      %v1859 = vpop.f32.mrf.mxu0
      %v1860 = vadd.f32 %v345, %v1859
      %v1861 = vpop.f32.mrf.mxu0
      %v1862 = vadd.f32 %v345, %v1861
      %1863 = vmatmul.bf16.gmra.mxu0 %v548
      %v1864 = vpop.f32.mrf.mxu0
      %v1865 = vadd.f32 %v345, %v1864
      %v1866 = vpop.f32.mrf.mxu0
      %v1867 = vadd.f32 %v345, %v1866
      %1868 = vdwg.mxu0
      %1869 = vmatpush.bf16.msra.mxu0 0
      %1870 = vmatpush.bf16.msra.mxu0 0
      %1871 = vmatpush.bf16.msra.mxu0 %v798
      %1872 = vmatpush.bf16.msra.mxu0 %v794
      %1873 = vmatpush.bf16.msra.mxu0 %v790
      %1874 = vmatpush.bf16.msra.mxu0 %v786
      %1875 = vmatpush.bf16.msra.mxu0 %v782
      %1876 = vmatpush.bf16.msra.mxu0 %v778
      %1877 = vmatmul.bf16.gmra.mxu0 %v857
      %v1878 = vpop.f32.mrf.mxu0
      %v1879 = vadd.f32 %v1745, %v1878
      %v1880 = vpop.f32.mrf.mxu0
      %v1881 = vadd.f32 %v1747, %v1880
      %1882 = vmatmul.bf16.gmra.mxu0 %v860
      %v1883 = vpop.f32.mrf.mxu0
      %v1884 = vadd.f32 %v1750, %v1883
      %v1885 = vpop.f32.mrf.mxu0
      %v1886 = vadd.f32 %v1752, %v1885
      %1887 = vmatmul.bf16.gmra.mxu0 %v863
      %v1888 = vpop.f32.mrf.mxu0
      %v1889 = vadd.f32 %v1755, %v1888
      %v1890 = vpop.f32.mrf.mxu0
      %v1891 = vadd.f32 %v1757, %v1890
      %1892 = vmatmul.bf16.gmra.mxu0 %v866
      %v1893 = vpop.f32.mrf.mxu0
      %v1894 = vadd.f32 %v1760, %v1893
      %v1895 = vpop.f32.mrf.mxu0
      %v1896 = vadd.f32 %v1762, %v1895
      %1897 = vmatmul.bf16.gmra.mxu0 %v869
      %v1898 = vpop.f32.mrf.mxu0
      %v1899 = vadd.f32 %v1765, %v1898
      %v1900 = vpop.f32.mrf.mxu0
      %v1901 = vadd.f32 %v1767, %v1900
      %1902 = vmatmul.bf16.gmra.mxu0 %v872
      %v1903 = vpop.f32.mrf.mxu0
      %v1904 = vadd.f32 %v1770, %v1903
      %v1905 = vpop.f32.mrf.mxu0
      %v1906 = vadd.f32 %v1772, %v1905
      %1907 = vmatmul.bf16.gmra.mxu0 %v875
      %v1908 = vpop.f32.mrf.mxu0
      %v1909 = vadd.f32 %v1775, %v1908
      %v1910 = vpop.f32.mrf.mxu0
      %v1911 = vadd.f32 %v1777, %v1910
      %1912 = vmatmul.bf16.gmra.mxu0 %v878
      %v1913 = vpop.f32.mrf.mxu0
      %v1914 = vadd.f32 %v1780, %v1913
      %v1915 = vpop.f32.mrf.mxu0
      %v1916 = vadd.f32 %v1782, %v1915
      %1917 = vmatmul.bf16.gmra.mxu0 %v881
      %v1918 = vpop.f32.mrf.mxu0
      %v1919 = vadd.f32 %v1785, %v1918
      %v1920 = vpop.f32.mrf.mxu0
      %v1921 = vadd.f32 %v1787, %v1920
      %1922 = vmatmul.bf16.gmra.mxu0 %v884
      %v1923 = vpop.f32.mrf.mxu0
      %v1924 = vadd.f32 %v1790, %v1923
      %v1925 = vpop.f32.mrf.mxu0
      %v1926 = vadd.f32 %v1792, %v1925
      %1927 = vmatmul.bf16.gmra.mxu0 %v887
      %v1928 = vpop.f32.mrf.mxu0
      %v1929 = vadd.f32 %v1795, %v1928
      %v1930 = vpop.f32.mrf.mxu0
      %v1931 = vadd.f32 %v1797, %v1930
      %1932 = vmatmul.bf16.gmra.mxu0 %v890
      %v1933 = vpop.f32.mrf.mxu0
      %v1934 = vadd.f32 %v1800, %v1933
      %v1935 = vpop.f32.mrf.mxu0
      %v1936 = vadd.f32 %v1802, %v1935
      %1937 = vmatmul.bf16.gmra.mxu0 %v893
      %v1938 = vpop.f32.mrf.mxu0
      %v1939 = vadd.f32 %v1805, %v1938
      %v1940 = vpop.f32.mrf.mxu0
      %v1941 = vadd.f32 %v1807, %v1940
      %1942 = vmatmul.bf16.gmra.mxu0 %v896
      %v1943 = vpop.f32.mrf.mxu0
      %v1944 = vadd.f32 %v1810, %v1943
      %v1945 = vpop.f32.mrf.mxu0
      %v1946 = vadd.f32 %v1812, %v1945
      %1947 = vmatmul.bf16.gmra.mxu0 %v899
      %v1948 = vpop.f32.mrf.mxu0
      %v1949 = vadd.f32 %v1815, %v1948
      %v1950 = vpop.f32.mrf.mxu0
      %v1951 = vadd.f32 %v1817, %v1950
      %1952 = vmatmul.bf16.gmra.mxu0 %v902
      %v1953 = vpop.f32.mrf.mxu0
      %v1954 = vadd.f32 %v1820, %v1953
      %v1955 = vpop.f32.mrf.mxu0
      %v1956 = vadd.f32 %v1822, %v1955
      %1957 = vmatmul.bf16.gmra.mxu0 %v905
      %v1958 = vpop.f32.mrf.mxu0
      %v1959 = vadd.f32 %v1825, %v1958
      %v1960 = vpop.f32.mrf.mxu0
      %v1961 = vadd.f32 %v1827, %v1960
      %1962 = vmatmul.bf16.gmra.mxu0 %v908
      %v1963 = vpop.f32.mrf.mxu0
      %v1964 = vadd.f32 %v1830, %v1963
      %v1965 = vpop.f32.mrf.mxu0
      %v1966 = vadd.f32 %v1832, %v1965
      %1967 = vmatmul.bf16.gmra.mxu0 %v911
      %v1968 = vpop.f32.mrf.mxu0
      %v1969 = vadd.f32 %v1835, %v1968
      %v1970 = vpop.f32.mrf.mxu0
      %v1971 = vadd.f32 %v1837, %v1970
      %1972 = vmatmul.bf16.gmra.mxu0 %v914
      %v1973 = vpop.f32.mrf.mxu0
      %v1974 = vadd.f32 %v1840, %v1973
      %v1975 = vpop.f32.mrf.mxu0
      %v1976 = vadd.f32 %v1842, %v1975
      %1977 = vmatmul.bf16.gmra.mxu0 %v917
      %v1978 = vpop.f32.mrf.mxu0
      %v1979 = vadd.f32 %v1845, %v1978
      %v1980 = vpop.f32.mrf.mxu0
      %v1981 = vadd.f32 %v1847, %v1980
      %1982 = vmatmul.bf16.gmra.mxu0 %v920
      %v1983 = vpop.f32.mrf.mxu0
      %v1984 = vadd.f32 %v1850, %v1983
      %v1985 = vpop.f32.mrf.mxu0
      %v1986 = vadd.f32 %v1852, %v1985
      %1987 = vmatmul.bf16.gmra.mxu0 %v923
      %v1988 = vpop.f32.mrf.mxu0
      %v1989 = vadd.f32 %v1855, %v1988
      %v1990 = vpop.f32.mrf.mxu0
      %v1991 = vadd.f32 %v1857, %v1990
      %1992 = vmatmul.bf16.gmra.mxu0 %v926
      %v1993 = vpop.f32.mrf.mxu0
      %v1994 = vadd.f32 %v1860, %v1993
      %v1995 = vpop.f32.mrf.mxu0
      %v1996 = vadd.f32 %v1862, %v1995
      %1997 = vmatmul.bf16.gmra.mxu0 %v929
      %v1998 = vpop.f32.mrf.mxu0
      %v1999 = vadd.f32 %v1865, %v1998
      %v2000 = vpop.f32.mrf.mxu0
      %v2001 = vadd.f32 %v1867, %v2000
      %2002 = vdwg.mxu0
      %v2003 = vmax.f32 %v1075, 0.0
      %v2004 = vmax.f32 %v1343, 0.0
      %v2005 = vmax.f32 %v1611, 0.0
      %v2006 = vmax.f32 %v1879, 0.0
      %v2007 = vmax.f32 %v1077, 0.0
      %v2008 = vmax.f32 %v1345, 0.0
      %v2009 = vmax.f32 %v1613, 0.0
      %v2010 = vmax.f32 %v1881, 0.0
      %v2011 = vmax.f32 %v1080, 0.0
      %v2012 = vmax.f32 %v1348, 0.0
      %v2013 = vmax.f32 %v1616, 0.0
      %v2014 = vmax.f32 %v1884, 0.0
      %v2015 = vmax.f32 %v1082, 0.0
      %v2016 = vmax.f32 %v1350, 0.0
      %v2017 = vmax.f32 %v1618, 0.0
      %v2018 = vmax.f32 %v1886, 0.0
      %v2019 = vmax.f32 %v1085, 0.0
      %v2020 = vmax.f32 %v1353, 0.0
      %v2021 = vmax.f32 %v1621, 0.0
      %v2022 = vmax.f32 %v1889, 0.0
      %v2023 = vmax.f32 %v1087, 0.0
      %v2024 = vmax.f32 %v1355, 0.0
      %v2025 = vmax.f32 %v1623, 0.0
      %v2026 = vmax.f32 %v1891, 0.0
      %v2027 = vmax.f32 %v1090, 0.0
      %v2028 = vmax.f32 %v1358, 0.0
      %v2029 = vmax.f32 %v1626, 0.0
      %v2030 = vmax.f32 %v1894, 0.0
      %v2031 = vmax.f32 %v1092, 0.0
      %v2032 = vmax.f32 %v1360, 0.0
      %v2033 = vmax.f32 %v1628, 0.0
      %v2034 = vmax.f32 %v1896, 0.0
      %v2035 = vmax.f32 %v1095, 0.0
      %v2036 = vmax.f32 %v1363, 0.0
      %v2037 = vmax.f32 %v1631, 0.0
      %v2038 = vmax.f32 %v1899, 0.0
      %v2039 = vmax.f32 %v1097, 0.0
      %v2040 = vmax.f32 %v1365, 0.0
      %v2041 = vmax.f32 %v1633, 0.0
      %v2042 = vmax.f32 %v1901, 0.0
      %v2043 = vmax.f32 %v1100, 0.0
      %v2044 = vmax.f32 %v1368, 0.0
      %v2045 = vmax.f32 %v1636, 0.0
      %v2046 = vmax.f32 %v1904, 0.0
      %v2047 = vmax.f32 %v1102, 0.0
      %v2048 = vmax.f32 %v1370, 0.0
      %v2049 = vmax.f32 %v1638, 0.0
      %v2050 = vmax.f32 %v1906, 0.0
      %v2051 = vmax.f32 %v1105, 0.0
      %v2052 = vmax.f32 %v1373, 0.0
      %v2053 = vmax.f32 %v1641, 0.0
      %v2054 = vmax.f32 %v1909, 0.0
      %v2055 = vmax.f32 %v1107, 0.0
      %v2056 = vmax.f32 %v1375, 0.0
      %v2057 = vmax.f32 %v1643, 0.0
      %v2058 = vmax.f32 %v1911, 0.0
      %v2059 = vmax.f32 %v1110, 0.0
      %v2060 = vmax.f32 %v1378, 0.0
      %v2061 = vmax.f32 %v1646, 0.0
      %v2062 = vmax.f32 %v1914, 0.0
      %v2063 = vmax.f32 %v1112, 0.0
      %v2064 = vmax.f32 %v1380, 0.0
      %v2065 = vmax.f32 %v1648, 0.0
      %v2066 = vmax.f32 %v1916, 0.0
      %v2067 = vmax.f32 %v1115, 0.0
      %v2068 = vmax.f32 %v1383, 0.0
      %v2069 = vmax.f32 %v1651, 0.0
      %v2070 = vmax.f32 %v1919, 0.0
      %v2071 = vmax.f32 %v1117, 0.0
      %v2072 = vmax.f32 %v1385, 0.0
      %v2073 = vmax.f32 %v1653, 0.0
      %v2074 = vmax.f32 %v1921, 0.0
      %v2075 = vmax.f32 %v1120, 0.0
      %v2076 = vmax.f32 %v1388, 0.0
      %v2077 = vmax.f32 %v1656, 0.0
      %v2078 = vmax.f32 %v1924, 0.0
      %v2079 = vmax.f32 %v1122, 0.0
      %v2080 = vmax.f32 %v1390, 0.0
      %v2081 = vmax.f32 %v1658, 0.0
      %v2082 = vmax.f32 %v1926, 0.0
      %v2083 = vmax.f32 %v1125, 0.0
      %v2084 = vmax.f32 %v1393, 0.0
      %v2085 = vmax.f32 %v1661, 0.0
      %v2086 = vmax.f32 %v1929, 0.0
      %v2087 = vmax.f32 %v1127, 0.0
      %v2088 = vmax.f32 %v1395, 0.0
      %v2089 = vmax.f32 %v1663, 0.0
      %v2090 = vmax.f32 %v1931, 0.0
      %v2091 = vmax.f32 %v1130, 0.0
      %v2092 = vmax.f32 %v1398, 0.0
      %v2093 = vmax.f32 %v1666, 0.0
      %v2094 = vmax.f32 %v1934, 0.0
      %v2095 = vmax.f32 %v1132, 0.0
      %v2096 = vmax.f32 %v1400, 0.0
      %v2097 = vmax.f32 %v1668, 0.0
      %v2098 = vmax.f32 %v1936, 0.0
      %v2099 = vmax.f32 %v1135, 0.0
      %v2100 = vmax.f32 %v1403, 0.0
      %v2101 = vmax.f32 %v1671, 0.0
      %v2102 = vmax.f32 %v1939, 0.0
      %v2103 = vmax.f32 %v1137, 0.0
      %v2104 = vmax.f32 %v1405, 0.0
      %v2105 = vmax.f32 %v1673, 0.0
      %v2106 = vmax.f32 %v1941, 0.0
      %v2107 = vmax.f32 %v1140, 0.0
      %v2108 = vmax.f32 %v1408, 0.0
      %v2109 = vmax.f32 %v1676, 0.0
      %v2110 = vmax.f32 %v1944, 0.0
      %v2111 = vmax.f32 %v1142, 0.0
      %v2112 = vmax.f32 %v1410, 0.0
      %v2113 = vmax.f32 %v1678, 0.0
      %v2114 = vmax.f32 %v1946, 0.0
      %v2115 = vmax.f32 %v1145, 0.0
      %v2116 = vmax.f32 %v1413, 0.0
      %v2117 = vmax.f32 %v1681, 0.0
      %v2118 = vmax.f32 %v1949, 0.0
      %v2119 = vmax.f32 %v1147, 0.0
      %v2120 = vmax.f32 %v1415, 0.0
      %v2121 = vmax.f32 %v1683, 0.0
      %v2122 = vmax.f32 %v1951, 0.0
      %v2123 = vmax.f32 %v1150, 0.0
      %v2124 = vmax.f32 %v1418, 0.0
      %v2125 = vmax.f32 %v1686, 0.0
      %v2126 = vmax.f32 %v1954, 0.0
      %v2127 = vmax.f32 %v1152, 0.0
      %v2128 = vmax.f32 %v1420, 0.0
      %v2129 = vmax.f32 %v1688, 0.0
      %v2130 = vmax.f32 %v1956, 0.0
      %v2131 = vmax.f32 %v1155, 0.0
      %v2132 = vmax.f32 %v1423, 0.0
      %v2133 = vmax.f32 %v1691, 0.0
      %v2134 = vmax.f32 %v1959, 0.0
      %v2135 = vmax.f32 %v1157, 0.0
      %v2136 = vmax.f32 %v1425, 0.0
      %v2137 = vmax.f32 %v1693, 0.0
      %v2138 = vmax.f32 %v1961, 0.0
      %v2139 = vmax.f32 %v1160, 0.0
      %v2140 = vmax.f32 %v1428, 0.0
      %v2141 = vmax.f32 %v1696, 0.0
      %v2142 = vmax.f32 %v1964, 0.0
      %v2143 = vmax.f32 %v1162, 0.0
      %v2144 = vmax.f32 %v1430, 0.0
      %v2145 = vmax.f32 %v1698, 0.0
      %v2146 = vmax.f32 %v1966, 0.0
      %v2147 = vmax.f32 %v1165, 0.0
      %v2148 = vmax.f32 %v1433, 0.0
      %v2149 = vmax.f32 %v1701, 0.0
      %v2150 = vmax.f32 %v1969, 0.0
      %v2151 = vmax.f32 %v1167, 0.0
      %v2152 = vmax.f32 %v1435, 0.0
      %v2153 = vmax.f32 %v1703, 0.0
      %v2154 = vmax.f32 %v1971, 0.0
      %v2155 = vmax.f32 %v1170, 0.0
      %v2156 = vmax.f32 %v1438, 0.0
      %v2157 = vmax.f32 %v1706, 0.0
      %v2158 = vmax.f32 %v1974, 0.0
      %v2159 = vmax.f32 %v1172, 0.0
      %v2160 = vmax.f32 %v1440, 0.0
      %v2161 = vmax.f32 %v1708, 0.0
      %v2162 = vmax.f32 %v1976, 0.0
      %v2163 = vmax.f32 %v1175, 0.0
      %v2164 = vmax.f32 %v1443, 0.0
      %v2165 = vmax.f32 %v1711, 0.0
      %v2166 = vmax.f32 %v1979, 0.0
      %v2167 = vmax.f32 %v1177, 0.0
      %v2168 = vmax.f32 %v1445, 0.0
      %v2169 = vmax.f32 %v1713, 0.0
      %v2170 = vmax.f32 %v1981, 0.0
      %v2171 = vmax.f32 %v1180, 0.0
      %v2172 = vmax.f32 %v1448, 0.0
      %v2173 = vmax.f32 %v1716, 0.0
      %v2174 = vmax.f32 %v1984, 0.0
      %v2175 = vmax.f32 %v1182, 0.0
      %v2176 = vmax.f32 %v1450, 0.0
      %v2177 = vmax.f32 %v1718, 0.0
      %v2178 = vmax.f32 %v1986, 0.0
      %v2179 = vmax.f32 %v1185, 0.0
      %v2180 = vmax.f32 %v1453, 0.0
      %v2181 = vmax.f32 %v1721, 0.0
      %v2182 = vmax.f32 %v1989, 0.0
      %v2183 = vmax.f32 %v1187, 0.0
      %v2184 = vmax.f32 %v1455, 0.0
      %v2185 = vmax.f32 %v1723, 0.0
      %v2186 = vmax.f32 %v1991, 0.0
      %v2187 = vmax.f32 %v1190, 0.0
      %v2188 = vmax.f32 %v1458, 0.0
      %v2189 = vmax.f32 %v1726, 0.0
      %v2190 = vmax.f32 %v1994, 0.0
      %v2191 = vmax.f32 %v1192, 0.0
      %v2192 = vmax.f32 %v1460, 0.0
      %v2193 = vmax.f32 %v1728, 0.0
      %v2194 = vmax.f32 %v1996, 0.0
      %v2195 = vmax.f32 %v1195, 0.0
      %v2196 = vmax.f32 %v1463, 0.0
      %v2197 = vmax.f32 %v1731, 0.0
      %v2198 = vmax.f32 %v1999, 0.0
      %v2199 = vmax.f32 %v1197, 0.0
      %v2200 = vmax.f32 %v1465, 0.0
      %v2201 = vmax.f32 %v1733, 0.0
      %v2202 = vmax.f32 %v2001, 0.0
      %v2203 = vpack.c.bf16 %v2007, %v2003
      %v2204 = vpack.c.bf16 %v2008, %v2004
      %v2205 = vpack.c.bf16 %v2009, %v2005
      %v2206 = vpack.c.bf16 %v2010, %v2006
      %v2207 = vpack.c.bf16 %v2015, %v2011
      %v2208 = vpack.c.bf16 %v2016, %v2012
      %v2209 = vpack.c.bf16 %v2017, %v2013
      %v2210 = vpack.c.bf16 %v2018, %v2014
      %v2211 = vpack.c.bf16 %v2023, %v2019
      %v2212 = vpack.c.bf16 %v2024, %v2020
      %v2213 = vpack.c.bf16 %v2025, %v2021
      %v2214 = vpack.c.bf16 %v2026, %v2022
      %v2215 = vpack.c.bf16 %v2031, %v2027
      %v2216 = vpack.c.bf16 %v2032, %v2028
      %v2217 = vpack.c.bf16 %v2033, %v2029
      %v2218 = vpack.c.bf16 %v2034, %v2030
      %v2219 = vpack.c.bf16 %v2039, %v2035
      %v2220 = vpack.c.bf16 %v2040, %v2036
      %v2221 = vpack.c.bf16 %v2041, %v2037
      %v2222 = vpack.c.bf16 %v2042, %v2038
      %v2223 = vpack.c.bf16 %v2047, %v2043
      %v2224 = vpack.c.bf16 %v2048, %v2044
      %v2225 = vpack.c.bf16 %v2049, %v2045
      %v2226 = vpack.c.bf16 %v2050, %v2046
      %v2227 = vpack.c.bf16 %v2055, %v2051
      %v2228 = vpack.c.bf16 %v2056, %v2052
      %v2229 = vpack.c.bf16 %v2057, %v2053
      %v2230 = vpack.c.bf16 %v2058, %v2054
      %v2231 = vpack.c.bf16 %v2063, %v2059
      %v2232 = vpack.c.bf16 %v2064, %v2060
      %v2233 = vpack.c.bf16 %v2065, %v2061
      %v2234 = vpack.c.bf16 %v2066, %v2062
      %v2235 = vpack.c.bf16 %v2071, %v2067
      %v2236 = vpack.c.bf16 %v2072, %v2068
      %v2237 = vpack.c.bf16 %v2073, %v2069
      %v2238 = vpack.c.bf16 %v2074, %v2070
      %v2239 = vpack.c.bf16 %v2079, %v2075
      %v2240 = vpack.c.bf16 %v2080, %v2076
      %v2241 = vpack.c.bf16 %v2081, %v2077
      %v2242 = vpack.c.bf16 %v2082, %v2078
      %v2243 = vpack.c.bf16 %v2087, %v2083
      %v2244 = vpack.c.bf16 %v2088, %v2084
      %v2245 = vpack.c.bf16 %v2089, %v2085
      %v2246 = vpack.c.bf16 %v2090, %v2086
      %v2247 = vpack.c.bf16 %v2095, %v2091
      %v2248 = vpack.c.bf16 %v2096, %v2092
      %v2249 = vpack.c.bf16 %v2097, %v2093
      %v2250 = vpack.c.bf16 %v2098, %v2094
      %v2251 = vpack.c.bf16 %v2103, %v2099
      %v2252 = vpack.c.bf16 %v2104, %v2100
      %v2253 = vpack.c.bf16 %v2105, %v2101
      %v2254 = vpack.c.bf16 %v2106, %v2102
      %v2255 = vpack.c.bf16 %v2111, %v2107
      %v2256 = vpack.c.bf16 %v2112, %v2108
      %v2257 = vpack.c.bf16 %v2113, %v2109
      %v2258 = vpack.c.bf16 %v2114, %v2110
      %v2259 = vpack.c.bf16 %v2119, %v2115
      %v2260 = vpack.c.bf16 %v2120, %v2116
      %v2261 = vpack.c.bf16 %v2121, %v2117
      %v2262 = vpack.c.bf16 %v2122, %v2118
      %v2263 = vpack.c.bf16 %v2127, %v2123
      %v2264 = vpack.c.bf16 %v2128, %v2124
      %v2265 = vpack.c.bf16 %v2129, %v2125
      %v2266 = vpack.c.bf16 %v2130, %v2126
      %v2267 = vpack.c.bf16 %v2135, %v2131
      %v2268 = vpack.c.bf16 %v2136, %v2132
      %v2269 = vpack.c.bf16 %v2137, %v2133
      %v2270 = vpack.c.bf16 %v2138, %v2134
      %v2271 = vpack.c.bf16 %v2143, %v2139
      %v2272 = vpack.c.bf16 %v2144, %v2140
      %v2273 = vpack.c.bf16 %v2145, %v2141
      %v2274 = vpack.c.bf16 %v2146, %v2142
      %v2275 = vpack.c.bf16 %v2151, %v2147
      %v2276 = vpack.c.bf16 %v2152, %v2148
      %v2277 = vpack.c.bf16 %v2153, %v2149
      %v2278 = vpack.c.bf16 %v2154, %v2150
      %v2279 = vpack.c.bf16 %v2159, %v2155
      %v2280 = vpack.c.bf16 %v2160, %v2156
      %v2281 = vpack.c.bf16 %v2161, %v2157
      %v2282 = vpack.c.bf16 %v2162, %v2158
      %v2283 = vpack.c.bf16 %v2167, %v2163
      %v2284 = vpack.c.bf16 %v2168, %v2164
      %v2285 = vpack.c.bf16 %v2169, %v2165
      %v2286 = vpack.c.bf16 %v2170, %v2166
      %v2287 = vpack.c.bf16 %v2175, %v2171
      %v2288 = vpack.c.bf16 %v2176, %v2172
      %v2289 = vpack.c.bf16 %v2177, %v2173
      %v2290 = vpack.c.bf16 %v2178, %v2174
      %v2291 = vpack.c.bf16 %v2183, %v2179
      %v2292 = vpack.c.bf16 %v2184, %v2180
      %v2293 = vpack.c.bf16 %v2185, %v2181
      %v2294 = vpack.c.bf16 %v2186, %v2182
      %v2295 = vpack.c.bf16 %v2191, %v2187
      %v2296 = vpack.c.bf16 %v2192, %v2188
      %v2297 = vpack.c.bf16 %v2193, %v2189
      %v2298 = vpack.c.bf16 %v2194, %v2190
      %v2299 = vpack.c.bf16 %v2199, %v2195
      %v2300 = vpack.c.bf16 %v2200, %v2196
      %v2301 = vpack.c.bf16 %v2201, %v2197
      %v2302 = vpack.c.bf16 %v2202, %v2198
      %v2303 = vld [vmem:[%s3] sm:$0xff]
      %v2304 = vld [vmem:[%s3 + $0x8] sm:$0xff]
      %v2305 = vld [vmem:[%s3 + $0x10] sm:$0xff]
      %v2306 = vld [vmem:[%s3 + $0x18] sm:$0xff]
      %v2307 = vld [vmem:[%s3 + $0x20] sm:$0xff]
      %v2308 = vld [vmem:[%s3 + $0x28] sm:$0xff]
      %v2309 = vld [vmem:[%s3 + $0x30] sm:$0xff]
      %v2310 = vld [vmem:[%s3 + $0x38] sm:$0xff]
      %v2311 = vld [vmem:[%s3 + $0x40] sm:$0xff]
      %v2312 = vld [vmem:[%s3 + $0x48] sm:$0xff]
      %v2313 = vld [vmem:[%s3 + $0x50] sm:$0xff]
      %v2314 = vld [vmem:[%s3 + $0x58] sm:$0xff]
      %v2315 = vld [vmem:[%s3 + $0x60] sm:$0xff]
      %v2316 = vld [vmem:[%s3 + $0x68] sm:$0xff]
      %v2317 = vld [vmem:[%s3 + $0x70] sm:$0xff]
      %v2318 = vld [vmem:[%s3 + $0x78] sm:$0xff]
      %v2319 = vld [vmem:[%s3 + $0x80] sm:$0xff]
      %v2320 = vld [vmem:[%s3 + $0x88] sm:$0xff]
      %v2321 = vld [vmem:[%s3 + $0x90] sm:$0xff]
      %v2322 = vld [vmem:[%s3 + $0x98] sm:$0xff]
      %v2323 = vld [vmem:[%s3 + $0xa0] sm:$0xff]
      %v2324 = vld [vmem:[%s3 + $0xa8] sm:$0xff]
      %v2325 = vld [vmem:[%s3 + $0xb0] sm:$0xff]
      %v2326 = vld [vmem:[%s3 + $0xb8] sm:$0xff]
      %v2327 = vld [vmem:[%s3 + $0xc0] sm:$0xff]
      %v2328 = vld [vmem:[%s3 + $0xc8] sm:$0xff]
      %v2329 = vld [vmem:[%s3 + $0xd0] sm:$0xff]
      %v2330 = vld [vmem:[%s3 + $0xd8] sm:$0xff]
      %v2331 = vld [vmem:[%s3 + $0xe0] sm:$0xff]
      %v2332 = vld [vmem:[%s3 + $0xe8] sm:$0xff]
      %v2333 = vld [vmem:[%s3 + $0xf0] sm:$0xff]
      %v2334 = vld [vmem:[%s3 + $0xf8] sm:$0xff]
      %v2335 = vld [vmem:[%s3 + $0x100] sm:$0xff]
      %v2336 = vld [vmem:[%s3 + $0x108] sm:$0xff]
      %v2337 = vld [vmem:[%s3 + $0x110] sm:$0xff]
      %v2338 = vld [vmem:[%s3 + $0x118] sm:$0xff]
      %v2339 = vld [vmem:[%s3 + $0x120] sm:$0xff]
      %v2340 = vld [vmem:[%s3 + $0x128] sm:$0xff]
      %v2341 = vld [vmem:[%s3 + $0x130] sm:$0xff]
      %v2342 = vld [vmem:[%s3 + $0x138] sm:$0xff]
      %v2343 = vld [vmem:[%s3 + $0x140] sm:$0xff]
      %v2344 = vld [vmem:[%s3 + $0x148] sm:$0xff]
      %v2345 = vld [vmem:[%s3 + $0x150] sm:$0xff]
      %v2346 = vld [vmem:[%s3 + $0x158] sm:$0xff]
      %v2347 = vld [vmem:[%s3 + $0x160] sm:$0xff]
      %v2348 = vld [vmem:[%s3 + $0x168] sm:$0xff]
      %v2349 = vld [vmem:[%s3 + $0x170] sm:$0xff]
      %v2350 = vld [vmem:[%s3 + $0x178] sm:$0xff]
      %v2351 = vld [vmem:[%s3 + $0x180] sm:$0xff]
      %v2352 = vld [vmem:[%s3 + $0x188] sm:$0xff]
      %v2353 = vld [vmem:[%s3 + $0x190] sm:$0xff]
      %v2354 = vld [vmem:[%s3 + $0x198] sm:$0xff]
      %v2355 = vld [vmem:[%s3 + $0x1a0] sm:$0xff]
      %v2356 = vld [vmem:[%s3 + $0x1a8] sm:$0xff]
      %v2357 = vld [vmem:[%s3 + $0x1b0] sm:$0xff]
      %v2358 = vld [vmem:[%s3 + $0x1b8] sm:$0xff]
      %v2359 = vld [vmem:[%s3 + $0x1c0] sm:$0xff]
      %v2360 = vld [vmem:[%s3 + $0x1c8] sm:$0xff]
      %v2361 = vld [vmem:[%s3 + $0x1d0] sm:$0xff]
      %v2362 = vld [vmem:[%s3 + $0x1d8] sm:$0xff]
      %v2363 = vld [vmem:[%s3 + $0x1e0] sm:$0xff]
      %v2364 = vld [vmem:[%s3 + $0x1e8] sm:$0xff]
      %v2365 = vld [vmem:[%s3 + $0x1f0] sm:$0xff]
      %v2366 = vld [vmem:[%s3 + $0x1f8] sm:$0xff]
      %v2367 = vld [vmem:[%s3 + $0x200] sm:$0xff]
      %v2368 = vld [vmem:[%s3 + $0x208] sm:$0xff]
      %v2369 = vld [vmem:[%s3 + $0x210] sm:$0xff]
      %v2370 = vld [vmem:[%s3 + $0x218] sm:$0xff]
      %v2371 = vld [vmem:[%s3 + $0x220] sm:$0xff]
      %v2372 = vld [vmem:[%s3 + $0x228] sm:$0xff]
      %v2373 = vld [vmem:[%s3 + $0x230] sm:$0xff]
      %v2374 = vld [vmem:[%s3 + $0x238] sm:$0xff]
      %v2375 = vld [vmem:[%s3 + $0x240] sm:$0xff]
      %v2376 = vld [vmem:[%s3 + $0x248] sm:$0xff]
      %v2377 = vld [vmem:[%s3 + $0x250] sm:$0xff]
      %v2378 = vld [vmem:[%s3 + $0x258] sm:$0xff]
      %v2379 = vld [vmem:[%s3 + $0x260] sm:$0xff]
      %v2380 = vld [vmem:[%s3 + $0x268] sm:$0xff]
      %v2381 = vld [vmem:[%s3 + $0x270] sm:$0xff]
      %v2382 = vld [vmem:[%s3 + $0x278] sm:$0xff]
      %v2383 = vld [vmem:[%s3 + $0x280] sm:$0xff]
      %v2384 = vld [vmem:[%s3 + $0x288] sm:$0xff]
      %v2385 = vld [vmem:[%s3 + $0x290] sm:$0xff]
      %v2386 = vld [vmem:[%s3 + $0x298] sm:$0xff]
      %v2387 = vld [vmem:[%s3 + $0x2a0] sm:$0xff]
      %v2388 = vld [vmem:[%s3 + $0x2a8] sm:$0xff]
      %v2389 = vld [vmem:[%s3 + $0x2b0] sm:$0xff]
      %v2390 = vld [vmem:[%s3 + $0x2b8] sm:$0xff]
      %v2391 = vld [vmem:[%s3 + $0x2c0] sm:$0xff]
      %v2392 = vld [vmem:[%s3 + $0x2c8] sm:$0xff]
      %v2393 = vld [vmem:[%s3 + $0x2d0] sm:$0xff]
      %v2394 = vld [vmem:[%s3 + $0x2d8] sm:$0xff]
      %v2395 = vld [vmem:[%s3 + $0x2e0] sm:$0xff]
      %v2396 = vld [vmem:[%s3 + $0x2e8] sm:$0xff]
      %v2397 = vld [vmem:[%s3 + $0x2f0] sm:$0xff]
      %v2398 = vld [vmem:[%s3 + $0x2f8] sm:$0xff]
      %v2399 = vld [vmem:[%s3 + $0x300] sm:$0xff]
      %v2400 = vld [vmem:[%s3 + $0x308] sm:$0xff]
      %v2401 = vld [vmem:[%s3 + $0x310] sm:$0xff]
      %v2402 = vld [vmem:[%s3 + $0x318] sm:$0xff]
      %v2403 = vld [vmem:[%s3 + $0x320] sm:$0xff]
      %v2404 = vld [vmem:[%s3 + $0x328] sm:$0xff]
      %v2405 = vld [vmem:[%s3 + $0x330] sm:$0xff]
      %v2406 = vld [vmem:[%s3 + $0x338] sm:$0xff]
      %v2407 = vld [vmem:[%s3 + $0x340] sm:$0xff]
      %v2408 = vld [vmem:[%s3 + $0x348] sm:$0xff]
      %v2409 = vld [vmem:[%s3 + $0x350] sm:$0xff]
      %v2410 = vld [vmem:[%s3 + $0x358] sm:$0xff]
      %v2411 = vld [vmem:[%s3 + $0x360] sm:$0xff]
      %v2412 = vld [vmem:[%s3 + $0x368] sm:$0xff]
      %v2413 = vld [vmem:[%s3 + $0x370] sm:$0xff]
      %v2414 = vld [vmem:[%s3 + $0x378] sm:$0xff]
      %v2415 = vld [vmem:[%s3 + $0x380] sm:$0xff]
      %v2416 = vld [vmem:[%s3 + $0x388] sm:$0xff]
      %v2417 = vld [vmem:[%s3 + $0x390] sm:$0xff]
      %v2418 = vld [vmem:[%s3 + $0x398] sm:$0xff]
      %v2419 = vld [vmem:[%s3 + $0x3a0] sm:$0xff]
      %v2420 = vld [vmem:[%s3 + $0x3a8] sm:$0xff]
      %v2421 = vld [vmem:[%s3 + $0x3b0] sm:$0xff]
      %v2422 = vld [vmem:[%s3 + $0x3b8] sm:$0xff]
      %v2423 = vld [vmem:[%s3 + $0x3c0] sm:$0xff]
      %v2424 = vld [vmem:[%s3 + $0x3c8] sm:$0xff]
      %v2425 = vld [vmem:[%s3 + $0x3d0] sm:$0xff]
      %v2426 = vld [vmem:[%s3 + $0x3d8] sm:$0xff]
      %v2427 = vld [vmem:[%s3 + $0x3e0] sm:$0xff]
      %v2428 = vld [vmem:[%s3 + $0x3e8] sm:$0xff]
      %v2429 = vld [vmem:[%s3 + $0x3f0] sm:$0xff]
      %v2430 = vld [vmem:[%s3 + $0x3f8] sm:$0xff]
      %v2431 = vld [vmem:[%s3 + $0x400] sm:$0xff]
      %v2432 = vld [vmem:[%s3 + $0x408] sm:$0xff]
      %v2433 = vld [vmem:[%s3 + $0x410] sm:$0xff]
      %v2434 = vld [vmem:[%s3 + $0x418] sm:$0xff]
      %v2435 = vld [vmem:[%s3 + $0x420] sm:$0xff]
      %v2436 = vld [vmem:[%s3 + $0x428] sm:$0xff]
      %v2437 = vld [vmem:[%s3 + $0x430] sm:$0xff]
      %v2438 = vld [vmem:[%s3 + $0x438] sm:$0xff]
      %v2439 = vld [vmem:[%s3 + $0x440] sm:$0xff]
      %v2440 = vld [vmem:[%s3 + $0x448] sm:$0xff]
      %v2441 = vld [vmem:[%s3 + $0x450] sm:$0xff]
      %v2442 = vld [vmem:[%s3 + $0x458] sm:$0xff]
      %v2443 = vld [vmem:[%s3 + $0x460] sm:$0xff]
      %v2444 = vld [vmem:[%s3 + $0x468] sm:$0xff]
      %v2445 = vld [vmem:[%s3 + $0x470] sm:$0xff]
      %v2446 = vld [vmem:[%s3 + $0x478] sm:$0xff]
      %v2447 = vld [vmem:[%s3 + $0x480] sm:$0xff]
      %v2448 = vld [vmem:[%s3 + $0x488] sm:$0xff]
      %v2449 = vld [vmem:[%s3 + $0x490] sm:$0xff]
      %v2450 = vld [vmem:[%s3 + $0x498] sm:$0xff]
      %v2451 = vld [vmem:[%s3 + $0x4a0] sm:$0xff]
      %v2452 = vld [vmem:[%s3 + $0x4a8] sm:$0xff]
      %v2453 = vld [vmem:[%s3 + $0x4b0] sm:$0xff]
      %v2454 = vld [vmem:[%s3 + $0x4b8] sm:$0xff]
      %v2455 = vld [vmem:[%s3 + $0x4c0] sm:$0xff]
      %v2456 = vld [vmem:[%s3 + $0x4c8] sm:$0xff]
      %v2457 = vld [vmem:[%s3 + $0x4d0] sm:$0xff]
      %v2458 = vld [vmem:[%s3 + $0x4d8] sm:$0xff]
      %v2459 = vld [vmem:[%s3 + $0x4e0] sm:$0xff]
      %v2460 = vld [vmem:[%s3 + $0x4e8] sm:$0xff]
      %v2461 = vld [vmem:[%s3 + $0x4f0] sm:$0xff]
      %v2462 = vld [vmem:[%s3 + $0x4f8] sm:$0xff]
      %v2463 = vld [vmem:[%s3 + $0x500] sm:$0xff]
      %v2464 = vld [vmem:[%s3 + $0x508] sm:$0xff]
      %v2465 = vld [vmem:[%s3 + $0x510] sm:$0xff]
      %v2466 = vld [vmem:[%s3 + $0x518] sm:$0xff]
      %v2467 = vld [vmem:[%s3 + $0x520] sm:$0xff]
      %v2468 = vld [vmem:[%s3 + $0x528] sm:$0xff]
      %v2469 = vld [vmem:[%s3 + $0x530] sm:$0xff]
      %v2470 = vld [vmem:[%s3 + $0x538] sm:$0xff]
      %v2471 = vld [vmem:[%s3 + $0x540] sm:$0xff]
      %v2472 = vld [vmem:[%s3 + $0x548] sm:$0xff]
      %v2473 = vld [vmem:[%s3 + $0x550] sm:$0xff]
      %v2474 = vld [vmem:[%s3 + $0x558] sm:$0xff]
      %v2475 = vld [vmem:[%s3 + $0x560] sm:$0xff]
      %v2476 = vld [vmem:[%s3 + $0x568] sm:$0xff]
      %v2477 = vld [vmem:[%s3 + $0x570] sm:$0xff]
      %v2478 = vld [vmem:[%s3 + $0x578] sm:$0xff]
      %v2479 = vld [vmem:[%s3 + $0x580] sm:$0xff]
      %v2480 = vld [vmem:[%s3 + $0x588] sm:$0xff]
      %v2481 = vld [vmem:[%s3 + $0x590] sm:$0xff]
      %v2482 = vld [vmem:[%s3 + $0x598] sm:$0xff]
      %v2483 = vld [vmem:[%s3 + $0x5a0] sm:$0xff]
      %v2484 = vld [vmem:[%s3 + $0x5a8] sm:$0xff]
      %v2485 = vld [vmem:[%s3 + $0x5b0] sm:$0xff]
      %v2486 = vld [vmem:[%s3 + $0x5b8] sm:$0xff]
      %v2487 = vld [vmem:[%s3 + $0x5c0] sm:$0xff]
      %v2488 = vld [vmem:[%s3 + $0x5c8] sm:$0xff]
      %v2489 = vld [vmem:[%s3 + $0x5d0] sm:$0xff]
      %v2490 = vld [vmem:[%s3 + $0x5d8] sm:$0xff]
      %v2491 = vld [vmem:[%s3 + $0x5e0] sm:$0xff]
      %v2492 = vld [vmem:[%s3 + $0x5e8] sm:$0xff]
      %v2493 = vld [vmem:[%s3 + $0x5f0] sm:$0xff]
      %v2494 = vld [vmem:[%s3 + $0x5f8] sm:$0xff]
      %v2495 = vld [vmem:[%s4] sm:$0x3f]
      %v2497 = vperm.slane %v2495, 0
      %v2498 = vperm.slane %v2495, 1
      %v2499 = vperm.slane %v2495, 2
      %v2500 = vperm.slane %v2495, 3
      %v2501 = vperm.slane %v2495, 4
      %v2502 = vperm.slane %v2495, 5
      %v2701 = vunpack.c.l.b16 %v2303
      %v2702 = vunpack.c.h.b16 %v2303
      %v2703 = vunpack.c.l.b16 %v2304
      %v2704 = vunpack.c.h.b16 %v2304
      %v2705 = vunpack.c.l.b16 %v2305
      %v2706 = vunpack.c.h.b16 %v2305
      %v2707 = vunpack.c.l.b16 %v2306
      %v2708 = vunpack.c.h.b16 %v2306
      %v2709 = vunpack.c.l.b16 %v2307
      %v2710 = vunpack.c.h.b16 %v2307
      %v2711 = vunpack.c.l.b16 %v2308
      %v2712 = vunpack.c.h.b16 %v2308
      %v2713 = vunpack.c.l.b16 %v2309
      %v2714 = vunpack.c.h.b16 %v2309
      %v2715 = vunpack.c.l.b16 %v2310
      %v2716 = vunpack.c.h.b16 %v2310
      %v2717 = vunpack.c.l.b16 %v2311
      %v2718 = vunpack.c.h.b16 %v2311
      %v2719 = vunpack.c.l.b16 %v2312
      %v2720 = vunpack.c.h.b16 %v2312
      %v2721 = vunpack.c.l.b16 %v2313
      %v2722 = vunpack.c.h.b16 %v2313
      %v2723 = vunpack.c.l.b16 %v2314
      %v2724 = vunpack.c.h.b16 %v2314
      %v2725 = vunpack.c.l.b16 %v2315
      %v2726 = vunpack.c.h.b16 %v2315
      %v2727 = vunpack.c.l.b16 %v2316
      %v2728 = vunpack.c.h.b16 %v2316
      %v2729 = vunpack.c.l.b16 %v2317
      %v2730 = vunpack.c.h.b16 %v2317
      %v2731 = vunpack.c.l.b16 %v2318
      %v2732 = vunpack.c.h.b16 %v2318
      %v2733 = vunpack.c.l.b16 %v2319
      %v2734 = vunpack.c.h.b16 %v2319
      %v2735 = vunpack.c.l.b16 %v2320
      %v2736 = vunpack.c.h.b16 %v2320
      %v2737 = vunpack.c.l.b16 %v2321
      %v2738 = vunpack.c.h.b16 %v2321
      %v2739 = vunpack.c.l.b16 %v2322
      %v2740 = vunpack.c.h.b16 %v2322
      %v2741 = vunpack.c.l.b16 %v2323
      %v2742 = vunpack.c.h.b16 %v2323
      %v2743 = vunpack.c.l.b16 %v2324
      %v2744 = vunpack.c.h.b16 %v2324
      %v2745 = vunpack.c.l.b16 %v2325
      %v2746 = vunpack.c.h.b16 %v2325
      %v2747 = vunpack.c.l.b16 %v2326
      %v2748 = vunpack.c.h.b16 %v2326
      %v2749 = vunpack.c.l.b16 %v2327
      %v2750 = vunpack.c.h.b16 %v2327
      %v2751 = vunpack.c.l.b16 %v2328
      %v2752 = vunpack.c.h.b16 %v2328
      %v2753 = vunpack.c.l.b16 %v2329
      %v2754 = vunpack.c.h.b16 %v2329
      %v2755 = vunpack.c.l.b16 %v2330
      %v2756 = vunpack.c.h.b16 %v2330
      %v2757 = vunpack.c.l.b16 %v2331
      %v2758 = vunpack.c.h.b16 %v2331
      %v2759 = vunpack.c.l.b16 %v2332
      %v2760 = vunpack.c.h.b16 %v2332
      %v2761 = vunpack.c.l.b16 %v2333
      %v2762 = vunpack.c.h.b16 %v2333
      %v2763 = vunpack.c.l.b16 %v2334
      %v2764 = vunpack.c.h.b16 %v2334
      %v2765 = vunpack.c.l.b16 %v2335
      %v2766 = vunpack.c.h.b16 %v2335
      %v2767 = vunpack.c.l.b16 %v2336
      %v2768 = vunpack.c.h.b16 %v2336
      %v2769 = vunpack.c.l.b16 %v2337
      %v2770 = vunpack.c.h.b16 %v2337
      %v2771 = vunpack.c.l.b16 %v2338
      %v2772 = vunpack.c.h.b16 %v2338
      %v2773 = vunpack.c.l.b16 %v2339
      %v2774 = vunpack.c.h.b16 %v2339
      %v2775 = vunpack.c.l.b16 %v2340
      %v2776 = vunpack.c.h.b16 %v2340
      %v2777 = vunpack.c.l.b16 %v2341
      %v2778 = vunpack.c.h.b16 %v2341
      %v2779 = vunpack.c.l.b16 %v2342
      %v2780 = vunpack.c.h.b16 %v2342
      %v2781 = vunpack.c.l.b16 %v2343
      %v2782 = vunpack.c.h.b16 %v2343
      %v2783 = vunpack.c.l.b16 %v2344
      %v2784 = vunpack.c.h.b16 %v2344
      %v2785 = vunpack.c.l.b16 %v2345
      %v2786 = vunpack.c.h.b16 %v2345
      %v2787 = vunpack.c.l.b16 %v2346
      %v2788 = vunpack.c.h.b16 %v2346
      %v2789 = vunpack.c.l.b16 %v2347
      %v2790 = vunpack.c.h.b16 %v2347
      %v2791 = vunpack.c.l.b16 %v2348
      %v2792 = vunpack.c.h.b16 %v2348
      %v2793 = vunpack.c.l.b16 %v2349
      %v2794 = vunpack.c.h.b16 %v2349
      %v2795 = vunpack.c.l.b16 %v2350
      %v2796 = vunpack.c.h.b16 %v2350
      %v2797 = vunpack.c.l.b16 %v2351
      %v2798 = vunpack.c.h.b16 %v2351
      %v2799 = vunpack.c.l.b16 %v2352
      %v2800 = vunpack.c.h.b16 %v2352
      %v2801 = vunpack.c.l.b16 %v2353
      %v2802 = vunpack.c.h.b16 %v2353
      %v2803 = vunpack.c.l.b16 %v2354
      %v2804 = vunpack.c.h.b16 %v2354
      %v2805 = vunpack.c.l.b16 %v2355
      %v2806 = vunpack.c.h.b16 %v2355
      %v2807 = vunpack.c.l.b16 %v2356
      %v2808 = vunpack.c.h.b16 %v2356
      %v2809 = vunpack.c.l.b16 %v2357
      %v2810 = vunpack.c.h.b16 %v2357
      %v2811 = vunpack.c.l.b16 %v2358
      %v2812 = vunpack.c.h.b16 %v2358
      %v2813 = vunpack.c.l.b16 %v2359
      %v2814 = vunpack.c.h.b16 %v2359
      %v2815 = vunpack.c.l.b16 %v2360
      %v2816 = vunpack.c.h.b16 %v2360
      %v2817 = vunpack.c.l.b16 %v2361
      %v2818 = vunpack.c.h.b16 %v2361
      %v2819 = vunpack.c.l.b16 %v2362
      %v2820 = vunpack.c.h.b16 %v2362
      %v2821 = vunpack.c.l.b16 %v2363
      %v2822 = vunpack.c.h.b16 %v2363
      %v2823 = vunpack.c.l.b16 %v2364
      %v2824 = vunpack.c.h.b16 %v2364
      %v2825 = vunpack.c.l.b16 %v2365
      %v2826 = vunpack.c.h.b16 %v2365
      %v2827 = vunpack.c.l.b16 %v2366
      %v2828 = vunpack.c.h.b16 %v2366
      %v2829 = vunpack.c.l.b16 %v2367
      %v2830 = vunpack.c.h.b16 %v2367
      %v2831 = vunpack.c.l.b16 %v2368
      %v2832 = vunpack.c.h.b16 %v2368
      %v2833 = vunpack.c.l.b16 %v2369
      %v2834 = vunpack.c.h.b16 %v2369
      %v2835 = vunpack.c.l.b16 %v2370
      %v2836 = vunpack.c.h.b16 %v2370
      %v2837 = vunpack.c.l.b16 %v2371
      %v2838 = vunpack.c.h.b16 %v2371
      %v2839 = vunpack.c.l.b16 %v2372
      %v2840 = vunpack.c.h.b16 %v2372
      %v2841 = vunpack.c.l.b16 %v2373
      %v2842 = vunpack.c.h.b16 %v2373
      %v2843 = vunpack.c.l.b16 %v2374
      %v2844 = vunpack.c.h.b16 %v2374
      %v2845 = vunpack.c.l.b16 %v2375
      %v2846 = vunpack.c.h.b16 %v2375
      %v2847 = vunpack.c.l.b16 %v2376
      %v2848 = vunpack.c.h.b16 %v2376
      %v2849 = vunpack.c.l.b16 %v2377
      %v2850 = vunpack.c.h.b16 %v2377
      %v2851 = vunpack.c.l.b16 %v2378
      %v2852 = vunpack.c.h.b16 %v2378
      %v2853 = vunpack.c.l.b16 %v2379
      %v2854 = vunpack.c.h.b16 %v2379
      %v2855 = vunpack.c.l.b16 %v2380
      %v2856 = vunpack.c.h.b16 %v2380
      %v2857 = vunpack.c.l.b16 %v2381
      %v2858 = vunpack.c.h.b16 %v2381
      %v2859 = vunpack.c.l.b16 %v2382
      %v2860 = vunpack.c.h.b16 %v2382
      %v2861 = vunpack.c.l.b16 %v2383
      %v2862 = vunpack.c.h.b16 %v2383
      %v2863 = vunpack.c.l.b16 %v2384
      %v2864 = vunpack.c.h.b16 %v2384
      %v2865 = vunpack.c.l.b16 %v2385
      %v2866 = vunpack.c.h.b16 %v2385
      %v2867 = vunpack.c.l.b16 %v2386
      %v2868 = vunpack.c.h.b16 %v2386
      %v2869 = vunpack.c.l.b16 %v2387
      %v2870 = vunpack.c.h.b16 %v2387
      %v2871 = vunpack.c.l.b16 %v2388
      %v2872 = vunpack.c.h.b16 %v2388
      %v2873 = vunpack.c.l.b16 %v2389
      %v2874 = vunpack.c.h.b16 %v2389
      %v2875 = vunpack.c.l.b16 %v2390
      %v2876 = vunpack.c.h.b16 %v2390
      %v2877 = vunpack.c.l.b16 %v2391
      %v2878 = vunpack.c.h.b16 %v2391
      %v2879 = vunpack.c.l.b16 %v2392
      %v2880 = vunpack.c.h.b16 %v2392
      %v2881 = vunpack.c.l.b16 %v2393
      %v2882 = vunpack.c.h.b16 %v2393
      %v2883 = vunpack.c.l.b16 %v2394
      %v2884 = vunpack.c.h.b16 %v2394
      %v2885 = vunpack.c.l.b16 %v2395
      %v2886 = vunpack.c.h.b16 %v2395
      %v2887 = vunpack.c.l.b16 %v2396
      %v2888 = vunpack.c.h.b16 %v2396
      %v2889 = vunpack.c.l.b16 %v2397
      %v2890 = vunpack.c.h.b16 %v2397
      %v2891 = vunpack.c.l.b16 %v2398
      %v2892 = vunpack.c.h.b16 %v2398
      %v2893 = vunpack.c.l.b16 %v2399
      %v2894 = vunpack.c.h.b16 %v2399
      %v2895 = vunpack.c.l.b16 %v2400
      %v2896 = vunpack.c.h.b16 %v2400
      %v2897 = vunpack.c.l.b16 %v2401
      %v2898 = vunpack.c.h.b16 %v2401
      %v2899 = vunpack.c.l.b16 %v2402
      %v2900 = vunpack.c.h.b16 %v2402
      %v2901 = vunpack.c.l.b16 %v2403
      %v2902 = vunpack.c.h.b16 %v2403
      %v2903 = vunpack.c.l.b16 %v2404
      %v2904 = vunpack.c.h.b16 %v2404
      %v2905 = vunpack.c.l.b16 %v2405
      %v2906 = vunpack.c.h.b16 %v2405
      %v2907 = vunpack.c.l.b16 %v2406
      %v2908 = vunpack.c.h.b16 %v2406
      %v2909 = vunpack.c.l.b16 %v2407
      %v2910 = vunpack.c.h.b16 %v2407
      %v2911 = vunpack.c.l.b16 %v2408
      %v2912 = vunpack.c.h.b16 %v2408
      %v2913 = vunpack.c.l.b16 %v2409
      %v2914 = vunpack.c.h.b16 %v2409
      %v2915 = vunpack.c.l.b16 %v2410
      %v2916 = vunpack.c.h.b16 %v2410
      %v2917 = vunpack.c.l.b16 %v2411
      %v2918 = vunpack.c.h.b16 %v2411
      %v2919 = vunpack.c.l.b16 %v2412
      %v2920 = vunpack.c.h.b16 %v2412
      %v2921 = vunpack.c.l.b16 %v2413
      %v2922 = vunpack.c.h.b16 %v2413
      %v2923 = vunpack.c.l.b16 %v2414
      %v2924 = vunpack.c.h.b16 %v2414
      %v2925 = vunpack.c.l.b16 %v2415
      %v2926 = vunpack.c.h.b16 %v2415
      %v2927 = vunpack.c.l.b16 %v2416
      %v2928 = vunpack.c.h.b16 %v2416
      %v2929 = vunpack.c.l.b16 %v2417
      %v2930 = vunpack.c.h.b16 %v2417
      %v2931 = vunpack.c.l.b16 %v2418
      %v2932 = vunpack.c.h.b16 %v2418
      %v2933 = vunpack.c.l.b16 %v2419
      %v2934 = vunpack.c.h.b16 %v2419
      %v2935 = vunpack.c.l.b16 %v2420
      %v2936 = vunpack.c.h.b16 %v2420
      %v2937 = vunpack.c.l.b16 %v2421
      %v2938 = vunpack.c.h.b16 %v2421
      %v2939 = vunpack.c.l.b16 %v2422
      %v2940 = vunpack.c.h.b16 %v2422
      %v2941 = vunpack.c.l.b16 %v2423
      %v2942 = vunpack.c.h.b16 %v2423
      %v2943 = vunpack.c.l.b16 %v2424
      %v2944 = vunpack.c.h.b16 %v2424
      %v2945 = vunpack.c.l.b16 %v2425
      %v2946 = vunpack.c.h.b16 %v2425
      %v2947 = vunpack.c.l.b16 %v2426
      %v2948 = vunpack.c.h.b16 %v2426
      %v2949 = vunpack.c.l.b16 %v2427
      %v2950 = vunpack.c.h.b16 %v2427
      %v2951 = vunpack.c.l.b16 %v2428
      %v2952 = vunpack.c.h.b16 %v2428
      %v2953 = vunpack.c.l.b16 %v2429
      %v2954 = vunpack.c.h.b16 %v2429
      %v2955 = vunpack.c.l.b16 %v2430
      %v2956 = vunpack.c.h.b16 %v2430
      %v2957 = vunpack.c.l.b16 %v2431
      %v2958 = vunpack.c.h.b16 %v2431
      %v2959 = vunpack.c.l.b16 %v2432
      %v2960 = vunpack.c.h.b16 %v2432
      %v2961 = vunpack.c.l.b16 %v2433
      %v2962 = vunpack.c.h.b16 %v2433
      %v2963 = vunpack.c.l.b16 %v2434
      %v2964 = vunpack.c.h.b16 %v2434
      %v2965 = vunpack.c.l.b16 %v2435
      %v2966 = vunpack.c.h.b16 %v2435
      %v2967 = vunpack.c.l.b16 %v2436
      %v2968 = vunpack.c.h.b16 %v2436
      %v2969 = vunpack.c.l.b16 %v2437
      %v2970 = vunpack.c.h.b16 %v2437
      %v2971 = vunpack.c.l.b16 %v2438
      %v2972 = vunpack.c.h.b16 %v2438
      %v2973 = vunpack.c.l.b16 %v2439
      %v2974 = vunpack.c.h.b16 %v2439
      %v2975 = vunpack.c.l.b16 %v2440
      %v2976 = vunpack.c.h.b16 %v2440
      %v2977 = vunpack.c.l.b16 %v2441
      %v2978 = vunpack.c.h.b16 %v2441
      %v2979 = vunpack.c.l.b16 %v2442
      %v2980 = vunpack.c.h.b16 %v2442
      %v2981 = vunpack.c.l.b16 %v2443
      %v2982 = vunpack.c.h.b16 %v2443
      %v2983 = vunpack.c.l.b16 %v2444
      %v2984 = vunpack.c.h.b16 %v2444
      %v2985 = vunpack.c.l.b16 %v2445
      %v2986 = vunpack.c.h.b16 %v2445
      %v2987 = vunpack.c.l.b16 %v2446
      %v2988 = vunpack.c.h.b16 %v2446
      %v2989 = vunpack.c.l.b16 %v2447
      %v2990 = vunpack.c.h.b16 %v2447
      %v2991 = vunpack.c.l.b16 %v2448
      %v2992 = vunpack.c.h.b16 %v2448
      %v2993 = vunpack.c.l.b16 %v2449
      %v2994 = vunpack.c.h.b16 %v2449
      %v2995 = vunpack.c.l.b16 %v2450
      %v2996 = vunpack.c.h.b16 %v2450
      %v2997 = vunpack.c.l.b16 %v2451
      %v2998 = vunpack.c.h.b16 %v2451
      %v2999 = vunpack.c.l.b16 %v2452
      %v3000 = vunpack.c.h.b16 %v2452
      %v3001 = vunpack.c.l.b16 %v2453
      %v3002 = vunpack.c.h.b16 %v2453
      %v3003 = vunpack.c.l.b16 %v2454
      %v3004 = vunpack.c.h.b16 %v2454
      %v3005 = vunpack.c.l.b16 %v2455
      %v3006 = vunpack.c.h.b16 %v2455
      %v3007 = vunpack.c.l.b16 %v2456
      %v3008 = vunpack.c.h.b16 %v2456
      %v3009 = vunpack.c.l.b16 %v2457
      %v3010 = vunpack.c.h.b16 %v2457
      %v3011 = vunpack.c.l.b16 %v2458
      %v3012 = vunpack.c.h.b16 %v2458
      %v3013 = vunpack.c.l.b16 %v2459
      %v3014 = vunpack.c.h.b16 %v2459
      %v3015 = vunpack.c.l.b16 %v2460
      %v3016 = vunpack.c.h.b16 %v2460
      %v3017 = vunpack.c.l.b16 %v2461
      %v3018 = vunpack.c.h.b16 %v2461
      %v3019 = vunpack.c.l.b16 %v2462
      %v3020 = vunpack.c.h.b16 %v2462
      %v3021 = vunpack.c.l.b16 %v2463
      %v3022 = vunpack.c.h.b16 %v2463
      %v3023 = vunpack.c.l.b16 %v2464
      %v3024 = vunpack.c.h.b16 %v2464
      %v3025 = vunpack.c.l.b16 %v2465
      %v3026 = vunpack.c.h.b16 %v2465
      %v3027 = vunpack.c.l.b16 %v2466
      %v3028 = vunpack.c.h.b16 %v2466
      %v3029 = vunpack.c.l.b16 %v2467
      %v3030 = vunpack.c.h.b16 %v2467
      %v3031 = vunpack.c.l.b16 %v2468
      %v3032 = vunpack.c.h.b16 %v2468
      %v3033 = vunpack.c.l.b16 %v2469
      %v3034 = vunpack.c.h.b16 %v2469
      %v3035 = vunpack.c.l.b16 %v2470
      %v3036 = vunpack.c.h.b16 %v2470
      %v3037 = vunpack.c.l.b16 %v2471
      %v3038 = vunpack.c.h.b16 %v2471
      %v3039 = vunpack.c.l.b16 %v2472
      %v3040 = vunpack.c.h.b16 %v2472
      %v3041 = vunpack.c.l.b16 %v2473
      %v3042 = vunpack.c.h.b16 %v2473
      %v3043 = vunpack.c.l.b16 %v2474
      %v3044 = vunpack.c.h.b16 %v2474
      %v3045 = vunpack.c.l.b16 %v2475
      %v3046 = vunpack.c.h.b16 %v2475
      %v3047 = vunpack.c.l.b16 %v2476
      %v3048 = vunpack.c.h.b16 %v2476
      %v3049 = vunpack.c.l.b16 %v2477
      %v3050 = vunpack.c.h.b16 %v2477
      %v3051 = vunpack.c.l.b16 %v2478
      %v3052 = vunpack.c.h.b16 %v2478
      %v3053 = vunpack.c.l.b16 %v2479
      %v3054 = vunpack.c.h.b16 %v2479
      %v3055 = vunpack.c.l.b16 %v2480
      %v3056 = vunpack.c.h.b16 %v2480
      %v3057 = vunpack.c.l.b16 %v2481
      %v3058 = vunpack.c.h.b16 %v2481
      %v3059 = vunpack.c.l.b16 %v2482
      %v3060 = vunpack.c.h.b16 %v2482
      %v3061 = vunpack.c.l.b16 %v2483
      %v3062 = vunpack.c.h.b16 %v2483
      %v3063 = vunpack.c.l.b16 %v2484
      %v3064 = vunpack.c.h.b16 %v2484
      %v3065 = vunpack.c.l.b16 %v2485
      %v3066 = vunpack.c.h.b16 %v2485
      %v3067 = vunpack.c.l.b16 %v2486
      %v3068 = vunpack.c.h.b16 %v2486
      %v3069 = vunpack.c.l.b16 %v2487
      %v3070 = vunpack.c.h.b16 %v2487
      %v3071 = vunpack.c.l.b16 %v2488
      %v3072 = vunpack.c.h.b16 %v2488
      %v3073 = vunpack.c.l.b16 %v2489
      %v3074 = vunpack.c.h.b16 %v2489
      %v3075 = vunpack.c.l.b16 %v2490
      %v3076 = vunpack.c.h.b16 %v2490
      %v3077 = vunpack.c.l.b16 %v2491
      %v3078 = vunpack.c.h.b16 %v2491
      %v3079 = vunpack.c.l.b16 %v2492
      %v3080 = vunpack.c.h.b16 %v2492
      %v3081 = vunpack.c.l.b16 %v2493
      %v3082 = vunpack.c.h.b16 %v2493
      %v3083 = vunpack.c.l.b16 %v2494
      %v3084 = vunpack.c.h.b16 %v2494
      %v3085 = vpack.c.b16 %v2707, %v2701
      %v3086 = vpack.c.b16 %v2708, %v2702
      %v3087 = vpack.c.b16 %v2709, %v2703
      %v3088 = vpack.c.b16 %v2710, %v2704
      %v3089 = vpack.c.b16 %v2711, %v2705
      %v3090 = vpack.c.b16 %v2712, %v2706
      %v3091 = vpack.c.b16 %v2719, %v2713
      %v3092 = vpack.c.b16 %v2720, %v2714
      %v3093 = vpack.c.b16 %v2721, %v2715
      %v3094 = vpack.c.b16 %v2722, %v2716
      %v3095 = vpack.c.b16 %v2723, %v2717
      %v3096 = vpack.c.b16 %v2724, %v2718
      %v3097 = vpack.c.b16 %v2731, %v2725
      %v3098 = vpack.c.b16 %v2732, %v2726
      %v3099 = vpack.c.b16 %v2733, %v2727
      %v3100 = vpack.c.b16 %v2734, %v2728
      %v3101 = vpack.c.b16 %v2735, %v2729
      %v3102 = vpack.c.b16 %v2736, %v2730
      %v3103 = vpack.c.b16 %v2743, %v2737
      %v3104 = vpack.c.b16 %v2744, %v2738
      %v3105 = vpack.c.b16 %v2745, %v2739
      %v3106 = vpack.c.b16 %v2746, %v2740
      %v3107 = vpack.c.b16 %v2747, %v2741
      %v3108 = vpack.c.b16 %v2748, %v2742
      %v3109 = vpack.c.b16 %v2755, %v2749
      %v3110 = vpack.c.b16 %v2756, %v2750
      %v3111 = vpack.c.b16 %v2757, %v2751
      %v3112 = vpack.c.b16 %v2758, %v2752
      %v3113 = vpack.c.b16 %v2759, %v2753
      %v3114 = vpack.c.b16 %v2760, %v2754
      %v3115 = vpack.c.b16 %v2767, %v2761
      %v3116 = vpack.c.b16 %v2768, %v2762
      %v3117 = vpack.c.b16 %v2769, %v2763
      %v3118 = vpack.c.b16 %v2770, %v2764
      %v3119 = vpack.c.b16 %v2771, %v2765
      %v3120 = vpack.c.b16 %v2772, %v2766
      %v3121 = vpack.c.b16 %v2779, %v2773
      %v3122 = vpack.c.b16 %v2780, %v2774
      %v3123 = vpack.c.b16 %v2781, %v2775
      %v3124 = vpack.c.b16 %v2782, %v2776
      %v3125 = vpack.c.b16 %v2783, %v2777
      %v3126 = vpack.c.b16 %v2784, %v2778
      %v3127 = vpack.c.b16 %v2791, %v2785
      %v3128 = vpack.c.b16 %v2792, %v2786
      %v3129 = vpack.c.b16 %v2793, %v2787
      %v3130 = vpack.c.b16 %v2794, %v2788
      %v3131 = vpack.c.b16 %v2795, %v2789
      %v3132 = vpack.c.b16 %v2796, %v2790
      %v3133 = vpack.c.b16 %v2803, %v2797
      %v3134 = vpack.c.b16 %v2804, %v2798
      %v3135 = vpack.c.b16 %v2805, %v2799
      %v3136 = vpack.c.b16 %v2806, %v2800
      %v3137 = vpack.c.b16 %v2807, %v2801
      %v3138 = vpack.c.b16 %v2808, %v2802
      %v3139 = vpack.c.b16 %v2815, %v2809
      %v3140 = vpack.c.b16 %v2816, %v2810
      %v3141 = vpack.c.b16 %v2817, %v2811
      %v3142 = vpack.c.b16 %v2818, %v2812
      %v3143 = vpack.c.b16 %v2819, %v2813
      %v3144 = vpack.c.b16 %v2820, %v2814
      %v3145 = vpack.c.b16 %v2827, %v2821
      %v3146 = vpack.c.b16 %v2828, %v2822
      %v3147 = vpack.c.b16 %v2829, %v2823
      %v3148 = vpack.c.b16 %v2830, %v2824
      %v3149 = vpack.c.b16 %v2831, %v2825
      %v3150 = vpack.c.b16 %v2832, %v2826
      %v3151 = vpack.c.b16 %v2839, %v2833
      %v3152 = vpack.c.b16 %v2840, %v2834
      %v3153 = vpack.c.b16 %v2841, %v2835
      %v3154 = vpack.c.b16 %v2842, %v2836
      %v3155 = vpack.c.b16 %v2843, %v2837
      %v3156 = vpack.c.b16 %v2844, %v2838
      %v3157 = vpack.c.b16 %v2851, %v2845
      %v3158 = vpack.c.b16 %v2852, %v2846
      %v3159 = vpack.c.b16 %v2853, %v2847
      %v3160 = vpack.c.b16 %v2854, %v2848
      %v3161 = vpack.c.b16 %v2855, %v2849
      %v3162 = vpack.c.b16 %v2856, %v2850
      %v3163 = vpack.c.b16 %v2863, %v2857
      %v3164 = vpack.c.b16 %v2864, %v2858
      %v3165 = vpack.c.b16 %v2865, %v2859
      %v3166 = vpack.c.b16 %v2866, %v2860
      %v3167 = vpack.c.b16 %v2867, %v2861
      %v3168 = vpack.c.b16 %v2868, %v2862
      %v3169 = vpack.c.b16 %v2875, %v2869
      %v3170 = vpack.c.b16 %v2876, %v2870
      %v3171 = vpack.c.b16 %v2877, %v2871
      %v3172 = vpack.c.b16 %v2878, %v2872
      %v3173 = vpack.c.b16 %v2879, %v2873
      %v3174 = vpack.c.b16 %v2880, %v2874
      %v3175 = vpack.c.b16 %v2887, %v2881
      %v3176 = vpack.c.b16 %v2888, %v2882
      %v3177 = vpack.c.b16 %v2889, %v2883
      %v3178 = vpack.c.b16 %v2890, %v2884
      %v3179 = vpack.c.b16 %v2891, %v2885
      %v3180 = vpack.c.b16 %v2892, %v2886
      %v3181 = vpack.c.b16 %v2899, %v2893
      %v3182 = vpack.c.b16 %v2900, %v2894
      %v3183 = vpack.c.b16 %v2901, %v2895
      %v3184 = vpack.c.b16 %v2902, %v2896
      %v3185 = vpack.c.b16 %v2903, %v2897
      %v3186 = vpack.c.b16 %v2904, %v2898
      %v3187 = vpack.c.b16 %v2911, %v2905
      %v3188 = vpack.c.b16 %v2912, %v2906
      %v3189 = vpack.c.b16 %v2913, %v2907
      %v3190 = vpack.c.b16 %v2914, %v2908
      %v3191 = vpack.c.b16 %v2915, %v2909
      %v3192 = vpack.c.b16 %v2916, %v2910
      %v3193 = vpack.c.b16 %v2923, %v2917
      %v3194 = vpack.c.b16 %v2924, %v2918
      %v3195 = vpack.c.b16 %v2925, %v2919
      %v3196 = vpack.c.b16 %v2926, %v2920
      %v3197 = vpack.c.b16 %v2927, %v2921
      %v3198 = vpack.c.b16 %v2928, %v2922
      %v3199 = vpack.c.b16 %v2935, %v2929
      %v3200 = vpack.c.b16 %v2936, %v2930
      %v3201 = vpack.c.b16 %v2937, %v2931
      %v3202 = vpack.c.b16 %v2938, %v2932
      %v3203 = vpack.c.b16 %v2939, %v2933
      %v3204 = vpack.c.b16 %v2940, %v2934
      %v3205 = vpack.c.b16 %v2947, %v2941
      %v3206 = vpack.c.b16 %v2948, %v2942
      %v3207 = vpack.c.b16 %v2949, %v2943
      %v3208 = vpack.c.b16 %v2950, %v2944
      %v3209 = vpack.c.b16 %v2951, %v2945
      %v3210 = vpack.c.b16 %v2952, %v2946
      %v3211 = vpack.c.b16 %v2959, %v2953
      %v3212 = vpack.c.b16 %v2960, %v2954
      %v3213 = vpack.c.b16 %v2961, %v2955
      %v3214 = vpack.c.b16 %v2962, %v2956
      %v3215 = vpack.c.b16 %v2963, %v2957
      %v3216 = vpack.c.b16 %v2964, %v2958
      %v3217 = vpack.c.b16 %v2971, %v2965
      %v3218 = vpack.c.b16 %v2972, %v2966
      %v3219 = vpack.c.b16 %v2973, %v2967
      %v3220 = vpack.c.b16 %v2974, %v2968
      %v3221 = vpack.c.b16 %v2975, %v2969
      %v3222 = vpack.c.b16 %v2976, %v2970
      %v3223 = vpack.c.b16 %v2983, %v2977
      %v3224 = vpack.c.b16 %v2984, %v2978
      %v3225 = vpack.c.b16 %v2985, %v2979
      %v3226 = vpack.c.b16 %v2986, %v2980
      %v3227 = vpack.c.b16 %v2987, %v2981
      %v3228 = vpack.c.b16 %v2988, %v2982
      %v3229 = vpack.c.b16 %v2995, %v2989
      %v3230 = vpack.c.b16 %v2996, %v2990
      %v3231 = vpack.c.b16 %v2997, %v2991
      %v3232 = vpack.c.b16 %v2998, %v2992
      %v3233 = vpack.c.b16 %v2999, %v2993
      %v3234 = vpack.c.b16 %v3000, %v2994
      %v3235 = vpack.c.b16 %v3007, %v3001
      %v3236 = vpack.c.b16 %v3008, %v3002
      %v3237 = vpack.c.b16 %v3009, %v3003
      %v3238 = vpack.c.b16 %v3010, %v3004
      %v3239 = vpack.c.b16 %v3011, %v3005
      %v3240 = vpack.c.b16 %v3012, %v3006
      %v3241 = vpack.c.b16 %v3019, %v3013
      %v3242 = vpack.c.b16 %v3020, %v3014
      %v3243 = vpack.c.b16 %v3021, %v3015
      %v3244 = vpack.c.b16 %v3022, %v3016
      %v3245 = vpack.c.b16 %v3023, %v3017
      %v3246 = vpack.c.b16 %v3024, %v3018
      %v3247 = vpack.c.b16 %v3031, %v3025
      %v3248 = vpack.c.b16 %v3032, %v3026
      %v3249 = vpack.c.b16 %v3033, %v3027
      %v3250 = vpack.c.b16 %v3034, %v3028
      %v3251 = vpack.c.b16 %v3035, %v3029
      %v3252 = vpack.c.b16 %v3036, %v3030
      %v3253 = vpack.c.b16 %v3043, %v3037
      %v3254 = vpack.c.b16 %v3044, %v3038
      %v3255 = vpack.c.b16 %v3045, %v3039
      %v3256 = vpack.c.b16 %v3046, %v3040
      %v3257 = vpack.c.b16 %v3047, %v3041
      %v3258 = vpack.c.b16 %v3048, %v3042
      %v3259 = vpack.c.b16 %v3055, %v3049
      %v3260 = vpack.c.b16 %v3056, %v3050
      %v3261 = vpack.c.b16 %v3057, %v3051
      %v3262 = vpack.c.b16 %v3058, %v3052
      %v3263 = vpack.c.b16 %v3059, %v3053
      %v3264 = vpack.c.b16 %v3060, %v3054
      %v3265 = vpack.c.b16 %v3067, %v3061
      %v3266 = vpack.c.b16 %v3068, %v3062
      %v3267 = vpack.c.b16 %v3069, %v3063
      %v3268 = vpack.c.b16 %v3070, %v3064
      %v3269 = vpack.c.b16 %v3071, %v3065
      %v3270 = vpack.c.b16 %v3072, %v3066
      %v3271 = vpack.c.b16 %v3079, %v3073
      %v3272 = vpack.c.b16 %v3080, %v3074
      %v3273 = vpack.c.b16 %v3081, %v3075
      %v3274 = vpack.c.b16 %v3082, %v3076
      %v3275 = vpack.c.b16 %v3083, %v3077
      %v3276 = vpack.c.b16 %v3084, %v3078
      %3469 = vmatpush.bf16.msra.mxu0 %v3127
      %3470 = vmatpush.bf16.msra.mxu0 %v3121
      %3471 = vmatpush.bf16.msra.mxu0 %v3115
      %3472 = vmatpush.bf16.msra.mxu0 %v3109
      %3473 = vmatpush.bf16.msra.mxu0 %v3103
      %3474 = vmatpush.bf16.msra.mxu0 %v3097
      %3475 = vmatpush.bf16.msra.mxu0 %v3091
      %3476 = vmatpush.bf16.msra.mxu0 %v3085
      %3477 = vmatmul.bf16.gmra.mxu0 %v2203
      %v3478 = vpop.f32.mrf.mxu0
      %v3479 = vadd.f32 %v2497, %v3478
      %v3480 = vpop.f32.mrf.mxu0
      %v3481 = vadd.f32 %v2497, %v3480
      %3482 = vmatmul.bf16.gmra.mxu0 %v2207
      %v3483 = vpop.f32.mrf.mxu0
      %v3484 = vadd.f32 %v2497, %v3483
      %v3485 = vpop.f32.mrf.mxu0
      %v3486 = vadd.f32 %v2497, %v3485
      %3487 = vmatmul.bf16.gmra.mxu0 %v2211
      %v3488 = vpop.f32.mrf.mxu0
      %v3489 = vadd.f32 %v2497, %v3488
      %v3490 = vpop.f32.mrf.mxu0
      %v3491 = vadd.f32 %v2497, %v3490
      %3492 = vmatmul.bf16.gmra.mxu0 %v2215
      %v3493 = vpop.f32.mrf.mxu0
      %v3494 = vadd.f32 %v2497, %v3493
      %v3495 = vpop.f32.mrf.mxu0
      %v3496 = vadd.f32 %v2497, %v3495
      %3497 = vmatmul.bf16.gmra.mxu0 %v2219
      %v3498 = vpop.f32.mrf.mxu0
      %v3499 = vadd.f32 %v2497, %v3498
      %v3500 = vpop.f32.mrf.mxu0
      %v3501 = vadd.f32 %v2497, %v3500
      %3502 = vmatmul.bf16.gmra.mxu0 %v2223
      %v3503 = vpop.f32.mrf.mxu0
      %v3504 = vadd.f32 %v2497, %v3503
      %v3505 = vpop.f32.mrf.mxu0
      %v3506 = vadd.f32 %v2497, %v3505
      %3507 = vmatmul.bf16.gmra.mxu0 %v2227
      %v3508 = vpop.f32.mrf.mxu0
      %v3509 = vadd.f32 %v2497, %v3508
      %v3510 = vpop.f32.mrf.mxu0
      %v3511 = vadd.f32 %v2497, %v3510
      %3512 = vmatmul.bf16.gmra.mxu0 %v2231
      %v3513 = vpop.f32.mrf.mxu0
      %v3514 = vadd.f32 %v2497, %v3513
      %v3515 = vpop.f32.mrf.mxu0
      %v3516 = vadd.f32 %v2497, %v3515
      %3517 = vmatmul.bf16.gmra.mxu0 %v2235
      %v3518 = vpop.f32.mrf.mxu0
      %v3519 = vadd.f32 %v2497, %v3518
      %v3520 = vpop.f32.mrf.mxu0
      %v3521 = vadd.f32 %v2497, %v3520
      %3522 = vmatmul.bf16.gmra.mxu0 %v2239
      %v3523 = vpop.f32.mrf.mxu0
      %v3524 = vadd.f32 %v2497, %v3523
      %v3525 = vpop.f32.mrf.mxu0
      %v3526 = vadd.f32 %v2497, %v3525
      %3527 = vmatmul.bf16.gmra.mxu0 %v2243
      %v3528 = vpop.f32.mrf.mxu0
      %v3529 = vadd.f32 %v2497, %v3528
      %v3530 = vpop.f32.mrf.mxu0
      %v3531 = vadd.f32 %v2497, %v3530
      %3532 = vmatmul.bf16.gmra.mxu0 %v2247
      %v3533 = vpop.f32.mrf.mxu0
      %v3534 = vadd.f32 %v2497, %v3533
      %v3535 = vpop.f32.mrf.mxu0
      %v3536 = vadd.f32 %v2497, %v3535
      %3537 = vmatmul.bf16.gmra.mxu0 %v2251
      %v3538 = vpop.f32.mrf.mxu0
      %v3539 = vadd.f32 %v2497, %v3538
      %v3540 = vpop.f32.mrf.mxu0
      %v3541 = vadd.f32 %v2497, %v3540
      %3542 = vmatmul.bf16.gmra.mxu0 %v2255
      %v3543 = vpop.f32.mrf.mxu0
      %v3544 = vadd.f32 %v2497, %v3543
      %v3545 = vpop.f32.mrf.mxu0
      %v3546 = vadd.f32 %v2497, %v3545
      %3547 = vmatmul.bf16.gmra.mxu0 %v2259
      %v3548 = vpop.f32.mrf.mxu0
      %v3549 = vadd.f32 %v2497, %v3548
      %v3550 = vpop.f32.mrf.mxu0
      %v3551 = vadd.f32 %v2497, %v3550
      %3552 = vmatmul.bf16.gmra.mxu0 %v2263
      %v3553 = vpop.f32.mrf.mxu0
      %v3554 = vadd.f32 %v2497, %v3553
      %v3555 = vpop.f32.mrf.mxu0
      %v3556 = vadd.f32 %v2497, %v3555
      %3557 = vmatmul.bf16.gmra.mxu0 %v2267
      %v3558 = vpop.f32.mrf.mxu0
      %v3559 = vadd.f32 %v2497, %v3558
      %v3560 = vpop.f32.mrf.mxu0
      %v3561 = vadd.f32 %v2497, %v3560
      %3562 = vmatmul.bf16.gmra.mxu0 %v2271
      %v3563 = vpop.f32.mrf.mxu0
      %v3564 = vadd.f32 %v2497, %v3563
      %v3565 = vpop.f32.mrf.mxu0
      %v3566 = vadd.f32 %v2497, %v3565
      %3567 = vmatmul.bf16.gmra.mxu0 %v2275
      %v3568 = vpop.f32.mrf.mxu0
      %v3569 = vadd.f32 %v2497, %v3568
      %v3570 = vpop.f32.mrf.mxu0
      %v3571 = vadd.f32 %v2497, %v3570
      %3572 = vmatmul.bf16.gmra.mxu0 %v2279
      %v3573 = vpop.f32.mrf.mxu0
      %v3574 = vadd.f32 %v2497, %v3573
      %v3575 = vpop.f32.mrf.mxu0
      %v3576 = vadd.f32 %v2497, %v3575
      %3577 = vmatmul.bf16.gmra.mxu0 %v2283
      %v3578 = vpop.f32.mrf.mxu0
      %v3579 = vadd.f32 %v2497, %v3578
      %v3580 = vpop.f32.mrf.mxu0
      %v3581 = vadd.f32 %v2497, %v3580
      %3582 = vmatmul.bf16.gmra.mxu0 %v2287
      %v3583 = vpop.f32.mrf.mxu0
      %v3584 = vadd.f32 %v2497, %v3583
      %v3585 = vpop.f32.mrf.mxu0
      %v3586 = vadd.f32 %v2497, %v3585
      %3587 = vmatmul.bf16.gmra.mxu0 %v2291
      %v3588 = vpop.f32.mrf.mxu0
      %v3589 = vadd.f32 %v2497, %v3588
      %v3590 = vpop.f32.mrf.mxu0
      %v3591 = vadd.f32 %v2497, %v3590
      %3592 = vmatmul.bf16.gmra.mxu0 %v2295
      %v3593 = vpop.f32.mrf.mxu0
      %v3594 = vadd.f32 %v2497, %v3593
      %v3595 = vpop.f32.mrf.mxu0
      %v3596 = vadd.f32 %v2497, %v3595
      %3597 = vmatmul.bf16.gmra.mxu0 %v2299
      %v3598 = vpop.f32.mrf.mxu0
      %v3599 = vadd.f32 %v2497, %v3598
      %v3600 = vpop.f32.mrf.mxu0
      %v3601 = vadd.f32 %v2497, %v3600
      %3602 = vdwg.mxu0
      %3603 = vmatpush.bf16.msra.mxu0 %v3175
      %3604 = vmatpush.bf16.msra.mxu0 %v3169
      %3605 = vmatpush.bf16.msra.mxu0 %v3163
      %3606 = vmatpush.bf16.msra.mxu0 %v3157
      %3607 = vmatpush.bf16.msra.mxu0 %v3151
      %3608 = vmatpush.bf16.msra.mxu0 %v3145
      %3609 = vmatpush.bf16.msra.mxu0 %v3139
      %3610 = vmatpush.bf16.msra.mxu0 %v3133
      %3611 = vmatmul.bf16.gmra.mxu0 %v2204
      %v3612 = vpop.f32.mrf.mxu0
      %v3613 = vadd.f32 %v3479, %v3612
      %v3614 = vpop.f32.mrf.mxu0
      %v3615 = vadd.f32 %v3481, %v3614
      %3616 = vmatmul.bf16.gmra.mxu0 %v2208
      %v3617 = vpop.f32.mrf.mxu0
      %v3618 = vadd.f32 %v3484, %v3617
      %v3619 = vpop.f32.mrf.mxu0
      %v3620 = vadd.f32 %v3486, %v3619
      %3621 = vmatmul.bf16.gmra.mxu0 %v2212
      %v3622 = vpop.f32.mrf.mxu0
      %v3623 = vadd.f32 %v3489, %v3622
      %v3624 = vpop.f32.mrf.mxu0
      %v3625 = vadd.f32 %v3491, %v3624
      %3626 = vmatmul.bf16.gmra.mxu0 %v2216
      %v3627 = vpop.f32.mrf.mxu0
      %v3628 = vadd.f32 %v3494, %v3627
      %v3629 = vpop.f32.mrf.mxu0
      %v3630 = vadd.f32 %v3496, %v3629
      %3631 = vmatmul.bf16.gmra.mxu0 %v2220
      %v3632 = vpop.f32.mrf.mxu0
      %v3633 = vadd.f32 %v3499, %v3632
      %v3634 = vpop.f32.mrf.mxu0
      %v3635 = vadd.f32 %v3501, %v3634
      %3636 = vmatmul.bf16.gmra.mxu0 %v2224
      %v3637 = vpop.f32.mrf.mxu0
      %v3638 = vadd.f32 %v3504, %v3637
      %v3639 = vpop.f32.mrf.mxu0
      %v3640 = vadd.f32 %v3506, %v3639
      %3641 = vmatmul.bf16.gmra.mxu0 %v2228
      %v3642 = vpop.f32.mrf.mxu0
      %v3643 = vadd.f32 %v3509, %v3642
      %v3644 = vpop.f32.mrf.mxu0
      %v3645 = vadd.f32 %v3511, %v3644
      %3646 = vmatmul.bf16.gmra.mxu0 %v2232
      %v3647 = vpop.f32.mrf.mxu0
      %v3648 = vadd.f32 %v3514, %v3647
      %v3649 = vpop.f32.mrf.mxu0
      %v3650 = vadd.f32 %v3516, %v3649
      %3651 = vmatmul.bf16.gmra.mxu0 %v2236
      %v3652 = vpop.f32.mrf.mxu0
      %v3653 = vadd.f32 %v3519, %v3652
      %v3654 = vpop.f32.mrf.mxu0
      %v3655 = vadd.f32 %v3521, %v3654
      %3656 = vmatmul.bf16.gmra.mxu0 %v2240
      %v3657 = vpop.f32.mrf.mxu0
      %v3658 = vadd.f32 %v3524, %v3657
      %v3659 = vpop.f32.mrf.mxu0
      %v3660 = vadd.f32 %v3526, %v3659
      %3661 = vmatmul.bf16.gmra.mxu0 %v2244
      %v3662 = vpop.f32.mrf.mxu0
      %v3663 = vadd.f32 %v3529, %v3662
      %v3664 = vpop.f32.mrf.mxu0
      %v3665 = vadd.f32 %v3531, %v3664
      %3666 = vmatmul.bf16.gmra.mxu0 %v2248
      %v3667 = vpop.f32.mrf.mxu0
      %v3668 = vadd.f32 %v3534, %v3667
      %v3669 = vpop.f32.mrf.mxu0
      %v3670 = vadd.f32 %v3536, %v3669
      %3671 = vmatmul.bf16.gmra.mxu0 %v2252
      %v3672 = vpop.f32.mrf.mxu0
      %v3673 = vadd.f32 %v3539, %v3672
      %v3674 = vpop.f32.mrf.mxu0
      %v3675 = vadd.f32 %v3541, %v3674
      %3676 = vmatmul.bf16.gmra.mxu0 %v2256
      %v3677 = vpop.f32.mrf.mxu0
      %v3678 = vadd.f32 %v3544, %v3677
      %v3679 = vpop.f32.mrf.mxu0
      %v3680 = vadd.f32 %v3546, %v3679
      %3681 = vmatmul.bf16.gmra.mxu0 %v2260
      %v3682 = vpop.f32.mrf.mxu0
      %v3683 = vadd.f32 %v3549, %v3682
      %v3684 = vpop.f32.mrf.mxu0
      %v3685 = vadd.f32 %v3551, %v3684
      %3686 = vmatmul.bf16.gmra.mxu0 %v2264
      %v3687 = vpop.f32.mrf.mxu0
      %v3688 = vadd.f32 %v3554, %v3687
      %v3689 = vpop.f32.mrf.mxu0
      %v3690 = vadd.f32 %v3556, %v3689
      %3691 = vmatmul.bf16.gmra.mxu0 %v2268
      %v3692 = vpop.f32.mrf.mxu0
      %v3693 = vadd.f32 %v3559, %v3692
      %v3694 = vpop.f32.mrf.mxu0
      %v3695 = vadd.f32 %v3561, %v3694
      %3696 = vmatmul.bf16.gmra.mxu0 %v2272
      %v3697 = vpop.f32.mrf.mxu0
      %v3698 = vadd.f32 %v3564, %v3697
      %v3699 = vpop.f32.mrf.mxu0
      %v3700 = vadd.f32 %v3566, %v3699
      %3701 = vmatmul.bf16.gmra.mxu0 %v2276
      %v3702 = vpop.f32.mrf.mxu0
      %v3703 = vadd.f32 %v3569, %v3702
      %v3704 = vpop.f32.mrf.mxu0
      %v3705 = vadd.f32 %v3571, %v3704
      %3706 = vmatmul.bf16.gmra.mxu0 %v2280
      %v3707 = vpop.f32.mrf.mxu0
      %v3708 = vadd.f32 %v3574, %v3707
      %v3709 = vpop.f32.mrf.mxu0
      %v3710 = vadd.f32 %v3576, %v3709
      %3711 = vmatmul.bf16.gmra.mxu0 %v2284
      %v3712 = vpop.f32.mrf.mxu0
      %v3713 = vadd.f32 %v3579, %v3712
      %v3714 = vpop.f32.mrf.mxu0
      %v3715 = vadd.f32 %v3581, %v3714
      %3716 = vmatmul.bf16.gmra.mxu0 %v2288
      %v3717 = vpop.f32.mrf.mxu0
      %v3718 = vadd.f32 %v3584, %v3717
      %v3719 = vpop.f32.mrf.mxu0
      %v3720 = vadd.f32 %v3586, %v3719
      %3721 = vmatmul.bf16.gmra.mxu0 %v2292
      %v3722 = vpop.f32.mrf.mxu0
      %v3723 = vadd.f32 %v3589, %v3722
      %v3724 = vpop.f32.mrf.mxu0
      %v3725 = vadd.f32 %v3591, %v3724
      %3726 = vmatmul.bf16.gmra.mxu0 %v2296
      %v3727 = vpop.f32.mrf.mxu0
      %v3728 = vadd.f32 %v3594, %v3727
      %v3729 = vpop.f32.mrf.mxu0
      %v3730 = vadd.f32 %v3596, %v3729
      %3731 = vmatmul.bf16.gmra.mxu0 %v2300
      %v3732 = vpop.f32.mrf.mxu0
      %v3733 = vadd.f32 %v3599, %v3732
      %v3734 = vpop.f32.mrf.mxu0
      %v3735 = vadd.f32 %v3601, %v3734
      %3736 = vdwg.mxu0
      %3737 = vmatpush.bf16.msra.mxu0 %v3223
      %3738 = vmatpush.bf16.msra.mxu0 %v3217
      %3739 = vmatpush.bf16.msra.mxu0 %v3211
      %3740 = vmatpush.bf16.msra.mxu0 %v3205
      %3741 = vmatpush.bf16.msra.mxu0 %v3199
      %3742 = vmatpush.bf16.msra.mxu0 %v3193
      %3743 = vmatpush.bf16.msra.mxu0 %v3187
      %3744 = vmatpush.bf16.msra.mxu0 %v3181
      %3745 = vmatmul.bf16.gmra.mxu0 %v2205
      %v3746 = vpop.f32.mrf.mxu0
      %v3747 = vadd.f32 %v3613, %v3746
      %v3748 = vpop.f32.mrf.mxu0
      %v3749 = vadd.f32 %v3615, %v3748
      %3750 = vmatmul.bf16.gmra.mxu0 %v2209
      %v3751 = vpop.f32.mrf.mxu0
      %v3752 = vadd.f32 %v3618, %v3751
      %v3753 = vpop.f32.mrf.mxu0
      %v3754 = vadd.f32 %v3620, %v3753
      %3755 = vmatmul.bf16.gmra.mxu0 %v2213
      %v3756 = vpop.f32.mrf.mxu0
      %v3757 = vadd.f32 %v3623, %v3756
      %v3758 = vpop.f32.mrf.mxu0
      %v3759 = vadd.f32 %v3625, %v3758
      %3760 = vmatmul.bf16.gmra.mxu0 %v2217
      %v3761 = vpop.f32.mrf.mxu0
      %v3762 = vadd.f32 %v3628, %v3761
      %v3763 = vpop.f32.mrf.mxu0
      %v3764 = vadd.f32 %v3630, %v3763
      %3765 = vmatmul.bf16.gmra.mxu0 %v2221
      %v3766 = vpop.f32.mrf.mxu0
      %v3767 = vadd.f32 %v3633, %v3766
      %v3768 = vpop.f32.mrf.mxu0
      %v3769 = vadd.f32 %v3635, %v3768
      %3770 = vmatmul.bf16.gmra.mxu0 %v2225
      %v3771 = vpop.f32.mrf.mxu0
      %v3772 = vadd.f32 %v3638, %v3771
      %v3773 = vpop.f32.mrf.mxu0
      %v3774 = vadd.f32 %v3640, %v3773
      %3775 = vmatmul.bf16.gmra.mxu0 %v2229
      %v3776 = vpop.f32.mrf.mxu0
      %v3777 = vadd.f32 %v3643, %v3776
      %v3778 = vpop.f32.mrf.mxu0
      %v3779 = vadd.f32 %v3645, %v3778
      %3780 = vmatmul.bf16.gmra.mxu0 %v2233
      %v3781 = vpop.f32.mrf.mxu0
      %v3782 = vadd.f32 %v3648, %v3781
      %v3783 = vpop.f32.mrf.mxu0
      %v3784 = vadd.f32 %v3650, %v3783
      %3785 = vmatmul.bf16.gmra.mxu0 %v2237
      %v3786 = vpop.f32.mrf.mxu0
      %v3787 = vadd.f32 %v3653, %v3786
      %v3788 = vpop.f32.mrf.mxu0
      %v3789 = vadd.f32 %v3655, %v3788
      %3790 = vmatmul.bf16.gmra.mxu0 %v2241
      %v3791 = vpop.f32.mrf.mxu0
      %v3792 = vadd.f32 %v3658, %v3791
      %v3793 = vpop.f32.mrf.mxu0
      %v3794 = vadd.f32 %v3660, %v3793
      %3795 = vmatmul.bf16.gmra.mxu0 %v2245
      %v3796 = vpop.f32.mrf.mxu0
      %v3797 = vadd.f32 %v3663, %v3796
      %v3798 = vpop.f32.mrf.mxu0
      %v3799 = vadd.f32 %v3665, %v3798
      %3800 = vmatmul.bf16.gmra.mxu0 %v2249
      %v3801 = vpop.f32.mrf.mxu0
      %v3802 = vadd.f32 %v3668, %v3801
      %v3803 = vpop.f32.mrf.mxu0
      %v3804 = vadd.f32 %v3670, %v3803
      %3805 = vmatmul.bf16.gmra.mxu0 %v2253
      %v3806 = vpop.f32.mrf.mxu0
      %v3807 = vadd.f32 %v3673, %v3806
      %v3808 = vpop.f32.mrf.mxu0
      %v3809 = vadd.f32 %v3675, %v3808
      %3810 = vmatmul.bf16.gmra.mxu0 %v2257
      %v3811 = vpop.f32.mrf.mxu0
      %v3812 = vadd.f32 %v3678, %v3811
      %v3813 = vpop.f32.mrf.mxu0
      %v3814 = vadd.f32 %v3680, %v3813
      %3815 = vmatmul.bf16.gmra.mxu0 %v2261
      %v3816 = vpop.f32.mrf.mxu0
      %v3817 = vadd.f32 %v3683, %v3816
      %v3818 = vpop.f32.mrf.mxu0
      %v3819 = vadd.f32 %v3685, %v3818
      %3820 = vmatmul.bf16.gmra.mxu0 %v2265
      %v3821 = vpop.f32.mrf.mxu0
      %v3822 = vadd.f32 %v3688, %v3821
      %v3823 = vpop.f32.mrf.mxu0
      %v3824 = vadd.f32 %v3690, %v3823
      %3825 = vmatmul.bf16.gmra.mxu0 %v2269
      %v3826 = vpop.f32.mrf.mxu0
      %v3827 = vadd.f32 %v3693, %v3826
      %v3828 = vpop.f32.mrf.mxu0
      %v3829 = vadd.f32 %v3695, %v3828
      %3830 = vmatmul.bf16.gmra.mxu0 %v2273
      %v3831 = vpop.f32.mrf.mxu0
      %v3832 = vadd.f32 %v3698, %v3831
      %v3833 = vpop.f32.mrf.mxu0
      %v3834 = vadd.f32 %v3700, %v3833
      %3835 = vmatmul.bf16.gmra.mxu0 %v2277
      %v3836 = vpop.f32.mrf.mxu0
      %v3837 = vadd.f32 %v3703, %v3836
      %v3838 = vpop.f32.mrf.mxu0
      %v3839 = vadd.f32 %v3705, %v3838
      %3840 = vmatmul.bf16.gmra.mxu0 %v2281
      %v3841 = vpop.f32.mrf.mxu0
      %v3842 = vadd.f32 %v3708, %v3841
      %v3843 = vpop.f32.mrf.mxu0
      %v3844 = vadd.f32 %v3710, %v3843
      %3845 = vmatmul.bf16.gmra.mxu0 %v2285
      %v3846 = vpop.f32.mrf.mxu0
      %v3847 = vadd.f32 %v3713, %v3846
      %v3848 = vpop.f32.mrf.mxu0
      %v3849 = vadd.f32 %v3715, %v3848
      %3850 = vmatmul.bf16.gmra.mxu0 %v2289
      %v3851 = vpop.f32.mrf.mxu0
      %v3852 = vadd.f32 %v3718, %v3851
      %v3853 = vpop.f32.mrf.mxu0
      %v3854 = vadd.f32 %v3720, %v3853
      %3855 = vmatmul.bf16.gmra.mxu0 %v2293
      %v3856 = vpop.f32.mrf.mxu0
      %v3857 = vadd.f32 %v3723, %v3856
      %v3858 = vpop.f32.mrf.mxu0
      %v3859 = vadd.f32 %v3725, %v3858
      %3860 = vmatmul.bf16.gmra.mxu0 %v2297
      %v3861 = vpop.f32.mrf.mxu0
      %v3862 = vadd.f32 %v3728, %v3861
      %v3863 = vpop.f32.mrf.mxu0
      %v3864 = vadd.f32 %v3730, %v3863
      %3865 = vmatmul.bf16.gmra.mxu0 %v2301
      %v3866 = vpop.f32.mrf.mxu0
      %v3867 = vadd.f32 %v3733, %v3866
      %v3868 = vpop.f32.mrf.mxu0
      %v3869 = vadd.f32 %v3735, %v3868
      %3870 = vdwg.mxu0
      %3871 = vmatpush.bf16.msra.mxu0 %v3271
      %3872 = vmatpush.bf16.msra.mxu0 %v3265
      %3873 = vmatpush.bf16.msra.mxu0 %v3259
      %3874 = vmatpush.bf16.msra.mxu0 %v3253
      %3875 = vmatpush.bf16.msra.mxu0 %v3247
      %3876 = vmatpush.bf16.msra.mxu0 %v3241
      %3877 = vmatpush.bf16.msra.mxu0 %v3235
      %3878 = vmatpush.bf16.msra.mxu0 %v3229
      %3879 = vmatmul.bf16.gmra.mxu0 %v2206
      %v3880 = vpop.f32.mrf.mxu0
      %v3881 = vadd.f32 %v3747, %v3880
      %v3882 = vpop.f32.mrf.mxu0
      %v3883 = vadd.f32 %v3749, %v3882
      %3884 = vmatmul.bf16.gmra.mxu0 %v2210
      %v3885 = vpop.f32.mrf.mxu0
      %v3886 = vadd.f32 %v3752, %v3885
      %v3887 = vpop.f32.mrf.mxu0
      %v3888 = vadd.f32 %v3754, %v3887
      %3889 = vmatmul.bf16.gmra.mxu0 %v2214
      %v3890 = vpop.f32.mrf.mxu0
      %v3891 = vadd.f32 %v3757, %v3890
      %v3892 = vpop.f32.mrf.mxu0
      %v3893 = vadd.f32 %v3759, %v3892
      %3894 = vmatmul.bf16.gmra.mxu0 %v2218
      %v3895 = vpop.f32.mrf.mxu0
      %v3896 = vadd.f32 %v3762, %v3895
      %v3897 = vpop.f32.mrf.mxu0
      %v3898 = vadd.f32 %v3764, %v3897
      %3899 = vmatmul.bf16.gmra.mxu0 %v2222
      %v3900 = vpop.f32.mrf.mxu0
      %v3901 = vadd.f32 %v3767, %v3900
      %v3902 = vpop.f32.mrf.mxu0
      %v3903 = vadd.f32 %v3769, %v3902
      %3904 = vmatmul.bf16.gmra.mxu0 %v2226
      %v3905 = vpop.f32.mrf.mxu0
      %v3906 = vadd.f32 %v3772, %v3905
      %v3907 = vpop.f32.mrf.mxu0
      %v3908 = vadd.f32 %v3774, %v3907
      %3909 = vmatmul.bf16.gmra.mxu0 %v2230
      %v3910 = vpop.f32.mrf.mxu0
      %v3911 = vadd.f32 %v3777, %v3910
      %v3912 = vpop.f32.mrf.mxu0
      %v3913 = vadd.f32 %v3779, %v3912
      %3914 = vmatmul.bf16.gmra.mxu0 %v2234
      %v3915 = vpop.f32.mrf.mxu0
      %v3916 = vadd.f32 %v3782, %v3915
      %v3917 = vpop.f32.mrf.mxu0
      %v3918 = vadd.f32 %v3784, %v3917
      %3919 = vmatmul.bf16.gmra.mxu0 %v2238
      %v3920 = vpop.f32.mrf.mxu0
      %v3921 = vadd.f32 %v3787, %v3920
      %v3922 = vpop.f32.mrf.mxu0
      %v3923 = vadd.f32 %v3789, %v3922
      %3924 = vmatmul.bf16.gmra.mxu0 %v2242
      %v3925 = vpop.f32.mrf.mxu0
      %v3926 = vadd.f32 %v3792, %v3925
      %v3927 = vpop.f32.mrf.mxu0
      %v3928 = vadd.f32 %v3794, %v3927
      %3929 = vmatmul.bf16.gmra.mxu0 %v2246
      %v3930 = vpop.f32.mrf.mxu0
      %v3931 = vadd.f32 %v3797, %v3930
      %v3932 = vpop.f32.mrf.mxu0
      %v3933 = vadd.f32 %v3799, %v3932
      %3934 = vmatmul.bf16.gmra.mxu0 %v2250
      %v3935 = vpop.f32.mrf.mxu0
      %v3936 = vadd.f32 %v3802, %v3935
      %v3937 = vpop.f32.mrf.mxu0
      %v3938 = vadd.f32 %v3804, %v3937
      %3939 = vmatmul.bf16.gmra.mxu0 %v2254
      %v3940 = vpop.f32.mrf.mxu0
      %v3941 = vadd.f32 %v3807, %v3940
      %v3942 = vpop.f32.mrf.mxu0
      %v3943 = vadd.f32 %v3809, %v3942
      %3944 = vmatmul.bf16.gmra.mxu0 %v2258
      %v3945 = vpop.f32.mrf.mxu0
      %v3946 = vadd.f32 %v3812, %v3945
      %v3947 = vpop.f32.mrf.mxu0
      %v3948 = vadd.f32 %v3814, %v3947
      %3949 = vmatmul.bf16.gmra.mxu0 %v2262
      %v3950 = vpop.f32.mrf.mxu0
      %v3951 = vadd.f32 %v3817, %v3950
      %v3952 = vpop.f32.mrf.mxu0
      %v3953 = vadd.f32 %v3819, %v3952
      %3954 = vmatmul.bf16.gmra.mxu0 %v2266
      %v3955 = vpop.f32.mrf.mxu0
      %v3956 = vadd.f32 %v3822, %v3955
      %v3957 = vpop.f32.mrf.mxu0
      %v3958 = vadd.f32 %v3824, %v3957
      %3959 = vmatmul.bf16.gmra.mxu0 %v2270
      %v3960 = vpop.f32.mrf.mxu0
      %v3961 = vadd.f32 %v3827, %v3960
      %v3962 = vpop.f32.mrf.mxu0
      %v3963 = vadd.f32 %v3829, %v3962
      %3964 = vmatmul.bf16.gmra.mxu0 %v2274
      %v3965 = vpop.f32.mrf.mxu0
      %v3966 = vadd.f32 %v3832, %v3965
      %v3967 = vpop.f32.mrf.mxu0
      %v3968 = vadd.f32 %v3834, %v3967
      %3969 = vmatmul.bf16.gmra.mxu0 %v2278
      %v3970 = vpop.f32.mrf.mxu0
      %v3971 = vadd.f32 %v3837, %v3970
      %v3972 = vpop.f32.mrf.mxu0
      %v3973 = vadd.f32 %v3839, %v3972
      %3974 = vmatmul.bf16.gmra.mxu0 %v2282
      %v3975 = vpop.f32.mrf.mxu0
      %v3976 = vadd.f32 %v3842, %v3975
      %v3977 = vpop.f32.mrf.mxu0
      %v3978 = vadd.f32 %v3844, %v3977
      %3979 = vmatmul.bf16.gmra.mxu0 %v2286
      %v3980 = vpop.f32.mrf.mxu0
      %v3981 = vadd.f32 %v3847, %v3980
      %v3982 = vpop.f32.mrf.mxu0
      %v3983 = vadd.f32 %v3849, %v3982
      %3984 = vmatmul.bf16.gmra.mxu0 %v2290
      %v3985 = vpop.f32.mrf.mxu0
      %v3986 = vadd.f32 %v3852, %v3985
      %v3987 = vpop.f32.mrf.mxu0
      %v3988 = vadd.f32 %v3854, %v3987
      %3989 = vmatmul.bf16.gmra.mxu0 %v2294
      %v3990 = vpop.f32.mrf.mxu0
      %v3991 = vadd.f32 %v3857, %v3990
      %v3992 = vpop.f32.mrf.mxu0
      %v3993 = vadd.f32 %v3859, %v3992
      %3994 = vmatmul.bf16.gmra.mxu0 %v2298
      %v3995 = vpop.f32.mrf.mxu0
      %v3996 = vadd.f32 %v3862, %v3995
      %v3997 = vpop.f32.mrf.mxu0
      %v3998 = vadd.f32 %v3864, %v3997
      %3999 = vmatmul.bf16.gmra.mxu0 %v2302
      %v4000 = vpop.f32.mrf.mxu0
      %v4001 = vadd.f32 %v3867, %v4000
      %v4002 = vpop.f32.mrf.mxu0
      %v4003 = vadd.f32 %v3869, %v4002
      %4004 = vdwg.mxu0
      %4005 = vmatpush.bf16.msra.mxu0 %v3128
      %4006 = vmatpush.bf16.msra.mxu0 %v3122
      %4007 = vmatpush.bf16.msra.mxu0 %v3116
      %4008 = vmatpush.bf16.msra.mxu0 %v3110
      %4009 = vmatpush.bf16.msra.mxu0 %v3104
      %4010 = vmatpush.bf16.msra.mxu0 %v3098
      %4011 = vmatpush.bf16.msra.mxu0 %v3092
      %4012 = vmatpush.bf16.msra.mxu0 %v3086
      %4013 = vmatmul.bf16.gmra.mxu0 %v2203
      %v4014 = vpop.f32.mrf.mxu0
      %v4015 = vadd.f32 %v2498, %v4014
      %v4016 = vpop.f32.mrf.mxu0
      %v4017 = vadd.f32 %v2498, %v4016
      %4018 = vmatmul.bf16.gmra.mxu0 %v2207
      %v4019 = vpop.f32.mrf.mxu0
      %v4020 = vadd.f32 %v2498, %v4019
      %v4021 = vpop.f32.mrf.mxu0
      %v4022 = vadd.f32 %v2498, %v4021
      %4023 = vmatmul.bf16.gmra.mxu0 %v2211
      %v4024 = vpop.f32.mrf.mxu0
      %v4025 = vadd.f32 %v2498, %v4024
      %v4026 = vpop.f32.mrf.mxu0
      %v4027 = vadd.f32 %v2498, %v4026
      %4028 = vmatmul.bf16.gmra.mxu0 %v2215
      %v4029 = vpop.f32.mrf.mxu0
      %v4030 = vadd.f32 %v2498, %v4029
      %v4031 = vpop.f32.mrf.mxu0
      %v4032 = vadd.f32 %v2498, %v4031
      %4033 = vmatmul.bf16.gmra.mxu0 %v2219
      %v4034 = vpop.f32.mrf.mxu0
      %v4035 = vadd.f32 %v2498, %v4034
      %v4036 = vpop.f32.mrf.mxu0
      %v4037 = vadd.f32 %v2498, %v4036
      %4038 = vmatmul.bf16.gmra.mxu0 %v2223
      %v4039 = vpop.f32.mrf.mxu0
      %v4040 = vadd.f32 %v2498, %v4039
      %v4041 = vpop.f32.mrf.mxu0
      %v4042 = vadd.f32 %v2498, %v4041
      %4043 = vmatmul.bf16.gmra.mxu0 %v2227
      %v4044 = vpop.f32.mrf.mxu0
      %v4045 = vadd.f32 %v2498, %v4044
      %v4046 = vpop.f32.mrf.mxu0
      %v4047 = vadd.f32 %v2498, %v4046
      %4048 = vmatmul.bf16.gmra.mxu0 %v2231
      %v4049 = vpop.f32.mrf.mxu0
      %v4050 = vadd.f32 %v2498, %v4049
      %v4051 = vpop.f32.mrf.mxu0
      %v4052 = vadd.f32 %v2498, %v4051
      %4053 = vmatmul.bf16.gmra.mxu0 %v2235
      %v4054 = vpop.f32.mrf.mxu0
      %v4055 = vadd.f32 %v2498, %v4054
      %v4056 = vpop.f32.mrf.mxu0
      %v4057 = vadd.f32 %v2498, %v4056
      %4058 = vmatmul.bf16.gmra.mxu0 %v2239
      %v4059 = vpop.f32.mrf.mxu0
      %v4060 = vadd.f32 %v2498, %v4059
      %v4061 = vpop.f32.mrf.mxu0
      %v4062 = vadd.f32 %v2498, %v4061
      %4063 = vmatmul.bf16.gmra.mxu0 %v2243
      %v4064 = vpop.f32.mrf.mxu0
      %v4065 = vadd.f32 %v2498, %v4064
      %v4066 = vpop.f32.mrf.mxu0
      %v4067 = vadd.f32 %v2498, %v4066
      %4068 = vmatmul.bf16.gmra.mxu0 %v2247
      %v4069 = vpop.f32.mrf.mxu0
      %v4070 = vadd.f32 %v2498, %v4069
      %v4071 = vpop.f32.mrf.mxu0
      %v4072 = vadd.f32 %v2498, %v4071
      %4073 = vmatmul.bf16.gmra.mxu0 %v2251
      %v4074 = vpop.f32.mrf.mxu0
      %v4075 = vadd.f32 %v2498, %v4074
      %v4076 = vpop.f32.mrf.mxu0
      %v4077 = vadd.f32 %v2498, %v4076
      %4078 = vmatmul.bf16.gmra.mxu0 %v2255
      %v4079 = vpop.f32.mrf.mxu0
      %v4080 = vadd.f32 %v2498, %v4079
      %v4081 = vpop.f32.mrf.mxu0
      %v4082 = vadd.f32 %v2498, %v4081
      %4083 = vmatmul.bf16.gmra.mxu0 %v2259
      %v4084 = vpop.f32.mrf.mxu0
      %v4085 = vadd.f32 %v2498, %v4084
      %v4086 = vpop.f32.mrf.mxu0
      %v4087 = vadd.f32 %v2498, %v4086
      %4088 = vmatmul.bf16.gmra.mxu0 %v2263
      %v4089 = vpop.f32.mrf.mxu0
      %v4090 = vadd.f32 %v2498, %v4089
      %v4091 = vpop.f32.mrf.mxu0
      %v4092 = vadd.f32 %v2498, %v4091
      %4093 = vmatmul.bf16.gmra.mxu0 %v2267
      %v4094 = vpop.f32.mrf.mxu0
      %v4095 = vadd.f32 %v2498, %v4094
      %v4096 = vpop.f32.mrf.mxu0
      %v4097 = vadd.f32 %v2498, %v4096
      %4098 = vmatmul.bf16.gmra.mxu0 %v2271
      %v4099 = vpop.f32.mrf.mxu0
      %v4100 = vadd.f32 %v2498, %v4099
      %v4101 = vpop.f32.mrf.mxu0
      %v4102 = vadd.f32 %v2498, %v4101
      %4103 = vmatmul.bf16.gmra.mxu0 %v2275
      %v4104 = vpop.f32.mrf.mxu0
      %v4105 = vadd.f32 %v2498, %v4104
      %v4106 = vpop.f32.mrf.mxu0
      %v4107 = vadd.f32 %v2498, %v4106
      %4108 = vmatmul.bf16.gmra.mxu0 %v2279
      %v4109 = vpop.f32.mrf.mxu0
      %v4110 = vadd.f32 %v2498, %v4109
      %v4111 = vpop.f32.mrf.mxu0
      %v4112 = vadd.f32 %v2498, %v4111
      %4113 = vmatmul.bf16.gmra.mxu0 %v2283
      %v4114 = vpop.f32.mrf.mxu0
      %v4115 = vadd.f32 %v2498, %v4114
      %v4116 = vpop.f32.mrf.mxu0
      %v4117 = vadd.f32 %v2498, %v4116
      %4118 = vmatmul.bf16.gmra.mxu0 %v2287
      %v4119 = vpop.f32.mrf.mxu0
      %v4120 = vadd.f32 %v2498, %v4119
      %v4121 = vpop.f32.mrf.mxu0
      %v4122 = vadd.f32 %v2498, %v4121
      %4123 = vmatmul.bf16.gmra.mxu0 %v2291
      %v4124 = vpop.f32.mrf.mxu0
      %v4125 = vadd.f32 %v2498, %v4124
      %v4126 = vpop.f32.mrf.mxu0
      %v4127 = vadd.f32 %v2498, %v4126
      %4128 = vmatmul.bf16.gmra.mxu0 %v2295
      %v4129 = vpop.f32.mrf.mxu0
      %v4130 = vadd.f32 %v2498, %v4129
      %v4131 = vpop.f32.mrf.mxu0
      %v4132 = vadd.f32 %v2498, %v4131
      %4133 = vmatmul.bf16.gmra.mxu0 %v2299
      %v4134 = vpop.f32.mrf.mxu0
      %v4135 = vadd.f32 %v2498, %v4134
      %v4136 = vpop.f32.mrf.mxu0
      %v4137 = vadd.f32 %v2498, %v4136
      %4138 = vdwg.mxu0
      %4139 = vmatpush.bf16.msra.mxu0 %v3176
      %4140 = vmatpush.bf16.msra.mxu0 %v3170
      %4141 = vmatpush.bf16.msra.mxu0 %v3164
      %4142 = vmatpush.bf16.msra.mxu0 %v3158
      %4143 = vmatpush.bf16.msra.mxu0 %v3152
      %4144 = vmatpush.bf16.msra.mxu0 %v3146
      %4145 = vmatpush.bf16.msra.mxu0 %v3140
      %4146 = vmatpush.bf16.msra.mxu0 %v3134
      %4147 = vmatmul.bf16.gmra.mxu0 %v2204
      %v4148 = vpop.f32.mrf.mxu0
      %v4149 = vadd.f32 %v4015, %v4148
      %v4150 = vpop.f32.mrf.mxu0
      %v4151 = vadd.f32 %v4017, %v4150
      %4152 = vmatmul.bf16.gmra.mxu0 %v2208
      %v4153 = vpop.f32.mrf.mxu0
      %v4154 = vadd.f32 %v4020, %v4153
      %v4155 = vpop.f32.mrf.mxu0
      %v4156 = vadd.f32 %v4022, %v4155
      %4157 = vmatmul.bf16.gmra.mxu0 %v2212
      %v4158 = vpop.f32.mrf.mxu0
      %v4159 = vadd.f32 %v4025, %v4158
      %v4160 = vpop.f32.mrf.mxu0
      %v4161 = vadd.f32 %v4027, %v4160
      %4162 = vmatmul.bf16.gmra.mxu0 %v2216
      %v4163 = vpop.f32.mrf.mxu0
      %v4164 = vadd.f32 %v4030, %v4163
      %v4165 = vpop.f32.mrf.mxu0
      %v4166 = vadd.f32 %v4032, %v4165
      %4167 = vmatmul.bf16.gmra.mxu0 %v2220
      %v4168 = vpop.f32.mrf.mxu0
      %v4169 = vadd.f32 %v4035, %v4168
      %v4170 = vpop.f32.mrf.mxu0
      %v4171 = vadd.f32 %v4037, %v4170
      %4172 = vmatmul.bf16.gmra.mxu0 %v2224
      %v4173 = vpop.f32.mrf.mxu0
      %v4174 = vadd.f32 %v4040, %v4173
      %v4175 = vpop.f32.mrf.mxu0
      %v4176 = vadd.f32 %v4042, %v4175
      %4177 = vmatmul.bf16.gmra.mxu0 %v2228
      %v4178 = vpop.f32.mrf.mxu0
      %v4179 = vadd.f32 %v4045, %v4178
      %v4180 = vpop.f32.mrf.mxu0
      %v4181 = vadd.f32 %v4047, %v4180
      %4182 = vmatmul.bf16.gmra.mxu0 %v2232
      %v4183 = vpop.f32.mrf.mxu0
      %v4184 = vadd.f32 %v4050, %v4183
      %v4185 = vpop.f32.mrf.mxu0
      %v4186 = vadd.f32 %v4052, %v4185
      %4187 = vmatmul.bf16.gmra.mxu0 %v2236
      %v4188 = vpop.f32.mrf.mxu0
      %v4189 = vadd.f32 %v4055, %v4188
      %v4190 = vpop.f32.mrf.mxu0
      %v4191 = vadd.f32 %v4057, %v4190
      %4192 = vmatmul.bf16.gmra.mxu0 %v2240
      %v4193 = vpop.f32.mrf.mxu0
      %v4194 = vadd.f32 %v4060, %v4193
      %v4195 = vpop.f32.mrf.mxu0
      %v4196 = vadd.f32 %v4062, %v4195
      %4197 = vmatmul.bf16.gmra.mxu0 %v2244
      %v4198 = vpop.f32.mrf.mxu0
      %v4199 = vadd.f32 %v4065, %v4198
      %v4200 = vpop.f32.mrf.mxu0
      %v4201 = vadd.f32 %v4067, %v4200
      %4202 = vmatmul.bf16.gmra.mxu0 %v2248
      %v4203 = vpop.f32.mrf.mxu0
      %v4204 = vadd.f32 %v4070, %v4203
      %v4205 = vpop.f32.mrf.mxu0
      %v4206 = vadd.f32 %v4072, %v4205
      %4207 = vmatmul.bf16.gmra.mxu0 %v2252
      %v4208 = vpop.f32.mrf.mxu0
      %v4209 = vadd.f32 %v4075, %v4208
      %v4210 = vpop.f32.mrf.mxu0
      %v4211 = vadd.f32 %v4077, %v4210
      %4212 = vmatmul.bf16.gmra.mxu0 %v2256
      %v4213 = vpop.f32.mrf.mxu0
      %v4214 = vadd.f32 %v4080, %v4213
      %v4215 = vpop.f32.mrf.mxu0
      %v4216 = vadd.f32 %v4082, %v4215
      %4217 = vmatmul.bf16.gmra.mxu0 %v2260
      %v4218 = vpop.f32.mrf.mxu0
      %v4219 = vadd.f32 %v4085, %v4218
      %v4220 = vpop.f32.mrf.mxu0
      %v4221 = vadd.f32 %v4087, %v4220
      %4222 = vmatmul.bf16.gmra.mxu0 %v2264
      %v4223 = vpop.f32.mrf.mxu0
      %v4224 = vadd.f32 %v4090, %v4223
      %v4225 = vpop.f32.mrf.mxu0
      %v4226 = vadd.f32 %v4092, %v4225
      %4227 = vmatmul.bf16.gmra.mxu0 %v2268
      %v4228 = vpop.f32.mrf.mxu0
      %v4229 = vadd.f32 %v4095, %v4228
      %v4230 = vpop.f32.mrf.mxu0
      %v4231 = vadd.f32 %v4097, %v4230
      %4232 = vmatmul.bf16.gmra.mxu0 %v2272
      %v4233 = vpop.f32.mrf.mxu0
      %v4234 = vadd.f32 %v4100, %v4233
      %v4235 = vpop.f32.mrf.mxu0
      %v4236 = vadd.f32 %v4102, %v4235
      %4237 = vmatmul.bf16.gmra.mxu0 %v2276
      %v4238 = vpop.f32.mrf.mxu0
      %v4239 = vadd.f32 %v4105, %v4238
      %v4240 = vpop.f32.mrf.mxu0
      %v4241 = vadd.f32 %v4107, %v4240
      %4242 = vmatmul.bf16.gmra.mxu0 %v2280
      %v4243 = vpop.f32.mrf.mxu0
      %v4244 = vadd.f32 %v4110, %v4243
      %v4245 = vpop.f32.mrf.mxu0
      %v4246 = vadd.f32 %v4112, %v4245
      %4247 = vmatmul.bf16.gmra.mxu0 %v2284
      %v4248 = vpop.f32.mrf.mxu0
      %v4249 = vadd.f32 %v4115, %v4248
      %v4250 = vpop.f32.mrf.mxu0
      %v4251 = vadd.f32 %v4117, %v4250
      %4252 = vmatmul.bf16.gmra.mxu0 %v2288
      %v4253 = vpop.f32.mrf.mxu0
      %v4254 = vadd.f32 %v4120, %v4253
      %v4255 = vpop.f32.mrf.mxu0
      %v4256 = vadd.f32 %v4122, %v4255
      %4257 = vmatmul.bf16.gmra.mxu0 %v2292
      %v4258 = vpop.f32.mrf.mxu0
      %v4259 = vadd.f32 %v4125, %v4258
      %v4260 = vpop.f32.mrf.mxu0
      %v4261 = vadd.f32 %v4127, %v4260
      %4262 = vmatmul.bf16.gmra.mxu0 %v2296
      %v4263 = vpop.f32.mrf.mxu0
      %v4264 = vadd.f32 %v4130, %v4263
      %v4265 = vpop.f32.mrf.mxu0
      %v4266 = vadd.f32 %v4132, %v4265
      %4267 = vmatmul.bf16.gmra.mxu0 %v2300
      %v4268 = vpop.f32.mrf.mxu0
      %v4269 = vadd.f32 %v4135, %v4268
      %v4270 = vpop.f32.mrf.mxu0
      %v4271 = vadd.f32 %v4137, %v4270
      %4272 = vdwg.mxu0
      %4273 = vmatpush.bf16.msra.mxu0 %v3224
      %4274 = vmatpush.bf16.msra.mxu0 %v3218
      %4275 = vmatpush.bf16.msra.mxu0 %v3212
      %4276 = vmatpush.bf16.msra.mxu0 %v3206
      %4277 = vmatpush.bf16.msra.mxu0 %v3200
      %4278 = vmatpush.bf16.msra.mxu0 %v3194
      %4279 = vmatpush.bf16.msra.mxu0 %v3188
      %4280 = vmatpush.bf16.msra.mxu0 %v3182
      %4281 = vmatmul.bf16.gmra.mxu0 %v2205
      %v4282 = vpop.f32.mrf.mxu0
      %v4283 = vadd.f32 %v4149, %v4282
      %v4284 = vpop.f32.mrf.mxu0
      %v4285 = vadd.f32 %v4151, %v4284
      %4286 = vmatmul.bf16.gmra.mxu0 %v2209
      %v4287 = vpop.f32.mrf.mxu0
      %v4288 = vadd.f32 %v4154, %v4287
      %v4289 = vpop.f32.mrf.mxu0
      %v4290 = vadd.f32 %v4156, %v4289
      %4291 = vmatmul.bf16.gmra.mxu0 %v2213
      %v4292 = vpop.f32.mrf.mxu0
      %v4293 = vadd.f32 %v4159, %v4292
      %v4294 = vpop.f32.mrf.mxu0
      %v4295 = vadd.f32 %v4161, %v4294
      %4296 = vmatmul.bf16.gmra.mxu0 %v2217
      %v4297 = vpop.f32.mrf.mxu0
      %v4298 = vadd.f32 %v4164, %v4297
      %v4299 = vpop.f32.mrf.mxu0
      %v4300 = vadd.f32 %v4166, %v4299
      %4301 = vmatmul.bf16.gmra.mxu0 %v2221
      %v4302 = vpop.f32.mrf.mxu0
      %v4303 = vadd.f32 %v4169, %v4302
      %v4304 = vpop.f32.mrf.mxu0
      %v4305 = vadd.f32 %v4171, %v4304
      %4306 = vmatmul.bf16.gmra.mxu0 %v2225
      %v4307 = vpop.f32.mrf.mxu0
      %v4308 = vadd.f32 %v4174, %v4307
      %v4309 = vpop.f32.mrf.mxu0
      %v4310 = vadd.f32 %v4176, %v4309
      %4311 = vmatmul.bf16.gmra.mxu0 %v2229
      %v4312 = vpop.f32.mrf.mxu0
      %v4313 = vadd.f32 %v4179, %v4312
      %v4314 = vpop.f32.mrf.mxu0
      %v4315 = vadd.f32 %v4181, %v4314
      %4316 = vmatmul.bf16.gmra.mxu0 %v2233
      %v4317 = vpop.f32.mrf.mxu0
      %v4318 = vadd.f32 %v4184, %v4317
      %v4319 = vpop.f32.mrf.mxu0
      %v4320 = vadd.f32 %v4186, %v4319
      %4321 = vmatmul.bf16.gmra.mxu0 %v2237
      %v4322 = vpop.f32.mrf.mxu0
      %v4323 = vadd.f32 %v4189, %v4322
      %v4324 = vpop.f32.mrf.mxu0
      %v4325 = vadd.f32 %v4191, %v4324
      %4326 = vmatmul.bf16.gmra.mxu0 %v2241
      %v4327 = vpop.f32.mrf.mxu0
      %v4328 = vadd.f32 %v4194, %v4327
      %v4329 = vpop.f32.mrf.mxu0
      %v4330 = vadd.f32 %v4196, %v4329
      %4331 = vmatmul.bf16.gmra.mxu0 %v2245
      %v4332 = vpop.f32.mrf.mxu0
      %v4333 = vadd.f32 %v4199, %v4332
      %v4334 = vpop.f32.mrf.mxu0
      %v4335 = vadd.f32 %v4201, %v4334
      %4336 = vmatmul.bf16.gmra.mxu0 %v2249
      %v4337 = vpop.f32.mrf.mxu0
      %v4338 = vadd.f32 %v4204, %v4337
      %v4339 = vpop.f32.mrf.mxu0
      %v4340 = vadd.f32 %v4206, %v4339
      %4341 = vmatmul.bf16.gmra.mxu0 %v2253
      %v4342 = vpop.f32.mrf.mxu0
      %v4343 = vadd.f32 %v4209, %v4342
      %v4344 = vpop.f32.mrf.mxu0
      %v4345 = vadd.f32 %v4211, %v4344
      %4346 = vmatmul.bf16.gmra.mxu0 %v2257
      %v4347 = vpop.f32.mrf.mxu0
      %v4348 = vadd.f32 %v4214, %v4347
      %v4349 = vpop.f32.mrf.mxu0
      %v4350 = vadd.f32 %v4216, %v4349
      %4351 = vmatmul.bf16.gmra.mxu0 %v2261
      %v4352 = vpop.f32.mrf.mxu0
      %v4353 = vadd.f32 %v4219, %v4352
      %v4354 = vpop.f32.mrf.mxu0
      %v4355 = vadd.f32 %v4221, %v4354
      %4356 = vmatmul.bf16.gmra.mxu0 %v2265
      %v4357 = vpop.f32.mrf.mxu0
      %v4358 = vadd.f32 %v4224, %v4357
      %v4359 = vpop.f32.mrf.mxu0
      %v4360 = vadd.f32 %v4226, %v4359
      %4361 = vmatmul.bf16.gmra.mxu0 %v2269
      %v4362 = vpop.f32.mrf.mxu0
      %v4363 = vadd.f32 %v4229, %v4362
      %v4364 = vpop.f32.mrf.mxu0
      %v4365 = vadd.f32 %v4231, %v4364
      %4366 = vmatmul.bf16.gmra.mxu0 %v2273
      %v4367 = vpop.f32.mrf.mxu0
      %v4368 = vadd.f32 %v4234, %v4367
      %v4369 = vpop.f32.mrf.mxu0
      %v4370 = vadd.f32 %v4236, %v4369
      %4371 = vmatmul.bf16.gmra.mxu0 %v2277
      %v4372 = vpop.f32.mrf.mxu0
      %v4373 = vadd.f32 %v4239, %v4372
      %v4374 = vpop.f32.mrf.mxu0
      %v4375 = vadd.f32 %v4241, %v4374
      %4376 = vmatmul.bf16.gmra.mxu0 %v2281
      %v4377 = vpop.f32.mrf.mxu0
      %v4378 = vadd.f32 %v4244, %v4377
      %v4379 = vpop.f32.mrf.mxu0
      %v4380 = vadd.f32 %v4246, %v4379
      %4381 = vmatmul.bf16.gmra.mxu0 %v2285
      %v4382 = vpop.f32.mrf.mxu0
      %v4383 = vadd.f32 %v4249, %v4382
      %v4384 = vpop.f32.mrf.mxu0
      %v4385 = vadd.f32 %v4251, %v4384
      %4386 = vmatmul.bf16.gmra.mxu0 %v2289
      %v4387 = vpop.f32.mrf.mxu0
      %v4388 = vadd.f32 %v4254, %v4387
      %v4389 = vpop.f32.mrf.mxu0
      %v4390 = vadd.f32 %v4256, %v4389
      %4391 = vmatmul.bf16.gmra.mxu0 %v2293
      %v4392 = vpop.f32.mrf.mxu0
      %v4393 = vadd.f32 %v4259, %v4392
      %v4394 = vpop.f32.mrf.mxu0
      %v4395 = vadd.f32 %v4261, %v4394
      %4396 = vmatmul.bf16.gmra.mxu0 %v2297
      %v4397 = vpop.f32.mrf.mxu0
      %v4398 = vadd.f32 %v4264, %v4397
      %v4399 = vpop.f32.mrf.mxu0
      %v4400 = vadd.f32 %v4266, %v4399
      %4401 = vmatmul.bf16.gmra.mxu0 %v2301
      %v4402 = vpop.f32.mrf.mxu0
      %v4403 = vadd.f32 %v4269, %v4402
      %v4404 = vpop.f32.mrf.mxu0
      %v4405 = vadd.f32 %v4271, %v4404
      %4406 = vdwg.mxu0
      %4407 = vmatpush.bf16.msra.mxu0 %v3272
      %4408 = vmatpush.bf16.msra.mxu0 %v3266
      %4409 = vmatpush.bf16.msra.mxu0 %v3260
      %4410 = vmatpush.bf16.msra.mxu0 %v3254
      %4411 = vmatpush.bf16.msra.mxu0 %v3248
      %4412 = vmatpush.bf16.msra.mxu0 %v3242
      %4413 = vmatpush.bf16.msra.mxu0 %v3236
      %4414 = vmatpush.bf16.msra.mxu0 %v3230
      %4415 = vmatmul.bf16.gmra.mxu0 %v2206
      %v4416 = vpop.f32.mrf.mxu0
      %v4417 = vadd.f32 %v4283, %v4416
      %v4418 = vpop.f32.mrf.mxu0
      %v4419 = vadd.f32 %v4285, %v4418
      %4420 = vmatmul.bf16.gmra.mxu0 %v2210
      %v4421 = vpop.f32.mrf.mxu0
      %v4422 = vadd.f32 %v4288, %v4421
      %v4423 = vpop.f32.mrf.mxu0
      %v4424 = vadd.f32 %v4290, %v4423
      %4425 = vmatmul.bf16.gmra.mxu0 %v2214
      %v4426 = vpop.f32.mrf.mxu0
      %v4427 = vadd.f32 %v4293, %v4426
      %v4428 = vpop.f32.mrf.mxu0
      %v4429 = vadd.f32 %v4295, %v4428
      %4430 = vmatmul.bf16.gmra.mxu0 %v2218
      %v4431 = vpop.f32.mrf.mxu0
      %v4432 = vadd.f32 %v4298, %v4431
      %v4433 = vpop.f32.mrf.mxu0
      %v4434 = vadd.f32 %v4300, %v4433
      %4435 = vmatmul.bf16.gmra.mxu0 %v2222
      %v4436 = vpop.f32.mrf.mxu0
      %v4437 = vadd.f32 %v4303, %v4436
      %v4438 = vpop.f32.mrf.mxu0
      %v4439 = vadd.f32 %v4305, %v4438
      %4440 = vmatmul.bf16.gmra.mxu0 %v2226
      %v4441 = vpop.f32.mrf.mxu0
      %v4442 = vadd.f32 %v4308, %v4441
      %v4443 = vpop.f32.mrf.mxu0
      %v4444 = vadd.f32 %v4310, %v4443
      %4445 = vmatmul.bf16.gmra.mxu0 %v2230
      %v4446 = vpop.f32.mrf.mxu0
      %v4447 = vadd.f32 %v4313, %v4446
      %v4448 = vpop.f32.mrf.mxu0
      %v4449 = vadd.f32 %v4315, %v4448
      %4450 = vmatmul.bf16.gmra.mxu0 %v2234
      %v4451 = vpop.f32.mrf.mxu0
      %v4452 = vadd.f32 %v4318, %v4451
      %v4453 = vpop.f32.mrf.mxu0
      %v4454 = vadd.f32 %v4320, %v4453
      %4455 = vmatmul.bf16.gmra.mxu0 %v2238
      %v4456 = vpop.f32.mrf.mxu0
      %v4457 = vadd.f32 %v4323, %v4456
      %v4458 = vpop.f32.mrf.mxu0
      %v4459 = vadd.f32 %v4325, %v4458
      %4460 = vmatmul.bf16.gmra.mxu0 %v2242
      %v4461 = vpop.f32.mrf.mxu0
      %v4462 = vadd.f32 %v4328, %v4461
      %v4463 = vpop.f32.mrf.mxu0
      %v4464 = vadd.f32 %v4330, %v4463
      %4465 = vmatmul.bf16.gmra.mxu0 %v2246
      %v4466 = vpop.f32.mrf.mxu0
      %v4467 = vadd.f32 %v4333, %v4466
      %v4468 = vpop.f32.mrf.mxu0
      %v4469 = vadd.f32 %v4335, %v4468
      %4470 = vmatmul.bf16.gmra.mxu0 %v2250
      %v4471 = vpop.f32.mrf.mxu0
      %v4472 = vadd.f32 %v4338, %v4471
      %v4473 = vpop.f32.mrf.mxu0
      %v4474 = vadd.f32 %v4340, %v4473
      %4475 = vmatmul.bf16.gmra.mxu0 %v2254
      %v4476 = vpop.f32.mrf.mxu0
      %v4477 = vadd.f32 %v4343, %v4476
      %v4478 = vpop.f32.mrf.mxu0
      %v4479 = vadd.f32 %v4345, %v4478
      %4480 = vmatmul.bf16.gmra.mxu0 %v2258
      %v4481 = vpop.f32.mrf.mxu0
      %v4482 = vadd.f32 %v4348, %v4481
      %v4483 = vpop.f32.mrf.mxu0
      %v4484 = vadd.f32 %v4350, %v4483
      %4485 = vmatmul.bf16.gmra.mxu0 %v2262
      %v4486 = vpop.f32.mrf.mxu0
      %v4487 = vadd.f32 %v4353, %v4486
      %v4488 = vpop.f32.mrf.mxu0
      %v4489 = vadd.f32 %v4355, %v4488
      %4490 = vmatmul.bf16.gmra.mxu0 %v2266
      %v4491 = vpop.f32.mrf.mxu0
      %v4492 = vadd.f32 %v4358, %v4491
      %v4493 = vpop.f32.mrf.mxu0
      %v4494 = vadd.f32 %v4360, %v4493
      %4495 = vmatmul.bf16.gmra.mxu0 %v2270
      %v4496 = vpop.f32.mrf.mxu0
      %v4497 = vadd.f32 %v4363, %v4496
      %v4498 = vpop.f32.mrf.mxu0
      %v4499 = vadd.f32 %v4365, %v4498
      %4500 = vmatmul.bf16.gmra.mxu0 %v2274
      %v4501 = vpop.f32.mrf.mxu0
      %v4502 = vadd.f32 %v4368, %v4501
      %v4503 = vpop.f32.mrf.mxu0
      %v4504 = vadd.f32 %v4370, %v4503
      %4505 = vmatmul.bf16.gmra.mxu0 %v2278
      %v4506 = vpop.f32.mrf.mxu0
      %v4507 = vadd.f32 %v4373, %v4506
      %v4508 = vpop.f32.mrf.mxu0
      %v4509 = vadd.f32 %v4375, %v4508
      %4510 = vmatmul.bf16.gmra.mxu0 %v2282
      %v4511 = vpop.f32.mrf.mxu0
      %v4512 = vadd.f32 %v4378, %v4511
      %v4513 = vpop.f32.mrf.mxu0
      %v4514 = vadd.f32 %v4380, %v4513
      %4515 = vmatmul.bf16.gmra.mxu0 %v2286
      %v4516 = vpop.f32.mrf.mxu0
      %v4517 = vadd.f32 %v4383, %v4516
      %v4518 = vpop.f32.mrf.mxu0
      %v4519 = vadd.f32 %v4385, %v4518
      %4520 = vmatmul.bf16.gmra.mxu0 %v2290
      %v4521 = vpop.f32.mrf.mxu0
      %v4522 = vadd.f32 %v4388, %v4521
      %v4523 = vpop.f32.mrf.mxu0
      %v4524 = vadd.f32 %v4390, %v4523
      %4525 = vmatmul.bf16.gmra.mxu0 %v2294
      %v4526 = vpop.f32.mrf.mxu0
      %v4527 = vadd.f32 %v4393, %v4526
      %v4528 = vpop.f32.mrf.mxu0
      %v4529 = vadd.f32 %v4395, %v4528
      %4530 = vmatmul.bf16.gmra.mxu0 %v2298
      %v4531 = vpop.f32.mrf.mxu0
      %v4532 = vadd.f32 %v4398, %v4531
      %v4533 = vpop.f32.mrf.mxu0
      %v4534 = vadd.f32 %v4400, %v4533
      %4535 = vmatmul.bf16.gmra.mxu0 %v2302
      %v4536 = vpop.f32.mrf.mxu0
      %v4537 = vadd.f32 %v4403, %v4536
      %v4538 = vpop.f32.mrf.mxu0
      %v4539 = vadd.f32 %v4405, %v4538
      %4540 = vdwg.mxu0
      %4541 = vmatpush.bf16.msra.mxu0 %v3129
      %4542 = vmatpush.bf16.msra.mxu0 %v3123
      %4543 = vmatpush.bf16.msra.mxu0 %v3117
      %4544 = vmatpush.bf16.msra.mxu0 %v3111
      %4545 = vmatpush.bf16.msra.mxu0 %v3105
      %4546 = vmatpush.bf16.msra.mxu0 %v3099
      %4547 = vmatpush.bf16.msra.mxu0 %v3093
      %4548 = vmatpush.bf16.msra.mxu0 %v3087
      %4549 = vmatmul.bf16.gmra.mxu0 %v2203
      %v4550 = vpop.f32.mrf.mxu0
      %v4551 = vadd.f32 %v2499, %v4550
      %v4552 = vpop.f32.mrf.mxu0
      %v4553 = vadd.f32 %v2499, %v4552
      %4554 = vmatmul.bf16.gmra.mxu0 %v2207
      %v4555 = vpop.f32.mrf.mxu0
      %v4556 = vadd.f32 %v2499, %v4555
      %v4557 = vpop.f32.mrf.mxu0
      %v4558 = vadd.f32 %v2499, %v4557
      %4559 = vmatmul.bf16.gmra.mxu0 %v2211
      %v4560 = vpop.f32.mrf.mxu0
      %v4561 = vadd.f32 %v2499, %v4560
      %v4562 = vpop.f32.mrf.mxu0
      %v4563 = vadd.f32 %v2499, %v4562
      %4564 = vmatmul.bf16.gmra.mxu0 %v2215
      %v4565 = vpop.f32.mrf.mxu0
      %v4566 = vadd.f32 %v2499, %v4565
      %v4567 = vpop.f32.mrf.mxu0
      %v4568 = vadd.f32 %v2499, %v4567
      %4569 = vmatmul.bf16.gmra.mxu0 %v2219
      %v4570 = vpop.f32.mrf.mxu0
      %v4571 = vadd.f32 %v2499, %v4570
      %v4572 = vpop.f32.mrf.mxu0
      %v4573 = vadd.f32 %v2499, %v4572
      %4574 = vmatmul.bf16.gmra.mxu0 %v2223
      %v4575 = vpop.f32.mrf.mxu0
      %v4576 = vadd.f32 %v2499, %v4575
      %v4577 = vpop.f32.mrf.mxu0
      %v4578 = vadd.f32 %v2499, %v4577
      %4579 = vmatmul.bf16.gmra.mxu0 %v2227
      %v4580 = vpop.f32.mrf.mxu0
      %v4581 = vadd.f32 %v2499, %v4580
      %v4582 = vpop.f32.mrf.mxu0
      %v4583 = vadd.f32 %v2499, %v4582
      %4584 = vmatmul.bf16.gmra.mxu0 %v2231
      %v4585 = vpop.f32.mrf.mxu0
      %v4586 = vadd.f32 %v2499, %v4585
      %v4587 = vpop.f32.mrf.mxu0
      %v4588 = vadd.f32 %v2499, %v4587
      %4589 = vmatmul.bf16.gmra.mxu0 %v2235
      %v4590 = vpop.f32.mrf.mxu0
      %v4591 = vadd.f32 %v2499, %v4590
      %v4592 = vpop.f32.mrf.mxu0
      %v4593 = vadd.f32 %v2499, %v4592
      %4594 = vmatmul.bf16.gmra.mxu0 %v2239
      %v4595 = vpop.f32.mrf.mxu0
      %v4596 = vadd.f32 %v2499, %v4595
      %v4597 = vpop.f32.mrf.mxu0
      %v4598 = vadd.f32 %v2499, %v4597
      %4599 = vmatmul.bf16.gmra.mxu0 %v2243
      %v4600 = vpop.f32.mrf.mxu0
      %v4601 = vadd.f32 %v2499, %v4600
      %v4602 = vpop.f32.mrf.mxu0
      %v4603 = vadd.f32 %v2499, %v4602
      %4604 = vmatmul.bf16.gmra.mxu0 %v2247
      %v4605 = vpop.f32.mrf.mxu0
      %v4606 = vadd.f32 %v2499, %v4605
      %v4607 = vpop.f32.mrf.mxu0
      %v4608 = vadd.f32 %v2499, %v4607
      %4609 = vmatmul.bf16.gmra.mxu0 %v2251
      %v4610 = vpop.f32.mrf.mxu0
      %v4611 = vadd.f32 %v2499, %v4610
      %v4612 = vpop.f32.mrf.mxu0
      %v4613 = vadd.f32 %v2499, %v4612
      %4614 = vmatmul.bf16.gmra.mxu0 %v2255
      %v4615 = vpop.f32.mrf.mxu0
      %v4616 = vadd.f32 %v2499, %v4615
      %v4617 = vpop.f32.mrf.mxu0
      %v4618 = vadd.f32 %v2499, %v4617
      %4619 = vmatmul.bf16.gmra.mxu0 %v2259
      %v4620 = vpop.f32.mrf.mxu0
      %v4621 = vadd.f32 %v2499, %v4620
      %v4622 = vpop.f32.mrf.mxu0
      %v4623 = vadd.f32 %v2499, %v4622
      %4624 = vmatmul.bf16.gmra.mxu0 %v2263
      %v4625 = vpop.f32.mrf.mxu0
      %v4626 = vadd.f32 %v2499, %v4625
      %v4627 = vpop.f32.mrf.mxu0
      %v4628 = vadd.f32 %v2499, %v4627
      %4629 = vmatmul.bf16.gmra.mxu0 %v2267
      %v4630 = vpop.f32.mrf.mxu0
      %v4631 = vadd.f32 %v2499, %v4630
      %v4632 = vpop.f32.mrf.mxu0
      %v4633 = vadd.f32 %v2499, %v4632
      %4634 = vmatmul.bf16.gmra.mxu0 %v2271
      %v4635 = vpop.f32.mrf.mxu0
      %v4636 = vadd.f32 %v2499, %v4635
      %v4637 = vpop.f32.mrf.mxu0
      %v4638 = vadd.f32 %v2499, %v4637
      %4639 = vmatmul.bf16.gmra.mxu0 %v2275
      %v4640 = vpop.f32.mrf.mxu0
      %v4641 = vadd.f32 %v2499, %v4640
      %v4642 = vpop.f32.mrf.mxu0
      %v4643 = vadd.f32 %v2499, %v4642
      %4644 = vmatmul.bf16.gmra.mxu0 %v2279
      %v4645 = vpop.f32.mrf.mxu0
      %v4646 = vadd.f32 %v2499, %v4645
      %v4647 = vpop.f32.mrf.mxu0
      %v4648 = vadd.f32 %v2499, %v4647
      %4649 = vmatmul.bf16.gmra.mxu0 %v2283
      %v4650 = vpop.f32.mrf.mxu0
      %v4651 = vadd.f32 %v2499, %v4650
      %v4652 = vpop.f32.mrf.mxu0
      %v4653 = vadd.f32 %v2499, %v4652
      %4654 = vmatmul.bf16.gmra.mxu0 %v2287
      %v4655 = vpop.f32.mrf.mxu0
      %v4656 = vadd.f32 %v2499, %v4655
      %v4657 = vpop.f32.mrf.mxu0
      %v4658 = vadd.f32 %v2499, %v4657
      %4659 = vmatmul.bf16.gmra.mxu0 %v2291
      %v4660 = vpop.f32.mrf.mxu0
      %v4661 = vadd.f32 %v2499, %v4660
      %v4662 = vpop.f32.mrf.mxu0
      %v4663 = vadd.f32 %v2499, %v4662
      %4664 = vmatmul.bf16.gmra.mxu0 %v2295
      %v4665 = vpop.f32.mrf.mxu0
      %v4666 = vadd.f32 %v2499, %v4665
      %v4667 = vpop.f32.mrf.mxu0
      %v4668 = vadd.f32 %v2499, %v4667
      %4669 = vmatmul.bf16.gmra.mxu0 %v2299
      %v4670 = vpop.f32.mrf.mxu0
      %v4671 = vadd.f32 %v2499, %v4670
      %v4672 = vpop.f32.mrf.mxu0
      %v4673 = vadd.f32 %v2499, %v4672
      %4674 = vdwg.mxu0
      %4675 = vmatpush.bf16.msra.mxu0 %v3177
      %4676 = vmatpush.bf16.msra.mxu0 %v3171
      %4677 = vmatpush.bf16.msra.mxu0 %v3165
      %4678 = vmatpush.bf16.msra.mxu0 %v3159
      %4679 = vmatpush.bf16.msra.mxu0 %v3153
      %4680 = vmatpush.bf16.msra.mxu0 %v3147
      %4681 = vmatpush.bf16.msra.mxu0 %v3141
      %4682 = vmatpush.bf16.msra.mxu0 %v3135
      %4683 = vmatmul.bf16.gmra.mxu0 %v2204
      %v4684 = vpop.f32.mrf.mxu0
      %v4685 = vadd.f32 %v4551, %v4684
      %v4686 = vpop.f32.mrf.mxu0
      %v4687 = vadd.f32 %v4553, %v4686
      %4688 = vmatmul.bf16.gmra.mxu0 %v2208
      %v4689 = vpop.f32.mrf.mxu0
      %v4690 = vadd.f32 %v4556, %v4689
      %v4691 = vpop.f32.mrf.mxu0
      %v4692 = vadd.f32 %v4558, %v4691
      %4693 = vmatmul.bf16.gmra.mxu0 %v2212
      %v4694 = vpop.f32.mrf.mxu0
      %v4695 = vadd.f32 %v4561, %v4694
      %v4696 = vpop.f32.mrf.mxu0
      %v4697 = vadd.f32 %v4563, %v4696
      %4698 = vmatmul.bf16.gmra.mxu0 %v2216
      %v4699 = vpop.f32.mrf.mxu0
      %v4700 = vadd.f32 %v4566, %v4699
      %v4701 = vpop.f32.mrf.mxu0
      %v4702 = vadd.f32 %v4568, %v4701
      %4703 = vmatmul.bf16.gmra.mxu0 %v2220
      %v4704 = vpop.f32.mrf.mxu0
      %v4705 = vadd.f32 %v4571, %v4704
      %v4706 = vpop.f32.mrf.mxu0
      %v4707 = vadd.f32 %v4573, %v4706
      %4708 = vmatmul.bf16.gmra.mxu0 %v2224
      %v4709 = vpop.f32.mrf.mxu0
      %v4710 = vadd.f32 %v4576, %v4709
      %v4711 = vpop.f32.mrf.mxu0
      %v4712 = vadd.f32 %v4578, %v4711
      %4713 = vmatmul.bf16.gmra.mxu0 %v2228
      %v4714 = vpop.f32.mrf.mxu0
      %v4715 = vadd.f32 %v4581, %v4714
      %v4716 = vpop.f32.mrf.mxu0
      %v4717 = vadd.f32 %v4583, %v4716
      %4718 = vmatmul.bf16.gmra.mxu0 %v2232
      %v4719 = vpop.f32.mrf.mxu0
      %v4720 = vadd.f32 %v4586, %v4719
      %v4721 = vpop.f32.mrf.mxu0
      %v4722 = vadd.f32 %v4588, %v4721
      %4723 = vmatmul.bf16.gmra.mxu0 %v2236
      %v4724 = vpop.f32.mrf.mxu0
      %v4725 = vadd.f32 %v4591, %v4724
      %v4726 = vpop.f32.mrf.mxu0
      %v4727 = vadd.f32 %v4593, %v4726
      %4728 = vmatmul.bf16.gmra.mxu0 %v2240
      %v4729 = vpop.f32.mrf.mxu0
      %v4730 = vadd.f32 %v4596, %v4729
      %v4731 = vpop.f32.mrf.mxu0
      %v4732 = vadd.f32 %v4598, %v4731
      %4733 = vmatmul.bf16.gmra.mxu0 %v2244
      %v4734 = vpop.f32.mrf.mxu0
      %v4735 = vadd.f32 %v4601, %v4734
      %v4736 = vpop.f32.mrf.mxu0
      %v4737 = vadd.f32 %v4603, %v4736
      %4738 = vmatmul.bf16.gmra.mxu0 %v2248
      %v4739 = vpop.f32.mrf.mxu0
      %v4740 = vadd.f32 %v4606, %v4739
      %v4741 = vpop.f32.mrf.mxu0
      %v4742 = vadd.f32 %v4608, %v4741
      %4743 = vmatmul.bf16.gmra.mxu0 %v2252
      %v4744 = vpop.f32.mrf.mxu0
      %v4745 = vadd.f32 %v4611, %v4744
      %v4746 = vpop.f32.mrf.mxu0
      %v4747 = vadd.f32 %v4613, %v4746
      %4748 = vmatmul.bf16.gmra.mxu0 %v2256
      %v4749 = vpop.f32.mrf.mxu0
      %v4750 = vadd.f32 %v4616, %v4749
      %v4751 = vpop.f32.mrf.mxu0
      %v4752 = vadd.f32 %v4618, %v4751
      %4753 = vmatmul.bf16.gmra.mxu0 %v2260
      %v4754 = vpop.f32.mrf.mxu0
      %v4755 = vadd.f32 %v4621, %v4754
      %v4756 = vpop.f32.mrf.mxu0
      %v4757 = vadd.f32 %v4623, %v4756
      %4758 = vmatmul.bf16.gmra.mxu0 %v2264
      %v4759 = vpop.f32.mrf.mxu0
      %v4760 = vadd.f32 %v4626, %v4759
      %v4761 = vpop.f32.mrf.mxu0
      %v4762 = vadd.f32 %v4628, %v4761
      %4763 = vmatmul.bf16.gmra.mxu0 %v2268
      %v4764 = vpop.f32.mrf.mxu0
      %v4765 = vadd.f32 %v4631, %v4764
      %v4766 = vpop.f32.mrf.mxu0
      %v4767 = vadd.f32 %v4633, %v4766
      %4768 = vmatmul.bf16.gmra.mxu0 %v2272
      %v4769 = vpop.f32.mrf.mxu0
      %v4770 = vadd.f32 %v4636, %v4769
      %v4771 = vpop.f32.mrf.mxu0
      %v4772 = vadd.f32 %v4638, %v4771
      %4773 = vmatmul.bf16.gmra.mxu0 %v2276
      %v4774 = vpop.f32.mrf.mxu0
      %v4775 = vadd.f32 %v4641, %v4774
      %v4776 = vpop.f32.mrf.mxu0
      %v4777 = vadd.f32 %v4643, %v4776
      %4778 = vmatmul.bf16.gmra.mxu0 %v2280
      %v4779 = vpop.f32.mrf.mxu0
      %v4780 = vadd.f32 %v4646, %v4779
      %v4781 = vpop.f32.mrf.mxu0
      %v4782 = vadd.f32 %v4648, %v4781
      %4783 = vmatmul.bf16.gmra.mxu0 %v2284
      %v4784 = vpop.f32.mrf.mxu0
      %v4785 = vadd.f32 %v4651, %v4784
      %v4786 = vpop.f32.mrf.mxu0
      %v4787 = vadd.f32 %v4653, %v4786
      %4788 = vmatmul.bf16.gmra.mxu0 %v2288
      %v4789 = vpop.f32.mrf.mxu0
      %v4790 = vadd.f32 %v4656, %v4789
      %v4791 = vpop.f32.mrf.mxu0
      %v4792 = vadd.f32 %v4658, %v4791
      %4793 = vmatmul.bf16.gmra.mxu0 %v2292
      %v4794 = vpop.f32.mrf.mxu0
      %v4795 = vadd.f32 %v4661, %v4794
      %v4796 = vpop.f32.mrf.mxu0
      %v4797 = vadd.f32 %v4663, %v4796
      %4798 = vmatmul.bf16.gmra.mxu0 %v2296
      %v4799 = vpop.f32.mrf.mxu0
      %v4800 = vadd.f32 %v4666, %v4799
      %v4801 = vpop.f32.mrf.mxu0
      %v4802 = vadd.f32 %v4668, %v4801
      %4803 = vmatmul.bf16.gmra.mxu0 %v2300
      %v4804 = vpop.f32.mrf.mxu0
      %v4805 = vadd.f32 %v4671, %v4804
      %v4806 = vpop.f32.mrf.mxu0
      %v4807 = vadd.f32 %v4673, %v4806
      %4808 = vdwg.mxu0
      %4809 = vmatpush.bf16.msra.mxu0 %v3225
      %4810 = vmatpush.bf16.msra.mxu0 %v3219
      %4811 = vmatpush.bf16.msra.mxu0 %v3213
      %4812 = vmatpush.bf16.msra.mxu0 %v3207
      %4813 = vmatpush.bf16.msra.mxu0 %v3201
      %4814 = vmatpush.bf16.msra.mxu0 %v3195
      %4815 = vmatpush.bf16.msra.mxu0 %v3189
      %4816 = vmatpush.bf16.msra.mxu0 %v3183
      %4817 = vmatmul.bf16.gmra.mxu0 %v2205
      %v4818 = vpop.f32.mrf.mxu0
      %v4819 = vadd.f32 %v4685, %v4818
      %v4820 = vpop.f32.mrf.mxu0
      %v4821 = vadd.f32 %v4687, %v4820
      %4822 = vmatmul.bf16.gmra.mxu0 %v2209
      %v4823 = vpop.f32.mrf.mxu0
      %v4824 = vadd.f32 %v4690, %v4823
      %v4825 = vpop.f32.mrf.mxu0
      %v4826 = vadd.f32 %v4692, %v4825
      %4827 = vmatmul.bf16.gmra.mxu0 %v2213
      %v4828 = vpop.f32.mrf.mxu0
      %v4829 = vadd.f32 %v4695, %v4828
      %v4830 = vpop.f32.mrf.mxu0
      %v4831 = vadd.f32 %v4697, %v4830
      %4832 = vmatmul.bf16.gmra.mxu0 %v2217
      %v4833 = vpop.f32.mrf.mxu0
      %v4834 = vadd.f32 %v4700, %v4833
      %v4835 = vpop.f32.mrf.mxu0
      %v4836 = vadd.f32 %v4702, %v4835
      %4837 = vmatmul.bf16.gmra.mxu0 %v2221
      %v4838 = vpop.f32.mrf.mxu0
      %v4839 = vadd.f32 %v4705, %v4838
      %v4840 = vpop.f32.mrf.mxu0
      %v4841 = vadd.f32 %v4707, %v4840
      %4842 = vmatmul.bf16.gmra.mxu0 %v2225
      %v4843 = vpop.f32.mrf.mxu0
      %v4844 = vadd.f32 %v4710, %v4843
      %v4845 = vpop.f32.mrf.mxu0
      %v4846 = vadd.f32 %v4712, %v4845
      %4847 = vmatmul.bf16.gmra.mxu0 %v2229
      %v4848 = vpop.f32.mrf.mxu0
      %v4849 = vadd.f32 %v4715, %v4848
      %v4850 = vpop.f32.mrf.mxu0
      %v4851 = vadd.f32 %v4717, %v4850
      %4852 = vmatmul.bf16.gmra.mxu0 %v2233
      %v4853 = vpop.f32.mrf.mxu0
      %v4854 = vadd.f32 %v4720, %v4853
      %v4855 = vpop.f32.mrf.mxu0
      %v4856 = vadd.f32 %v4722, %v4855
      %4857 = vmatmul.bf16.gmra.mxu0 %v2237
      %v4858 = vpop.f32.mrf.mxu0
      %v4859 = vadd.f32 %v4725, %v4858
      %v4860 = vpop.f32.mrf.mxu0
      %v4861 = vadd.f32 %v4727, %v4860
      %4862 = vmatmul.bf16.gmra.mxu0 %v2241
      %v4863 = vpop.f32.mrf.mxu0
      %v4864 = vadd.f32 %v4730, %v4863
      %v4865 = vpop.f32.mrf.mxu0
      %v4866 = vadd.f32 %v4732, %v4865
      %4867 = vmatmul.bf16.gmra.mxu0 %v2245
      %v4868 = vpop.f32.mrf.mxu0
      %v4869 = vadd.f32 %v4735, %v4868
      %v4870 = vpop.f32.mrf.mxu0
      %v4871 = vadd.f32 %v4737, %v4870
      %4872 = vmatmul.bf16.gmra.mxu0 %v2249
      %v4873 = vpop.f32.mrf.mxu0
      %v4874 = vadd.f32 %v4740, %v4873
      %v4875 = vpop.f32.mrf.mxu0
      %v4876 = vadd.f32 %v4742, %v4875
      %4877 = vmatmul.bf16.gmra.mxu0 %v2253
      %v4878 = vpop.f32.mrf.mxu0
      %v4879 = vadd.f32 %v4745, %v4878
      %v4880 = vpop.f32.mrf.mxu0
      %v4881 = vadd.f32 %v4747, %v4880
      %4882 = vmatmul.bf16.gmra.mxu0 %v2257
      %v4883 = vpop.f32.mrf.mxu0
      %v4884 = vadd.f32 %v4750, %v4883
      %v4885 = vpop.f32.mrf.mxu0
      %v4886 = vadd.f32 %v4752, %v4885
      %4887 = vmatmul.bf16.gmra.mxu0 %v2261
      %v4888 = vpop.f32.mrf.mxu0
      %v4889 = vadd.f32 %v4755, %v4888
      %v4890 = vpop.f32.mrf.mxu0
      %v4891 = vadd.f32 %v4757, %v4890
      %4892 = vmatmul.bf16.gmra.mxu0 %v2265
      %v4893 = vpop.f32.mrf.mxu0
      %v4894 = vadd.f32 %v4760, %v4893
      %v4895 = vpop.f32.mrf.mxu0
      %v4896 = vadd.f32 %v4762, %v4895
      %4897 = vmatmul.bf16.gmra.mxu0 %v2269
      %v4898 = vpop.f32.mrf.mxu0
      %v4899 = vadd.f32 %v4765, %v4898
      %v4900 = vpop.f32.mrf.mxu0
      %v4901 = vadd.f32 %v4767, %v4900
      %4902 = vmatmul.bf16.gmra.mxu0 %v2273
      %v4903 = vpop.f32.mrf.mxu0
      %v4904 = vadd.f32 %v4770, %v4903
      %v4905 = vpop.f32.mrf.mxu0
      %v4906 = vadd.f32 %v4772, %v4905
      %4907 = vmatmul.bf16.gmra.mxu0 %v2277
      %v4908 = vpop.f32.mrf.mxu0
      %v4909 = vadd.f32 %v4775, %v4908
      %v4910 = vpop.f32.mrf.mxu0
      %v4911 = vadd.f32 %v4777, %v4910
      %4912 = vmatmul.bf16.gmra.mxu0 %v2281
      %v4913 = vpop.f32.mrf.mxu0
      %v4914 = vadd.f32 %v4780, %v4913
      %v4915 = vpop.f32.mrf.mxu0
      %v4916 = vadd.f32 %v4782, %v4915
      %4917 = vmatmul.bf16.gmra.mxu0 %v2285
      %v4918 = vpop.f32.mrf.mxu0
      %v4919 = vadd.f32 %v4785, %v4918
      %v4920 = vpop.f32.mrf.mxu0
      %v4921 = vadd.f32 %v4787, %v4920
      %4922 = vmatmul.bf16.gmra.mxu0 %v2289
      %v4923 = vpop.f32.mrf.mxu0
      %v4924 = vadd.f32 %v4790, %v4923
      %v4925 = vpop.f32.mrf.mxu0
      %v4926 = vadd.f32 %v4792, %v4925
      %4927 = vmatmul.bf16.gmra.mxu0 %v2293
      %v4928 = vpop.f32.mrf.mxu0
      %v4929 = vadd.f32 %v4795, %v4928
      %v4930 = vpop.f32.mrf.mxu0
      %v4931 = vadd.f32 %v4797, %v4930
      %4932 = vmatmul.bf16.gmra.mxu0 %v2297
      %v4933 = vpop.f32.mrf.mxu0
      %v4934 = vadd.f32 %v4800, %v4933
      %v4935 = vpop.f32.mrf.mxu0
      %v4936 = vadd.f32 %v4802, %v4935
      %4937 = vmatmul.bf16.gmra.mxu0 %v2301
      %v4938 = vpop.f32.mrf.mxu0
      %v4939 = vadd.f32 %v4805, %v4938
      %v4940 = vpop.f32.mrf.mxu0
      %v4941 = vadd.f32 %v4807, %v4940
      %4942 = vdwg.mxu0
      %4943 = vmatpush.bf16.msra.mxu0 %v3273
      %4944 = vmatpush.bf16.msra.mxu0 %v3267
      %4945 = vmatpush.bf16.msra.mxu0 %v3261
      %4946 = vmatpush.bf16.msra.mxu0 %v3255
      %4947 = vmatpush.bf16.msra.mxu0 %v3249
      %4948 = vmatpush.bf16.msra.mxu0 %v3243
      %4949 = vmatpush.bf16.msra.mxu0 %v3237
      %4950 = vmatpush.bf16.msra.mxu0 %v3231
      %4951 = vmatmul.bf16.gmra.mxu0 %v2206
      %v4952 = vpop.f32.mrf.mxu0
      %v4953 = vadd.f32 %v4819, %v4952
      %v4954 = vpop.f32.mrf.mxu0
      %v4955 = vadd.f32 %v4821, %v4954
      %4956 = vmatmul.bf16.gmra.mxu0 %v2210
      %v4957 = vpop.f32.mrf.mxu0
      %v4958 = vadd.f32 %v4824, %v4957
      %v4959 = vpop.f32.mrf.mxu0
      %v4960 = vadd.f32 %v4826, %v4959
      %4961 = vmatmul.bf16.gmra.mxu0 %v2214
      %v4962 = vpop.f32.mrf.mxu0
      %v4963 = vadd.f32 %v4829, %v4962
      %v4964 = vpop.f32.mrf.mxu0
      %v4965 = vadd.f32 %v4831, %v4964
      %4966 = vmatmul.bf16.gmra.mxu0 %v2218
      %v4967 = vpop.f32.mrf.mxu0
      %v4968 = vadd.f32 %v4834, %v4967
      %v4969 = vpop.f32.mrf.mxu0
      %v4970 = vadd.f32 %v4836, %v4969
      %4971 = vmatmul.bf16.gmra.mxu0 %v2222
      %v4972 = vpop.f32.mrf.mxu0
      %v4973 = vadd.f32 %v4839, %v4972
      %v4974 = vpop.f32.mrf.mxu0
      %v4975 = vadd.f32 %v4841, %v4974
      %4976 = vmatmul.bf16.gmra.mxu0 %v2226
      %v4977 = vpop.f32.mrf.mxu0
      %v4978 = vadd.f32 %v4844, %v4977
      %v4979 = vpop.f32.mrf.mxu0
      %v4980 = vadd.f32 %v4846, %v4979
      %4981 = vmatmul.bf16.gmra.mxu0 %v2230
      %v4982 = vpop.f32.mrf.mxu0
      %v4983 = vadd.f32 %v4849, %v4982
      %v4984 = vpop.f32.mrf.mxu0
      %v4985 = vadd.f32 %v4851, %v4984
      %4986 = vmatmul.bf16.gmra.mxu0 %v2234
      %v4987 = vpop.f32.mrf.mxu0
      %v4988 = vadd.f32 %v4854, %v4987
      %v4989 = vpop.f32.mrf.mxu0
      %v4990 = vadd.f32 %v4856, %v4989
      %4991 = vmatmul.bf16.gmra.mxu0 %v2238
      %v4992 = vpop.f32.mrf.mxu0
      %v4993 = vadd.f32 %v4859, %v4992
      %v4994 = vpop.f32.mrf.mxu0
      %v4995 = vadd.f32 %v4861, %v4994
      %4996 = vmatmul.bf16.gmra.mxu0 %v2242
      %v4997 = vpop.f32.mrf.mxu0
      %v4998 = vadd.f32 %v4864, %v4997
      %v4999 = vpop.f32.mrf.mxu0
      %v5000 = vadd.f32 %v4866, %v4999
      %5001 = vmatmul.bf16.gmra.mxu0 %v2246
      %v5002 = vpop.f32.mrf.mxu0
      %v5003 = vadd.f32 %v4869, %v5002
      %v5004 = vpop.f32.mrf.mxu0
      %v5005 = vadd.f32 %v4871, %v5004
      %5006 = vmatmul.bf16.gmra.mxu0 %v2250
      %v5007 = vpop.f32.mrf.mxu0
      %v5008 = vadd.f32 %v4874, %v5007
      %v5009 = vpop.f32.mrf.mxu0
      %v5010 = vadd.f32 %v4876, %v5009
      %5011 = vmatmul.bf16.gmra.mxu0 %v2254
      %v5012 = vpop.f32.mrf.mxu0
      %v5013 = vadd.f32 %v4879, %v5012
      %v5014 = vpop.f32.mrf.mxu0
      %v5015 = vadd.f32 %v4881, %v5014
      %5016 = vmatmul.bf16.gmra.mxu0 %v2258
      %v5017 = vpop.f32.mrf.mxu0
      %v5018 = vadd.f32 %v4884, %v5017
      %v5019 = vpop.f32.mrf.mxu0
      %v5020 = vadd.f32 %v4886, %v5019
      %5021 = vmatmul.bf16.gmra.mxu0 %v2262
      %v5022 = vpop.f32.mrf.mxu0
      %v5023 = vadd.f32 %v4889, %v5022
      %v5024 = vpop.f32.mrf.mxu0
      %v5025 = vadd.f32 %v4891, %v5024
      %5026 = vmatmul.bf16.gmra.mxu0 %v2266
      %v5027 = vpop.f32.mrf.mxu0
      %v5028 = vadd.f32 %v4894, %v5027
      %v5029 = vpop.f32.mrf.mxu0
      %v5030 = vadd.f32 %v4896, %v5029
      %5031 = vmatmul.bf16.gmra.mxu0 %v2270
      %v5032 = vpop.f32.mrf.mxu0
      %v5033 = vadd.f32 %v4899, %v5032
      %v5034 = vpop.f32.mrf.mxu0
      %v5035 = vadd.f32 %v4901, %v5034
      %5036 = vmatmul.bf16.gmra.mxu0 %v2274
      %v5037 = vpop.f32.mrf.mxu0
      %v5038 = vadd.f32 %v4904, %v5037
      %v5039 = vpop.f32.mrf.mxu0
      %v5040 = vadd.f32 %v4906, %v5039
      %5041 = vmatmul.bf16.gmra.mxu0 %v2278
      %v5042 = vpop.f32.mrf.mxu0
      %v5043 = vadd.f32 %v4909, %v5042
      %v5044 = vpop.f32.mrf.mxu0
      %v5045 = vadd.f32 %v4911, %v5044
      %5046 = vmatmul.bf16.gmra.mxu0 %v2282
      %v5047 = vpop.f32.mrf.mxu0
      %v5048 = vadd.f32 %v4914, %v5047
      %v5049 = vpop.f32.mrf.mxu0
      %v5050 = vadd.f32 %v4916, %v5049
      %5051 = vmatmul.bf16.gmra.mxu0 %v2286
      %v5052 = vpop.f32.mrf.mxu0
      %v5053 = vadd.f32 %v4919, %v5052
      %v5054 = vpop.f32.mrf.mxu0
      %v5055 = vadd.f32 %v4921, %v5054
      %5056 = vmatmul.bf16.gmra.mxu0 %v2290
      %v5057 = vpop.f32.mrf.mxu0
      %v5058 = vadd.f32 %v4924, %v5057
      %v5059 = vpop.f32.mrf.mxu0
      %v5060 = vadd.f32 %v4926, %v5059
      %5061 = vmatmul.bf16.gmra.mxu0 %v2294
      %v5062 = vpop.f32.mrf.mxu0
      %v5063 = vadd.f32 %v4929, %v5062
      %v5064 = vpop.f32.mrf.mxu0
      %v5065 = vadd.f32 %v4931, %v5064
      %5066 = vmatmul.bf16.gmra.mxu0 %v2298
      %v5067 = vpop.f32.mrf.mxu0
      %v5068 = vadd.f32 %v4934, %v5067
      %v5069 = vpop.f32.mrf.mxu0
      %v5070 = vadd.f32 %v4936, %v5069
      %5071 = vmatmul.bf16.gmra.mxu0 %v2302
      %v5072 = vpop.f32.mrf.mxu0
      %v5073 = vadd.f32 %v4939, %v5072
      %v5074 = vpop.f32.mrf.mxu0
      %v5075 = vadd.f32 %v4941, %v5074
      %5076 = vdwg.mxu0
      %5077 = vmatpush.bf16.msra.mxu0 %v3130
      %5078 = vmatpush.bf16.msra.mxu0 %v3124
      %5079 = vmatpush.bf16.msra.mxu0 %v3118
      %5080 = vmatpush.bf16.msra.mxu0 %v3112
      %5081 = vmatpush.bf16.msra.mxu0 %v3106
      %5082 = vmatpush.bf16.msra.mxu0 %v3100
      %5083 = vmatpush.bf16.msra.mxu0 %v3094
      %5084 = vmatpush.bf16.msra.mxu0 %v3088
      %5085 = vmatmul.bf16.gmra.mxu0 %v2203
      %v5086 = vpop.f32.mrf.mxu0
      %v5087 = vadd.f32 %v2500, %v5086
      %v5088 = vpop.f32.mrf.mxu0
      %v5089 = vadd.f32 %v2500, %v5088
      %5090 = vmatmul.bf16.gmra.mxu0 %v2207
      %v5091 = vpop.f32.mrf.mxu0
      %v5092 = vadd.f32 %v2500, %v5091
      %v5093 = vpop.f32.mrf.mxu0
      %v5094 = vadd.f32 %v2500, %v5093
      %5095 = vmatmul.bf16.gmra.mxu0 %v2211
      %v5096 = vpop.f32.mrf.mxu0
      %v5097 = vadd.f32 %v2500, %v5096
      %v5098 = vpop.f32.mrf.mxu0
      %v5099 = vadd.f32 %v2500, %v5098
      %5100 = vmatmul.bf16.gmra.mxu0 %v2215
      %v5101 = vpop.f32.mrf.mxu0
      %v5102 = vadd.f32 %v2500, %v5101
      %v5103 = vpop.f32.mrf.mxu0
      %v5104 = vadd.f32 %v2500, %v5103
      %5105 = vmatmul.bf16.gmra.mxu0 %v2219
      %v5106 = vpop.f32.mrf.mxu0
      %v5107 = vadd.f32 %v2500, %v5106
      %v5108 = vpop.f32.mrf.mxu0
      %v5109 = vadd.f32 %v2500, %v5108
      %5110 = vmatmul.bf16.gmra.mxu0 %v2223
      %v5111 = vpop.f32.mrf.mxu0
      %v5112 = vadd.f32 %v2500, %v5111
      %v5113 = vpop.f32.mrf.mxu0
      %v5114 = vadd.f32 %v2500, %v5113
      %5115 = vmatmul.bf16.gmra.mxu0 %v2227
      %v5116 = vpop.f32.mrf.mxu0
      %v5117 = vadd.f32 %v2500, %v5116
      %v5118 = vpop.f32.mrf.mxu0
      %v5119 = vadd.f32 %v2500, %v5118
      %5120 = vmatmul.bf16.gmra.mxu0 %v2231
      %v5121 = vpop.f32.mrf.mxu0
      %v5122 = vadd.f32 %v2500, %v5121
      %v5123 = vpop.f32.mrf.mxu0
      %v5124 = vadd.f32 %v2500, %v5123
      %5125 = vmatmul.bf16.gmra.mxu0 %v2235
      %v5126 = vpop.f32.mrf.mxu0
      %v5127 = vadd.f32 %v2500, %v5126
      %v5128 = vpop.f32.mrf.mxu0
      %v5129 = vadd.f32 %v2500, %v5128
      %5130 = vmatmul.bf16.gmra.mxu0 %v2239
      %v5131 = vpop.f32.mrf.mxu0
      %v5132 = vadd.f32 %v2500, %v5131
      %v5133 = vpop.f32.mrf.mxu0
      %v5134 = vadd.f32 %v2500, %v5133
      %5135 = vmatmul.bf16.gmra.mxu0 %v2243
      %v5136 = vpop.f32.mrf.mxu0
      %v5137 = vadd.f32 %v2500, %v5136
      %v5138 = vpop.f32.mrf.mxu0
      %v5139 = vadd.f32 %v2500, %v5138
      %5140 = vmatmul.bf16.gmra.mxu0 %v2247
      %v5141 = vpop.f32.mrf.mxu0
      %v5142 = vadd.f32 %v2500, %v5141
      %v5143 = vpop.f32.mrf.mxu0
      %v5144 = vadd.f32 %v2500, %v5143
      %5145 = vmatmul.bf16.gmra.mxu0 %v2251
      %v5146 = vpop.f32.mrf.mxu0
      %v5147 = vadd.f32 %v2500, %v5146
      %v5148 = vpop.f32.mrf.mxu0
      %v5149 = vadd.f32 %v2500, %v5148
      %5150 = vmatmul.bf16.gmra.mxu0 %v2255
      %v5151 = vpop.f32.mrf.mxu0
      %v5152 = vadd.f32 %v2500, %v5151
      %v5153 = vpop.f32.mrf.mxu0
      %v5154 = vadd.f32 %v2500, %v5153
      %5155 = vmatmul.bf16.gmra.mxu0 %v2259
      %v5156 = vpop.f32.mrf.mxu0
      %v5157 = vadd.f32 %v2500, %v5156
      %v5158 = vpop.f32.mrf.mxu0
      %v5159 = vadd.f32 %v2500, %v5158
      %5160 = vmatmul.bf16.gmra.mxu0 %v2263
      %v5161 = vpop.f32.mrf.mxu0
      %v5162 = vadd.f32 %v2500, %v5161
      %v5163 = vpop.f32.mrf.mxu0
      %v5164 = vadd.f32 %v2500, %v5163
      %5165 = vmatmul.bf16.gmra.mxu0 %v2267
      %v5166 = vpop.f32.mrf.mxu0
      %v5167 = vadd.f32 %v2500, %v5166
      %v5168 = vpop.f32.mrf.mxu0
      %v5169 = vadd.f32 %v2500, %v5168
      %5170 = vmatmul.bf16.gmra.mxu0 %v2271
      %v5171 = vpop.f32.mrf.mxu0
      %v5172 = vadd.f32 %v2500, %v5171
      %v5173 = vpop.f32.mrf.mxu0
      %v5174 = vadd.f32 %v2500, %v5173
      %5175 = vmatmul.bf16.gmra.mxu0 %v2275
      %v5176 = vpop.f32.mrf.mxu0
      %v5177 = vadd.f32 %v2500, %v5176
      %v5178 = vpop.f32.mrf.mxu0
      %v5179 = vadd.f32 %v2500, %v5178
      %5180 = vmatmul.bf16.gmra.mxu0 %v2279
      %v5181 = vpop.f32.mrf.mxu0
      %v5182 = vadd.f32 %v2500, %v5181
      %v5183 = vpop.f32.mrf.mxu0
      %v5184 = vadd.f32 %v2500, %v5183
      %5185 = vmatmul.bf16.gmra.mxu0 %v2283
      %v5186 = vpop.f32.mrf.mxu0
      %v5187 = vadd.f32 %v2500, %v5186
      %v5188 = vpop.f32.mrf.mxu0
      %v5189 = vadd.f32 %v2500, %v5188
      %5190 = vmatmul.bf16.gmra.mxu0 %v2287
      %v5191 = vpop.f32.mrf.mxu0
      %v5192 = vadd.f32 %v2500, %v5191
      %v5193 = vpop.f32.mrf.mxu0
      %v5194 = vadd.f32 %v2500, %v5193
      %5195 = vmatmul.bf16.gmra.mxu0 %v2291
      %v5196 = vpop.f32.mrf.mxu0
      %v5197 = vadd.f32 %v2500, %v5196
      %v5198 = vpop.f32.mrf.mxu0
      %v5199 = vadd.f32 %v2500, %v5198
      %5200 = vmatmul.bf16.gmra.mxu0 %v2295
      %v5201 = vpop.f32.mrf.mxu0
      %v5202 = vadd.f32 %v2500, %v5201
      %v5203 = vpop.f32.mrf.mxu0
      %v5204 = vadd.f32 %v2500, %v5203
      %5205 = vmatmul.bf16.gmra.mxu0 %v2299
      %v5206 = vpop.f32.mrf.mxu0
      %v5207 = vadd.f32 %v2500, %v5206
      %v5208 = vpop.f32.mrf.mxu0
      %v5209 = vadd.f32 %v2500, %v5208
      %5210 = vdwg.mxu0
      %5211 = vmatpush.bf16.msra.mxu0 %v3178
      %5212 = vmatpush.bf16.msra.mxu0 %v3172
      %5213 = vmatpush.bf16.msra.mxu0 %v3166
      %5214 = vmatpush.bf16.msra.mxu0 %v3160
      %5215 = vmatpush.bf16.msra.mxu0 %v3154
      %5216 = vmatpush.bf16.msra.mxu0 %v3148
      %5217 = vmatpush.bf16.msra.mxu0 %v3142
      %5218 = vmatpush.bf16.msra.mxu0 %v3136
      %5219 = vmatmul.bf16.gmra.mxu0 %v2204
      %v5220 = vpop.f32.mrf.mxu0
      %v5221 = vadd.f32 %v5087, %v5220
      %v5222 = vpop.f32.mrf.mxu0
      %v5223 = vadd.f32 %v5089, %v5222
      %5224 = vmatmul.bf16.gmra.mxu0 %v2208
      %v5225 = vpop.f32.mrf.mxu0
      %v5226 = vadd.f32 %v5092, %v5225
      %v5227 = vpop.f32.mrf.mxu0
      %v5228 = vadd.f32 %v5094, %v5227
      %5229 = vmatmul.bf16.gmra.mxu0 %v2212
      %v5230 = vpop.f32.mrf.mxu0
      %v5231 = vadd.f32 %v5097, %v5230
      %v5232 = vpop.f32.mrf.mxu0
      %v5233 = vadd.f32 %v5099, %v5232
      %5234 = vmatmul.bf16.gmra.mxu0 %v2216
      %v5235 = vpop.f32.mrf.mxu0
      %v5236 = vadd.f32 %v5102, %v5235
      %v5237 = vpop.f32.mrf.mxu0
      %v5238 = vadd.f32 %v5104, %v5237
      %5239 = vmatmul.bf16.gmra.mxu0 %v2220
      %v5240 = vpop.f32.mrf.mxu0
      %v5241 = vadd.f32 %v5107, %v5240
      %v5242 = vpop.f32.mrf.mxu0
      %v5243 = vadd.f32 %v5109, %v5242
      %5244 = vmatmul.bf16.gmra.mxu0 %v2224
      %v5245 = vpop.f32.mrf.mxu0
      %v5246 = vadd.f32 %v5112, %v5245
      %v5247 = vpop.f32.mrf.mxu0
      %v5248 = vadd.f32 %v5114, %v5247
      %5249 = vmatmul.bf16.gmra.mxu0 %v2228
      %v5250 = vpop.f32.mrf.mxu0
      %v5251 = vadd.f32 %v5117, %v5250
      %v5252 = vpop.f32.mrf.mxu0
      %v5253 = vadd.f32 %v5119, %v5252
      %5254 = vmatmul.bf16.gmra.mxu0 %v2232
      %v5255 = vpop.f32.mrf.mxu0
      %v5256 = vadd.f32 %v5122, %v5255
      %v5257 = vpop.f32.mrf.mxu0
      %v5258 = vadd.f32 %v5124, %v5257
      %5259 = vmatmul.bf16.gmra.mxu0 %v2236
      %v5260 = vpop.f32.mrf.mxu0
      %v5261 = vadd.f32 %v5127, %v5260
      %v5262 = vpop.f32.mrf.mxu0
      %v5263 = vadd.f32 %v5129, %v5262
      %5264 = vmatmul.bf16.gmra.mxu0 %v2240
      %v5265 = vpop.f32.mrf.mxu0
      %v5266 = vadd.f32 %v5132, %v5265
      %v5267 = vpop.f32.mrf.mxu0
      %v5268 = vadd.f32 %v5134, %v5267
      %5269 = vmatmul.bf16.gmra.mxu0 %v2244
      %v5270 = vpop.f32.mrf.mxu0
      %v5271 = vadd.f32 %v5137, %v5270
      %v5272 = vpop.f32.mrf.mxu0
      %v5273 = vadd.f32 %v5139, %v5272
      %5274 = vmatmul.bf16.gmra.mxu0 %v2248
      %v5275 = vpop.f32.mrf.mxu0
      %v5276 = vadd.f32 %v5142, %v5275
      %v5277 = vpop.f32.mrf.mxu0
      %v5278 = vadd.f32 %v5144, %v5277
      %5279 = vmatmul.bf16.gmra.mxu0 %v2252
      %v5280 = vpop.f32.mrf.mxu0
      %v5281 = vadd.f32 %v5147, %v5280
      %v5282 = vpop.f32.mrf.mxu0
      %v5283 = vadd.f32 %v5149, %v5282
      %5284 = vmatmul.bf16.gmra.mxu0 %v2256
      %v5285 = vpop.f32.mrf.mxu0
      %v5286 = vadd.f32 %v5152, %v5285
      %v5287 = vpop.f32.mrf.mxu0
      %v5288 = vadd.f32 %v5154, %v5287
      %5289 = vmatmul.bf16.gmra.mxu0 %v2260
      %v5290 = vpop.f32.mrf.mxu0
      %v5291 = vadd.f32 %v5157, %v5290
      %v5292 = vpop.f32.mrf.mxu0
      %v5293 = vadd.f32 %v5159, %v5292
      %5294 = vmatmul.bf16.gmra.mxu0 %v2264
      %v5295 = vpop.f32.mrf.mxu0
      %v5296 = vadd.f32 %v5162, %v5295
      %v5297 = vpop.f32.mrf.mxu0
      %v5298 = vadd.f32 %v5164, %v5297
      %5299 = vmatmul.bf16.gmra.mxu0 %v2268
      %v5300 = vpop.f32.mrf.mxu0
      %v5301 = vadd.f32 %v5167, %v5300
      %v5302 = vpop.f32.mrf.mxu0
      %v5303 = vadd.f32 %v5169, %v5302
      %5304 = vmatmul.bf16.gmra.mxu0 %v2272
      %v5305 = vpop.f32.mrf.mxu0
      %v5306 = vadd.f32 %v5172, %v5305
      %v5307 = vpop.f32.mrf.mxu0
      %v5308 = vadd.f32 %v5174, %v5307
      %5309 = vmatmul.bf16.gmra.mxu0 %v2276
      %v5310 = vpop.f32.mrf.mxu0
      %v5311 = vadd.f32 %v5177, %v5310
      %v5312 = vpop.f32.mrf.mxu0
      %v5313 = vadd.f32 %v5179, %v5312
      %5314 = vmatmul.bf16.gmra.mxu0 %v2280
      %v5315 = vpop.f32.mrf.mxu0
      %v5316 = vadd.f32 %v5182, %v5315
      %v5317 = vpop.f32.mrf.mxu0
      %v5318 = vadd.f32 %v5184, %v5317
      %5319 = vmatmul.bf16.gmra.mxu0 %v2284
      %v5320 = vpop.f32.mrf.mxu0
      %v5321 = vadd.f32 %v5187, %v5320
      %v5322 = vpop.f32.mrf.mxu0
      %v5323 = vadd.f32 %v5189, %v5322
      %5324 = vmatmul.bf16.gmra.mxu0 %v2288
      %v5325 = vpop.f32.mrf.mxu0
      %v5326 = vadd.f32 %v5192, %v5325
      %v5327 = vpop.f32.mrf.mxu0
      %v5328 = vadd.f32 %v5194, %v5327
      %5329 = vmatmul.bf16.gmra.mxu0 %v2292
      %v5330 = vpop.f32.mrf.mxu0
      %v5331 = vadd.f32 %v5197, %v5330
      %v5332 = vpop.f32.mrf.mxu0
      %v5333 = vadd.f32 %v5199, %v5332
      %5334 = vmatmul.bf16.gmra.mxu0 %v2296
      %v5335 = vpop.f32.mrf.mxu0
      %v5336 = vadd.f32 %v5202, %v5335
      %v5337 = vpop.f32.mrf.mxu0
      %v5338 = vadd.f32 %v5204, %v5337
      %5339 = vmatmul.bf16.gmra.mxu0 %v2300
      %v5340 = vpop.f32.mrf.mxu0
      %v5341 = vadd.f32 %v5207, %v5340
      %v5342 = vpop.f32.mrf.mxu0
      %v5343 = vadd.f32 %v5209, %v5342
      %5344 = vdwg.mxu0
      %5345 = vmatpush.bf16.msra.mxu0 %v3226
      %5346 = vmatpush.bf16.msra.mxu0 %v3220
      %5347 = vmatpush.bf16.msra.mxu0 %v3214
      %5348 = vmatpush.bf16.msra.mxu0 %v3208
      %5349 = vmatpush.bf16.msra.mxu0 %v3202
      %5350 = vmatpush.bf16.msra.mxu0 %v3196
      %5351 = vmatpush.bf16.msra.mxu0 %v3190
      %5352 = vmatpush.bf16.msra.mxu0 %v3184
      %5353 = vmatmul.bf16.gmra.mxu0 %v2205
      %v5354 = vpop.f32.mrf.mxu0
      %v5355 = vadd.f32 %v5221, %v5354
      %v5356 = vpop.f32.mrf.mxu0
      %v5357 = vadd.f32 %v5223, %v5356
      %5358 = vmatmul.bf16.gmra.mxu0 %v2209
      %v5359 = vpop.f32.mrf.mxu0
      %v5360 = vadd.f32 %v5226, %v5359
      %v5361 = vpop.f32.mrf.mxu0
      %v5362 = vadd.f32 %v5228, %v5361
      %5363 = vmatmul.bf16.gmra.mxu0 %v2213
      %v5364 = vpop.f32.mrf.mxu0
      %v5365 = vadd.f32 %v5231, %v5364
      %v5366 = vpop.f32.mrf.mxu0
      %v5367 = vadd.f32 %v5233, %v5366
      %5368 = vmatmul.bf16.gmra.mxu0 %v2217
      %v5369 = vpop.f32.mrf.mxu0
      %v5370 = vadd.f32 %v5236, %v5369
      %v5371 = vpop.f32.mrf.mxu0
      %v5372 = vadd.f32 %v5238, %v5371
      %5373 = vmatmul.bf16.gmra.mxu0 %v2221
      %v5374 = vpop.f32.mrf.mxu0
      %v5375 = vadd.f32 %v5241, %v5374
      %v5376 = vpop.f32.mrf.mxu0
      %v5377 = vadd.f32 %v5243, %v5376
      %5378 = vmatmul.bf16.gmra.mxu0 %v2225
      %v5379 = vpop.f32.mrf.mxu0
      %v5380 = vadd.f32 %v5246, %v5379
      %v5381 = vpop.f32.mrf.mxu0
      %v5382 = vadd.f32 %v5248, %v5381
      %5383 = vmatmul.bf16.gmra.mxu0 %v2229
      %v5384 = vpop.f32.mrf.mxu0
      %v5385 = vadd.f32 %v5251, %v5384
      %v5386 = vpop.f32.mrf.mxu0
      %v5387 = vadd.f32 %v5253, %v5386
      %5388 = vmatmul.bf16.gmra.mxu0 %v2233
      %v5389 = vpop.f32.mrf.mxu0
      %v5390 = vadd.f32 %v5256, %v5389
      %v5391 = vpop.f32.mrf.mxu0
      %v5392 = vadd.f32 %v5258, %v5391
      %5393 = vmatmul.bf16.gmra.mxu0 %v2237
      %v5394 = vpop.f32.mrf.mxu0
      %v5395 = vadd.f32 %v5261, %v5394
      %v5396 = vpop.f32.mrf.mxu0
      %v5397 = vadd.f32 %v5263, %v5396
      %5398 = vmatmul.bf16.gmra.mxu0 %v2241
      %v5399 = vpop.f32.mrf.mxu0
      %v5400 = vadd.f32 %v5266, %v5399
      %v5401 = vpop.f32.mrf.mxu0
      %v5402 = vadd.f32 %v5268, %v5401
      %5403 = vmatmul.bf16.gmra.mxu0 %v2245
      %v5404 = vpop.f32.mrf.mxu0
      %v5405 = vadd.f32 %v5271, %v5404
      %v5406 = vpop.f32.mrf.mxu0
      %v5407 = vadd.f32 %v5273, %v5406
      %5408 = vmatmul.bf16.gmra.mxu0 %v2249
      %v5409 = vpop.f32.mrf.mxu0
      %v5410 = vadd.f32 %v5276, %v5409
      %v5411 = vpop.f32.mrf.mxu0
      %v5412 = vadd.f32 %v5278, %v5411
      %5413 = vmatmul.bf16.gmra.mxu0 %v2253
      %v5414 = vpop.f32.mrf.mxu0
      %v5415 = vadd.f32 %v5281, %v5414
      %v5416 = vpop.f32.mrf.mxu0
      %v5417 = vadd.f32 %v5283, %v5416
      %5418 = vmatmul.bf16.gmra.mxu0 %v2257
      %v5419 = vpop.f32.mrf.mxu0
      %v5420 = vadd.f32 %v5286, %v5419
      %v5421 = vpop.f32.mrf.mxu0
      %v5422 = vadd.f32 %v5288, %v5421
      %5423 = vmatmul.bf16.gmra.mxu0 %v2261
      %v5424 = vpop.f32.mrf.mxu0
      %v5425 = vadd.f32 %v5291, %v5424
      %v5426 = vpop.f32.mrf.mxu0
      %v5427 = vadd.f32 %v5293, %v5426
      %5428 = vmatmul.bf16.gmra.mxu0 %v2265
      %v5429 = vpop.f32.mrf.mxu0
      %v5430 = vadd.f32 %v5296, %v5429
      %v5431 = vpop.f32.mrf.mxu0
      %v5432 = vadd.f32 %v5298, %v5431
      %5433 = vmatmul.bf16.gmra.mxu0 %v2269
      %v5434 = vpop.f32.mrf.mxu0
      %v5435 = vadd.f32 %v5301, %v5434
      %v5436 = vpop.f32.mrf.mxu0
      %v5437 = vadd.f32 %v5303, %v5436
      %5438 = vmatmul.bf16.gmra.mxu0 %v2273
      %v5439 = vpop.f32.mrf.mxu0
      %v5440 = vadd.f32 %v5306, %v5439
      %v5441 = vpop.f32.mrf.mxu0
      %v5442 = vadd.f32 %v5308, %v5441
      %5443 = vmatmul.bf16.gmra.mxu0 %v2277
      %v5444 = vpop.f32.mrf.mxu0
      %v5445 = vadd.f32 %v5311, %v5444
      %v5446 = vpop.f32.mrf.mxu0
      %v5447 = vadd.f32 %v5313, %v5446
      %5448 = vmatmul.bf16.gmra.mxu0 %v2281
      %v5449 = vpop.f32.mrf.mxu0
      %v5450 = vadd.f32 %v5316, %v5449
      %v5451 = vpop.f32.mrf.mxu0
      %v5452 = vadd.f32 %v5318, %v5451
      %5453 = vmatmul.bf16.gmra.mxu0 %v2285
      %v5454 = vpop.f32.mrf.mxu0
      %v5455 = vadd.f32 %v5321, %v5454
      %v5456 = vpop.f32.mrf.mxu0
      %v5457 = vadd.f32 %v5323, %v5456
      %5458 = vmatmul.bf16.gmra.mxu0 %v2289
      %v5459 = vpop.f32.mrf.mxu0
      %v5460 = vadd.f32 %v5326, %v5459
      %v5461 = vpop.f32.mrf.mxu0
      %v5462 = vadd.f32 %v5328, %v5461
      %5463 = vmatmul.bf16.gmra.mxu0 %v2293
      %v5464 = vpop.f32.mrf.mxu0
      %v5465 = vadd.f32 %v5331, %v5464
      %v5466 = vpop.f32.mrf.mxu0
      %v5467 = vadd.f32 %v5333, %v5466
      %5468 = vmatmul.bf16.gmra.mxu0 %v2297
      %v5469 = vpop.f32.mrf.mxu0
      %v5470 = vadd.f32 %v5336, %v5469
      %v5471 = vpop.f32.mrf.mxu0
      %v5472 = vadd.f32 %v5338, %v5471
      %5473 = vmatmul.bf16.gmra.mxu0 %v2301
      %v5474 = vpop.f32.mrf.mxu0
      %v5475 = vadd.f32 %v5341, %v5474
      %v5476 = vpop.f32.mrf.mxu0
      %v5477 = vadd.f32 %v5343, %v5476
      %5478 = vdwg.mxu0
      %5479 = vmatpush.bf16.msra.mxu0 %v3274
      %5480 = vmatpush.bf16.msra.mxu0 %v3268
      %5481 = vmatpush.bf16.msra.mxu0 %v3262
      %5482 = vmatpush.bf16.msra.mxu0 %v3256
      %5483 = vmatpush.bf16.msra.mxu0 %v3250
      %5484 = vmatpush.bf16.msra.mxu0 %v3244
      %5485 = vmatpush.bf16.msra.mxu0 %v3238
      %5486 = vmatpush.bf16.msra.mxu0 %v3232
      %5487 = vmatmul.bf16.gmra.mxu0 %v2206
      %v5488 = vpop.f32.mrf.mxu0
      %v5489 = vadd.f32 %v5355, %v5488
      %v5490 = vpop.f32.mrf.mxu0
      %v5491 = vadd.f32 %v5357, %v5490
      %5492 = vmatmul.bf16.gmra.mxu0 %v2210
      %v5493 = vpop.f32.mrf.mxu0
      %v5494 = vadd.f32 %v5360, %v5493
      %v5495 = vpop.f32.mrf.mxu0
      %v5496 = vadd.f32 %v5362, %v5495
      %5497 = vmatmul.bf16.gmra.mxu0 %v2214
      %v5498 = vpop.f32.mrf.mxu0
      %v5499 = vadd.f32 %v5365, %v5498
      %v5500 = vpop.f32.mrf.mxu0
      %v5501 = vadd.f32 %v5367, %v5500
      %5502 = vmatmul.bf16.gmra.mxu0 %v2218
      %v5503 = vpop.f32.mrf.mxu0
      %v5504 = vadd.f32 %v5370, %v5503
      %v5505 = vpop.f32.mrf.mxu0
      %v5506 = vadd.f32 %v5372, %v5505
      %5507 = vmatmul.bf16.gmra.mxu0 %v2222
      %v5508 = vpop.f32.mrf.mxu0
      %v5509 = vadd.f32 %v5375, %v5508
      %v5510 = vpop.f32.mrf.mxu0
      %v5511 = vadd.f32 %v5377, %v5510
      %5512 = vmatmul.bf16.gmra.mxu0 %v2226
      %v5513 = vpop.f32.mrf.mxu0
      %v5514 = vadd.f32 %v5380, %v5513
      %v5515 = vpop.f32.mrf.mxu0
      %v5516 = vadd.f32 %v5382, %v5515
      %5517 = vmatmul.bf16.gmra.mxu0 %v2230
      %v5518 = vpop.f32.mrf.mxu0
      %v5519 = vadd.f32 %v5385, %v5518
      %v5520 = vpop.f32.mrf.mxu0
      %v5521 = vadd.f32 %v5387, %v5520
      %5522 = vmatmul.bf16.gmra.mxu0 %v2234
      %v5523 = vpop.f32.mrf.mxu0
      %v5524 = vadd.f32 %v5390, %v5523
      %v5525 = vpop.f32.mrf.mxu0
      %v5526 = vadd.f32 %v5392, %v5525
      %5527 = vmatmul.bf16.gmra.mxu0 %v2238
      %v5528 = vpop.f32.mrf.mxu0
      %v5529 = vadd.f32 %v5395, %v5528
      %v5530 = vpop.f32.mrf.mxu0
      %v5531 = vadd.f32 %v5397, %v5530
      %5532 = vmatmul.bf16.gmra.mxu0 %v2242
      %v5533 = vpop.f32.mrf.mxu0
      %v5534 = vadd.f32 %v5400, %v5533
      %v5535 = vpop.f32.mrf.mxu0
      %v5536 = vadd.f32 %v5402, %v5535
      %5537 = vmatmul.bf16.gmra.mxu0 %v2246
      %v5538 = vpop.f32.mrf.mxu0
      %v5539 = vadd.f32 %v5405, %v5538
      %v5540 = vpop.f32.mrf.mxu0
      %v5541 = vadd.f32 %v5407, %v5540
      %5542 = vmatmul.bf16.gmra.mxu0 %v2250
      %v5543 = vpop.f32.mrf.mxu0
      %v5544 = vadd.f32 %v5410, %v5543
      %v5545 = vpop.f32.mrf.mxu0
      %v5546 = vadd.f32 %v5412, %v5545
      %5547 = vmatmul.bf16.gmra.mxu0 %v2254
      %v5548 = vpop.f32.mrf.mxu0
      %v5549 = vadd.f32 %v5415, %v5548
      %v5550 = vpop.f32.mrf.mxu0
      %v5551 = vadd.f32 %v5417, %v5550
      %5552 = vmatmul.bf16.gmra.mxu0 %v2258
      %v5553 = vpop.f32.mrf.mxu0
      %v5554 = vadd.f32 %v5420, %v5553
      %v5555 = vpop.f32.mrf.mxu0
      %v5556 = vadd.f32 %v5422, %v5555
      %5557 = vmatmul.bf16.gmra.mxu0 %v2262
      %v5558 = vpop.f32.mrf.mxu0
      %v5559 = vadd.f32 %v5425, %v5558
      %v5560 = vpop.f32.mrf.mxu0
      %v5561 = vadd.f32 %v5427, %v5560
      %5562 = vmatmul.bf16.gmra.mxu0 %v2266
      %v5563 = vpop.f32.mrf.mxu0
      %v5564 = vadd.f32 %v5430, %v5563
      %v5565 = vpop.f32.mrf.mxu0
      %v5566 = vadd.f32 %v5432, %v5565
      %5567 = vmatmul.bf16.gmra.mxu0 %v2270
      %v5568 = vpop.f32.mrf.mxu0
      %v5569 = vadd.f32 %v5435, %v5568
      %v5570 = vpop.f32.mrf.mxu0
      %v5571 = vadd.f32 %v5437, %v5570
      %5572 = vmatmul.bf16.gmra.mxu0 %v2274
      %v5573 = vpop.f32.mrf.mxu0
      %v5574 = vadd.f32 %v5440, %v5573
      %v5575 = vpop.f32.mrf.mxu0
      %v5576 = vadd.f32 %v5442, %v5575
      %5577 = vmatmul.bf16.gmra.mxu0 %v2278
      %v5578 = vpop.f32.mrf.mxu0
      %v5579 = vadd.f32 %v5445, %v5578
      %v5580 = vpop.f32.mrf.mxu0
      %v5581 = vadd.f32 %v5447, %v5580
      %5582 = vmatmul.bf16.gmra.mxu0 %v2282
      %v5583 = vpop.f32.mrf.mxu0
      %v5584 = vadd.f32 %v5450, %v5583
      %v5585 = vpop.f32.mrf.mxu0
      %v5586 = vadd.f32 %v5452, %v5585
      %5587 = vmatmul.bf16.gmra.mxu0 %v2286
      %v5588 = vpop.f32.mrf.mxu0
      %v5589 = vadd.f32 %v5455, %v5588
      %v5590 = vpop.f32.mrf.mxu0
      %v5591 = vadd.f32 %v5457, %v5590
      %5592 = vmatmul.bf16.gmra.mxu0 %v2290
      %v5593 = vpop.f32.mrf.mxu0
      %v5594 = vadd.f32 %v5460, %v5593
      %v5595 = vpop.f32.mrf.mxu0
      %v5596 = vadd.f32 %v5462, %v5595
      %5597 = vmatmul.bf16.gmra.mxu0 %v2294
      %v5598 = vpop.f32.mrf.mxu0
      %v5599 = vadd.f32 %v5465, %v5598
      %v5600 = vpop.f32.mrf.mxu0
      %v5601 = vadd.f32 %v5467, %v5600
      %5602 = vmatmul.bf16.gmra.mxu0 %v2298
      %v5603 = vpop.f32.mrf.mxu0
      %v5604 = vadd.f32 %v5470, %v5603
      %v5605 = vpop.f32.mrf.mxu0
      %v5606 = vadd.f32 %v5472, %v5605
      %5607 = vmatmul.bf16.gmra.mxu0 %v2302
      %v5608 = vpop.f32.mrf.mxu0
      %v5609 = vadd.f32 %v5475, %v5608
      %v5610 = vpop.f32.mrf.mxu0
      %v5611 = vadd.f32 %v5477, %v5610
      %5612 = vdwg.mxu0
      %5613 = vmatpush.bf16.msra.mxu0 %v3131
      %5614 = vmatpush.bf16.msra.mxu0 %v3125
      %5615 = vmatpush.bf16.msra.mxu0 %v3119
      %5616 = vmatpush.bf16.msra.mxu0 %v3113
      %5617 = vmatpush.bf16.msra.mxu0 %v3107
      %5618 = vmatpush.bf16.msra.mxu0 %v3101
      %5619 = vmatpush.bf16.msra.mxu0 %v3095
      %5620 = vmatpush.bf16.msra.mxu0 %v3089
      %5621 = vmatmul.bf16.gmra.mxu0 %v2203
      %v5622 = vpop.f32.mrf.mxu0
      %v5623 = vadd.f32 %v2501, %v5622
      %v5624 = vpop.f32.mrf.mxu0
      %v5625 = vadd.f32 %v2501, %v5624
      %5626 = vmatmul.bf16.gmra.mxu0 %v2207
      %v5627 = vpop.f32.mrf.mxu0
      %v5628 = vadd.f32 %v2501, %v5627
      %v5629 = vpop.f32.mrf.mxu0
      %v5630 = vadd.f32 %v2501, %v5629
      %5631 = vmatmul.bf16.gmra.mxu0 %v2211
      %v5632 = vpop.f32.mrf.mxu0
      %v5633 = vadd.f32 %v2501, %v5632
      %v5634 = vpop.f32.mrf.mxu0
      %v5635 = vadd.f32 %v2501, %v5634
      %5636 = vmatmul.bf16.gmra.mxu0 %v2215
      %v5637 = vpop.f32.mrf.mxu0
      %v5638 = vadd.f32 %v2501, %v5637
      %v5639 = vpop.f32.mrf.mxu0
      %v5640 = vadd.f32 %v2501, %v5639
      %5641 = vmatmul.bf16.gmra.mxu0 %v2219
      %v5642 = vpop.f32.mrf.mxu0
      %v5643 = vadd.f32 %v2501, %v5642
      %v5644 = vpop.f32.mrf.mxu0
      %v5645 = vadd.f32 %v2501, %v5644
      %5646 = vmatmul.bf16.gmra.mxu0 %v2223
      %v5647 = vpop.f32.mrf.mxu0
      %v5648 = vadd.f32 %v2501, %v5647
      %v5649 = vpop.f32.mrf.mxu0
      %v5650 = vadd.f32 %v2501, %v5649
      %5651 = vmatmul.bf16.gmra.mxu0 %v2227
      %v5652 = vpop.f32.mrf.mxu0
      %v5653 = vadd.f32 %v2501, %v5652
      %v5654 = vpop.f32.mrf.mxu0
      %v5655 = vadd.f32 %v2501, %v5654
      %5656 = vmatmul.bf16.gmra.mxu0 %v2231
      %v5657 = vpop.f32.mrf.mxu0
      %v5658 = vadd.f32 %v2501, %v5657
      %v5659 = vpop.f32.mrf.mxu0
      %v5660 = vadd.f32 %v2501, %v5659
      %5661 = vmatmul.bf16.gmra.mxu0 %v2235
      %v5662 = vpop.f32.mrf.mxu0
      %v5663 = vadd.f32 %v2501, %v5662
      %v5664 = vpop.f32.mrf.mxu0
      %v5665 = vadd.f32 %v2501, %v5664
      %5666 = vmatmul.bf16.gmra.mxu0 %v2239
      %v5667 = vpop.f32.mrf.mxu0
      %v5668 = vadd.f32 %v2501, %v5667
      %v5669 = vpop.f32.mrf.mxu0
      %v5670 = vadd.f32 %v2501, %v5669
      %5671 = vmatmul.bf16.gmra.mxu0 %v2243
      %v5672 = vpop.f32.mrf.mxu0
      %v5673 = vadd.f32 %v2501, %v5672
      %v5674 = vpop.f32.mrf.mxu0
      %v5675 = vadd.f32 %v2501, %v5674
      %5676 = vmatmul.bf16.gmra.mxu0 %v2247
      %v5677 = vpop.f32.mrf.mxu0
      %v5678 = vadd.f32 %v2501, %v5677
      %v5679 = vpop.f32.mrf.mxu0
      %v5680 = vadd.f32 %v2501, %v5679
      %5681 = vmatmul.bf16.gmra.mxu0 %v2251
      %v5682 = vpop.f32.mrf.mxu0
      %v5683 = vadd.f32 %v2501, %v5682
      %v5684 = vpop.f32.mrf.mxu0
      %v5685 = vadd.f32 %v2501, %v5684
      %5686 = vmatmul.bf16.gmra.mxu0 %v2255
      %v5687 = vpop.f32.mrf.mxu0
      %v5688 = vadd.f32 %v2501, %v5687
      %v5689 = vpop.f32.mrf.mxu0
      %v5690 = vadd.f32 %v2501, %v5689
      %5691 = vmatmul.bf16.gmra.mxu0 %v2259
      %v5692 = vpop.f32.mrf.mxu0
      %v5693 = vadd.f32 %v2501, %v5692
      %v5694 = vpop.f32.mrf.mxu0
      %v5695 = vadd.f32 %v2501, %v5694
      %5696 = vmatmul.bf16.gmra.mxu0 %v2263
      %v5697 = vpop.f32.mrf.mxu0
      %v5698 = vadd.f32 %v2501, %v5697
      %v5699 = vpop.f32.mrf.mxu0
      %v5700 = vadd.f32 %v2501, %v5699
      %5701 = vmatmul.bf16.gmra.mxu0 %v2267
      %v5702 = vpop.f32.mrf.mxu0
      %v5703 = vadd.f32 %v2501, %v5702
      %v5704 = vpop.f32.mrf.mxu0
      %v5705 = vadd.f32 %v2501, %v5704
      %5706 = vmatmul.bf16.gmra.mxu0 %v2271
      %v5707 = vpop.f32.mrf.mxu0
      %v5708 = vadd.f32 %v2501, %v5707
      %v5709 = vpop.f32.mrf.mxu0
      %v5710 = vadd.f32 %v2501, %v5709
      %5711 = vmatmul.bf16.gmra.mxu0 %v2275
      %v5712 = vpop.f32.mrf.mxu0
      %v5713 = vadd.f32 %v2501, %v5712
      %v5714 = vpop.f32.mrf.mxu0
      %v5715 = vadd.f32 %v2501, %v5714
      %5716 = vmatmul.bf16.gmra.mxu0 %v2279
      %v5717 = vpop.f32.mrf.mxu0
      %v5718 = vadd.f32 %v2501, %v5717
      %v5719 = vpop.f32.mrf.mxu0
      %v5720 = vadd.f32 %v2501, %v5719
      %5721 = vmatmul.bf16.gmra.mxu0 %v2283
      %v5722 = vpop.f32.mrf.mxu0
      %v5723 = vadd.f32 %v2501, %v5722
      %v5724 = vpop.f32.mrf.mxu0
      %v5725 = vadd.f32 %v2501, %v5724
      %5726 = vmatmul.bf16.gmra.mxu0 %v2287
      %v5727 = vpop.f32.mrf.mxu0
      %v5728 = vadd.f32 %v2501, %v5727
      %v5729 = vpop.f32.mrf.mxu0
      %v5730 = vadd.f32 %v2501, %v5729
      %5731 = vmatmul.bf16.gmra.mxu0 %v2291
      %v5732 = vpop.f32.mrf.mxu0
      %v5733 = vadd.f32 %v2501, %v5732
      %v5734 = vpop.f32.mrf.mxu0
      %v5735 = vadd.f32 %v2501, %v5734
      %5736 = vmatmul.bf16.gmra.mxu0 %v2295
      %v5737 = vpop.f32.mrf.mxu0
      %v5738 = vadd.f32 %v2501, %v5737
      %v5739 = vpop.f32.mrf.mxu0
      %v5740 = vadd.f32 %v2501, %v5739
      %5741 = vmatmul.bf16.gmra.mxu0 %v2299
      %v5742 = vpop.f32.mrf.mxu0
      %v5743 = vadd.f32 %v2501, %v5742
      %v5744 = vpop.f32.mrf.mxu0
      %v5745 = vadd.f32 %v2501, %v5744
      %5746 = vdwg.mxu0
      %5747 = vmatpush.bf16.msra.mxu0 %v3179
      %5748 = vmatpush.bf16.msra.mxu0 %v3173
      %5749 = vmatpush.bf16.msra.mxu0 %v3167
      %5750 = vmatpush.bf16.msra.mxu0 %v3161
      %5751 = vmatpush.bf16.msra.mxu0 %v3155
      %5752 = vmatpush.bf16.msra.mxu0 %v3149
      %5753 = vmatpush.bf16.msra.mxu0 %v3143
      %5754 = vmatpush.bf16.msra.mxu0 %v3137
      %5755 = vmatmul.bf16.gmra.mxu0 %v2204
      %v5756 = vpop.f32.mrf.mxu0
      %v5757 = vadd.f32 %v5623, %v5756
      %v5758 = vpop.f32.mrf.mxu0
      %v5759 = vadd.f32 %v5625, %v5758
      %5760 = vmatmul.bf16.gmra.mxu0 %v2208
      %v5761 = vpop.f32.mrf.mxu0
      %v5762 = vadd.f32 %v5628, %v5761
      %v5763 = vpop.f32.mrf.mxu0
      %v5764 = vadd.f32 %v5630, %v5763
      %5765 = vmatmul.bf16.gmra.mxu0 %v2212
      %v5766 = vpop.f32.mrf.mxu0
      %v5767 = vadd.f32 %v5633, %v5766
      %v5768 = vpop.f32.mrf.mxu0
      %v5769 = vadd.f32 %v5635, %v5768
      %5770 = vmatmul.bf16.gmra.mxu0 %v2216
      %v5771 = vpop.f32.mrf.mxu0
      %v5772 = vadd.f32 %v5638, %v5771
      %v5773 = vpop.f32.mrf.mxu0
      %v5774 = vadd.f32 %v5640, %v5773
      %5775 = vmatmul.bf16.gmra.mxu0 %v2220
      %v5776 = vpop.f32.mrf.mxu0
      %v5777 = vadd.f32 %v5643, %v5776
      %v5778 = vpop.f32.mrf.mxu0
      %v5779 = vadd.f32 %v5645, %v5778
      %5780 = vmatmul.bf16.gmra.mxu0 %v2224
      %v5781 = vpop.f32.mrf.mxu0
      %v5782 = vadd.f32 %v5648, %v5781
      %v5783 = vpop.f32.mrf.mxu0
      %v5784 = vadd.f32 %v5650, %v5783
      %5785 = vmatmul.bf16.gmra.mxu0 %v2228
      %v5786 = vpop.f32.mrf.mxu0
      %v5787 = vadd.f32 %v5653, %v5786
      %v5788 = vpop.f32.mrf.mxu0
      %v5789 = vadd.f32 %v5655, %v5788
      %5790 = vmatmul.bf16.gmra.mxu0 %v2232
      %v5791 = vpop.f32.mrf.mxu0
      %v5792 = vadd.f32 %v5658, %v5791
      %v5793 = vpop.f32.mrf.mxu0
      %v5794 = vadd.f32 %v5660, %v5793
      %5795 = vmatmul.bf16.gmra.mxu0 %v2236
      %v5796 = vpop.f32.mrf.mxu0
      %v5797 = vadd.f32 %v5663, %v5796
      %v5798 = vpop.f32.mrf.mxu0
      %v5799 = vadd.f32 %v5665, %v5798
      %5800 = vmatmul.bf16.gmra.mxu0 %v2240
      %v5801 = vpop.f32.mrf.mxu0
      %v5802 = vadd.f32 %v5668, %v5801
      %v5803 = vpop.f32.mrf.mxu0
      %v5804 = vadd.f32 %v5670, %v5803
      %5805 = vmatmul.bf16.gmra.mxu0 %v2244
      %v5806 = vpop.f32.mrf.mxu0
      %v5807 = vadd.f32 %v5673, %v5806
      %v5808 = vpop.f32.mrf.mxu0
      %v5809 = vadd.f32 %v5675, %v5808
      %5810 = vmatmul.bf16.gmra.mxu0 %v2248
      %v5811 = vpop.f32.mrf.mxu0
      %v5812 = vadd.f32 %v5678, %v5811
      %v5813 = vpop.f32.mrf.mxu0
      %v5814 = vadd.f32 %v5680, %v5813
      %5815 = vmatmul.bf16.gmra.mxu0 %v2252
      %v5816 = vpop.f32.mrf.mxu0
      %v5817 = vadd.f32 %v5683, %v5816
      %v5818 = vpop.f32.mrf.mxu0
      %v5819 = vadd.f32 %v5685, %v5818
      %5820 = vmatmul.bf16.gmra.mxu0 %v2256
      %v5821 = vpop.f32.mrf.mxu0
      %v5822 = vadd.f32 %v5688, %v5821
      %v5823 = vpop.f32.mrf.mxu0
      %v5824 = vadd.f32 %v5690, %v5823
      %5825 = vmatmul.bf16.gmra.mxu0 %v2260
      %v5826 = vpop.f32.mrf.mxu0
      %v5827 = vadd.f32 %v5693, %v5826
      %v5828 = vpop.f32.mrf.mxu0
      %v5829 = vadd.f32 %v5695, %v5828
      %5830 = vmatmul.bf16.gmra.mxu0 %v2264
      %v5831 = vpop.f32.mrf.mxu0
      %v5832 = vadd.f32 %v5698, %v5831
      %v5833 = vpop.f32.mrf.mxu0
      %v5834 = vadd.f32 %v5700, %v5833
      %5835 = vmatmul.bf16.gmra.mxu0 %v2268
      %v5836 = vpop.f32.mrf.mxu0
      %v5837 = vadd.f32 %v5703, %v5836
      %v5838 = vpop.f32.mrf.mxu0
      %v5839 = vadd.f32 %v5705, %v5838
      %5840 = vmatmul.bf16.gmra.mxu0 %v2272
      %v5841 = vpop.f32.mrf.mxu0
      %v5842 = vadd.f32 %v5708, %v5841
      %v5843 = vpop.f32.mrf.mxu0
      %v5844 = vadd.f32 %v5710, %v5843
      %5845 = vmatmul.bf16.gmra.mxu0 %v2276
      %v5846 = vpop.f32.mrf.mxu0
      %v5847 = vadd.f32 %v5713, %v5846
      %v5848 = vpop.f32.mrf.mxu0
      %v5849 = vadd.f32 %v5715, %v5848
      %5850 = vmatmul.bf16.gmra.mxu0 %v2280
      %v5851 = vpop.f32.mrf.mxu0
      %v5852 = vadd.f32 %v5718, %v5851
      %v5853 = vpop.f32.mrf.mxu0
      %v5854 = vadd.f32 %v5720, %v5853
      %5855 = vmatmul.bf16.gmra.mxu0 %v2284
      %v5856 = vpop.f32.mrf.mxu0
      %v5857 = vadd.f32 %v5723, %v5856
      %v5858 = vpop.f32.mrf.mxu0
      %v5859 = vadd.f32 %v5725, %v5858
      %5860 = vmatmul.bf16.gmra.mxu0 %v2288
      %v5861 = vpop.f32.mrf.mxu0
      %v5862 = vadd.f32 %v5728, %v5861
      %v5863 = vpop.f32.mrf.mxu0
      %v5864 = vadd.f32 %v5730, %v5863
      %5865 = vmatmul.bf16.gmra.mxu0 %v2292
      %v5866 = vpop.f32.mrf.mxu0
      %v5867 = vadd.f32 %v5733, %v5866
      %v5868 = vpop.f32.mrf.mxu0
      %v5869 = vadd.f32 %v5735, %v5868
      %5870 = vmatmul.bf16.gmra.mxu0 %v2296
      %v5871 = vpop.f32.mrf.mxu0
      %v5872 = vadd.f32 %v5738, %v5871
      %v5873 = vpop.f32.mrf.mxu0
      %v5874 = vadd.f32 %v5740, %v5873
      %5875 = vmatmul.bf16.gmra.mxu0 %v2300
      %v5876 = vpop.f32.mrf.mxu0
      %v5877 = vadd.f32 %v5743, %v5876
      %v5878 = vpop.f32.mrf.mxu0
      %v5879 = vadd.f32 %v5745, %v5878
      %5880 = vdwg.mxu0
      %5881 = vmatpush.bf16.msra.mxu0 %v3227
      %5882 = vmatpush.bf16.msra.mxu0 %v3221
      %5883 = vmatpush.bf16.msra.mxu0 %v3215
      %5884 = vmatpush.bf16.msra.mxu0 %v3209
      %5885 = vmatpush.bf16.msra.mxu0 %v3203
      %5886 = vmatpush.bf16.msra.mxu0 %v3197
      %5887 = vmatpush.bf16.msra.mxu0 %v3191
      %5888 = vmatpush.bf16.msra.mxu0 %v3185
      %5889 = vmatmul.bf16.gmra.mxu0 %v2205
      %v5890 = vpop.f32.mrf.mxu0
      %v5891 = vadd.f32 %v5757, %v5890
      %v5892 = vpop.f32.mrf.mxu0
      %v5893 = vadd.f32 %v5759, %v5892
      %5894 = vmatmul.bf16.gmra.mxu0 %v2209
      %v5895 = vpop.f32.mrf.mxu0
      %v5896 = vadd.f32 %v5762, %v5895
      %v5897 = vpop.f32.mrf.mxu0
      %v5898 = vadd.f32 %v5764, %v5897
      %5899 = vmatmul.bf16.gmra.mxu0 %v2213
      %v5900 = vpop.f32.mrf.mxu0
      %v5901 = vadd.f32 %v5767, %v5900
      %v5902 = vpop.f32.mrf.mxu0
      %v5903 = vadd.f32 %v5769, %v5902
      %5904 = vmatmul.bf16.gmra.mxu0 %v2217
      %v5905 = vpop.f32.mrf.mxu0
      %v5906 = vadd.f32 %v5772, %v5905
      %v5907 = vpop.f32.mrf.mxu0
      %v5908 = vadd.f32 %v5774, %v5907
      %5909 = vmatmul.bf16.gmra.mxu0 %v2221
      %v5910 = vpop.f32.mrf.mxu0
      %v5911 = vadd.f32 %v5777, %v5910
      %v5912 = vpop.f32.mrf.mxu0
      %v5913 = vadd.f32 %v5779, %v5912
      %5914 = vmatmul.bf16.gmra.mxu0 %v2225
      %v5915 = vpop.f32.mrf.mxu0
      %v5916 = vadd.f32 %v5782, %v5915
      %v5917 = vpop.f32.mrf.mxu0
      %v5918 = vadd.f32 %v5784, %v5917
      %5919 = vmatmul.bf16.gmra.mxu0 %v2229
      %v5920 = vpop.f32.mrf.mxu0
      %v5921 = vadd.f32 %v5787, %v5920
      %v5922 = vpop.f32.mrf.mxu0
      %v5923 = vadd.f32 %v5789, %v5922
      %5924 = vmatmul.bf16.gmra.mxu0 %v2233
      %v5925 = vpop.f32.mrf.mxu0
      %v5926 = vadd.f32 %v5792, %v5925
      %v5927 = vpop.f32.mrf.mxu0
      %v5928 = vadd.f32 %v5794, %v5927
      %5929 = vmatmul.bf16.gmra.mxu0 %v2237
      %v5930 = vpop.f32.mrf.mxu0
      %v5931 = vadd.f32 %v5797, %v5930
      %v5932 = vpop.f32.mrf.mxu0
      %v5933 = vadd.f32 %v5799, %v5932
      %5934 = vmatmul.bf16.gmra.mxu0 %v2241
      %v5935 = vpop.f32.mrf.mxu0
      %v5936 = vadd.f32 %v5802, %v5935
      %v5937 = vpop.f32.mrf.mxu0
      %v5938 = vadd.f32 %v5804, %v5937
      %5939 = vmatmul.bf16.gmra.mxu0 %v2245
      %v5940 = vpop.f32.mrf.mxu0
      %v5941 = vadd.f32 %v5807, %v5940
      %v5942 = vpop.f32.mrf.mxu0
      %v5943 = vadd.f32 %v5809, %v5942
      %5944 = vmatmul.bf16.gmra.mxu0 %v2249
      %v5945 = vpop.f32.mrf.mxu0
      %v5946 = vadd.f32 %v5812, %v5945
      %v5947 = vpop.f32.mrf.mxu0
      %v5948 = vadd.f32 %v5814, %v5947
      %5949 = vmatmul.bf16.gmra.mxu0 %v2253
      %v5950 = vpop.f32.mrf.mxu0
      %v5951 = vadd.f32 %v5817, %v5950
      %v5952 = vpop.f32.mrf.mxu0
      %v5953 = vadd.f32 %v5819, %v5952
      %5954 = vmatmul.bf16.gmra.mxu0 %v2257
      %v5955 = vpop.f32.mrf.mxu0
      %v5956 = vadd.f32 %v5822, %v5955
      %v5957 = vpop.f32.mrf.mxu0
      %v5958 = vadd.f32 %v5824, %v5957
      %5959 = vmatmul.bf16.gmra.mxu0 %v2261
      %v5960 = vpop.f32.mrf.mxu0
      %v5961 = vadd.f32 %v5827, %v5960
      %v5962 = vpop.f32.mrf.mxu0
      %v5963 = vadd.f32 %v5829, %v5962
      %5964 = vmatmul.bf16.gmra.mxu0 %v2265
      %v5965 = vpop.f32.mrf.mxu0
      %v5966 = vadd.f32 %v5832, %v5965
      %v5967 = vpop.f32.mrf.mxu0
      %v5968 = vadd.f32 %v5834, %v5967
      %5969 = vmatmul.bf16.gmra.mxu0 %v2269
      %v5970 = vpop.f32.mrf.mxu0
      %v5971 = vadd.f32 %v5837, %v5970
      %v5972 = vpop.f32.mrf.mxu0
      %v5973 = vadd.f32 %v5839, %v5972
      %5974 = vmatmul.bf16.gmra.mxu0 %v2273
      %v5975 = vpop.f32.mrf.mxu0
      %v5976 = vadd.f32 %v5842, %v5975
      %v5977 = vpop.f32.mrf.mxu0
      %v5978 = vadd.f32 %v5844, %v5977
      %5979 = vmatmul.bf16.gmra.mxu0 %v2277
      %v5980 = vpop.f32.mrf.mxu0
      %v5981 = vadd.f32 %v5847, %v5980
      %v5982 = vpop.f32.mrf.mxu0
      %v5983 = vadd.f32 %v5849, %v5982
      %5984 = vmatmul.bf16.gmra.mxu0 %v2281
      %v5985 = vpop.f32.mrf.mxu0
      %v5986 = vadd.f32 %v5852, %v5985
      %v5987 = vpop.f32.mrf.mxu0
      %v5988 = vadd.f32 %v5854, %v5987
      %5989 = vmatmul.bf16.gmra.mxu0 %v2285
      %v5990 = vpop.f32.mrf.mxu0
      %v5991 = vadd.f32 %v5857, %v5990
      %v5992 = vpop.f32.mrf.mxu0
      %v5993 = vadd.f32 %v5859, %v5992
      %5994 = vmatmul.bf16.gmra.mxu0 %v2289
      %v5995 = vpop.f32.mrf.mxu0
      %v5996 = vadd.f32 %v5862, %v5995
      %v5997 = vpop.f32.mrf.mxu0
      %v5998 = vadd.f32 %v5864, %v5997
      %5999 = vmatmul.bf16.gmra.mxu0 %v2293
      %v6000 = vpop.f32.mrf.mxu0
      %v6001 = vadd.f32 %v5867, %v6000
      %v6002 = vpop.f32.mrf.mxu0
      %v6003 = vadd.f32 %v5869, %v6002
      %6004 = vmatmul.bf16.gmra.mxu0 %v2297
      %v6005 = vpop.f32.mrf.mxu0
      %v6006 = vadd.f32 %v5872, %v6005
      %v6007 = vpop.f32.mrf.mxu0
      %v6008 = vadd.f32 %v5874, %v6007
      %6009 = vmatmul.bf16.gmra.mxu0 %v2301
      %v6010 = vpop.f32.mrf.mxu0
      %v6011 = vadd.f32 %v5877, %v6010
      %v6012 = vpop.f32.mrf.mxu0
      %v6013 = vadd.f32 %v5879, %v6012
      %6014 = vdwg.mxu0
      %6015 = vmatpush.bf16.msra.mxu0 %v3275
      %6016 = vmatpush.bf16.msra.mxu0 %v3269
      %6017 = vmatpush.bf16.msra.mxu0 %v3263
      %6018 = vmatpush.bf16.msra.mxu0 %v3257
      %6019 = vmatpush.bf16.msra.mxu0 %v3251
      %6020 = vmatpush.bf16.msra.mxu0 %v3245
      %6021 = vmatpush.bf16.msra.mxu0 %v3239
      %6022 = vmatpush.bf16.msra.mxu0 %v3233
      %6023 = vmatmul.bf16.gmra.mxu0 %v2206
      %v6024 = vpop.f32.mrf.mxu0
      %v6025 = vadd.f32 %v5891, %v6024
      %v6026 = vpop.f32.mrf.mxu0
      %v6027 = vadd.f32 %v5893, %v6026
      %6028 = vmatmul.bf16.gmra.mxu0 %v2210
      %v6029 = vpop.f32.mrf.mxu0
      %v6030 = vadd.f32 %v5896, %v6029
      %v6031 = vpop.f32.mrf.mxu0
      %v6032 = vadd.f32 %v5898, %v6031
      %6033 = vmatmul.bf16.gmra.mxu0 %v2214
      %v6034 = vpop.f32.mrf.mxu0
      %v6035 = vadd.f32 %v5901, %v6034
      %v6036 = vpop.f32.mrf.mxu0
      %v6037 = vadd.f32 %v5903, %v6036
      %6038 = vmatmul.bf16.gmra.mxu0 %v2218
      %v6039 = vpop.f32.mrf.mxu0
      %v6040 = vadd.f32 %v5906, %v6039
      %v6041 = vpop.f32.mrf.mxu0
      %v6042 = vadd.f32 %v5908, %v6041
      %6043 = vmatmul.bf16.gmra.mxu0 %v2222
      %v6044 = vpop.f32.mrf.mxu0
      %v6045 = vadd.f32 %v5911, %v6044
      %v6046 = vpop.f32.mrf.mxu0
      %v6047 = vadd.f32 %v5913, %v6046
      %6048 = vmatmul.bf16.gmra.mxu0 %v2226
      %v6049 = vpop.f32.mrf.mxu0
      %v6050 = vadd.f32 %v5916, %v6049
      %v6051 = vpop.f32.mrf.mxu0
      %v6052 = vadd.f32 %v5918, %v6051
      %6053 = vmatmul.bf16.gmra.mxu0 %v2230
      %v6054 = vpop.f32.mrf.mxu0
      %v6055 = vadd.f32 %v5921, %v6054
      %v6056 = vpop.f32.mrf.mxu0
      %v6057 = vadd.f32 %v5923, %v6056
      %6058 = vmatmul.bf16.gmra.mxu0 %v2234
      %v6059 = vpop.f32.mrf.mxu0
      %v6060 = vadd.f32 %v5926, %v6059
      %v6061 = vpop.f32.mrf.mxu0
      %v6062 = vadd.f32 %v5928, %v6061
      %6063 = vmatmul.bf16.gmra.mxu0 %v2238
      %v6064 = vpop.f32.mrf.mxu0
      %v6065 = vadd.f32 %v5931, %v6064
      %v6066 = vpop.f32.mrf.mxu0
      %v6067 = vadd.f32 %v5933, %v6066
      %6068 = vmatmul.bf16.gmra.mxu0 %v2242
      %v6069 = vpop.f32.mrf.mxu0
      %v6070 = vadd.f32 %v5936, %v6069
      %v6071 = vpop.f32.mrf.mxu0
      %v6072 = vadd.f32 %v5938, %v6071
      %6073 = vmatmul.bf16.gmra.mxu0 %v2246
      %v6074 = vpop.f32.mrf.mxu0
      %v6075 = vadd.f32 %v5941, %v6074
      %v6076 = vpop.f32.mrf.mxu0
      %v6077 = vadd.f32 %v5943, %v6076
      %6078 = vmatmul.bf16.gmra.mxu0 %v2250
      %v6079 = vpop.f32.mrf.mxu0
      %v6080 = vadd.f32 %v5946, %v6079
      %v6081 = vpop.f32.mrf.mxu0
      %v6082 = vadd.f32 %v5948, %v6081
      %6083 = vmatmul.bf16.gmra.mxu0 %v2254
      %v6084 = vpop.f32.mrf.mxu0
      %v6085 = vadd.f32 %v5951, %v6084
      %v6086 = vpop.f32.mrf.mxu0
      %v6087 = vadd.f32 %v5953, %v6086
      %6088 = vmatmul.bf16.gmra.mxu0 %v2258
      %v6089 = vpop.f32.mrf.mxu0
      %v6090 = vadd.f32 %v5956, %v6089
      %v6091 = vpop.f32.mrf.mxu0
      %v6092 = vadd.f32 %v5958, %v6091
      %6093 = vmatmul.bf16.gmra.mxu0 %v2262
      %v6094 = vpop.f32.mrf.mxu0
      %v6095 = vadd.f32 %v5961, %v6094
      %v6096 = vpop.f32.mrf.mxu0
      %v6097 = vadd.f32 %v5963, %v6096
      %6098 = vmatmul.bf16.gmra.mxu0 %v2266
      %v6099 = vpop.f32.mrf.mxu0
      %v6100 = vadd.f32 %v5966, %v6099
      %v6101 = vpop.f32.mrf.mxu0
      %v6102 = vadd.f32 %v5968, %v6101
      %6103 = vmatmul.bf16.gmra.mxu0 %v2270
      %v6104 = vpop.f32.mrf.mxu0
      %v6105 = vadd.f32 %v5971, %v6104
      %v6106 = vpop.f32.mrf.mxu0
      %v6107 = vadd.f32 %v5973, %v6106
      %6108 = vmatmul.bf16.gmra.mxu0 %v2274
      %v6109 = vpop.f32.mrf.mxu0
      %v6110 = vadd.f32 %v5976, %v6109
      %v6111 = vpop.f32.mrf.mxu0
      %v6112 = vadd.f32 %v5978, %v6111
      %6113 = vmatmul.bf16.gmra.mxu0 %v2278
      %v6114 = vpop.f32.mrf.mxu0
      %v6115 = vadd.f32 %v5981, %v6114
      %v6116 = vpop.f32.mrf.mxu0
      %v6117 = vadd.f32 %v5983, %v6116
      %6118 = vmatmul.bf16.gmra.mxu0 %v2282
      %v6119 = vpop.f32.mrf.mxu0
      %v6120 = vadd.f32 %v5986, %v6119
      %v6121 = vpop.f32.mrf.mxu0
      %v6122 = vadd.f32 %v5988, %v6121
      %6123 = vmatmul.bf16.gmra.mxu0 %v2286
      %v6124 = vpop.f32.mrf.mxu0
      %v6125 = vadd.f32 %v5991, %v6124
      %v6126 = vpop.f32.mrf.mxu0
      %v6127 = vadd.f32 %v5993, %v6126
      %6128 = vmatmul.bf16.gmra.mxu0 %v2290
      %v6129 = vpop.f32.mrf.mxu0
      %v6130 = vadd.f32 %v5996, %v6129
      %v6131 = vpop.f32.mrf.mxu0
      %v6132 = vadd.f32 %v5998, %v6131
      %6133 = vmatmul.bf16.gmra.mxu0 %v2294
      %v6134 = vpop.f32.mrf.mxu0
      %v6135 = vadd.f32 %v6001, %v6134
      %v6136 = vpop.f32.mrf.mxu0
      %v6137 = vadd.f32 %v6003, %v6136
      %6138 = vmatmul.bf16.gmra.mxu0 %v2298
      %v6139 = vpop.f32.mrf.mxu0
      %v6140 = vadd.f32 %v6006, %v6139
      %v6141 = vpop.f32.mrf.mxu0
      %v6142 = vadd.f32 %v6008, %v6141
      %6143 = vmatmul.bf16.gmra.mxu0 %v2302
      %v6144 = vpop.f32.mrf.mxu0
      %v6145 = vadd.f32 %v6011, %v6144
      %v6146 = vpop.f32.mrf.mxu0
      %v6147 = vadd.f32 %v6013, %v6146
      %6148 = vdwg.mxu0
      %6149 = vmatpush.bf16.msra.mxu0 %v3132
      %6150 = vmatpush.bf16.msra.mxu0 %v3126
      %6151 = vmatpush.bf16.msra.mxu0 %v3120
      %6152 = vmatpush.bf16.msra.mxu0 %v3114
      %6153 = vmatpush.bf16.msra.mxu0 %v3108
      %6154 = vmatpush.bf16.msra.mxu0 %v3102
      %6155 = vmatpush.bf16.msra.mxu0 %v3096
      %6156 = vmatpush.bf16.msra.mxu0 %v3090
      %6157 = vmatmul.bf16.gmra.mxu0 %v2203
      %v6158 = vpop.f32.mrf.mxu0
      %v6159 = vadd.f32 %v2502, %v6158
      %v6160 = vpop.f32.mrf.mxu0
      %v6161 = vadd.f32 %v2502, %v6160
      %6162 = vmatmul.bf16.gmra.mxu0 %v2207
      %v6163 = vpop.f32.mrf.mxu0
      %v6164 = vadd.f32 %v2502, %v6163
      %v6165 = vpop.f32.mrf.mxu0
      %v6166 = vadd.f32 %v2502, %v6165
      %6167 = vmatmul.bf16.gmra.mxu0 %v2211
      %v6168 = vpop.f32.mrf.mxu0
      %v6169 = vadd.f32 %v2502, %v6168
      %v6170 = vpop.f32.mrf.mxu0
      %v6171 = vadd.f32 %v2502, %v6170
      %6172 = vmatmul.bf16.gmra.mxu0 %v2215
      %v6173 = vpop.f32.mrf.mxu0
      %v6174 = vadd.f32 %v2502, %v6173
      %v6175 = vpop.f32.mrf.mxu0
      %v6176 = vadd.f32 %v2502, %v6175
      %6177 = vmatmul.bf16.gmra.mxu0 %v2219
      %v6178 = vpop.f32.mrf.mxu0
      %v6179 = vadd.f32 %v2502, %v6178
      %v6180 = vpop.f32.mrf.mxu0
      %v6181 = vadd.f32 %v2502, %v6180
      %6182 = vmatmul.bf16.gmra.mxu0 %v2223
      %v6183 = vpop.f32.mrf.mxu0
      %v6184 = vadd.f32 %v2502, %v6183
      %v6185 = vpop.f32.mrf.mxu0
      %v6186 = vadd.f32 %v2502, %v6185
      %6187 = vmatmul.bf16.gmra.mxu0 %v2227
      %v6188 = vpop.f32.mrf.mxu0
      %v6189 = vadd.f32 %v2502, %v6188
      %v6190 = vpop.f32.mrf.mxu0
      %v6191 = vadd.f32 %v2502, %v6190
      %6192 = vmatmul.bf16.gmra.mxu0 %v2231
      %v6193 = vpop.f32.mrf.mxu0
      %v6194 = vadd.f32 %v2502, %v6193
      %v6195 = vpop.f32.mrf.mxu0
      %v6196 = vadd.f32 %v2502, %v6195
      %6197 = vmatmul.bf16.gmra.mxu0 %v2235
      %v6198 = vpop.f32.mrf.mxu0
      %v6199 = vadd.f32 %v2502, %v6198
      %v6200 = vpop.f32.mrf.mxu0
      %v6201 = vadd.f32 %v2502, %v6200
      %6202 = vmatmul.bf16.gmra.mxu0 %v2239
      %v6203 = vpop.f32.mrf.mxu0
      %v6204 = vadd.f32 %v2502, %v6203
      %v6205 = vpop.f32.mrf.mxu0
      %v6206 = vadd.f32 %v2502, %v6205
      %6207 = vmatmul.bf16.gmra.mxu0 %v2243
      %v6208 = vpop.f32.mrf.mxu0
      %v6209 = vadd.f32 %v2502, %v6208
      %v6210 = vpop.f32.mrf.mxu0
      %v6211 = vadd.f32 %v2502, %v6210
      %6212 = vmatmul.bf16.gmra.mxu0 %v2247
      %v6213 = vpop.f32.mrf.mxu0
      %v6214 = vadd.f32 %v2502, %v6213
      %v6215 = vpop.f32.mrf.mxu0
      %v6216 = vadd.f32 %v2502, %v6215
      %6217 = vmatmul.bf16.gmra.mxu0 %v2251
      %v6218 = vpop.f32.mrf.mxu0
      %v6219 = vadd.f32 %v2502, %v6218
      %v6220 = vpop.f32.mrf.mxu0
      %v6221 = vadd.f32 %v2502, %v6220
      %6222 = vmatmul.bf16.gmra.mxu0 %v2255
      %v6223 = vpop.f32.mrf.mxu0
      %v6224 = vadd.f32 %v2502, %v6223
      %v6225 = vpop.f32.mrf.mxu0
      %v6226 = vadd.f32 %v2502, %v6225
      %6227 = vmatmul.bf16.gmra.mxu0 %v2259
      %v6228 = vpop.f32.mrf.mxu0
      %v6229 = vadd.f32 %v2502, %v6228
      %v6230 = vpop.f32.mrf.mxu0
      %v6231 = vadd.f32 %v2502, %v6230
      %6232 = vmatmul.bf16.gmra.mxu0 %v2263
      %v6233 = vpop.f32.mrf.mxu0
      %v6234 = vadd.f32 %v2502, %v6233
      %v6235 = vpop.f32.mrf.mxu0
      %v6236 = vadd.f32 %v2502, %v6235
      %6237 = vmatmul.bf16.gmra.mxu0 %v2267
      %v6238 = vpop.f32.mrf.mxu0
      %v6239 = vadd.f32 %v2502, %v6238
      %v6240 = vpop.f32.mrf.mxu0
      %v6241 = vadd.f32 %v2502, %v6240
      %6242 = vmatmul.bf16.gmra.mxu0 %v2271
      %v6243 = vpop.f32.mrf.mxu0
      %v6244 = vadd.f32 %v2502, %v6243
      %v6245 = vpop.f32.mrf.mxu0
      %v6246 = vadd.f32 %v2502, %v6245
      %6247 = vmatmul.bf16.gmra.mxu0 %v2275
      %v6248 = vpop.f32.mrf.mxu0
      %v6249 = vadd.f32 %v2502, %v6248
      %v6250 = vpop.f32.mrf.mxu0
      %v6251 = vadd.f32 %v2502, %v6250
      %6252 = vmatmul.bf16.gmra.mxu0 %v2279
      %v6253 = vpop.f32.mrf.mxu0
      %v6254 = vadd.f32 %v2502, %v6253
      %v6255 = vpop.f32.mrf.mxu0
      %v6256 = vadd.f32 %v2502, %v6255
      %6257 = vmatmul.bf16.gmra.mxu0 %v2283
      %v6258 = vpop.f32.mrf.mxu0
      %v6259 = vadd.f32 %v2502, %v6258
      %v6260 = vpop.f32.mrf.mxu0
      %v6261 = vadd.f32 %v2502, %v6260
      %6262 = vmatmul.bf16.gmra.mxu0 %v2287
      %v6263 = vpop.f32.mrf.mxu0
      %v6264 = vadd.f32 %v2502, %v6263
      %v6265 = vpop.f32.mrf.mxu0
      %v6266 = vadd.f32 %v2502, %v6265
      %6267 = vmatmul.bf16.gmra.mxu0 %v2291
      %v6268 = vpop.f32.mrf.mxu0
      %v6269 = vadd.f32 %v2502, %v6268
      %v6270 = vpop.f32.mrf.mxu0
      %v6271 = vadd.f32 %v2502, %v6270
      %6272 = vmatmul.bf16.gmra.mxu0 %v2295
      %v6273 = vpop.f32.mrf.mxu0
      %v6274 = vadd.f32 %v2502, %v6273
      %v6275 = vpop.f32.mrf.mxu0
      %v6276 = vadd.f32 %v2502, %v6275
      %6277 = vmatmul.bf16.gmra.mxu0 %v2299
      %v6278 = vpop.f32.mrf.mxu0
      %v6279 = vadd.f32 %v2502, %v6278
      %v6280 = vpop.f32.mrf.mxu0
      %v6281 = vadd.f32 %v2502, %v6280
      %6282 = vdwg.mxu0
      %6283 = vmatpush.bf16.msra.mxu0 %v3180
      %6284 = vmatpush.bf16.msra.mxu0 %v3174
      %6285 = vmatpush.bf16.msra.mxu0 %v3168
      %6286 = vmatpush.bf16.msra.mxu0 %v3162
      %6287 = vmatpush.bf16.msra.mxu0 %v3156
      %6288 = vmatpush.bf16.msra.mxu0 %v3150
      %6289 = vmatpush.bf16.msra.mxu0 %v3144
      %6290 = vmatpush.bf16.msra.mxu0 %v3138
      %6291 = vmatmul.bf16.gmra.mxu0 %v2204
      %v6292 = vpop.f32.mrf.mxu0
      %v6293 = vadd.f32 %v6159, %v6292
      %v6294 = vpop.f32.mrf.mxu0
      %v6295 = vadd.f32 %v6161, %v6294
      %6296 = vmatmul.bf16.gmra.mxu0 %v2208
      %v6297 = vpop.f32.mrf.mxu0
      %v6298 = vadd.f32 %v6164, %v6297
      %v6299 = vpop.f32.mrf.mxu0
      %v6300 = vadd.f32 %v6166, %v6299
      %6301 = vmatmul.bf16.gmra.mxu0 %v2212
      %v6302 = vpop.f32.mrf.mxu0
      %v6303 = vadd.f32 %v6169, %v6302
      %v6304 = vpop.f32.mrf.mxu0
      %v6305 = vadd.f32 %v6171, %v6304
      %6306 = vmatmul.bf16.gmra.mxu0 %v2216
      %v6307 = vpop.f32.mrf.mxu0
      %v6308 = vadd.f32 %v6174, %v6307
      %v6309 = vpop.f32.mrf.mxu0
      %v6310 = vadd.f32 %v6176, %v6309
      %6311 = vmatmul.bf16.gmra.mxu0 %v2220
      %v6312 = vpop.f32.mrf.mxu0
      %v6313 = vadd.f32 %v6179, %v6312
      %v6314 = vpop.f32.mrf.mxu0
      %v6315 = vadd.f32 %v6181, %v6314
      %6316 = vmatmul.bf16.gmra.mxu0 %v2224
      %v6317 = vpop.f32.mrf.mxu0
      %v6318 = vadd.f32 %v6184, %v6317
      %v6319 = vpop.f32.mrf.mxu0
      %v6320 = vadd.f32 %v6186, %v6319
      %6321 = vmatmul.bf16.gmra.mxu0 %v2228
      %v6322 = vpop.f32.mrf.mxu0
      %v6323 = vadd.f32 %v6189, %v6322
      %v6324 = vpop.f32.mrf.mxu0
      %v6325 = vadd.f32 %v6191, %v6324
      %6326 = vmatmul.bf16.gmra.mxu0 %v2232
      %v6327 = vpop.f32.mrf.mxu0
      %v6328 = vadd.f32 %v6194, %v6327
      %v6329 = vpop.f32.mrf.mxu0
      %v6330 = vadd.f32 %v6196, %v6329
      %6331 = vmatmul.bf16.gmra.mxu0 %v2236
      %v6332 = vpop.f32.mrf.mxu0
      %v6333 = vadd.f32 %v6199, %v6332
      %v6334 = vpop.f32.mrf.mxu0
      %v6335 = vadd.f32 %v6201, %v6334
      %6336 = vmatmul.bf16.gmra.mxu0 %v2240
      %v6337 = vpop.f32.mrf.mxu0
      %v6338 = vadd.f32 %v6204, %v6337
      %v6339 = vpop.f32.mrf.mxu0
      %v6340 = vadd.f32 %v6206, %v6339
      %6341 = vmatmul.bf16.gmra.mxu0 %v2244
      %v6342 = vpop.f32.mrf.mxu0
      %v6343 = vadd.f32 %v6209, %v6342
      %v6344 = vpop.f32.mrf.mxu0
      %v6345 = vadd.f32 %v6211, %v6344
      %6346 = vmatmul.bf16.gmra.mxu0 %v2248
      %v6347 = vpop.f32.mrf.mxu0
      %v6348 = vadd.f32 %v6214, %v6347
      %v6349 = vpop.f32.mrf.mxu0
      %v6350 = vadd.f32 %v6216, %v6349
      %6351 = vmatmul.bf16.gmra.mxu0 %v2252
      %v6352 = vpop.f32.mrf.mxu0
      %v6353 = vadd.f32 %v6219, %v6352
      %v6354 = vpop.f32.mrf.mxu0
      %v6355 = vadd.f32 %v6221, %v6354
      %6356 = vmatmul.bf16.gmra.mxu0 %v2256
      %v6357 = vpop.f32.mrf.mxu0
      %v6358 = vadd.f32 %v6224, %v6357
      %v6359 = vpop.f32.mrf.mxu0
      %v6360 = vadd.f32 %v6226, %v6359
      %6361 = vmatmul.bf16.gmra.mxu0 %v2260
      %v6362 = vpop.f32.mrf.mxu0
      %v6363 = vadd.f32 %v6229, %v6362
      %v6364 = vpop.f32.mrf.mxu0
      %v6365 = vadd.f32 %v6231, %v6364
      %6366 = vmatmul.bf16.gmra.mxu0 %v2264
      %v6367 = vpop.f32.mrf.mxu0
      %v6368 = vadd.f32 %v6234, %v6367
      %v6369 = vpop.f32.mrf.mxu0
      %v6370 = vadd.f32 %v6236, %v6369
      %6371 = vmatmul.bf16.gmra.mxu0 %v2268
      %v6372 = vpop.f32.mrf.mxu0
      %v6373 = vadd.f32 %v6239, %v6372
      %v6374 = vpop.f32.mrf.mxu0
      %v6375 = vadd.f32 %v6241, %v6374
      %6376 = vmatmul.bf16.gmra.mxu0 %v2272
      %v6377 = vpop.f32.mrf.mxu0
      %v6378 = vadd.f32 %v6244, %v6377
      %v6379 = vpop.f32.mrf.mxu0
      %v6380 = vadd.f32 %v6246, %v6379
      %6381 = vmatmul.bf16.gmra.mxu0 %v2276
      %v6382 = vpop.f32.mrf.mxu0
      %v6383 = vadd.f32 %v6249, %v6382
      %v6384 = vpop.f32.mrf.mxu0
      %v6385 = vadd.f32 %v6251, %v6384
      %6386 = vmatmul.bf16.gmra.mxu0 %v2280
      %v6387 = vpop.f32.mrf.mxu0
      %v6388 = vadd.f32 %v6254, %v6387
      %v6389 = vpop.f32.mrf.mxu0
      %v6390 = vadd.f32 %v6256, %v6389
      %6391 = vmatmul.bf16.gmra.mxu0 %v2284
      %v6392 = vpop.f32.mrf.mxu0
      %v6393 = vadd.f32 %v6259, %v6392
      %v6394 = vpop.f32.mrf.mxu0
      %v6395 = vadd.f32 %v6261, %v6394
      %6396 = vmatmul.bf16.gmra.mxu0 %v2288
      %v6397 = vpop.f32.mrf.mxu0
      %v6398 = vadd.f32 %v6264, %v6397
      %v6399 = vpop.f32.mrf.mxu0
      %v6400 = vadd.f32 %v6266, %v6399
      %6401 = vmatmul.bf16.gmra.mxu0 %v2292
      %v6402 = vpop.f32.mrf.mxu0
      %v6403 = vadd.f32 %v6269, %v6402
      %v6404 = vpop.f32.mrf.mxu0
      %v6405 = vadd.f32 %v6271, %v6404
      %6406 = vmatmul.bf16.gmra.mxu0 %v2296
      %v6407 = vpop.f32.mrf.mxu0
      %v6408 = vadd.f32 %v6274, %v6407
      %v6409 = vpop.f32.mrf.mxu0
      %v6410 = vadd.f32 %v6276, %v6409
      %6411 = vmatmul.bf16.gmra.mxu0 %v2300
      %v6412 = vpop.f32.mrf.mxu0
      %v6413 = vadd.f32 %v6279, %v6412
      %v6414 = vpop.f32.mrf.mxu0
      %v6415 = vadd.f32 %v6281, %v6414
      %6416 = vdwg.mxu0
      %6417 = vmatpush.bf16.msra.mxu0 %v3228
      %6418 = vmatpush.bf16.msra.mxu0 %v3222
      %6419 = vmatpush.bf16.msra.mxu0 %v3216
      %6420 = vmatpush.bf16.msra.mxu0 %v3210
      %6421 = vmatpush.bf16.msra.mxu0 %v3204
      %6422 = vmatpush.bf16.msra.mxu0 %v3198
      %6423 = vmatpush.bf16.msra.mxu0 %v3192
      %6424 = vmatpush.bf16.msra.mxu0 %v3186
      %6425 = vmatmul.bf16.gmra.mxu0 %v2205
      %v6426 = vpop.f32.mrf.mxu0
      %v6427 = vadd.f32 %v6293, %v6426
      %v6428 = vpop.f32.mrf.mxu0
      %v6429 = vadd.f32 %v6295, %v6428
      %6430 = vmatmul.bf16.gmra.mxu0 %v2209
      %v6431 = vpop.f32.mrf.mxu0
      %v6432 = vadd.f32 %v6298, %v6431
      %v6433 = vpop.f32.mrf.mxu0
      %v6434 = vadd.f32 %v6300, %v6433
      %6435 = vmatmul.bf16.gmra.mxu0 %v2213
      %v6436 = vpop.f32.mrf.mxu0
      %v6437 = vadd.f32 %v6303, %v6436
      %v6438 = vpop.f32.mrf.mxu0
      %v6439 = vadd.f32 %v6305, %v6438
      %6440 = vmatmul.bf16.gmra.mxu0 %v2217
      %v6441 = vpop.f32.mrf.mxu0
      %v6442 = vadd.f32 %v6308, %v6441
      %v6443 = vpop.f32.mrf.mxu0
      %v6444 = vadd.f32 %v6310, %v6443
      %6445 = vmatmul.bf16.gmra.mxu0 %v2221
      %v6446 = vpop.f32.mrf.mxu0
      %v6447 = vadd.f32 %v6313, %v6446
      %v6448 = vpop.f32.mrf.mxu0
      %v6449 = vadd.f32 %v6315, %v6448
      %6450 = vmatmul.bf16.gmra.mxu0 %v2225
      %v6451 = vpop.f32.mrf.mxu0
      %v6452 = vadd.f32 %v6318, %v6451
      %v6453 = vpop.f32.mrf.mxu0
      %v6454 = vadd.f32 %v6320, %v6453
      %6455 = vmatmul.bf16.gmra.mxu0 %v2229
      %v6456 = vpop.f32.mrf.mxu0
      %v6457 = vadd.f32 %v6323, %v6456
      %v6458 = vpop.f32.mrf.mxu0
      %v6459 = vadd.f32 %v6325, %v6458
      %6460 = vmatmul.bf16.gmra.mxu0 %v2233
      %v6461 = vpop.f32.mrf.mxu0
      %v6462 = vadd.f32 %v6328, %v6461
      %v6463 = vpop.f32.mrf.mxu0
      %v6464 = vadd.f32 %v6330, %v6463
      %6465 = vmatmul.bf16.gmra.mxu0 %v2237
      %v6466 = vpop.f32.mrf.mxu0
      %v6467 = vadd.f32 %v6333, %v6466
      %v6468 = vpop.f32.mrf.mxu0
      %v6469 = vadd.f32 %v6335, %v6468
      %6470 = vmatmul.bf16.gmra.mxu0 %v2241
      %v6471 = vpop.f32.mrf.mxu0
      %v6472 = vadd.f32 %v6338, %v6471
      %v6473 = vpop.f32.mrf.mxu0
      %v6474 = vadd.f32 %v6340, %v6473
      %6475 = vmatmul.bf16.gmra.mxu0 %v2245
      %v6476 = vpop.f32.mrf.mxu0
      %v6477 = vadd.f32 %v6343, %v6476
      %v6478 = vpop.f32.mrf.mxu0
      %v6479 = vadd.f32 %v6345, %v6478
      %6480 = vmatmul.bf16.gmra.mxu0 %v2249
      %v6481 = vpop.f32.mrf.mxu0
      %v6482 = vadd.f32 %v6348, %v6481
      %v6483 = vpop.f32.mrf.mxu0
      %v6484 = vadd.f32 %v6350, %v6483
      %6485 = vmatmul.bf16.gmra.mxu0 %v2253
      %v6486 = vpop.f32.mrf.mxu0
      %v6487 = vadd.f32 %v6353, %v6486
      %v6488 = vpop.f32.mrf.mxu0
      %v6489 = vadd.f32 %v6355, %v6488
      %6490 = vmatmul.bf16.gmra.mxu0 %v2257
      %v6491 = vpop.f32.mrf.mxu0
      %v6492 = vadd.f32 %v6358, %v6491
      %v6493 = vpop.f32.mrf.mxu0
      %v6494 = vadd.f32 %v6360, %v6493
      %6495 = vmatmul.bf16.gmra.mxu0 %v2261
      %v6496 = vpop.f32.mrf.mxu0
      %v6497 = vadd.f32 %v6363, %v6496
      %v6498 = vpop.f32.mrf.mxu0
      %v6499 = vadd.f32 %v6365, %v6498
      %6500 = vmatmul.bf16.gmra.mxu0 %v2265
      %v6501 = vpop.f32.mrf.mxu0
      %v6502 = vadd.f32 %v6368, %v6501
      %v6503 = vpop.f32.mrf.mxu0
      %v6504 = vadd.f32 %v6370, %v6503
      %6505 = vmatmul.bf16.gmra.mxu0 %v2269
      %v6506 = vpop.f32.mrf.mxu0
      %v6507 = vadd.f32 %v6373, %v6506
      %v6508 = vpop.f32.mrf.mxu0
      %v6509 = vadd.f32 %v6375, %v6508
      %6510 = vmatmul.bf16.gmra.mxu0 %v2273
      %v6511 = vpop.f32.mrf.mxu0
      %v6512 = vadd.f32 %v6378, %v6511
      %v6513 = vpop.f32.mrf.mxu0
      %v6514 = vadd.f32 %v6380, %v6513
      %6515 = vmatmul.bf16.gmra.mxu0 %v2277
      %v6516 = vpop.f32.mrf.mxu0
      %v6517 = vadd.f32 %v6383, %v6516
      %v6518 = vpop.f32.mrf.mxu0
      %v6519 = vadd.f32 %v6385, %v6518
      %6520 = vmatmul.bf16.gmra.mxu0 %v2281
      %v6521 = vpop.f32.mrf.mxu0
      %v6522 = vadd.f32 %v6388, %v6521
      %v6523 = vpop.f32.mrf.mxu0
      %v6524 = vadd.f32 %v6390, %v6523
      %6525 = vmatmul.bf16.gmra.mxu0 %v2285
      %v6526 = vpop.f32.mrf.mxu0
      %v6527 = vadd.f32 %v6393, %v6526
      %v6528 = vpop.f32.mrf.mxu0
      %v6529 = vadd.f32 %v6395, %v6528
      %6530 = vmatmul.bf16.gmra.mxu0 %v2289
      %v6531 = vpop.f32.mrf.mxu0
      %v6532 = vadd.f32 %v6398, %v6531
      %v6533 = vpop.f32.mrf.mxu0
      %v6534 = vadd.f32 %v6400, %v6533
      %6535 = vmatmul.bf16.gmra.mxu0 %v2293
      %v6536 = vpop.f32.mrf.mxu0
      %v6537 = vadd.f32 %v6403, %v6536
      %v6538 = vpop.f32.mrf.mxu0
      %v6539 = vadd.f32 %v6405, %v6538
      %6540 = vmatmul.bf16.gmra.mxu0 %v2297
      %v6541 = vpop.f32.mrf.mxu0
      %v6542 = vadd.f32 %v6408, %v6541
      %v6543 = vpop.f32.mrf.mxu0
      %v6544 = vadd.f32 %v6410, %v6543
      %6545 = vmatmul.bf16.gmra.mxu0 %v2301
      %v6546 = vpop.f32.mrf.mxu0
      %v6547 = vadd.f32 %v6413, %v6546
      %v6548 = vpop.f32.mrf.mxu0
      %v6549 = vadd.f32 %v6415, %v6548
      %6550 = vdwg.mxu0
      %6551 = vmatpush.bf16.msra.mxu0 %v3276
      %6552 = vmatpush.bf16.msra.mxu0 %v3270
      %6553 = vmatpush.bf16.msra.mxu0 %v3264
      %6554 = vmatpush.bf16.msra.mxu0 %v3258
      %6555 = vmatpush.bf16.msra.mxu0 %v3252
      %6556 = vmatpush.bf16.msra.mxu0 %v3246
      %6557 = vmatpush.bf16.msra.mxu0 %v3240
      %6558 = vmatpush.bf16.msra.mxu0 %v3234
      %6559 = vmatmul.bf16.gmra.mxu0 %v2206
      %v6560 = vpop.f32.mrf.mxu0
      %v6561 = vadd.f32 %v6427, %v6560
      %v6562 = vpop.f32.mrf.mxu0
      %v6563 = vadd.f32 %v6429, %v6562
      %6564 = vmatmul.bf16.gmra.mxu0 %v2210
      %v6565 = vpop.f32.mrf.mxu0
      %v6566 = vadd.f32 %v6432, %v6565
      %v6567 = vpop.f32.mrf.mxu0
      %v6568 = vadd.f32 %v6434, %v6567
      %6569 = vmatmul.bf16.gmra.mxu0 %v2214
      %v6570 = vpop.f32.mrf.mxu0
      %v6571 = vadd.f32 %v6437, %v6570
      %v6572 = vpop.f32.mrf.mxu0
      %v6573 = vadd.f32 %v6439, %v6572
      %6574 = vmatmul.bf16.gmra.mxu0 %v2218
      %v6575 = vpop.f32.mrf.mxu0
      %v6576 = vadd.f32 %v6442, %v6575
      %v6577 = vpop.f32.mrf.mxu0
      %v6578 = vadd.f32 %v6444, %v6577
      %6579 = vmatmul.bf16.gmra.mxu0 %v2222
      %v6580 = vpop.f32.mrf.mxu0
      %v6581 = vadd.f32 %v6447, %v6580
      %v6582 = vpop.f32.mrf.mxu0
      %v6583 = vadd.f32 %v6449, %v6582
      %6584 = vmatmul.bf16.gmra.mxu0 %v2226
      %v6585 = vpop.f32.mrf.mxu0
      %v6586 = vadd.f32 %v6452, %v6585
      %v6587 = vpop.f32.mrf.mxu0
      %v6588 = vadd.f32 %v6454, %v6587
      %6589 = vmatmul.bf16.gmra.mxu0 %v2230
      %v6590 = vpop.f32.mrf.mxu0
      %v6591 = vadd.f32 %v6457, %v6590
      %v6592 = vpop.f32.mrf.mxu0
      %v6593 = vadd.f32 %v6459, %v6592
      %6594 = vmatmul.bf16.gmra.mxu0 %v2234
      %v6595 = vpop.f32.mrf.mxu0
      %v6596 = vadd.f32 %v6462, %v6595
      %v6597 = vpop.f32.mrf.mxu0
      %v6598 = vadd.f32 %v6464, %v6597
      %6599 = vmatmul.bf16.gmra.mxu0 %v2238
      %v6600 = vpop.f32.mrf.mxu0
      %v6601 = vadd.f32 %v6467, %v6600
      %v6602 = vpop.f32.mrf.mxu0
      %v6603 = vadd.f32 %v6469, %v6602
      %6604 = vmatmul.bf16.gmra.mxu0 %v2242
      %v6605 = vpop.f32.mrf.mxu0
      %v6606 = vadd.f32 %v6472, %v6605
      %v6607 = vpop.f32.mrf.mxu0
      %v6608 = vadd.f32 %v6474, %v6607
      %6609 = vmatmul.bf16.gmra.mxu0 %v2246
      %v6610 = vpop.f32.mrf.mxu0
      %v6611 = vadd.f32 %v6477, %v6610
      %v6612 = vpop.f32.mrf.mxu0
      %v6613 = vadd.f32 %v6479, %v6612
      %6614 = vmatmul.bf16.gmra.mxu0 %v2250
      %v6615 = vpop.f32.mrf.mxu0
      %v6616 = vadd.f32 %v6482, %v6615
      %v6617 = vpop.f32.mrf.mxu0
      %v6618 = vadd.f32 %v6484, %v6617
      %6619 = vmatmul.bf16.gmra.mxu0 %v2254
      %v6620 = vpop.f32.mrf.mxu0
      %v6621 = vadd.f32 %v6487, %v6620
      %v6622 = vpop.f32.mrf.mxu0
      %v6623 = vadd.f32 %v6489, %v6622
      %6624 = vmatmul.bf16.gmra.mxu0 %v2258
      %v6625 = vpop.f32.mrf.mxu0
      %v6626 = vadd.f32 %v6492, %v6625
      %v6627 = vpop.f32.mrf.mxu0
      %v6628 = vadd.f32 %v6494, %v6627
      %6629 = vmatmul.bf16.gmra.mxu0 %v2262
      %v6630 = vpop.f32.mrf.mxu0
      %v6631 = vadd.f32 %v6497, %v6630
      %v6632 = vpop.f32.mrf.mxu0
      %v6633 = vadd.f32 %v6499, %v6632
      %6634 = vmatmul.bf16.gmra.mxu0 %v2266
      %v6635 = vpop.f32.mrf.mxu0
      %v6636 = vadd.f32 %v6502, %v6635
      %v6637 = vpop.f32.mrf.mxu0
      %v6638 = vadd.f32 %v6504, %v6637
      %6639 = vmatmul.bf16.gmra.mxu0 %v2270
      %v6640 = vpop.f32.mrf.mxu0
      %v6641 = vadd.f32 %v6507, %v6640
      %v6642 = vpop.f32.mrf.mxu0
      %v6643 = vadd.f32 %v6509, %v6642
      %6644 = vmatmul.bf16.gmra.mxu0 %v2274
      %v6645 = vpop.f32.mrf.mxu0
      %v6646 = vadd.f32 %v6512, %v6645
      %v6647 = vpop.f32.mrf.mxu0
      %v6648 = vadd.f32 %v6514, %v6647
      %6649 = vmatmul.bf16.gmra.mxu0 %v2278
      %v6650 = vpop.f32.mrf.mxu0
      %v6651 = vadd.f32 %v6517, %v6650
      %v6652 = vpop.f32.mrf.mxu0
      %v6653 = vadd.f32 %v6519, %v6652
      %6654 = vmatmul.bf16.gmra.mxu0 %v2282
      %v6655 = vpop.f32.mrf.mxu0
      %v6656 = vadd.f32 %v6522, %v6655
      %v6657 = vpop.f32.mrf.mxu0
      %v6658 = vadd.f32 %v6524, %v6657
      %6659 = vmatmul.bf16.gmra.mxu0 %v2286
      %v6660 = vpop.f32.mrf.mxu0
      %v6661 = vadd.f32 %v6527, %v6660
      %v6662 = vpop.f32.mrf.mxu0
      %v6663 = vadd.f32 %v6529, %v6662
      %6664 = vmatmul.bf16.gmra.mxu0 %v2290
      %v6665 = vpop.f32.mrf.mxu0
      %v6666 = vadd.f32 %v6532, %v6665
      %v6667 = vpop.f32.mrf.mxu0
      %v6668 = vadd.f32 %v6534, %v6667
      %6669 = vmatmul.bf16.gmra.mxu0 %v2294
      %v6670 = vpop.f32.mrf.mxu0
      %v6671 = vadd.f32 %v6537, %v6670
      %v6672 = vpop.f32.mrf.mxu0
      %v6673 = vadd.f32 %v6539, %v6672
      %6674 = vmatmul.bf16.gmra.mxu0 %v2298
      %v6675 = vpop.f32.mrf.mxu0
      %v6676 = vadd.f32 %v6542, %v6675
      %v6677 = vpop.f32.mrf.mxu0
      %v6678 = vadd.f32 %v6544, %v6677
      %6679 = vmatmul.bf16.gmra.mxu0 %v2302
      %v6680 = vpop.f32.mrf.mxu0
      %v6681 = vadd.f32 %v6547, %v6680
      %v6682 = vpop.f32.mrf.mxu0
      %v6683 = vadd.f32 %v6549, %v6682
      %6684 = vdwg.mxu0
      %v6685 = vpack.c.bf16 %v4417, %v3881
      %v6686 = vpack.c.bf16 %v5489, %v4953
      %v6687 = vpack.c.bf16 %v6561, %v6025
      %v6688 = vpack.c.bf16 %v4419, %v3883
      %v6689 = vpack.c.bf16 %v5491, %v4955
      %v6690 = vpack.c.bf16 %v6563, %v6027
      %v6691 = vpack.c.bf16 %v4422, %v3886
      %v6692 = vpack.c.bf16 %v5494, %v4958
      %v6693 = vpack.c.bf16 %v6566, %v6030
      %v6694 = vpack.c.bf16 %v4424, %v3888
      %v6695 = vpack.c.bf16 %v5496, %v4960
      %v6696 = vpack.c.bf16 %v6568, %v6032
      %v6697 = vpack.c.bf16 %v4427, %v3891
      %v6698 = vpack.c.bf16 %v5499, %v4963
      %v6699 = vpack.c.bf16 %v6571, %v6035
      %v6700 = vpack.c.bf16 %v4429, %v3893
      %v6701 = vpack.c.bf16 %v5501, %v4965
      %v6702 = vpack.c.bf16 %v6573, %v6037
      %v6703 = vpack.c.bf16 %v4432, %v3896
      %v6704 = vpack.c.bf16 %v5504, %v4968
      %v6705 = vpack.c.bf16 %v6576, %v6040
      %v6706 = vpack.c.bf16 %v4434, %v3898
      %v6707 = vpack.c.bf16 %v5506, %v4970
      %v6708 = vpack.c.bf16 %v6578, %v6042
      %v6709 = vpack.c.bf16 %v4437, %v3901
      %v6710 = vpack.c.bf16 %v5509, %v4973
      %v6711 = vpack.c.bf16 %v6581, %v6045
      %v6712 = vpack.c.bf16 %v4439, %v3903
      %v6713 = vpack.c.bf16 %v5511, %v4975
      %v6714 = vpack.c.bf16 %v6583, %v6047
      %v6715 = vpack.c.bf16 %v4442, %v3906
      %v6716 = vpack.c.bf16 %v5514, %v4978
      %v6717 = vpack.c.bf16 %v6586, %v6050
      %v6718 = vpack.c.bf16 %v4444, %v3908
      %v6719 = vpack.c.bf16 %v5516, %v4980
      %v6720 = vpack.c.bf16 %v6588, %v6052
      %v6721 = vpack.c.bf16 %v4447, %v3911
      %v6722 = vpack.c.bf16 %v5519, %v4983
      %v6723 = vpack.c.bf16 %v6591, %v6055
      %v6724 = vpack.c.bf16 %v4449, %v3913
      %v6725 = vpack.c.bf16 %v5521, %v4985
      %v6726 = vpack.c.bf16 %v6593, %v6057
      %v6727 = vpack.c.bf16 %v4452, %v3916
      %v6728 = vpack.c.bf16 %v5524, %v4988
      %v6729 = vpack.c.bf16 %v6596, %v6060
      %v6730 = vpack.c.bf16 %v4454, %v3918
      %v6731 = vpack.c.bf16 %v5526, %v4990
      %v6732 = vpack.c.bf16 %v6598, %v6062
      %v6733 = vpack.c.bf16 %v4457, %v3921
      %v6734 = vpack.c.bf16 %v5529, %v4993
      %v6735 = vpack.c.bf16 %v6601, %v6065
      %v6736 = vpack.c.bf16 %v4459, %v3923
      %v6737 = vpack.c.bf16 %v5531, %v4995
      %v6738 = vpack.c.bf16 %v6603, %v6067
      %v6739 = vpack.c.bf16 %v4462, %v3926
      %v6740 = vpack.c.bf16 %v5534, %v4998
      %v6741 = vpack.c.bf16 %v6606, %v6070
      %v6742 = vpack.c.bf16 %v4464, %v3928
      %v6743 = vpack.c.bf16 %v5536, %v5000
      %v6744 = vpack.c.bf16 %v6608, %v6072
      %v6745 = vpack.c.bf16 %v4467, %v3931
      %v6746 = vpack.c.bf16 %v5539, %v5003
      %v6747 = vpack.c.bf16 %v6611, %v6075
      %v6748 = vpack.c.bf16 %v4469, %v3933
      %v6749 = vpack.c.bf16 %v5541, %v5005
      %v6750 = vpack.c.bf16 %v6613, %v6077
      %v6751 = vpack.c.bf16 %v4472, %v3936
      %v6752 = vpack.c.bf16 %v5544, %v5008
      %v6753 = vpack.c.bf16 %v6616, %v6080
      %v6754 = vpack.c.bf16 %v4474, %v3938
      %v6755 = vpack.c.bf16 %v5546, %v5010
      %v6756 = vpack.c.bf16 %v6618, %v6082
      %v6757 = vpack.c.bf16 %v4477, %v3941
      %v6758 = vpack.c.bf16 %v5549, %v5013
      %v6759 = vpack.c.bf16 %v6621, %v6085
      %v6760 = vpack.c.bf16 %v4479, %v3943
      %v6761 = vpack.c.bf16 %v5551, %v5015
      %v6762 = vpack.c.bf16 %v6623, %v6087
      %v6763 = vpack.c.bf16 %v4482, %v3946
      %v6764 = vpack.c.bf16 %v5554, %v5018
      %v6765 = vpack.c.bf16 %v6626, %v6090
      %v6766 = vpack.c.bf16 %v4484, %v3948
      %v6767 = vpack.c.bf16 %v5556, %v5020
      %v6768 = vpack.c.bf16 %v6628, %v6092
      %v6769 = vpack.c.bf16 %v4487, %v3951
      %v6770 = vpack.c.bf16 %v5559, %v5023
      %v6771 = vpack.c.bf16 %v6631, %v6095
      %v6772 = vpack.c.bf16 %v4489, %v3953
      %v6773 = vpack.c.bf16 %v5561, %v5025
      %v6774 = vpack.c.bf16 %v6633, %v6097
      %v6775 = vpack.c.bf16 %v4492, %v3956
      %v6776 = vpack.c.bf16 %v5564, %v5028
      %v6777 = vpack.c.bf16 %v6636, %v6100
      %v6778 = vpack.c.bf16 %v4494, %v3958
      %v6779 = vpack.c.bf16 %v5566, %v5030
      %v6780 = vpack.c.bf16 %v6638, %v6102
      %v6781 = vpack.c.bf16 %v4497, %v3961
      %v6782 = vpack.c.bf16 %v5569, %v5033
      %v6783 = vpack.c.bf16 %v6641, %v6105
      %v6784 = vpack.c.bf16 %v4499, %v3963
      %v6785 = vpack.c.bf16 %v5571, %v5035
      %v6786 = vpack.c.bf16 %v6643, %v6107
      %v6787 = vpack.c.bf16 %v4502, %v3966
      %v6788 = vpack.c.bf16 %v5574, %v5038
      %v6789 = vpack.c.bf16 %v6646, %v6110
      %v6790 = vpack.c.bf16 %v4504, %v3968
      %v6791 = vpack.c.bf16 %v5576, %v5040
      %v6792 = vpack.c.bf16 %v6648, %v6112
      %v6793 = vpack.c.bf16 %v4507, %v3971
      %v6794 = vpack.c.bf16 %v5579, %v5043
      %v6795 = vpack.c.bf16 %v6651, %v6115
      %v6796 = vpack.c.bf16 %v4509, %v3973
      %v6797 = vpack.c.bf16 %v5581, %v5045
      %v6798 = vpack.c.bf16 %v6653, %v6117
      %v6799 = vpack.c.bf16 %v4512, %v3976
      %v6800 = vpack.c.bf16 %v5584, %v5048
      %v6801 = vpack.c.bf16 %v6656, %v6120
      %v6802 = vpack.c.bf16 %v4514, %v3978
      %v6803 = vpack.c.bf16 %v5586, %v5050
      %v6804 = vpack.c.bf16 %v6658, %v6122
      %v6805 = vpack.c.bf16 %v4517, %v3981
      %v6806 = vpack.c.bf16 %v5589, %v5053
      %v6807 = vpack.c.bf16 %v6661, %v6125
      %v6808 = vpack.c.bf16 %v4519, %v3983
      %v6809 = vpack.c.bf16 %v5591, %v5055
      %v6810 = vpack.c.bf16 %v6663, %v6127
      %v6811 = vpack.c.bf16 %v4522, %v3986
      %v6812 = vpack.c.bf16 %v5594, %v5058
      %v6813 = vpack.c.bf16 %v6666, %v6130
      %v6814 = vpack.c.bf16 %v4524, %v3988
      %v6815 = vpack.c.bf16 %v5596, %v5060
      %v6816 = vpack.c.bf16 %v6668, %v6132
      %v6817 = vpack.c.bf16 %v4527, %v3991
      %v6818 = vpack.c.bf16 %v5599, %v5063
      %v6819 = vpack.c.bf16 %v6671, %v6135
      %v6820 = vpack.c.bf16 %v4529, %v3993
      %v6821 = vpack.c.bf16 %v5601, %v5065
      %v6822 = vpack.c.bf16 %v6673, %v6137
      %v6823 = vpack.c.bf16 %v4532, %v3996
      %v6824 = vpack.c.bf16 %v5604, %v5068
      %v6825 = vpack.c.bf16 %v6676, %v6140
      %v6826 = vpack.c.bf16 %v4534, %v3998
      %v6827 = vpack.c.bf16 %v5606, %v5070
      %v6828 = vpack.c.bf16 %v6678, %v6142
      %v6829 = vpack.c.bf16 %v4537, %v4001
      %v6830 = vpack.c.bf16 %v5609, %v5073
      %v6831 = vpack.c.bf16 %v6681, %v6145
      %v6832 = vpack.c.bf16 %v4539, %v4003
      %v6833 = vpack.c.bf16 %v5611, %v5075
      %v6834 = vpack.c.bf16 %v6683, %v6147
      %6835 = vst [vmem:[%s231] sm:$0xff] %v6685
      %6836 = vst [vmem:[%s231 + $0x8] sm:$0xff] %v6686
      %6837 = vst [vmem:[%s231 + $0x10] sm:$0xff] %v6687
      %6838 = vst [vmem:[%s231 + $0x18] sm:$0xff] %v6688
      %6839 = vst [vmem:[%s231 + $0x20] sm:$0xff] %v6689
      %6840 = vst [vmem:[%s231 + $0x28] sm:$0xff] %v6690
      %6841 = vst [vmem:[%s231 + $0x30] sm:$0xff] %v6691
      %6842 = vst [vmem:[%s231 + $0x38] sm:$0xff] %v6692
      %6843 = vst [vmem:[%s231 + $0x40] sm:$0xff] %v6693
      %6844 = vst [vmem:[%s231 + $0x48] sm:$0xff] %v6694
      %6845 = vst [vmem:[%s231 + $0x50] sm:$0xff] %v6695
      %6846 = vst [vmem:[%s231 + $0x58] sm:$0xff] %v6696
      %6847 = vst [vmem:[%s231 + $0x60] sm:$0xff] %v6697
      %6848 = vst [vmem:[%s231 + $0x68] sm:$0xff] %v6698
      %6849 = vst [vmem:[%s231 + $0x70] sm:$0xff] %v6699
      %6850 = vst [vmem:[%s231 + $0x78] sm:$0xff] %v6700
      %6851 = vst [vmem:[%s231 + $0x80] sm:$0xff] %v6701
      %6852 = vst [vmem:[%s231 + $0x88] sm:$0xff] %v6702
      %6853 = vst [vmem:[%s231 + $0x90] sm:$0xff] %v6703
      %6854 = vst [vmem:[%s231 + $0x98] sm:$0xff] %v6704
      %6855 = vst [vmem:[%s231 + $0xa0] sm:$0xff] %v6705
      %6856 = vst [vmem:[%s231 + $0xa8] sm:$0xff] %v6706
      %6857 = vst [vmem:[%s231 + $0xb0] sm:$0xff] %v6707
      %6858 = vst [vmem:[%s231 + $0xb8] sm:$0xff] %v6708
      %6859 = vst [vmem:[%s231 + $0xc0] sm:$0xff] %v6709
      %6860 = vst [vmem:[%s231 + $0xc8] sm:$0xff] %v6710
      %6861 = vst [vmem:[%s231 + $0xd0] sm:$0xff] %v6711
      %6862 = vst [vmem:[%s231 + $0xd8] sm:$0xff] %v6712
      %6863 = vst [vmem:[%s231 + $0xe0] sm:$0xff] %v6713
      %6864 = vst [vmem:[%s231 + $0xe8] sm:$0xff] %v6714
      %6865 = vst [vmem:[%s231 + $0xf0] sm:$0xff] %v6715
      %6866 = vst [vmem:[%s231 + $0xf8] sm:$0xff] %v6716
      %6867 = vst [vmem:[%s231 + $0x100] sm:$0xff] %v6717
      %6868 = vst [vmem:[%s231 + $0x108] sm:$0xff] %v6718
      %6869 = vst [vmem:[%s231 + $0x110] sm:$0xff] %v6719
      %6870 = vst [vmem:[%s231 + $0x118] sm:$0xff] %v6720
      %6871 = vst [vmem:[%s231 + $0x120] sm:$0xff] %v6721
      %6872 = vst [vmem:[%s231 + $0x128] sm:$0xff] %v6722
      %6873 = vst [vmem:[%s231 + $0x130] sm:$0xff] %v6723
      %6874 = vst [vmem:[%s231 + $0x138] sm:$0xff] %v6724
      %6875 = vst [vmem:[%s231 + $0x140] sm:$0xff] %v6725
      %6876 = vst [vmem:[%s231 + $0x148] sm:$0xff] %v6726
      %6877 = vst [vmem:[%s231 + $0x150] sm:$0xff] %v6727
      %6878 = vst [vmem:[%s231 + $0x158] sm:$0xff] %v6728
      %6879 = vst [vmem:[%s231 + $0x160] sm:$0xff] %v6729
      %6880 = vst [vmem:[%s231 + $0x168] sm:$0xff] %v6730
      %6881 = vst [vmem:[%s231 + $0x170] sm:$0xff] %v6731
      %6882 = vst [vmem:[%s231 + $0x178] sm:$0xff] %v6732
      %6883 = vst [vmem:[%s231 + $0x180] sm:$0xff] %v6733
      %6884 = vst [vmem:[%s231 + $0x188] sm:$0xff] %v6734
      %6885 = vst [vmem:[%s231 + $0x190] sm:$0xff] %v6735
      %6886 = vst [vmem:[%s231 + $0x198] sm:$0xff] %v6736
      %6887 = vst [vmem:[%s231 + $0x1a0] sm:$0xff] %v6737
      %6888 = vst [vmem:[%s231 + $0x1a8] sm:$0xff] %v6738
      %6889 = vst [vmem:[%s231 + $0x1b0] sm:$0xff] %v6739
      %6890 = vst [vmem:[%s231 + $0x1b8] sm:$0xff] %v6740
      %6891 = vst [vmem:[%s231 + $0x1c0] sm:$0xff] %v6741
      %6892 = vst [vmem:[%s231 + $0x1c8] sm:$0xff] %v6742
      %6893 = vst [vmem:[%s231 + $0x1d0] sm:$0xff] %v6743
      %6894 = vst [vmem:[%s231 + $0x1d8] sm:$0xff] %v6744
      %6895 = vst [vmem:[%s231 + $0x1e0] sm:$0xff] %v6745
      %6896 = vst [vmem:[%s231 + $0x1e8] sm:$0xff] %v6746
      %6897 = vst [vmem:[%s231 + $0x1f0] sm:$0xff] %v6747
      %6898 = vst [vmem:[%s231 + $0x1f8] sm:$0xff] %v6748
      %6899 = vst [vmem:[%s231 + $0x200] sm:$0xff] %v6749
      %6900 = vst [vmem:[%s231 + $0x208] sm:$0xff] %v6750
      %6901 = vst [vmem:[%s231 + $0x210] sm:$0xff] %v6751
      %6902 = vst [vmem:[%s231 + $0x218] sm:$0xff] %v6752
      %6903 = vst [vmem:[%s231 + $0x220] sm:$0xff] %v6753
      %6904 = vst [vmem:[%s231 + $0x228] sm:$0xff] %v6754
      %6905 = vst [vmem:[%s231 + $0x230] sm:$0xff] %v6755
      %6906 = vst [vmem:[%s231 + $0x238] sm:$0xff] %v6756
      %6907 = vst [vmem:[%s231 + $0x240] sm:$0xff] %v6757
      %6908 = vst [vmem:[%s231 + $0x248] sm:$0xff] %v6758
      %6909 = vst [vmem:[%s231 + $0x250] sm:$0xff] %v6759
      %6910 = vst [vmem:[%s231 + $0x258] sm:$0xff] %v6760
      %6911 = vst [vmem:[%s231 + $0x260] sm:$0xff] %v6761
      %6912 = vst [vmem:[%s231 + $0x268] sm:$0xff] %v6762
      %6913 = vst [vmem:[%s231 + $0x270] sm:$0xff] %v6763
      %6914 = vst [vmem:[%s231 + $0x278] sm:$0xff] %v6764
      %6915 = vst [vmem:[%s231 + $0x280] sm:$0xff] %v6765
      %6916 = vst [vmem:[%s231 + $0x288] sm:$0xff] %v6766
      %6917 = vst [vmem:[%s231 + $0x290] sm:$0xff] %v6767
      %6918 = vst [vmem:[%s231 + $0x298] sm:$0xff] %v6768
      %6919 = vst [vmem:[%s231 + $0x2a0] sm:$0xff] %v6769
      %6920 = vst [vmem:[%s231 + $0x2a8] sm:$0xff] %v6770
      %6921 = vst [vmem:[%s231 + $0x2b0] sm:$0xff] %v6771
      %6922 = vst [vmem:[%s231 + $0x2b8] sm:$0xff] %v6772
      %6923 = vst [vmem:[%s231 + $0x2c0] sm:$0xff] %v6773
      %6924 = vst [vmem:[%s231 + $0x2c8] sm:$0xff] %v6774
      %6925 = vst [vmem:[%s231 + $0x2d0] sm:$0xff] %v6775
      %6926 = vst [vmem:[%s231 + $0x2d8] sm:$0xff] %v6776
      %6927 = vst [vmem:[%s231 + $0x2e0] sm:$0xff] %v6777
      %6928 = vst [vmem:[%s231 + $0x2e8] sm:$0xff] %v6778
      %6929 = vst [vmem:[%s231 + $0x2f0] sm:$0xff] %v6779
      %6930 = vst [vmem:[%s231 + $0x2f8] sm:$0xff] %v6780
      %6931 = vst [vmem:[%s231 + $0x300] sm:$0xff] %v6781
      %6932 = vst [vmem:[%s231 + $0x308] sm:$0xff] %v6782
      %6933 = vst [vmem:[%s231 + $0x310] sm:$0xff] %v6783
      %6934 = vst [vmem:[%s231 + $0x318] sm:$0xff] %v6784
      %6935 = vst [vmem:[%s231 + $0x320] sm:$0xff] %v6785
      %6936 = vst [vmem:[%s231 + $0x328] sm:$0xff] %v6786
      %6937 = vst [vmem:[%s231 + $0x330] sm:$0xff] %v6787
      %6938 = vst [vmem:[%s231 + $0x338] sm:$0xff] %v6788
      %6939 = vst [vmem:[%s231 + $0x340] sm:$0xff] %v6789
      %6940 = vst [vmem:[%s231 + $0x348] sm:$0xff] %v6790
      %6941 = vst [vmem:[%s231 + $0x350] sm:$0xff] %v6791
      %6942 = vst [vmem:[%s231 + $0x358] sm:$0xff] %v6792
      %6943 = vst [vmem:[%s231 + $0x360] sm:$0xff] %v6793
      %6944 = vst [vmem:[%s231 + $0x368] sm:$0xff] %v6794
      %6945 = vst [vmem:[%s231 + $0x370] sm:$0xff] %v6795
      %6946 = vst [vmem:[%s231 + $0x378] sm:$0xff] %v6796
      %6947 = vst [vmem:[%s231 + $0x380] sm:$0xff] %v6797
      %6948 = vst [vmem:[%s231 + $0x388] sm:$0xff] %v6798
      %6949 = vst [vmem:[%s231 + $0x390] sm:$0xff] %v6799
      %6950 = vst [vmem:[%s231 + $0x398] sm:$0xff] %v6800
      %6951 = vst [vmem:[%s231 + $0x3a0] sm:$0xff] %v6801
      %6952 = vst [vmem:[%s231 + $0x3a8] sm:$0xff] %v6802
      %6953 = vst [vmem:[%s231 + $0x3b0] sm:$0xff] %v6803
      %6954 = vst [vmem:[%s231 + $0x3b8] sm:$0xff] %v6804
      %6955 = vst [vmem:[%s231 + $0x3c0] sm:$0xff] %v6805
      %6956 = vst [vmem:[%s231 + $0x3c8] sm:$0xff] %v6806
      %6957 = vst [vmem:[%s231 + $0x3d0] sm:$0xff] %v6807
      %6958 = vst [vmem:[%s231 + $0x3d8] sm:$0xff] %v6808
      %6959 = vst [vmem:[%s231 + $0x3e0] sm:$0xff] %v6809
      %6960 = vst [vmem:[%s231 + $0x3e8] sm:$0xff] %v6810
      %6961 = vst [vmem:[%s231 + $0x3f0] sm:$0xff] %v6811
      %6962 = vst [vmem:[%s231 + $0x3f8] sm:$0xff] %v6812
      %6963 = vst [vmem:[%s231 + $0x400] sm:$0xff] %v6813
      %6964 = vst [vmem:[%s231 + $0x408] sm:$0xff] %v6814
      %6965 = vst [vmem:[%s231 + $0x410] sm:$0xff] %v6815
      %6966 = vst [vmem:[%s231 + $0x418] sm:$0xff] %v6816
      %6967 = vst [vmem:[%s231 + $0x420] sm:$0xff] %v6817
      %6968 = vst [vmem:[%s231 + $0x428] sm:$0xff] %v6818
      %6969 = vst [vmem:[%s231 + $0x430] sm:$0xff] %v6819
      %6970 = vst [vmem:[%s231 + $0x438] sm:$0xff] %v6820
      %6971 = vst [vmem:[%s231 + $0x440] sm:$0xff] %v6821
      %6972 = vst [vmem:[%s231 + $0x448] sm:$0xff] %v6822
      %6973 = vst [vmem:[%s231 + $0x450] sm:$0xff] %v6823
      %6974 = vst [vmem:[%s231 + $0x458] sm:$0xff] %v6824
      %6975 = vst [vmem:[%s231 + $0x460] sm:$0xff] %v6825
      %6976 = vst [vmem:[%s231 + $0x468] sm:$0xff] %v6826
      %6977 = vst [vmem:[%s231 + $0x470] sm:$0xff] %v6827
      %6978 = vst [vmem:[%s231 + $0x478] sm:$0xff] %v6828
      %6979 = vst [vmem:[%s231 + $0x480] sm:$0xff] %v6829
      %6980 = vst [vmem:[%s231 + $0x488] sm:$0xff] %v6830
      %6981 = vst [vmem:[%s231 + $0x490] sm:$0xff] %v6831
      %6982 = vst [vmem:[%s231 + $0x498] sm:$0xff] %v6832
      %6983 = vst [vmem:[%s231 + $0x4a0] sm:$0xff] %v6833
      %6984 = vst [vmem:[%s231 + $0x4a8] sm:$0xff] %v6834
      %s6985 = smul.u32 50, %s16
      %p6986 = scmp.lt.s32.totalorder %s6985, 249
      %s6987 = scalar_select %p6986, %s6985, 249
      %s6988 = smul.addr %s6987, 6
      %s6989 = smul.addr %s6988, 4
      %s6990 = scalar_lea.vmem %s5, %s6989
      // Predicated region
      $region41: #{net_forward.2} parent=39 // pred_check
        %p6991 = pneg %p144
      $region42: #{net_forward.2} parent=39 // pred_check_branch
        %6993 = sbr.rel (%p6991) target = $region44
      $region43: #{net_forward.2} parent=39 // pred_region
        %s6994 = smul.u32 50, %s16
      $region44: #{net_forward.2} parent=39 // pred_fallthru
        _
    $region40: #{net_forward.2} parent=5 // pred_fallthru
      _
    %p6995 = scmp.le.s32.totalorder 2, %s11
    // Predicated region
    $region45: #{net_forward.2} parent=5 // pred_check
      %p6996 = pneg %p6995
    $region46: #{net_forward.2} parent=5 // pred_check_branch
      %6998 = sbr.rel (%p6996) target = $region48
    $region47: #{net_forward.2} parent=5 // pred_region
      %s6999 = ssub.s32 %s11, 2
      // Predicated region
      $region49: #{net_forward.2} parent=47 // pred_check
        %p7000 = pneg %p150
      $region50: #{net_forward.2} parent=47 // pred_check_branch
        %7002 = sbr.rel (%p7000) target = $region52
      $region51: #{net_forward.2} parent=47 // pred_region
        %s7003 = smul.u32 50, %s17
        %p7004 = scmp.lt.s32.totalorder %s7003, 249
        %s7005 = scalar_select %p7004, %s7003, 249
        %s7006 = smul.addr %s7005, 6
        %s7007 = smul.addr %s7006, 4
        %s7008 = scalar_lea.vmem %s5, %s7007
      $region52: #{net_forward.2} parent=47 // pred_fallthru
        _
    $region48: #{net_forward.2} parent=5 // pred_fallthru
      _
  $region6: #{net_forward.2} parent=0 // loop_footer
    %s15 = sadd.s32 1, %s11
  $region7: #{net_forward.2} parent=0 // loop_footer_branch
    %10 = sbr.rel target = $region3
  $region8: #{net_forward.2} parent=0 // loop_exit
    _

</llo_original>
